<compile_context>
chip_gen: v7x
topology: tpu7x:2x2x1
jax: 0.10.0
libtpu: 0.0.40
codegen_flags: <defaults>
</compile_context>

<pallas_src>
import functools
import math

import jax
import jax.numpy as jnp
from jax.experimental import pallas as pl
from jax.experimental.pallas import tpu as pltpu


def _mha_kernel(x_ref, kv_ref, wq_ref, wkv_ref, wo_ref, vec_ref,
                out_ref, acc_ref, *, nhead: int, hop_in_ref: bool):
    """One (batch_block, hop) grid step.

    x_ref:   (Bb, Lq, D)        initial query block (read only at hop == 0)
    kv_ref:  (Bb, Lk, D)        key/value block (resident across hops)
    wq_ref:  (H or 1, D, D)     bf16, 1/sqrt(hd) pre-folded
    wkv_ref: (H or 1, D, 2D)    bf16, [Wk | Wv]
    wo_ref:  (H or 1, D, D)     bf16 output projection
    vec_ref: (H or 1, 8, D)     f32 packed [bq*scale, bk, bv, bo, gamma, beta, 0, 0]
    out_ref: (Bb, Lq, D)        written only at the last hop
    acc_ref: (Bb, Lq, D)        f32 scratch — running activation across hops
    """
    hop = pl.program_id(1)
    n_hops = pl.num_programs(1)
    f32 = jnp.float32

    Bb, Lq, D = acc_ref.shape
    _, Lk, _ = kv_ref.shape
    hd = D // nhead
    cdt = wq_ref.dtype                      # MXU compute dtype (bf16)

    # Weight index: dynamic hop when all hops are VMEM-resident, else 0.
    hidx = hop if hop_in_ref else 0

    @pl.when(hop == 0)
    def _():
        acc_ref[...] = x_ref[...].astype(f32)

    vecs = vec_ref[hidx]                    # (8, D) f32
    bq, bk, bv, bo = vecs[0:1], vecs[1:2], vecs[2:3], vecs[3:4]
    gamma, beta = vecs[4:5], vecs[5:6]

    # ---- Projections (bf16 operands, f32 accumulation on the MXU) ----------
    x2 = acc_ref[...].reshape(Bb * Lq, D)                       # f32 residual
    q3 = (jnp.dot(x2.astype(cdt), wq_ref[hidx],
                  preferred_element_type=f32) + bq).astype(cdt).reshape(Bb, Lq, D)

    kv2 = kv_ref[...].reshape(Bb * Lk, D).astype(cdt)           # single f32->bf16 cast
    kvp = jnp.dot(kv2, wkv_ref[hidx], preferred_element_type=f32)   # (Bb*Lk, 2D)
    k3 = (kvp[:, :D] + bk).astype(cdt).reshape(Bb, Lk, D)       # bf16 immediately
    v3 = (kvp[:, D:] + bv).astype(cdt).reshape(Bb, Lk, D)

    # ---- Per-head attention (batch block = single leading batch dim) -------
    # Lane slices are layout-free because hd % 128 == 0 for the demo config.
    # TODO(synk): for hd < 128, move heads into the dot_general batch dim to
    # avoid sub-128 lane slices.
    ctx_heads = []
    for h in range(nhead):                                      # static, small
        sl = slice(h * hd, (h + 1) * hd)
        s = jnp.einsum('bqd,bkd->bqk', q3[:, :, sl], k3[:, :, sl],
                       preferred_element_type=f32)              # (Bb, Lq, Lk)
        s = s - jnp.max(s, axis=-1, keepdims=True)
        p = jnp.exp(s)
        p = p * pl.reciprocal(jnp.sum(p, axis=-1, keepdims=True), approx=True)
        o = jnp.einsum('bqk,bkd->bqd', p.astype(cdt), v3[:, :, sl],
                       preferred_element_type=f32)              # (Bb, Lq, hd)
        ctx_heads.append(o.astype(cdt))

    # Single full-D output projection instead of nhead K=hd matmuls + adds.
    ctx2 = jnp.concatenate(ctx_heads, axis=-1).reshape(Bb * Lq, D)
    y2 = jnp.dot(ctx2, wo_ref[hidx], preferred_element_type=f32) + bo

    # Dropout(p=0.1) in eval mode == identity.
    # TODO(synk): training-mode dropout (RNG mask) is not implemented.
    y = x2 + y2                                                 # residual, f32

    # LayerNorm over last dim (biased variance, eps=1e-5, affine), in f32.
    mean = jnp.mean(y, axis=-1, keepdims=True)
    yc = y - mean
    var = jnp.mean(yc * yc, axis=-1, keepdims=True)
    y = yc * jax.lax.rsqrt(var + 1e-5) * gamma + beta
    y3 = y.reshape(Bb, Lq, D)

    @pl.when(hop < n_hops - 1)
    def _():
        acc_ref[...] = y3                   # carry to next hop

    @pl.when(hop == n_hops - 1)
    def _():
        out_ref[...] = y3.astype(out_ref.dtype)   # write result directly


def _prefer_two_parallel_blocks() -> bool:
    """True only on chips with 2 TensorCores (v7x); v5e/v6e are single-TC."""
    try:
        kind = jax.devices()[0].device_kind.lower()
    except Exception:
        return False
    return ("v7" in kind) or ("7x" in kind)


def _pick_block_b(batch: int, lq: int, prefer_parallel: bool,
                  target_rows: int = 512) -> int:
    """Largest divisor of `batch` such that block_b*Lq <= target_rows; on
    2-TC chips keep exactly 2 batch blocks (one per core) when possible."""
    divisors = [d for d in range(1, batch + 1) if batch % d == 0]
    capped = [d for d in divisors if d * lq <= target_rows] or [1]
    if prefer_parallel:
        two_plus = [d for d in capped if batch // d >= 2]
        if two_plus:
            return max(two_plus)
    return max(capped)


def multi_hop_attention(query, key_value, params, nhead, *, block_b=None,
                        weights_resident=None, vmem_limit_bytes=None):
    """query = att_i(query, key_value, key_value) for every hop, fully fused."""
    B, Lq, D = query.shape
    Bk, Lk, Dk = key_value.shape
    assert Bk == B and Dk == D and D % nhead == 0
    num_hops = params["wq"].shape[0]

    if block_b is None:
        block_b = _pick_block_b(B, Lq, _prefer_two_parallel_blocks())
    assert B % block_b == 0
    nb = B // block_b

    # --- weight residency decision (all hops in VMEM if they fit) -----------
    wdt = jnp.dtype(params["wq"].dtype).itemsize
    w_bytes_per_hop = 4 * D * D * wdt + 8 * D * 4          # wq + wkv + wo + vecs
    if weights_resident is None:
        weights_resident = num_hops * w_bytes_per_hop <= 24 * 1024 * 1024

    if weights_resident:
        w_specs = [
            pl.BlockSpec((num_hops, D, D), lambda b, h: (0, 0, 0)),       # wq
            pl.BlockSpec((num_hops, D, 2 * D), lambda b, h: (0, 0, 0)),   # wkv
            pl.BlockSpec((num_hops, D, D), lambda b, h: (0, 0, 0)),       # wo
            pl.BlockSpec((num_hops, 8, D), lambda b, h: (0, 0, 0)),       # vecs
        ]
    else:
        # Streaming fallback: triple-buffer so the DMA-exposed pipeline hides
        # the per-hop weight fetch.
        w_specs = [
            pl.BlockSpec((1, D, D), lambda b, h: (h, 0, 0),
                         pipeline_mode=pl.Buffered(3)),
            pl.BlockSpec((1, D, 2 * D), lambda b, h: (h, 0, 0),
                         pipeline_mode=pl.Buffered(3)),
            pl.BlockSpec((1, D, D), lambda b, h: (h, 0, 0),
                         pipeline_mode=pl.Buffered(3)),
            pl.BlockSpec((1, 8, D), lambda b, h: (h, 0, 0)),
        ]

    # --- VMEM budget: actual footprint + margin, capped at 48 MiB -----------
    if vmem_limit_bytes is None:
        io_bytes = (block_b * Lq * D * jnp.dtype(query.dtype).itemsize
                    + block_b * Lk * D * jnp.dtype(key_value.dtype).itemsize
                    + block_b * Lq * D * jnp.dtype(query.dtype).itemsize)
        scratch_bytes = block_b * Lq * D * 4
        if weights_resident:
            w_foot = 2 * num_hops * w_bytes_per_hop   # allow double-buffering
        else:
            w_foot = 3 * w_bytes_per_hop
        est = 2 * io_bytes + scratch_bytes + w_foot + (8 << 20)
        vmem_limit_bytes = int(min(48 << 20, max(est, 16 << 20)))

    kernel = functools.partial(_mha_kernel, nhead=nhead,
                               hop_in_ref=weights_resident)

    # The hop axis MUST stay innermost and "arbitrary": acc_ref carries the
    # activation between hops of one batch block.
    return pl.pallas_call(
        kernel,
        out_shape=jax.ShapeDtypeStruct((B, Lq, D), query.dtype),
        grid=(nb, num_hops),
        in_specs=[
            pl.BlockSpec((block_b, Lq, D), lambda b, h: (b, 0, 0)),   # query
            pl.BlockSpec((block_b, Lk, D), lambda b, h: (b, 0, 0)),   # key_value
        ] + w_specs,
        out_specs=pl.BlockSpec((block_b, Lq, D), lambda b, h: (b, 0, 0)),
        scratch_shapes=[pltpu.VMEM((block_b, Lq, D), jnp.float32)],
        compiler_params=pltpu.CompilerParams(
            dimension_semantics=("parallel", "arbitrary"),
            vmem_limit_bytes=vmem_limit_bytes),
    )(query, key_value,
      params["wq"], params["wkv"], params["wo"], params["vecs"])


def init_params(key, d_model, num_hops):
    """Raw per-hop parameters (x @ W convention: PyTorch weights pre-transposed)."""
    scale = 1.0 / math.sqrt(d_model)
    ks = jax.random.split(key, 4)
    shape = (num_hops, d_model, d_model)
    return {
        "wq": jax.random.normal(ks[0], shape, jnp.float32) * scale,
        "wk": jax.random.normal(ks[1], shape, jnp.float32) * scale,
        "wv": jax.random.normal(ks[2], shape, jnp.float32) * scale,
        "wo": jax.random.normal(ks[3], shape, jnp.float32) * scale,
        "bq": jnp.zeros((num_hops, d_model), jnp.float32),
        "bk": jnp.zeros((num_hops, d_model), jnp.float32),
        "bv": jnp.zeros((num_hops, d_model), jnp.float32),
        "bo": jnp.zeros((num_hops, d_model), jnp.float32),
        "gamma": jnp.ones((num_hops, d_model), jnp.float32),
        "beta": jnp.zeros((num_hops, d_model), jnp.float32),
    }


def prepare_params(params, nhead, compute_dtype=jnp.bfloat16):
    """One-time layout prep: fold 1/sqrt(hd) into Wq/bq, fuse Wk|Wv, pack the
    six bias/affine vectors into one (H, 8, D) array, cast weights to bf16."""
    wq, wk, wv, wo = params["wq"], params["wk"], params["wv"], params["wo"]
    H, D, _ = wq.shape
    assert D % nhead == 0
    hd = D // nhead
    scale = 1.0 / math.sqrt(hd)

    wq_s = wq * scale
    bq_s = params["bq"] * scale
    wkv = jnp.concatenate([wk, wv], axis=-1)                    # (H, D, 2D)

    zeros = jnp.zeros_like(bq_s)
    vecs = jnp.stack(
        [bq_s, params["bk"], params["bv"], params["bo"],
         params["gamma"], params["beta"], zeros, zeros], axis=1)  # (H, 8, D)

    return {
        "wq": wq_s.astype(compute_dtype),
        "wkv": wkv.astype(compute_dtype),
        "wo": wo.astype(compute_dtype),
        "vecs": vecs.astype(jnp.float32),
    }


def reference(query, key_value, raw, nhead):
    """Pure-JAX f32 reference of the PyTorch forward (eval-mode dropout)."""
    x = query
    H, D, _ = raw["wq"].shape
    hd = D // nhead
    B, Lq, _ = query.shape
    Lk = key_value.shape[1]
    for i in range(H):
        q = x @ raw["wq"][i] + raw["bq"][i]
        k = key_value @ raw["wk"][i] + raw["bk"][i]
        v = key_value @ raw["wv"][i] + raw["bv"][i]
        qh = q.reshape(B, Lq, nhead, hd).transpose(0, 2, 1, 3)
        kh = k.reshape(B, Lk, nhead, hd).transpose(0, 2, 1, 3)
        vh = v.reshape(B, Lk, nhead, hd).transpose(0, 2, 1, 3)
        s = jnp.einsum("bhqd,bhkd->bhqk", qh, kh) / math.sqrt(hd)
        p = jax.nn.softmax(s, axis=-1)
        o = jnp.einsum("bhqk,bhkd->bhqd", p, vh)
        o = o.transpose(0, 2, 1, 3).reshape(B, Lq, D)
        y = x + (o @ raw["wo"][i] + raw["bo"][i])
        mu = jnp.mean(y, axis=-1, keepdims=True)
        var = jnp.mean((y - mu) ** 2, axis=-1, keepdims=True)
        x = (y - mu) * jax.lax.rsqrt(var + 1e-5) * raw["gamma"][i] + raw["beta"][i]
    return x


if __name__ == "__main__":
    # Small but lane-dense demo shapes: D multiple of 128, head_dim = 128.
    B, Lq, Lkv = 8, 8, 8
    d_model, nhead, num_hops = 512, 4, 2

    key = jax.random.PRNGKey(0)
    kq, kkv, kparam = jax.random.split(key, 3)
    query = jax.random.normal(kq, (B, Lq, d_model), jnp.float32)
    key_value = jax.random.normal(kkv, (B, Lkv, d_model), jnp.float32)

    raw = init_params(kparam, d_model, num_hops)
    prepared = prepare_params(raw, nhead)

    out = multi_hop_attention(query, key_value, prepared, nhead)
    out = jax.block_until_ready(out)

    assert out.shape == (B, Lq, d_model) and out.dtype == jnp.float32
    assert bool(jnp.all(jnp.isfinite(out)))

    # Loose-tolerance sanity check vs. f32 reference (kernel uses bf16 MXU
    # matmuls and an approximate softmax reciprocal).
    ref = jax.block_until_ready(reference(query, key_value, raw, nhead))
    max_err = float(jnp.max(jnp.abs(out - ref)))
    assert max_err < 0.25, f"max abs error vs reference too large: {max_err}"

    print("KERNEL_OK")
</pallas_src>

<mosaic_0001>
module attributes {stable_mosaic.version = 11 : i64} {
  func.func @_mha_kernel(%arg0: i32, %arg1: i32, %arg2: memref<8x8x512xf32, #tpu.memory_space<vmem>>, %arg3: memref<8x8x512xf32, #tpu.memory_space<vmem>>, %arg4: memref<2x512x512xbf16, #tpu.memory_space<vmem>>, %arg5: memref<2x512x1024xbf16, #tpu.memory_space<vmem>>, %arg6: memref<2x512x512xbf16, #tpu.memory_space<vmem>>, %arg7: memref<2x8x512xf32, #tpu.memory_space<vmem>>, %arg8: memref<8x8x512xf32, #tpu.memory_space<vmem>>, %arg9: memref<8x8x512xf32, #tpu.memory_space<vmem>>) attributes {dimension_semantics = [#tpu.dimension_semantics<parallel>, #tpu.dimension_semantics<arbitrary>], iteration_bounds = array<i64: 1, 2>, scalar_prefetch = 0 : i64, scratch_operands = 1 : i64, tpu.core_type = #tpu.core_type<tc>, window_params = [{transform_indices = @transform_0, window_bounds = array<i64: 8, 8, 512>}, {transform_indices = @transform_1, window_bounds = array<i64: 8, 8, 512>}, {pipeline_mode = #tpu.pipeline_mode<synchronous>, transform_indices = @transform_2, window_bounds = array<i64: 2, 512, 512>}, {pipeline_mode = #tpu.pipeline_mode<synchronous>, transform_indices = @transform_3, window_bounds = array<i64: 2, 512, 1024>}, {pipeline_mode = #tpu.pipeline_mode<synchronous>, transform_indices = @transform_4, window_bounds = array<i64: 2, 512, 512>}, {pipeline_mode = #tpu.pipeline_mode<synchronous>, transform_indices = @transform_5, window_bounds = array<i64: 2, 8, 512>}, {transform_indices = @transform_6, window_bounds = array<i64: 8, 8, 512>}]} {
    %c0_i32 = arith.constant 0 : i32
    %0 = arith.cmpi eq, %arg1, %c0_i32 : i32
    %1 = arith.extui %0 : i1 to i32
    %c0_i32_0 = arith.constant 0 : i32
    %2 = arith.cmpi ne, %1, %c0_i32_0 : i32
    scf.if %2 {
      %c0_40 = arith.constant 0 : index
      %c0_41 = arith.constant 0 : index
      %c0_42 = arith.constant 0 : index
      %144 = vector.load %arg2[%c0_40, %c0_41, %c0_42] : memref<8x8x512xf32, #tpu.memory_space<vmem>>, vector<8x8x512xf32>
      %c0_43 = arith.constant 0 : index
      %c0_44 = arith.constant 0 : index
      %c0_45 = arith.constant 0 : index
      %145 = vector.load %arg9[%c0_43, %c0_44, %c0_45] : memref<8x8x512xf32, #tpu.memory_space<vmem>>, vector<8x8x512xf32>
      tpu.vector_store %arg9[%c0_43, %c0_44, %c0_45], %144 {strides = array<i32>} : memref<8x8x512xf32, #tpu.memory_space<vmem>>, vector<8x8x512xf32>,
    } else {
    }
    %3 = arith.index_cast %arg1 : i32 to index
    %c0 = arith.constant 0 : index
    %c0_1 = arith.constant 0 : index
    %4 = vector.load %arg7[%3, %c0, %c0_1] : memref<2x8x512xf32, #tpu.memory_space<vmem>>, vector<1x8x512xf32>
    %5 = vector.shape_cast %4 : vector<1x8x512xf32> to vector<8x512xf32>
    %6 = vector.extract_strided_slice %5 {offsets = [0, 0], sizes = [1, 512], strides = [1, 1]} : vector<8x512xf32> to vector<1x512xf32>
    %7 = vector.extract_strided_slice %5 {offsets = [1, 0], sizes = [1, 512], strides = [1, 1]} : vector<8x512xf32> to vector<1x512xf32>
    %8 = vector.extract_strided_slice %5 {offsets = [2, 0], sizes = [1, 512], strides = [1, 1]} : vector<8x512xf32> to vector<1x512xf32>
    %9 = vector.extract_strided_slice %5 {offsets = [3, 0], sizes = [1, 512], strides = [1, 1]} : vector<8x512xf32> to vector<1x512xf32>
    %10 = vector.extract_strided_slice %5 {offsets = [4, 0], sizes = [1, 512], strides = [1, 1]} : vector<8x512xf32> to vector<1x512xf32>
    %11 = vector.extract_strided_slice %5 {offsets = [5, 0], sizes = [1, 512], strides = [1, 1]} : vector<8x512xf32> to vector<1x512xf32>
    %c0_2 = arith.constant 0 : index
    %c0_3 = arith.constant 0 : index
    %c0_4 = arith.constant 0 : index
    %12 = vector.load %arg9[%c0_2, %c0_3, %c0_4] : memref<8x8x512xf32, #tpu.memory_space<vmem>>, vector<8x8x512xf32>
    %13 = vector.shape_cast %12 : vector<8x8x512xf32> to vector<64x512xf32>
    %14 = arith.truncf %13 : vector<64x512xf32> to vector<64x512xbf16>
    %15 = arith.index_cast %arg1 : i32 to index
    %c0_5 = arith.constant 0 : index
    %c0_6 = arith.constant 0 : index
    %16 = vector.load %arg4[%15, %c0_5, %c0_6] : memref<2x512x512xbf16, #tpu.memory_space<vmem>>, vector<1x512x512xbf16>
    %17 = vector.shape_cast %16 : vector<1x512x512xbf16> to vector<512x512xbf16>
    %cst = arith.constant dense<0.000000e+00> : vector<64x512xf32>
    %18 = tpu.matmul %14, %17, %cst {dimension_numbers = #tpu.dot_dimension_numbers<[1], [0], [0], [1], [0, 0, 1, 1], [], []>} : vector<64x512xbf16>, vector<512x512xbf16>, vector<64x512xf32> -> vector<64x512xf32>
    %19 = vector.broadcast %6 : vector<1x512xf32> to vector<64x512xf32>
    %20 = arith.addf %18, %19 : vector<64x512xf32>
    %21 = arith.truncf %20 : vector<64x512xf32> to vector<64x512xbf16>
    %22 = vector.shape_cast %21 : vector<64x512xbf16> to vector<8x8x512xbf16>
    %c0_7 = arith.constant 0 : index
    %c0_8 = arith.constant 0 : index
    %c0_9 = arith.constant 0 : index
    %23 = vector.load %arg3[%c0_7, %c0_8, %c0_9] : memref<8x8x512xf32, #tpu.memory_space<vmem>>, vector<8x8x512xf32>
    %24 = vector.shape_cast %23 : vector<8x8x512xf32> to vector<64x512xf32>
    %25 = arith.truncf %24 : vector<64x512xf32> to vector<64x512xbf16>
    %26 = arith.index_cast %arg1 : i32 to index
    %c0_10 = arith.constant 0 : index
    %c0_11 = arith.constant 0 : index
    %27 = vector.load %arg5[%26, %c0_10, %c0_11] : memref<2x512x1024xbf16, #tpu.memory_space<vmem>>, vector<1x512x1024xbf16>
    %28 = vector.shape_cast %27 : vector<1x512x1024xbf16> to vector<512x1024xbf16>
    %cst_12 = arith.constant dense<0.000000e+00> : vector<64x1024xf32>
    %29 = tpu.matmul %25, %28, %cst_12 {dimension_numbers = #tpu.dot_dimension_numbers<[1], [0], [0], [1], [0, 0, 1, 1], [], []>} : vector<64x512xbf16>, vector<512x1024xbf16>, vector<64x1024xf32> -> vector<64x1024xf32>
    %30 = vector.extract_strided_slice %29 {offsets = [0, 0], sizes = [64, 512], strides = [1, 1]} : vector<64x1024xf32> to vector<64x512xf32>
    %31 = vector.broadcast %7 : vector<1x512xf32> to vector<64x512xf32>
    %32 = arith.addf %30, %31 : vector<64x512xf32>
    %33 = arith.truncf %32 : vector<64x512xf32> to vector<64x512xbf16>
    %34 = vector.shape_cast %33 : vector<64x512xbf16> to vector<8x8x512xbf16>
    %35 = vector.extract_strided_slice %29 {offsets = [0, 512], sizes = [64, 512], strides = [1, 1]} : vector<64x1024xf32> to vector<64x512xf32>
    %36 = vector.broadcast %8 : vector<1x512xf32> to vector<64x512xf32>
    %37 = arith.addf %35, %36 : vector<64x512xf32>
    %38 = arith.truncf %37 : vector<64x512xf32> to vector<64x512xbf16>
    %39 = vector.shape_cast %38 : vector<64x512xbf16> to vector<8x8x512xbf16>
    %40 = vector.extract_strided_slice %22 {offsets = [0, 0, 0], sizes = [8, 8, 128], strides = [1, 1, 1]} : vector<8x8x512xbf16> to vector<8x8x128xbf16>
    %41 = vector.extract_strided_slice %34 {offsets = [0, 0, 0], sizes = [8, 8, 128], strides = [1, 1, 1]} : vector<8x8x512xbf16> to vector<8x8x128xbf16>
    "tpu.trace_start"() <{level = 10 : i32, message = "bqd,bkd->bqk"}> : () -> ()
    %cst_13 = arith.constant dense<0.000000e+00> : vector<8x8x8xf32>
    %42 = tpu.matmul %40, %41, %cst_13 {dimension_numbers = #tpu.dot_dimension_numbers<[2], [2], [1], [1], [0, 0, 0, 1, 1, 1], [0], [0]>} : vector<8x8x128xbf16>, vector<8x8x128xbf16>, vector<8x8x8xf32> -> vector<8x8x8xf32>
    "tpu.trace_stop"() : () -> ()
    %cst_14 = arith.constant dense<0xFF800000> : vector<8x8xf32>
    %43 = vector.multi_reduction <maximumf>, %42, %cst_14 [2] : vector<8x8x8xf32> to vector<8x8xf32>
    %44 = vector.shape_cast %43 : vector<8x8xf32> to vector<8x8x1xf32>
    %45 = vector.broadcast %44 : vector<8x8x1xf32> to vector<8x8x8xf32>
    %46 = arith.subf %42, %45 : vector<8x8x8xf32>
    %47 = math.exp %46 : vector<8x8x8xf32>
    %cst_15 = arith.constant dense<0.000000e+00> : vector<8x8xf32>
    %48 = vector.multi_reduction <add>, %47, %cst_15 [2] : vector<8x8x8xf32> to vector<8x8xf32>
    %49 = vector.shape_cast %48 : vector<8x8xf32> to vector<8x8x1xf32>
    %50 = tpu.reciprocal %49 {approx = true} : vector<8x8x1xf32> -> vector<8x8x1xf32>
    %51 = vector.broadcast %50 : vector<8x8x1xf32> to vector<8x8x8xf32>
    %52 = arith.mulf %47, %51 : vector<8x8x8xf32>
    %53 = arith.truncf %52 : vector<8x8x8xf32> to vector<8x8x8xbf16>
    %54 = vector.extract_strided_slice %39 {offsets = [0, 0, 0], sizes = [8, 8, 128], strides = [1, 1, 1]} : vector<8x8x512xbf16> to vector<8x8x128xbf16>
    "tpu.trace_start"() <{level = 10 : i32, message = "bqk,bkd->bqd"}> : () -> ()
    %cst_16 = arith.constant dense<0.000000e+00> : vector<8x8x128xf32>
    %55 = tpu.matmul %53, %54, %cst_16 {dimension_numbers = #tpu.dot_dimension_numbers<[2], [1], [1], [2], [0, 0, 0, 1, 1, 2], [0], [0]>} : vector<8x8x8xbf16>, vector<8x8x128xbf16>, vector<8x8x128xf32> -> vector<8x8x128xf32>
    "tpu.trace_stop"() : () -> ()
    %56 = arith.truncf %55 : vector<8x8x128xf32> to vector<8x8x128xbf16>
    %57 = vector.extract_strided_slice %22 {offsets = [0, 0, 128], sizes = [8, 8, 128], strides = [1, 1, 1]} : vector<8x8x512xbf16> to vector<8x8x128xbf16>
    %58 = vector.extract_strided_slice %34 {offsets = [0, 0, 128], sizes = [8, 8, 128], strides = [1, 1, 1]} : vector<8x8x512xbf16> to vector<8x8x128xbf16>
    "tpu.trace_start"() <{level = 10 : i32, message = "bqd,bkd->bqk"}> : () -> ()
    %cst_17 = arith.constant dense<0.000000e+00> : vector<8x8x8xf32>
    %59 = tpu.matmul %57, %58, %cst_17 {dimension_numbers = #tpu.dot_dimension_numbers<[2], [2], [1], [1], [0, 0, 0, 1, 1, 1], [0], [0]>} : vector<8x8x128xbf16>, vector<8x8x128xbf16>, vector<8x8x8xf32> -> vector<8x8x8xf32>
    "tpu.trace_stop"() : () -> ()
    %cst_18 = arith.constant dense<0xFF800000> : vector<8x8xf32>
    %60 = vector.multi_reduction <maximumf>, %59, %cst_18 [2] : vector<8x8x8xf32> to vector<8x8xf32>
    %61 = vector.shape_cast %60 : vector<8x8xf32> to vector<8x8x1xf32>
    %62 = vector.broadcast %61 : vector<8x8x1xf32> to vector<8x8x8xf32>
    %63 = arith.subf %59, %62 : vector<8x8x8xf32>
    %64 = math.exp %63 : vector<8x8x8xf32>
    %cst_19 = arith.constant dense<0.000000e+00> : vector<8x8xf32>
    %65 = vector.multi_reduction <add>, %64, %cst_19 [2] : vector<8x8x8xf32> to vector<8x8xf32>
    %66 = vector.shape_cast %65 : vector<8x8xf32> to vector<8x8x1xf32>
    %67 = tpu.reciprocal %66 {approx = true} : vector<8x8x1xf32> -> vector<8x8x1xf32>
    %68 = vector.broadcast %67 : vector<8x8x1xf32> to vector<8x8x8xf32>
    %69 = arith.mulf %64, %68 : vector<8x8x8xf32>
    %70 = arith.truncf %69 : vector<8x8x8xf32> to vector<8x8x8xbf16>
    %71 = vector.extract_strided_slice %39 {offsets = [0, 0, 128], sizes = [8, 8, 128], strides = [1, 1, 1]} : vector<8x8x512xbf16> to vector<8x8x128xbf16>
    "tpu.trace_start"() <{level = 10 : i32, message = "bqk,bkd->bqd"}> : () -> ()
    %cst_20 = arith.constant dense<0.000000e+00> : vector<8x8x128xf32>
    %72 = tpu.matmul %70, %71, %cst_20 {dimension_numbers = #tpu.dot_dimension_numbers<[2], [1], [1], [2], [0, 0, 0, 1, 1, 2], [0], [0]>} : vector<8x8x8xbf16>, vector<8x8x128xbf16>, vector<8x8x128xf32> -> vector<8x8x128xf32>
    "tpu.trace_stop"() : () -> ()
    %73 = arith.truncf %72 : vector<8x8x128xf32> to vector<8x8x128xbf16>
    %74 = vector.extract_strided_slice %22 {offsets = [0, 0, 256], sizes = [8, 8, 128], strides = [1, 1, 1]} : vector<8x8x512xbf16> to vector<8x8x128xbf16>
    %75 = vector.extract_strided_slice %34 {offsets = [0, 0, 256], sizes = [8, 8, 128], strides = [1, 1, 1]} : vector<8x8x512xbf16> to vector<8x8x128xbf16>
    "tpu.trace_start"() <{level = 10 : i32, message = "bqd,bkd->bqk"}> : () -> ()
    %cst_21 = arith.constant dense<0.000000e+00> : vector<8x8x8xf32>
    %76 = tpu.matmul %74, %75, %cst_21 {dimension_numbers = #tpu.dot_dimension_numbers<[2], [2], [1], [1], [0, 0, 0, 1, 1, 1], [0], [0]>} : vector<8x8x128xbf16>, vector<8x8x128xbf16>, vector<8x8x8xf32> -> vector<8x8x8xf32>
    "tpu.trace_stop"() : () -> ()
    %cst_22 = arith.constant dense<0xFF800000> : vector<8x8xf32>
    %77 = vector.multi_reduction <maximumf>, %76, %cst_22 [2] : vector<8x8x8xf32> to vector<8x8xf32>
    %78 = vector.shape_cast %77 : vector<8x8xf32> to vector<8x8x1xf32>
    %79 = vector.broadcast %78 : vector<8x8x1xf32> to vector<8x8x8xf32>
    %80 = arith.subf %76, %79 : vector<8x8x8xf32>
    %81 = math.exp %80 : vector<8x8x8xf32>
    %cst_23 = arith.constant dense<0.000000e+00> : vector<8x8xf32>
    %82 = vector.multi_reduction <add>, %81, %cst_23 [2] : vector<8x8x8xf32> to vector<8x8xf32>
    %83 = vector.shape_cast %82 : vector<8x8xf32> to vector<8x8x1xf32>
    %84 = tpu.reciprocal %83 {approx = true} : vector<8x8x1xf32> -> vector<8x8x1xf32>
    %85 = vector.broadcast %84 : vector<8x8x1xf32> to vector<8x8x8xf32>
    %86 = arith.mulf %81, %85 : vector<8x8x8xf32>
    %87 = arith.truncf %86 : vector<8x8x8xf32> to vector<8x8x8xbf16>
    %88 = vector.extract_strided_slice %39 {offsets = [0, 0, 256], sizes = [8, 8, 128], strides = [1, 1, 1]} : vector<8x8x512xbf16> to vector<8x8x128xbf16>
    "tpu.trace_start"() <{level = 10 : i32, message = "bqk,bkd->bqd"}> : () -> ()
    %cst_24 = arith.constant dense<0.000000e+00> : vector<8x8x128xf32>
    %89 = tpu.matmul %87, %88, %cst_24 {dimension_numbers = #tpu.dot_dimension_numbers<[2], [1], [1], [2], [0, 0, 0, 1, 1, 2], [0], [0]>} : vector<8x8x8xbf16>, vector<8x8x128xbf16>, vector<8x8x128xf32> -> vector<8x8x128xf32>
    "tpu.trace_stop"() : () -> ()
    %90 = arith.truncf %89 : vector<8x8x128xf32> to vector<8x8x128xbf16>
    %91 = vector.extract_strided_slice %22 {offsets = [0, 0, 384], sizes = [8, 8, 128], strides = [1, 1, 1]} : vector<8x8x512xbf16> to vector<8x8x128xbf16>
    %92 = vector.extract_strided_slice %34 {offsets = [0, 0, 384], sizes = [8, 8, 128], strides = [1, 1, 1]} : vector<8x8x512xbf16> to vector<8x8x128xbf16>
    "tpu.trace_start"() <{level = 10 : i32, message = "bqd,bkd->bqk"}> : () -> ()
    %cst_25 = arith.constant dense<0.000000e+00> : vector<8x8x8xf32>
    %93 = tpu.matmul %91, %92, %cst_25 {dimension_numbers = #tpu.dot_dimension_numbers<[2], [2], [1], [1], [0, 0, 0, 1, 1, 1], [0], [0]>} : vector<8x8x128xbf16>, vector<8x8x128xbf16>, vector<8x8x8xf32> -> vector<8x8x8xf32>
    "tpu.trace_stop"() : () -> ()
    %cst_26 = arith.constant dense<0xFF800000> : vector<8x8xf32>
    %94 = vector.multi_reduction <maximumf>, %93, %cst_26 [2] : vector<8x8x8xf32> to vector<8x8xf32>
    %95 = vector.shape_cast %94 : vector<8x8xf32> to vector<8x8x1xf32>
    %96 = vector.broadcast %95 : vector<8x8x1xf32> to vector<8x8x8xf32>
    %97 = arith.subf %93, %96 : vector<8x8x8xf32>
    %98 = math.exp %97 : vector<8x8x8xf32>
    %cst_27 = arith.constant dense<0.000000e+00> : vector<8x8xf32>
    %99 = vector.multi_reduction <add>, %98, %cst_27 [2] : vector<8x8x8xf32> to vector<8x8xf32>
    %100 = vector.shape_cast %99 : vector<8x8xf32> to vector<8x8x1xf32>
    %101 = tpu.reciprocal %100 {approx = true} : vector<8x8x1xf32> -> vector<8x8x1xf32>
    %102 = vector.broadcast %101 : vector<8x8x1xf32> to vector<8x8x8xf32>
    %103 = arith.mulf %98, %102 : vector<8x8x8xf32>
    %104 = arith.truncf %103 : vector<8x8x8xf32> to vector<8x8x8xbf16>
    %105 = vector.extract_strided_slice %39 {offsets = [0, 0, 384], sizes = [8, 8, 128], strides = [1, 1, 1]} : vector<8x8x512xbf16> to vector<8x8x128xbf16>
    "tpu.trace_start"() <{level = 10 : i32, message = "bqk,bkd->bqd"}> : () -> ()
    %cst_28 = arith.constant dense<0.000000e+00> : vector<8x8x128xf32>
    %106 = tpu.matmul %104, %105, %cst_28 {dimension_numbers = #tpu.dot_dimension_numbers<[2], [1], [1], [2], [0, 0, 0, 1, 1, 2], [0], [0]>} : vector<8x8x8xbf16>, vector<8x8x128xbf16>, vector<8x8x128xf32> -> vector<8x8x128xf32>
    "tpu.trace_stop"() : () -> ()
    %107 = arith.truncf %106 : vector<8x8x128xf32> to vector<8x8x128xbf16>
    %108 = tpu.concatenate %56, %73, %90, %107 in 2 : vector<8x8x128xbf16>, vector<8x8x128xbf16>, vector<8x8x128xbf16>, vector<8x8x128xbf16> -> vector<8x8x512xbf16>
    %109 = vector.shape_cast %108 : vector<8x8x512xbf16> to vector<64x512xbf16>
    %110 = arith.index_cast %arg1 : i32 to index
    %c0_29 = arith.constant 0 : index
    %c0_30 = arith.constant 0 : index
    %111 = vector.load %arg6[%110, %c0_29, %c0_30] : memref<2x512x512xbf16, #tpu.memory_space<vmem>>, vector<1x512x512xbf16>
    %112 = vector.shape_cast %111 : vector<1x512x512xbf16> to vector<512x512xbf16>
    %cst_31 = arith.constant dense<0.000000e+00> : vector<64x512xf32>
    %113 = tpu.matmul %109, %112, %cst_31 {dimension_numbers = #tpu.dot_dimension_numbers<[1], [0], [0], [1], [0, 0, 1, 1], [], []>} : vector<64x512xbf16>, vector<512x512xbf16>, vector<64x512xf32> -> vector<64x512xf32>
    %114 = vector.broadcast %9 : vector<1x512xf32> to vector<64x512xf32>
    %115 = arith.addf %113, %114 : vector<64x512xf32>
    %116 = arith.addf %13, %115 : vector<64x512xf32>
    %cst_32 = arith.constant dense<0.000000e+00> : vector<64xf32>
    %117 = vector.multi_reduction <add>, %116, %cst_32 [1] : vector<64x512xf32> to vector<64xf32>
    %118 = vector.shape_cast %117 : vector<64xf32> to vector<64x1xf32>
    %cst_33 = arith.constant 5.120000e+02 : f32
    %119 = vector.broadcast %cst_33 : f32 to vector<64x1xf32>
    %120 = arith.divf %118, %119 : vector<64x1xf32>
    %121 = vector.broadcast %120 : vector<64x1xf32> to vector<64x512xf32>
    %122 = arith.subf %116, %121 : vector<64x512xf32>
    %123 = arith.mulf %122, %122 : vector<64x512xf32>
    %cst_34 = arith.constant dense<0.000000e+00> : vector<64xf32>
    %124 = vector.multi_reduction <add>, %123, %cst_34 [1] : vector<64x512xf32> to vector<64xf32>
    %125 = vector.shape_cast %124 : vector<64xf32> to vector<64x1xf32>
    %cst_35 = arith.constant 5.120000e+02 : f32
    %126 = vector.broadcast %cst_35 : f32 to vector<64x1xf32>
    %127 = arith.divf %125, %126 : vector<64x1xf32>
    %cst_36 = arith.constant 9.99999974E-6 : f32
    %128 = vector.broadcast %cst_36 : f32 to vector<64x1xf32>
    %129 = arith.addf %127, %128 : vector<64x1xf32>
    %130 = math.rsqrt %129 : vector<64x1xf32>
    %131 = vector.broadcast %130 : vector<64x1xf32> to vector<64x512xf32>
    %132 = arith.mulf %122, %131 : vector<64x512xf32>
    %133 = vector.broadcast %10 : vector<1x512xf32> to vector<64x512xf32>
    %134 = arith.mulf %132, %133 : vector<64x512xf32>
    %135 = vector.broadcast %11 : vector<1x512xf32> to vector<64x512xf32>
    %136 = arith.addf %134, %135 : vector<64x512xf32>
    %137 = vector.shape_cast %136 : vector<64x512xf32> to vector<8x8x512xf32>
    %c1_i32 = arith.constant 1 : i32
    %138 = arith.cmpi slt, %arg1, %c1_i32 : i32
    %139 = arith.extui %138 : i1 to i32
    %c0_i32_37 = arith.constant 0 : i32
    %140 = arith.cmpi ne, %139, %c0_i32_37 : i32
    scf.if %140 {
      %c0_40 = arith.constant 0 : index
      %c0_41 = arith.constant 0 : index
      %c0_42 = arith.constant 0 : index
      %144 = vector.load %arg9[%c0_40, %c0_41, %c0_42] : memref<8x8x512xf32, #tpu.memory_space<vmem>>, vector<8x8x512xf32>
      tpu.vector_store %arg9[%c0_40, %c0_41, %c0_42], %137 {strides = array<i32>} : memref<8x8x512xf32, #tpu.memory_space<vmem>>, vector<8x8x512xf32>,
    } else {
    }
    %c1_i32_38 = arith.constant 1 : i32
    %141 = arith.cmpi eq, %arg1, %c1_i32_38 : i32
    %142 = arith.extui %141 : i1 to i32
    %c0_i32_39 = arith.constant 0 : i32
    %143 = arith.cmpi ne, %142, %c0_i32_39 : i32
    scf.if %143 {
      %c0_40 = arith.constant 0 : index
      %c0_41 = arith.constant 0 : index
      %c0_42 = arith.constant 0 : index
      %144 = vector.load %arg8[%c0_40, %c0_41, %c0_42] : memref<8x8x512xf32, #tpu.memory_space<vmem>>, vector<8x8x512xf32>
      tpu.vector_store %arg8[%c0_40, %c0_41, %c0_42], %137 {strides = array<i32>} : memref<8x8x512xf32, #tpu.memory_space<vmem>>, vector<8x8x512xf32>,
    } else {
    }
    return
  }
  func.func @transform_0(%arg0: i32, %arg1: i32) -> (i32, i32, i32) {
    %c0_i32 = arith.constant 0 : i32
    %c0_i32_0 = arith.constant 0 : i32
    %c0_i32_1 = arith.constant 0 : i32
    return %arg0, %c0_i32, %c0_i32_0 : i32, i32, i32
  }
  func.func @transform_1(%arg0: i32, %arg1: i32) -> (i32, i32, i32) {
    %c0_i32 = arith.constant 0 : i32
    %c0_i32_0 = arith.constant 0 : i32
    %c0_i32_1 = arith.constant 0 : i32
    return %arg0, %c0_i32, %c0_i32_0 : i32, i32, i32
  }
  func.func @transform_2(%arg0: i32, %arg1: i32) -> (i32, i32, i32) {
    %c0_i32 = arith.constant 0 : i32
    %c0_i32_0 = arith.constant 0 : i32
    %c0_i32_1 = arith.constant 0 : i32
    %c0_i32_2 = arith.constant 0 : i32
    return %c0_i32, %c0_i32_0, %c0_i32_1 : i32, i32, i32
  }
  func.func @transform_3(%arg0: i32, %arg1: i32) -> (i32, i32, i32) {
    %c0_i32 = arith.constant 0 : i32
    %c0_i32_0 = arith.constant 0 : i32
    %c0_i32_1 = arith.constant 0 : i32
    %c0_i32_2 = arith.constant 0 : i32
    return %c0_i32, %c0_i32_0, %c0_i32_1 : i32, i32, i32
  }
  func.func @transform_4(%arg0: i32, %arg1: i32) -> (i32, i32, i32) {
    %c0_i32 = arith.constant 0 : i32
    %c0_i32_0 = arith.constant 0 : i32
    %c0_i32_1 = arith.constant 0 : i32
    %c0_i32_2 = arith.constant 0 : i32
    return %c0_i32, %c0_i32_0, %c0_i32_1 : i32, i32, i32
  }
  func.func @transform_5(%arg0: i32, %arg1: i32) -> (i32, i32, i32) {
    %c0_i32 = arith.constant 0 : i32
    %c0_i32_0 = arith.constant 0 : i32
    %c0_i32_1 = arith.constant 0 : i32
    %c0_i32_2 = arith.constant 0 : i32
    return %c0_i32, %c0_i32_0, %c0_i32_1 : i32, i32, i32
  }
  func.func @transform_6(%arg0: i32, %arg1: i32) -> (i32, i32, i32) {
    %c0_i32 = arith.constant 0 : i32
    %c0_i32_0 = arith.constant 0 : i32
    %c0_i32_1 = arith.constant 0 : i32
    return %arg0, %c0_i32, %c0_i32_0 : i32, i32, i32
  }
}

</mosaic_0001>

<llo_original>
// kernel: tpu_custom_call.1
$region0: #{tpu_custom_call.1}
  #allocation0 [shape = 'u32[]', space=smem, size = 0x4, offset = 0x4, fixed_abs, tag = 'smem constant byte address 0x4 - core index']
  #allocation1 [shape = 'u32[144,128]{1,0:T(1,128)}', space=vmem, size = 0x12000, scoped, tag = 'internal scratch']
  #allocation2 [shape = 'f32[8,8,512]{2,1,0:T(8,128)}', space=vmem, size = 0x20000, scoped, tag = 'scratch operand']
  %s0 = inlined_call_operand.hbm [shape: f32[8,8,512], index: 0, kind: input, shape index: {}]
  %s1 = inlined_call_operand.hbm [shape: f32[8,8,512], index: 1, kind: input, shape index: {}]
  %s2 = inlined_call_operand.hbm [shape: bf16[2,512,512], index: 2, kind: input, shape index: {}]
  %s3 = inlined_call_operand.hbm [shape: bf16[2,512,1024], index: 3, kind: input, shape index: {}]
  %s4 = inlined_call_operand.hbm [shape: bf16[2,512,512], index: 4, kind: input, shape index: {}]
  %s5 = inlined_call_operand.hbm [shape: f32[2,8,512], index: 5, kind: input, shape index: {}]
  %s6 = inlined_call_operand.hbm [shape: f32[8,8,512], index: 6, kind: output, shape index: {}]
  %s7 = sld [smem:[#allocation0]]
  $region93: #{tpu_custom_call.1} parent=0
    _
  %s9 = ssub.s32 1, %s7
  %s10 = scalar_select 0, %s9, %s7
  $region1: #{tpu_custom_call.1} parent=0
    #allocation3 [shape = 'u8[131072]{0}', space=vmem, size = 0x20000, scoped, tag = 'input window, operand 0, single buffered']
    #allocation4 [shape = 's32[2]{0}', space=sflag, size = 0x8, scoped, tag = 'scoped memory for tpu_custom_call.1']
    #allocation5 [shape = 's32[2]{0}', space=sflag, size = 0x8, scoped, tag = 'scoped memory for tpu_custom_call.1']
    #allocation6 [shape = 'u8[131072]{0}', space=vmem, size = 0x20000, scoped, tag = 'input window, operand 1, single buffered']
    #allocation7 [shape = 's32[1]{0}', space=sflag, size = 0x4, scoped, tag = 'scoped memory for tpu_custom_call.1']
    #allocation8 [shape = 'u8[1048576]{0}', space=vmem, size = 0x100000, scoped, tag = 'input window, operand 2, single buffered']
    #allocation9 [shape = 'u8[2097152]{0}', space=vmem, size = 0x200000, scoped, tag = 'input window, operand 3, single buffered']
    #allocation10 [shape = 's32[1]{0}', space=sflag, size = 0x4, scoped, tag = 'scoped memory for tpu_custom_call.1']
    #allocation11 [shape = 'u8[1048576]{0}', space=vmem, size = 0x100000, scoped, tag = 'input window, operand 4, single buffered']
    #allocation12 [shape = 'u8[32768]{0}', space=vmem, size = 0x8000, scoped, tag = 'input window, operand 5, single buffered']
    #allocation13 [shape = 's32[1]{0}', space=sflag, size = 0x4, scoped, tag = 'scoped memory for tpu_custom_call.1']
    #allocation14 [shape = 'u8[131072]{0}', space=vmem, size = 0x20000, scoped, tag = 'output window, operand 0, single buffered']
    %11 = vsyncpa [#allocation4], 0
    %12 = vsyncpa [#allocation7], 0
    %13 = vsyncpa [#allocation10], 0
    %14 = vsyncpa [#allocation13], 0
    %15 = vsyncpa [#allocation5], 0
    loop: start=0, step=1, limit=4
    $region2: #{tpu_custom_call.1} parent=1 // loop_pre_header
      _
    $region3: #{tpu_custom_call.1} parent=1 // loop_header
      %s17 = sphi 0, %s21
      %p18 = scmp.ge.s32.totalorder %s17, 4
      %s24 = sphi 0, %s36
      %s25 = sphi 0, %s32
      %s26 = sphi 0, %s24
      %s27 = sphi 0, %s25
      %s28 = sphi 0, %s26
      %s29 = sphi 0, %s27
      %s39 = sphi 0, %s41
      %s42 = sphi 0, %s39
      %s43 = sphi 0, %s42
      %s59 = sphi 0, %s43
      %s65 = sphi 0, %s67
      %s68 = sphi 0, %s65
      %s69 = sphi 0, %s68
      %s85 = sphi 0, %s69
      %s89 = sphi 0, %s89
      %s91 = sphi 0, %s89
      %s92 = sphi 0, %s91
      %s106 = sphi 0, %s92
      %s110 = sphi 0, %s110
      %s112 = sphi 0, %s110
      %s113 = sphi 0, %s112
      %s127 = sphi 0, %s113
      %s131 = sphi 0, %s131
      %s133 = sphi 0, %s131
      %s134 = sphi 0, %s133
      %s148 = sphi 0, %s134
      %s152 = sphi 0, %s152
      %s154 = sphi 0, %s152
      %s155 = sphi 0, %s154
      %s169 = sphi 0, %s155
      %s175 = sphi 0, %s177
      %s178 = sphi 0, %s175
      %s179 = sphi 0, %s178
      %s195 = sphi 0, %s179
    $region4: #{tpu_custom_call.1} parent=1 // loop_header_branch
      %20 = sbr.rel (%p18) target = $region8
    $region5: #{tpu_custom_call.1} parent=1 // loop_body
      %s22 = ssub.s32 %s17, 1
      %s23 = ssub.s32 %s17, 2
      %s30 = sadd.s32 1, %s25
      %p31 = scmp.ge.s32.totalorder %s30, 2
      %s32 = scalar_select %p31, 0, %s30
      %s33 = sadd.s32 1, %s24
      %s34 = scalar_select %p31, %s33, %s24
      %p35 = scmp.ge.s32.totalorder %s34, 1
      %s36 = scalar_select %p35, 0, %s34
      %s37 = ssub.s32 %s24, %s36
      %p38 = scmp.eq.s32.totalorder %s37, 0
      %s40 = sadd.s32 %s39, 1
      %s41 = scalar_select %p38, %s39, %s40
      %p44 = pneg %p38
      %p45 = scmp.eq.s32.totalorder %s17, 1
      %p46 = por %p44, %p45
      %p47 = scmp.ne.s32.totalorder %s39, %s42
      %p48 = scmp.eq.s32.totalorder %s17, 0
      %p49 = por %p47, %p48
      %p50 = scmp.ne.s32.totalorder %s39, %s42
      %p51 = scmp.eq.s32.totalorder %s22, 1
      %p52 = por %p50, %p51
      %p53 = scmp.ne.s32.totalorder %s42, %s43
      %p54 = scmp.eq.s32.totalorder %s22, 0
      %p55 = por %p53, %p54
      %p56 = scmp.ne.s32.totalorder %s42, %s43
      %p57 = scmp.eq.s32.totalorder %s23, 1
      %p58 = por %p56, %p57
      %p60 = scmp.ne.s32.totalorder %s43, %s59
      %p61 = scmp.eq.s32.totalorder %s23, 0
      %p62 = por %p60, %p61
      %s63 = ssub.s32 %s24, %s36
      %p64 = scmp.eq.s32.totalorder %s63, 0
      %s66 = sadd.s32 %s65, 1
      %s67 = scalar_select %p64, %s65, %s66
      %p70 = pneg %p64
      %p71 = scmp.eq.s32.totalorder %s17, 1
      %p72 = por %p70, %p71
      %p73 = scmp.ne.s32.totalorder %s65, %s68
      %p74 = scmp.eq.s32.totalorder %s17, 0
      %p75 = por %p73, %p74
      %p76 = scmp.ne.s32.totalorder %s65, %s68
      %p77 = scmp.eq.s32.totalorder %s22, 1
      %p78 = por %p76, %p77
      %p79 = scmp.ne.s32.totalorder %s68, %s69
      %p80 = scmp.eq.s32.totalorder %s22, 0
      %p81 = por %p79, %p80
      %p82 = scmp.ne.s32.totalorder %s68, %s69
      %p83 = scmp.eq.s32.totalorder %s23, 1
      %p84 = por %p82, %p83
      %p86 = scmp.ne.s32.totalorder %s69, %s85
      %p87 = scmp.eq.s32.totalorder %s23, 0
      %p88 = por %p86, %p87
      %s90 = sadd.s32 %s89, 1
      %p93 = scmp.eq.s32.totalorder %s17, 1
      %p94 = scmp.ne.s32.totalorder %s89, %s91
      %p95 = scmp.eq.s32.totalorder %s17, 0
      %p96 = por %p94, %p95
      %p97 = scmp.ne.s32.totalorder %s89, %s91
      %p98 = scmp.eq.s32.totalorder %s22, 1
      %p99 = por %p97, %p98
      %p100 = scmp.ne.s32.totalorder %s91, %s92
      %p101 = scmp.eq.s32.totalorder %s22, 0
      %p102 = por %p100, %p101
      %p103 = scmp.ne.s32.totalorder %s91, %s92
      %p104 = scmp.eq.s32.totalorder %s23, 1
      %p105 = por %p103, %p104
      %p107 = scmp.ne.s32.totalorder %s92, %s106
      %p108 = scmp.eq.s32.totalorder %s23, 0
      %p109 = por %p107, %p108
      %s111 = sadd.s32 %s110, 1
      %p114 = scmp.eq.s32.totalorder %s17, 1
      %p115 = scmp.ne.s32.totalorder %s110, %s112
      %p116 = scmp.eq.s32.totalorder %s17, 0
      %p117 = por %p115, %p116
      %p118 = scmp.ne.s32.totalorder %s110, %s112
      %p119 = scmp.eq.s32.totalorder %s22, 1
      %p120 = por %p118, %p119
      %p121 = scmp.ne.s32.totalorder %s112, %s113
      %p122 = scmp.eq.s32.totalorder %s22, 0
      %p123 = por %p121, %p122
      %p124 = scmp.ne.s32.totalorder %s112, %s113
      %p125 = scmp.eq.s32.totalorder %s23, 1
      %p126 = por %p124, %p125
      %p128 = scmp.ne.s32.totalorder %s113, %s127
      %p129 = scmp.eq.s32.totalorder %s23, 0
      %p130 = por %p128, %p129
      %s132 = sadd.s32 %s131, 1
      %p135 = scmp.eq.s32.totalorder %s17, 1
      %p136 = scmp.ne.s32.totalorder %s131, %s133
      %p137 = scmp.eq.s32.totalorder %s17, 0
      %p138 = por %p136, %p137
      %p139 = scmp.ne.s32.totalorder %s131, %s133
      %p140 = scmp.eq.s32.totalorder %s22, 1
      %p141 = por %p139, %p140
      %p142 = scmp.ne.s32.totalorder %s133, %s134
      %p143 = scmp.eq.s32.totalorder %s22, 0
      %p144 = por %p142, %p143
      %p145 = scmp.ne.s32.totalorder %s133, %s134
      %p146 = scmp.eq.s32.totalorder %s23, 1
      %p147 = por %p145, %p146
      %p149 = scmp.ne.s32.totalorder %s134, %s148
      %p150 = scmp.eq.s32.totalorder %s23, 0
      %p151 = por %p149, %p150
      %s153 = sadd.s32 %s152, 1
      %p156 = scmp.eq.s32.totalorder %s17, 1
      %p157 = scmp.ne.s32.totalorder %s152, %s154
      %p158 = scmp.eq.s32.totalorder %s17, 0
      %p159 = por %p157, %p158
      %p160 = scmp.ne.s32.totalorder %s152, %s154
      %p161 = scmp.eq.s32.totalorder %s22, 1
      %p162 = por %p160, %p161
      %p163 = scmp.ne.s32.totalorder %s154, %s155
      %p164 = scmp.eq.s32.totalorder %s22, 0
      %p165 = por %p163, %p164
      %p166 = scmp.ne.s32.totalorder %s154, %s155
      %p167 = scmp.eq.s32.totalorder %s23, 1
      %p168 = por %p166, %p167
      %p170 = scmp.ne.s32.totalorder %s155, %s169
      %p171 = scmp.eq.s32.totalorder %s23, 0
      %p172 = por %p170, %p171
      %s173 = ssub.s32 %s24, %s36
      %p174 = scmp.eq.s32.totalorder %s173, 0
      %s176 = sadd.s32 %s175, 1
      %s177 = scalar_select %p174, %s175, %s176
      %p180 = pneg %p174
      %p181 = scmp.eq.s32.totalorder %s17, 1
      %p182 = por %p180, %p181
      %p183 = scmp.ne.s32.totalorder %s175, %s178
      %p184 = scmp.eq.s32.totalorder %s17, 0
      %p185 = por %p183, %p184
      %p186 = scmp.ne.s32.totalorder %s175, %s178
      %p187 = scmp.eq.s32.totalorder %s22, 1
      %p188 = por %p186, %p187
      %p189 = scmp.ne.s32.totalorder %s178, %s179
      %p190 = scmp.eq.s32.totalorder %s22, 0
      %p191 = por %p189, %p190
      %p192 = scmp.ne.s32.totalorder %s178, %s179
      %p193 = scmp.eq.s32.totalorder %s23, 1
      %p194 = por %p192, %p193
      %p196 = scmp.ne.s32.totalorder %s179, %s195
      %p197 = scmp.eq.s32.totalorder %s23, 0
      %p198 = por %p196, %p197
      %p199 = scmp.le.s32.totalorder 1, %s17
      %p200 = scmp.lt.s32.totalorder %s17, 3
      %p201 = pnand %p199, %p200
      %p202 = pneg %p201
      // Predicated region
      $region9: #{tpu_custom_call.1} parent=5 // pred_check
        _
      $region10: #{tpu_custom_call.1} parent=5 // pred_check_branch
        %204 = sbr.rel (%p201) target = $region12
      $region11: #{tpu_custom_call.1} parent=5 // pred_region
        %s205 = ssub.s32 %s17, 1
        // Predicated region
        $region13: #{tpu_custom_call.1} parent=11 // pred_check
          %p206 = pneg %p55
        $region14: #{tpu_custom_call.1} parent=11 // pred_check_branch
          %208 = sbr.rel (%p206) target = $region16
        $region15: #{tpu_custom_call.1} parent=11 // pred_region
          %s209 = smul.u32 8, %s26
          %s211 = ssub.s32 4096, 4096
          %212 = vsyncadd [#allocation4], %s211
          %s213 = smul.addr %s209, 4
          %s214 = smul.addr %s213, 128
          %s215 = scalar_lea.hbm %s0, %s214
          %s216 = sshll.u32 [#allocation3], 4
          %s217 = int_to_ptr.vmem [resolvable:$true] %s216
          %222 = dma.hbm_to_vmem [thread:$0]  %s215, 4096, %s217, [#allocation4], 512, 512, 32
        $region16: #{tpu_custom_call.1} parent=11 // pred_fallthru
          _
        // Predicated region
        $region17: #{tpu_custom_call.1} parent=11 // pred_check
          %p223 = pneg %p81
        $region18: #{tpu_custom_call.1} parent=11 // pred_check_branch
          %225 = sbr.rel (%p223) target = $region20
        $region19: #{tpu_custom_call.1} parent=11 // pred_region
          %s226 = smul.u32 8, %s26
          %s228 = ssub.s32 4096, 4096
          %229 = vsyncadd [#allocation7], %s228
          %s230 = smul.addr %s226, 4
          %s231 = smul.addr %s230, 128
          %s232 = scalar_lea.hbm %s1, %s231
          %s233 = sshll.u32 [#allocation6], 4
          %s234 = int_to_ptr.vmem [resolvable:$true] %s233
          %239 = dma.hbm_to_vmem [thread:$0]  %s232, 4096, %s234, [#allocation7], 512, 512, 32
        $region20: #{tpu_custom_call.1} parent=11 // pred_fallthru
          _
        // Predicated region
        $region21: #{tpu_custom_call.1} parent=11 // pred_check
          %p240 = pneg %p102
        $region22: #{tpu_custom_call.1} parent=11 // pred_check_branch
          %242 = sbr.rel (%p240) target = $region24
        $region23: #{tpu_custom_call.1} parent=11 // pred_region
          %s244 = ssub.s32 32768, 32768
          %245 = vsyncadd [#allocation7], %s244
          %s246 = sshll.u32 [#allocation8], 4
          %s247 = int_to_ptr.vmem [resolvable:$true] %s246
          %252 = dma.hbm_to_vmem [thread:$0]  %s2, 32768, %s247, [#allocation7], 256, 256, 16
        $region24: #{tpu_custom_call.1} parent=11 // pred_fallthru
          _
        // Predicated region
        $region25: #{tpu_custom_call.1} parent=11 // pred_check
          %p253 = pneg %p123
        $region26: #{tpu_custom_call.1} parent=11 // pred_check_branch
          %255 = sbr.rel (%p253) target = $region28
        $region27: #{tpu_custom_call.1} parent=11 // pred_region
          %s257 = ssub.s32 65536, 65536
          %258 = vsyncadd [#allocation10], %s257
          %s259 = sshll.u32 [#allocation9], 4
          %s260 = int_to_ptr.vmem [resolvable:$true] %s259
          %265 = dma.hbm_to_vmem [thread:$0]  %s3, 65536, %s260, [#allocation10], 512, 512, 32
        $region28: #{tpu_custom_call.1} parent=11 // pred_fallthru
          _
        // Predicated region
        $region29: #{tpu_custom_call.1} parent=11 // pred_check
          %p266 = pneg %p144
        $region30: #{tpu_custom_call.1} parent=11 // pred_check_branch
          %268 = sbr.rel (%p266) target = $region32
        $region31: #{tpu_custom_call.1} parent=11 // pred_region
          %s270 = ssub.s32 32768, 32768
          %271 = vsyncadd [#allocation10], %s270
          %s272 = sshll.u32 [#allocation11], 4
          %s273 = int_to_ptr.vmem [resolvable:$true] %s272
          %278 = dma.hbm_to_vmem [thread:$0]  %s4, 32768, %s273, [#allocation10], 256, 256, 16
        $region32: #{tpu_custom_call.1} parent=11 // pred_fallthru
          _
        // Predicated region
        $region33: #{tpu_custom_call.1} parent=11 // pred_check
          %p279 = pneg %p165
        $region34: #{tpu_custom_call.1} parent=11 // pred_check_branch
          %281 = sbr.rel (%p279) target = $region36
        $region35: #{tpu_custom_call.1} parent=11 // pred_region
          %s283 = ssub.s32 1024, 1024
          %284 = vsyncadd [#allocation13], %s283
          %s285 = sshll.u32 [#allocation12], 4
          %s286 = int_to_ptr.vmem [resolvable:$true] %s285
          %291 = dma.hbm_to_vmem [thread:$0]  %s5, 1024, %s286, [#allocation13], 512, 512, 32
        $region36: #{tpu_custom_call.1} parent=11 // pred_fallthru
          _
      $region12: #{tpu_custom_call.1} parent=5 // pred_fallthru
        _
      %p292 = scmp.lt.s32.totalorder %s17, 2
      // Predicated region
      $region37: #{tpu_custom_call.1} parent=5 // pred_check
        %p293 = pneg %p292
      $region38: #{tpu_custom_call.1} parent=5 // pred_check_branch
        %295 = sbr.rel (%p293) target = $region40
      $region39: #{tpu_custom_call.1} parent=5 // pred_region
        _
      $region40: #{tpu_custom_call.1} parent=5 // pred_fallthru
        _
      %p296 = scmp.le.s32.totalorder 1, %s17
      %p297 = scmp.lt.s32.totalorder %s17, 3
      %p298 = pnand %p296, %p297
      %p299 = pneg %p298
      // Predicated region
      $region41: #{tpu_custom_call.1} parent=5 // pred_check
        _
      $region42: #{tpu_custom_call.1} parent=5 // pred_check_branch
        %301 = sbr.rel (%p298) target = $region44
      $region43: #{tpu_custom_call.1} parent=5 // pred_region
        %s302 = ssub.s32 %s17, 1
        // Predicated region
        $region45: #{tpu_custom_call.1} parent=43 // pred_check
          %p303 = pneg %p55
        $region46: #{tpu_custom_call.1} parent=43 // pred_check_branch
          %305 = sbr.rel (%p303) target = $region48
        $region47: #{tpu_custom_call.1} parent=43 // pred_region
          %306 = dma.done [#allocation4], 4096
        $region48: #{tpu_custom_call.1} parent=43 // pred_fallthru
          _
        // Predicated region
        $region49: #{tpu_custom_call.1} parent=43 // pred_check
          %p307 = pneg %p81
        $region50: #{tpu_custom_call.1} parent=43 // pred_check_branch
          %309 = sbr.rel (%p307) target = $region52
        $region51: #{tpu_custom_call.1} parent=43 // pred_region
          %310 = dma.done [#allocation7], 4096
        $region52: #{tpu_custom_call.1} parent=43 // pred_fallthru
          _
        // Predicated region
        $region53: #{tpu_custom_call.1} parent=43 // pred_check
          %p311 = pneg %p102
        $region54: #{tpu_custom_call.1} parent=43 // pred_check_branch
          %313 = sbr.rel (%p311) target = $region56
        $region55: #{tpu_custom_call.1} parent=43 // pred_region
          %314 = dma.done [#allocation7], 32768
        $region56: #{tpu_custom_call.1} parent=43 // pred_fallthru
          _
        // Predicated region
        $region57: #{tpu_custom_call.1} parent=43 // pred_check
          %p315 = pneg %p123
        $region58: #{tpu_custom_call.1} parent=43 // pred_check_branch
          %317 = sbr.rel (%p315) target = $region60
        $region59: #{tpu_custom_call.1} parent=43 // pred_region
          %318 = dma.done [#allocation10], 65536
        $region60: #{tpu_custom_call.1} parent=43 // pred_fallthru
          _
        // Predicated region
        $region61: #{tpu_custom_call.1} parent=43 // pred_check
          %p319 = pneg %p144
        $region62: #{tpu_custom_call.1} parent=43 // pred_check_branch
          %321 = sbr.rel (%p319) target = $region64
        $region63: #{tpu_custom_call.1} parent=43 // pred_region
          %322 = dma.done [#allocation10], 32768
        $region64: #{tpu_custom_call.1} parent=43 // pred_fallthru
          _
        // Predicated region
        $region65: #{tpu_custom_call.1} parent=43 // pred_check
          %p323 = pneg %p165
        $region66: #{tpu_custom_call.1} parent=43 // pred_check_branch
          %325 = sbr.rel (%p323) target = $region68
        $region67: #{tpu_custom_call.1} parent=43 // pred_region
          %326 = dma.done [#allocation13], 1024
        $region68: #{tpu_custom_call.1} parent=43 // pred_fallthru
          _
        %p327 = pneg %p55
        %p328 = pneg %p52
        %p329 = pneg %p81
        %p330 = pneg %p78
        %p331 = pneg %p102
        %p332 = pneg %p99
        %p333 = pneg %p123
        %p334 = pneg %p120
        %p335 = pneg %p144
        %p336 = pneg %p141
        %p337 = pneg %p165
        %p338 = pneg %p162
        %p339 = pneg %p191
        %p340 = pneg %p188
        %s341 = smul.u32 8, %s26
        %s342 = smul.u32 8, %s26
        %s343 = smul.u32 8, %s26
        %p345 = scmp.eq.s32.totalorder %s27, 0
        // Predicated region
        $region69: #{tpu_custom_call.1} parent=43 // pred_check
          %p346 = pneg %p345
        $region70: #{tpu_custom_call.1} parent=43 // pred_check_branch
          %348 = sbr.rel (%p346) target = $region72
        $region71: #{tpu_custom_call.1} parent=43 // pred_region
          %v349 = vld [vmem:[#allocation3] sm:$0xff]
          %v350 = vld [vmem:[#allocation3 + $0x8] sm:$0xff]
          %v351 = vld [vmem:[#allocation3 + $0x10] sm:$0xff]
          %v352 = vld [vmem:[#allocation3 + $0x18] sm:$0xff]
          %v353 = vld [vmem:[#allocation3 + $0x20] sm:$0xff]
          %v354 = vld [vmem:[#allocation3 + $0x28] sm:$0xff]
          %v355 = vld [vmem:[#allocation3 + $0x30] sm:$0xff]
          %v356 = vld [vmem:[#allocation3 + $0x38] sm:$0xff]
          %v357 = vld [vmem:[#allocation3 + $0x40] sm:$0xff]
          %v358 = vld [vmem:[#allocation3 + $0x48] sm:$0xff]
          %v359 = vld [vmem:[#allocation3 + $0x50] sm:$0xff]
          %v360 = vld [vmem:[#allocation3 + $0x58] sm:$0xff]
          %v361 = vld [vmem:[#allocation3 + $0x60] sm:$0xff]
          %v362 = vld [vmem:[#allocation3 + $0x68] sm:$0xff]
          %v363 = vld [vmem:[#allocation3 + $0x70] sm:$0xff]
          %v364 = vld [vmem:[#allocation3 + $0x78] sm:$0xff]
          %v365 = vld [vmem:[#allocation3 + $0x80] sm:$0xff]
          %v366 = vld [vmem:[#allocation3 + $0x88] sm:$0xff]
          %v367 = vld [vmem:[#allocation3 + $0x90] sm:$0xff]
          %v368 = vld [vmem:[#allocation3 + $0x98] sm:$0xff]
          %v369 = vld [vmem:[#allocation3 + $0xa0] sm:$0xff]
          %v370 = vld [vmem:[#allocation3 + $0xa8] sm:$0xff]
          %v371 = vld [vmem:[#allocation3 + $0xb0] sm:$0xff]
          %v372 = vld [vmem:[#allocation3 + $0xb8] sm:$0xff]
          %v373 = vld [vmem:[#allocation3 + $0xc0] sm:$0xff]
          %v374 = vld [vmem:[#allocation3 + $0xc8] sm:$0xff]
          %v375 = vld [vmem:[#allocation3 + $0xd0] sm:$0xff]
          %v376 = vld [vmem:[#allocation3 + $0xd8] sm:$0xff]
          %v377 = vld [vmem:[#allocation3 + $0xe0] sm:$0xff]
          %v378 = vld [vmem:[#allocation3 + $0xe8] sm:$0xff]
          %v379 = vld [vmem:[#allocation3 + $0xf0] sm:$0xff]
          %v380 = vld [vmem:[#allocation3 + $0xf8] sm:$0xff]
          %381 = vst [vmem:[#allocation2] sm:$0xff] %v349
          %382 = vst [vmem:[#allocation2 + $0x8] sm:$0xff] %v350
          %383 = vst [vmem:[#allocation2 + $0x10] sm:$0xff] %v351
          %384 = vst [vmem:[#allocation2 + $0x18] sm:$0xff] %v352
          %385 = vst [vmem:[#allocation2 + $0x20] sm:$0xff] %v353
          %386 = vst [vmem:[#allocation2 + $0x28] sm:$0xff] %v354
          %387 = vst [vmem:[#allocation2 + $0x30] sm:$0xff] %v355
          %388 = vst [vmem:[#allocation2 + $0x38] sm:$0xff] %v356
          %389 = vst [vmem:[#allocation2 + $0x40] sm:$0xff] %v357
          %390 = vst [vmem:[#allocation2 + $0x48] sm:$0xff] %v358
          %391 = vst [vmem:[#allocation2 + $0x50] sm:$0xff] %v359
          %392 = vst [vmem:[#allocation2 + $0x58] sm:$0xff] %v360
          %393 = vst [vmem:[#allocation2 + $0x60] sm:$0xff] %v361
          %394 = vst [vmem:[#allocation2 + $0x68] sm:$0xff] %v362
          %395 = vst [vmem:[#allocation2 + $0x70] sm:$0xff] %v363
          %396 = vst [vmem:[#allocation2 + $0x78] sm:$0xff] %v364
          %397 = vst [vmem:[#allocation2 + $0x80] sm:$0xff] %v365
          %398 = vst [vmem:[#allocation2 + $0x88] sm:$0xff] %v366
          %399 = vst [vmem:[#allocation2 + $0x90] sm:$0xff] %v367
          %400 = vst [vmem:[#allocation2 + $0x98] sm:$0xff] %v368
          %401 = vst [vmem:[#allocation2 + $0xa0] sm:$0xff] %v369
          %402 = vst [vmem:[#allocation2 + $0xa8] sm:$0xff] %v370
          %403 = vst [vmem:[#allocation2 + $0xb0] sm:$0xff] %v371
          %404 = vst [vmem:[#allocation2 + $0xb8] sm:$0xff] %v372
          %405 = vst [vmem:[#allocation2 + $0xc0] sm:$0xff] %v373
          %406 = vst [vmem:[#allocation2 + $0xc8] sm:$0xff] %v374
          %407 = vst [vmem:[#allocation2 + $0xd0] sm:$0xff] %v375
          %408 = vst [vmem:[#allocation2 + $0xd8] sm:$0xff] %v376
          %409 = vst [vmem:[#allocation2 + $0xe0] sm:$0xff] %v377
          %410 = vst [vmem:[#allocation2 + $0xe8] sm:$0xff] %v378
          %411 = vst [vmem:[#allocation2 + $0xf0] sm:$0xff] %v379
          %412 = vst [vmem:[#allocation2 + $0xf8] sm:$0xff] %v380
        $region72: #{tpu_custom_call.1} parent=43 // pred_fallthru
          _
        %s413 = smul.u32 %s27, 4
        %s414 = smul.addr %s413, 8
        %s415 = scalar_lea.vmem [#allocation12], %s414
        %v416 = vld [vmem:[%s415] sm:$0xff]
        %v417 = vld [vmem:[%s415 + $0x8] sm:$0xff]
        %v418 = vld [vmem:[%s415 + $0x10] sm:$0xff]
        %v419 = vld [vmem:[%s415 + $0x18] sm:$0xff]
        %v420 = vld [vmem:[#allocation2] sm:$0xff]
        %v421 = vld [vmem:[#allocation2 + $0x8] sm:$0xff]
        %v422 = vld [vmem:[#allocation2 + $0x10] sm:$0xff]
        %v423 = vld [vmem:[#allocation2 + $0x18] sm:$0xff]
        %v424 = vld [vmem:[#allocation2 + $0x20] sm:$0xff]
        %v425 = vld [vmem:[#allocation2 + $0x28] sm:$0xff]
        %v426 = vld [vmem:[#allocation2 + $0x30] sm:$0xff]
        %v427 = vld [vmem:[#allocation2 + $0x38] sm:$0xff]
        %v428 = vld [vmem:[#allocation2 + $0x40] sm:$0xff]
        %v429 = vld [vmem:[#allocation2 + $0x48] sm:$0xff]
        %v430 = vld [vmem:[#allocation2 + $0x50] sm:$0xff]
        %v431 = vld [vmem:[#allocation2 + $0x58] sm:$0xff]
        %v432 = vld [vmem:[#allocation2 + $0x60] sm:$0xff]
        %v433 = vld [vmem:[#allocation2 + $0x68] sm:$0xff]
        %v434 = vld [vmem:[#allocation2 + $0x70] sm:$0xff]
        %v435 = vld [vmem:[#allocation2 + $0x78] sm:$0xff]
        %v436 = vld [vmem:[#allocation2 + $0x80] sm:$0xff]
        %v437 = vld [vmem:[#allocation2 + $0x88] sm:$0xff]
        %v438 = vld [vmem:[#allocation2 + $0x90] sm:$0xff]
        %v439 = vld [vmem:[#allocation2 + $0x98] sm:$0xff]
        %v440 = vld [vmem:[#allocation2 + $0xa0] sm:$0xff]
        %v441 = vld [vmem:[#allocation2 + $0xa8] sm:$0xff]
        %v442 = vld [vmem:[#allocation2 + $0xb0] sm:$0xff]
        %v443 = vld [vmem:[#allocation2 + $0xb8] sm:$0xff]
        %v444 = vld [vmem:[#allocation2 + $0xc0] sm:$0xff]
        %v445 = vld [vmem:[#allocation2 + $0xc8] sm:$0xff]
        %v446 = vld [vmem:[#allocation2 + $0xd0] sm:$0xff]
        %v447 = vld [vmem:[#allocation2 + $0xd8] sm:$0xff]
        %v448 = vld [vmem:[#allocation2 + $0xe0] sm:$0xff]
        %v449 = vld [vmem:[#allocation2 + $0xe8] sm:$0xff]
        %v450 = vld [vmem:[#allocation2 + $0xf0] sm:$0xff]
        %v451 = vld [vmem:[#allocation2 + $0xf8] sm:$0xff]
        %v452 = vpack.c.bf16 %v424, %v420
        %v453 = vpack.c.bf16 %v425, %v421
        %v454 = vpack.c.bf16 %v426, %v422
        %v455 = vpack.c.bf16 %v427, %v423
        %v456 = vpack.c.bf16 %v432, %v428
        %v457 = vpack.c.bf16 %v433, %v429
        %v458 = vpack.c.bf16 %v434, %v430
        %v459 = vpack.c.bf16 %v435, %v431
        %v460 = vpack.c.bf16 %v440, %v436
        %v461 = vpack.c.bf16 %v441, %v437
        %v462 = vpack.c.bf16 %v442, %v438
        %v463 = vpack.c.bf16 %v443, %v439
        %v464 = vpack.c.bf16 %v448, %v444
        %v465 = vpack.c.bf16 %v449, %v445
        %v466 = vpack.c.bf16 %v450, %v446
        %v467 = vpack.c.bf16 %v451, %v447
        %s468 = smul.u32 %s27, 256
        %s469 = smul.addr %s468, 4
        %s470 = scalar_lea.vmem [#allocation8], %s469
        %v471 = vld [vmem:[%s470] sm:$0xff]
        %v472 = vld [vmem:[%s470 + $0x8] sm:$0xff]
        %v473 = vld [vmem:[%s470 + $0x10] sm:$0xff]
        %v474 = vld [vmem:[%s470 + $0x18] sm:$0xff]
        %v475 = vld [vmem:[%s470 + $0x20] sm:$0xff]
        %v476 = vld [vmem:[%s470 + $0x28] sm:$0xff]
        %v477 = vld [vmem:[%s470 + $0x30] sm:$0xff]
        %v478 = vld [vmem:[%s470 + $0x38] sm:$0xff]
        %v479 = vld [vmem:[%s470 + $0x40] sm:$0xff]
        %v480 = vld [vmem:[%s470 + $0x48] sm:$0xff]
        %v481 = vld [vmem:[%s470 + $0x50] sm:$0xff]
        %v482 = vld [vmem:[%s470 + $0x58] sm:$0xff]
        %v483 = vld [vmem:[%s470 + $0x60] sm:$0xff]
        %v484 = vld [vmem:[%s470 + $0x68] sm:$0xff]
        %v485 = vld [vmem:[%s470 + $0x70] sm:$0xff]
        %v486 = vld [vmem:[%s470 + $0x78] sm:$0xff]
        %v487 = vld [vmem:[%s470 + $0x80] sm:$0xff]
        %v488 = vld [vmem:[%s470 + $0x88] sm:$0xff]
        %v489 = vld [vmem:[%s470 + $0x90] sm:$0xff]
        %v490 = vld [vmem:[%s470 + $0x98] sm:$0xff]
        %v491 = vld [vmem:[%s470 + $0xa0] sm:$0xff]
        %v492 = vld [vmem:[%s470 + $0xa8] sm:$0xff]
        %v493 = vld [vmem:[%s470 + $0xb0] sm:$0xff]
        %v494 = vld [vmem:[%s470 + $0xb8] sm:$0xff]
        %v495 = vld [vmem:[%s470 + $0xc0] sm:$0xff]
        %v496 = vld [vmem:[%s470 + $0xc8] sm:$0xff]
        %v497 = vld [vmem:[%s470 + $0xd0] sm:$0xff]
        %v498 = vld [vmem:[%s470 + $0xd8] sm:$0xff]
        %v499 = vld [vmem:[%s470 + $0xe0] sm:$0xff]
        %v500 = vld [vmem:[%s470 + $0xe8] sm:$0xff]
        %v501 = vld [vmem:[%s470 + $0xf0] sm:$0xff]
        %v502 = vld [vmem:[%s470 + $0xf8] sm:$0xff]
        %v503 = vld [vmem:[%s470 + $0x100] sm:$0xff]
        %v504 = vld [vmem:[%s470 + $0x108] sm:$0xff]
        %v505 = vld [vmem:[%s470 + $0x110] sm:$0xff]
        %v506 = vld [vmem:[%s470 + $0x118] sm:$0xff]
        %v507 = vld [vmem:[%s470 + $0x120] sm:$0xff]
        %v508 = vld [vmem:[%s470 + $0x128] sm:$0xff]
        %v509 = vld [vmem:[%s470 + $0x130] sm:$0xff]
        %v510 = vld [vmem:[%s470 + $0x138] sm:$0xff]
        %v511 = vld [vmem:[%s470 + $0x140] sm:$0xff]
        %v512 = vld [vmem:[%s470 + $0x148] sm:$0xff]
        %v513 = vld [vmem:[%s470 + $0x150] sm:$0xff]
        %v514 = vld [vmem:[%s470 + $0x158] sm:$0xff]
        %v515 = vld [vmem:[%s470 + $0x160] sm:$0xff]
        %v516 = vld [vmem:[%s470 + $0x168] sm:$0xff]
        %v517 = vld [vmem:[%s470 + $0x170] sm:$0xff]
        %v518 = vld [vmem:[%s470 + $0x178] sm:$0xff]
        %v519 = vld [vmem:[%s470 + $0x180] sm:$0xff]
        %v520 = vld [vmem:[%s470 + $0x188] sm:$0xff]
        %v521 = vld [vmem:[%s470 + $0x190] sm:$0xff]
        %v522 = vld [vmem:[%s470 + $0x198] sm:$0xff]
        %v523 = vld [vmem:[%s470 + $0x1a0] sm:$0xff]
        %v524 = vld [vmem:[%s470 + $0x1a8] sm:$0xff]
        %v525 = vld [vmem:[%s470 + $0x1b0] sm:$0xff]
        %v526 = vld [vmem:[%s470 + $0x1b8] sm:$0xff]
        %v527 = vld [vmem:[%s470 + $0x1c0] sm:$0xff]
        %v528 = vld [vmem:[%s470 + $0x1c8] sm:$0xff]
        %v529 = vld [vmem:[%s470 + $0x1d0] sm:$0xff]
        %v530 = vld [vmem:[%s470 + $0x1d8] sm:$0xff]
        %v531 = vld [vmem:[%s470 + $0x1e0] sm:$0xff]
        %v532 = vld [vmem:[%s470 + $0x1e8] sm:$0xff]
        %v533 = vld [vmem:[%s470 + $0x1f0] sm:$0xff]
        %v534 = vld [vmem:[%s470 + $0x1f8] sm:$0xff]
        %v535 = vld [vmem:[%s470 + $0x200] sm:$0xff]
        %v536 = vld [vmem:[%s470 + $0x208] sm:$0xff]
        %v537 = vld [vmem:[%s470 + $0x210] sm:$0xff]
        %v538 = vld [vmem:[%s470 + $0x218] sm:$0xff]
        %v539 = vld [vmem:[%s470 + $0x220] sm:$0xff]
        %v540 = vld [vmem:[%s470 + $0x228] sm:$0xff]
        %v541 = vld [vmem:[%s470 + $0x230] sm:$0xff]
        %v542 = vld [vmem:[%s470 + $0x238] sm:$0xff]
        %v543 = vld [vmem:[%s470 + $0x240] sm:$0xff]
        %v544 = vld [vmem:[%s470 + $0x248] sm:$0xff]
        %v545 = vld [vmem:[%s470 + $0x250] sm:$0xff]
        %v546 = vld [vmem:[%s470 + $0x258] sm:$0xff]
        %v547 = vld [vmem:[%s470 + $0x260] sm:$0xff]
        %v548 = vld [vmem:[%s470 + $0x268] sm:$0xff]
        %v549 = vld [vmem:[%s470 + $0x270] sm:$0xff]
        %v550 = vld [vmem:[%s470 + $0x278] sm:$0xff]
        %v551 = vld [vmem:[%s470 + $0x280] sm:$0xff]
        %v552 = vld [vmem:[%s470 + $0x288] sm:$0xff]
        %v553 = vld [vmem:[%s470 + $0x290] sm:$0xff]
        %v554 = vld [vmem:[%s470 + $0x298] sm:$0xff]
        %v555 = vld [vmem:[%s470 + $0x2a0] sm:$0xff]
        %v556 = vld [vmem:[%s470 + $0x2a8] sm:$0xff]
        %v557 = vld [vmem:[%s470 + $0x2b0] sm:$0xff]
        %v558 = vld [vmem:[%s470 + $0x2b8] sm:$0xff]
        %v559 = vld [vmem:[%s470 + $0x2c0] sm:$0xff]
        %v560 = vld [vmem:[%s470 + $0x2c8] sm:$0xff]
        %v561 = vld [vmem:[%s470 + $0x2d0] sm:$0xff]
        %v562 = vld [vmem:[%s470 + $0x2d8] sm:$0xff]
        %v563 = vld [vmem:[%s470 + $0x2e0] sm:$0xff]
        %v564 = vld [vmem:[%s470 + $0x2e8] sm:$0xff]
        %v565 = vld [vmem:[%s470 + $0x2f0] sm:$0xff]
        %v566 = vld [vmem:[%s470 + $0x2f8] sm:$0xff]
        %v567 = vld [vmem:[%s470 + $0x300] sm:$0xff]
        %v568 = vld [vmem:[%s470 + $0x308] sm:$0xff]
        %v569 = vld [vmem:[%s470 + $0x310] sm:$0xff]
        %v570 = vld [vmem:[%s470 + $0x318] sm:$0xff]
        %v571 = vld [vmem:[%s470 + $0x320] sm:$0xff]
        %v572 = vld [vmem:[%s470 + $0x328] sm:$0xff]
        %v573 = vld [vmem:[%s470 + $0x330] sm:$0xff]
        %v574 = vld [vmem:[%s470 + $0x338] sm:$0xff]
        %v575 = vld [vmem:[%s470 + $0x340] sm:$0xff]
        %v576 = vld [vmem:[%s470 + $0x348] sm:$0xff]
        %v577 = vld [vmem:[%s470 + $0x350] sm:$0xff]
        %v578 = vld [vmem:[%s470 + $0x358] sm:$0xff]
        %v579 = vld [vmem:[%s470 + $0x360] sm:$0xff]
        %v580 = vld [vmem:[%s470 + $0x368] sm:$0xff]
        %v581 = vld [vmem:[%s470 + $0x370] sm:$0xff]
        %v582 = vld [vmem:[%s470 + $0x378] sm:$0xff]
        %v583 = vld [vmem:[%s470 + $0x380] sm:$0xff]
        %v584 = vld [vmem:[%s470 + $0x388] sm:$0xff]
        %v585 = vld [vmem:[%s470 + $0x390] sm:$0xff]
        %v586 = vld [vmem:[%s470 + $0x398] sm:$0xff]
        %v587 = vld [vmem:[%s470 + $0x3a0] sm:$0xff]
        %v588 = vld [vmem:[%s470 + $0x3a8] sm:$0xff]
        %v589 = vld [vmem:[%s470 + $0x3b0] sm:$0xff]
        %v590 = vld [vmem:[%s470 + $0x3b8] sm:$0xff]
        %v591 = vld [vmem:[%s470 + $0x3c0] sm:$0xff]
        %v592 = vld [vmem:[%s470 + $0x3c8] sm:$0xff]
        %v593 = vld [vmem:[%s470 + $0x3d0] sm:$0xff]
        %v594 = vld [vmem:[%s470 + $0x3d8] sm:$0xff]
        %v595 = vld [vmem:[%s470 + $0x3e0] sm:$0xff]
        %v596 = vld [vmem:[%s470 + $0x3e8] sm:$0xff]
        %v597 = vld [vmem:[%s470 + $0x3f0] sm:$0xff]
        %v598 = vld [vmem:[%s470 + $0x3f8] sm:$0xff]
        %v599 = vlaneseq
        %v600 = vshrl.u32 %v599, 7
        %v601 = vsub.s32 0, %v600
        %v602 = vrot.slane %v416, %v601
        %v603 = vlaneseq
        %v604 = vshrl.u32 %v603, 7
        %v605 = vsub.s32 0, %v604
        %v606 = vrot.slane %v417, %v605
        %v607 = vlaneseq
        %v608 = vshrl.u32 %v607, 7
        %v609 = vsub.s32 0, %v608
        %v610 = vrot.slane %v418, %v609
        %v611 = vlaneseq
        %v612 = vshrl.u32 %v611, 7
        %v613 = vsub.s32 0, %v612
        %v614 = vrot.slane %v419, %v613
        %v743 = vunpack.c.l.b16 %v471
        %v744 = vunpack.c.h.b16 %v471
        %v745 = vunpack.c.l.b16 %v472
        %v746 = vunpack.c.h.b16 %v472
        %v747 = vunpack.c.l.b16 %v473
        %v748 = vunpack.c.h.b16 %v473
        %v749 = vunpack.c.l.b16 %v474
        %v750 = vunpack.c.h.b16 %v474
        %v751 = vunpack.c.l.b16 %v475
        %v752 = vunpack.c.h.b16 %v475
        %v753 = vunpack.c.l.b16 %v476
        %v754 = vunpack.c.h.b16 %v476
        %v755 = vunpack.c.l.b16 %v477
        %v756 = vunpack.c.h.b16 %v477
        %v757 = vunpack.c.l.b16 %v478
        %v758 = vunpack.c.h.b16 %v478
        %v759 = vunpack.c.l.b16 %v479
        %v760 = vunpack.c.h.b16 %v479
        %v761 = vunpack.c.l.b16 %v480
        %v762 = vunpack.c.h.b16 %v480
        %v763 = vunpack.c.l.b16 %v481
        %v764 = vunpack.c.h.b16 %v481
        %v765 = vunpack.c.l.b16 %v482
        %v766 = vunpack.c.h.b16 %v482
        %v767 = vunpack.c.l.b16 %v483
        %v768 = vunpack.c.h.b16 %v483
        %v769 = vunpack.c.l.b16 %v484
        %v770 = vunpack.c.h.b16 %v484
        %v771 = vunpack.c.l.b16 %v485
        %v772 = vunpack.c.h.b16 %v485
        %v773 = vunpack.c.l.b16 %v486
        %v774 = vunpack.c.h.b16 %v486
        %v775 = vunpack.c.l.b16 %v487
        %v776 = vunpack.c.h.b16 %v487
        %v777 = vunpack.c.l.b16 %v488
        %v778 = vunpack.c.h.b16 %v488
        %v779 = vunpack.c.l.b16 %v489
        %v780 = vunpack.c.h.b16 %v489
        %v781 = vunpack.c.l.b16 %v490
        %v782 = vunpack.c.h.b16 %v490
        %v783 = vunpack.c.l.b16 %v491
        %v784 = vunpack.c.h.b16 %v491
        %v785 = vunpack.c.l.b16 %v492
        %v786 = vunpack.c.h.b16 %v492
        %v787 = vunpack.c.l.b16 %v493
        %v788 = vunpack.c.h.b16 %v493
        %v789 = vunpack.c.l.b16 %v494
        %v790 = vunpack.c.h.b16 %v494
        %v791 = vunpack.c.l.b16 %v495
        %v792 = vunpack.c.h.b16 %v495
        %v793 = vunpack.c.l.b16 %v496
        %v794 = vunpack.c.h.b16 %v496
        %v795 = vunpack.c.l.b16 %v497
        %v796 = vunpack.c.h.b16 %v497
        %v797 = vunpack.c.l.b16 %v498
        %v798 = vunpack.c.h.b16 %v498
        %v799 = vunpack.c.l.b16 %v499
        %v800 = vunpack.c.h.b16 %v499
        %v801 = vunpack.c.l.b16 %v500
        %v802 = vunpack.c.h.b16 %v500
        %v803 = vunpack.c.l.b16 %v501
        %v804 = vunpack.c.h.b16 %v501
        %v805 = vunpack.c.l.b16 %v502
        %v806 = vunpack.c.h.b16 %v502
        %v807 = vunpack.c.l.b16 %v503
        %v808 = vunpack.c.h.b16 %v503
        %v809 = vunpack.c.l.b16 %v504
        %v810 = vunpack.c.h.b16 %v504
        %v811 = vunpack.c.l.b16 %v505
        %v812 = vunpack.c.h.b16 %v505
        %v813 = vunpack.c.l.b16 %v506
        %v814 = vunpack.c.h.b16 %v506
        %v815 = vunpack.c.l.b16 %v507
        %v816 = vunpack.c.h.b16 %v507
        %v817 = vunpack.c.l.b16 %v508
        %v818 = vunpack.c.h.b16 %v508
        %v819 = vunpack.c.l.b16 %v509
        %v820 = vunpack.c.h.b16 %v509
        %v821 = vunpack.c.l.b16 %v510
        %v822 = vunpack.c.h.b16 %v510
        %v823 = vunpack.c.l.b16 %v511
        %v824 = vunpack.c.h.b16 %v511
        %v825 = vunpack.c.l.b16 %v512
        %v826 = vunpack.c.h.b16 %v512
        %v827 = vunpack.c.l.b16 %v513
        %v828 = vunpack.c.h.b16 %v513
        %v829 = vunpack.c.l.b16 %v514
        %v830 = vunpack.c.h.b16 %v514
        %v831 = vunpack.c.l.b16 %v515
        %v832 = vunpack.c.h.b16 %v515
        %v833 = vunpack.c.l.b16 %v516
        %v834 = vunpack.c.h.b16 %v516
        %v835 = vunpack.c.l.b16 %v517
        %v836 = vunpack.c.h.b16 %v517
        %v837 = vunpack.c.l.b16 %v518
        %v838 = vunpack.c.h.b16 %v518
        %v839 = vunpack.c.l.b16 %v519
        %v840 = vunpack.c.h.b16 %v519
        %v841 = vunpack.c.l.b16 %v520
        %v842 = vunpack.c.h.b16 %v520
        %v843 = vunpack.c.l.b16 %v521
        %v844 = vunpack.c.h.b16 %v521
        %v845 = vunpack.c.l.b16 %v522
        %v846 = vunpack.c.h.b16 %v522
        %v847 = vunpack.c.l.b16 %v523
        %v848 = vunpack.c.h.b16 %v523
        %v849 = vunpack.c.l.b16 %v524
        %v850 = vunpack.c.h.b16 %v524
        %v851 = vunpack.c.l.b16 %v525
        %v852 = vunpack.c.h.b16 %v525
        %v853 = vunpack.c.l.b16 %v526
        %v854 = vunpack.c.h.b16 %v526
        %v855 = vunpack.c.l.b16 %v527
        %v856 = vunpack.c.h.b16 %v527
        %v857 = vunpack.c.l.b16 %v528
        %v858 = vunpack.c.h.b16 %v528
        %v859 = vunpack.c.l.b16 %v529
        %v860 = vunpack.c.h.b16 %v529
        %v861 = vunpack.c.l.b16 %v530
        %v862 = vunpack.c.h.b16 %v530
        %v863 = vunpack.c.l.b16 %v531
        %v864 = vunpack.c.h.b16 %v531
        %v865 = vunpack.c.l.b16 %v532
        %v866 = vunpack.c.h.b16 %v532
        %v867 = vunpack.c.l.b16 %v533
        %v868 = vunpack.c.h.b16 %v533
        %v869 = vunpack.c.l.b16 %v534
        %v870 = vunpack.c.h.b16 %v534
        %v871 = vunpack.c.l.b16 %v535
        %v872 = vunpack.c.h.b16 %v535
        %v873 = vunpack.c.l.b16 %v536
        %v874 = vunpack.c.h.b16 %v536
        %v875 = vunpack.c.l.b16 %v537
        %v876 = vunpack.c.h.b16 %v537
        %v877 = vunpack.c.l.b16 %v538
        %v878 = vunpack.c.h.b16 %v538
        %v879 = vunpack.c.l.b16 %v539
        %v880 = vunpack.c.h.b16 %v539
        %v881 = vunpack.c.l.b16 %v540
        %v882 = vunpack.c.h.b16 %v540
        %v883 = vunpack.c.l.b16 %v541
        %v884 = vunpack.c.h.b16 %v541
        %v885 = vunpack.c.l.b16 %v542
        %v886 = vunpack.c.h.b16 %v542
        %v887 = vunpack.c.l.b16 %v543
        %v888 = vunpack.c.h.b16 %v543
        %v889 = vunpack.c.l.b16 %v544
        %v890 = vunpack.c.h.b16 %v544
        %v891 = vunpack.c.l.b16 %v545
        %v892 = vunpack.c.h.b16 %v545
        %v893 = vunpack.c.l.b16 %v546
        %v894 = vunpack.c.h.b16 %v546
        %v895 = vunpack.c.l.b16 %v547
        %v896 = vunpack.c.h.b16 %v547
        %v897 = vunpack.c.l.b16 %v548
        %v898 = vunpack.c.h.b16 %v548
        %v899 = vunpack.c.l.b16 %v549
        %v900 = vunpack.c.h.b16 %v549
        %v901 = vunpack.c.l.b16 %v550
        %v902 = vunpack.c.h.b16 %v550
        %v903 = vunpack.c.l.b16 %v551
        %v904 = vunpack.c.h.b16 %v551
        %v905 = vunpack.c.l.b16 %v552
        %v906 = vunpack.c.h.b16 %v552
        %v907 = vunpack.c.l.b16 %v553
        %v908 = vunpack.c.h.b16 %v553
        %v909 = vunpack.c.l.b16 %v554
        %v910 = vunpack.c.h.b16 %v554
        %v911 = vunpack.c.l.b16 %v555
        %v912 = vunpack.c.h.b16 %v555
        %v913 = vunpack.c.l.b16 %v556
        %v914 = vunpack.c.h.b16 %v556
        %v915 = vunpack.c.l.b16 %v557
        %v916 = vunpack.c.h.b16 %v557
        %v917 = vunpack.c.l.b16 %v558
        %v918 = vunpack.c.h.b16 %v558
        %v919 = vunpack.c.l.b16 %v559
        %v920 = vunpack.c.h.b16 %v559
        %v921 = vunpack.c.l.b16 %v560
        %v922 = vunpack.c.h.b16 %v560
        %v923 = vunpack.c.l.b16 %v561
        %v924 = vunpack.c.h.b16 %v561
        %v925 = vunpack.c.l.b16 %v562
        %v926 = vunpack.c.h.b16 %v562
        %v927 = vunpack.c.l.b16 %v563
        %v928 = vunpack.c.h.b16 %v563
        %v929 = vunpack.c.l.b16 %v564
        %v930 = vunpack.c.h.b16 %v564
        %v931 = vunpack.c.l.b16 %v565
        %v932 = vunpack.c.h.b16 %v565
        %v933 = vunpack.c.l.b16 %v566
        %v934 = vunpack.c.h.b16 %v566
        %v935 = vunpack.c.l.b16 %v567
        %v936 = vunpack.c.h.b16 %v567
        %v937 = vunpack.c.l.b16 %v568
        %v938 = vunpack.c.h.b16 %v568
        %v939 = vunpack.c.l.b16 %v569
        %v940 = vunpack.c.h.b16 %v569
        %v941 = vunpack.c.l.b16 %v570
        %v942 = vunpack.c.h.b16 %v570
        %v943 = vunpack.c.l.b16 %v571
        %v944 = vunpack.c.h.b16 %v571
        %v945 = vunpack.c.l.b16 %v572
        %v946 = vunpack.c.h.b16 %v572
        %v947 = vunpack.c.l.b16 %v573
        %v948 = vunpack.c.h.b16 %v573
        %v949 = vunpack.c.l.b16 %v574
        %v950 = vunpack.c.h.b16 %v574
        %v951 = vunpack.c.l.b16 %v575
        %v952 = vunpack.c.h.b16 %v575
        %v953 = vunpack.c.l.b16 %v576
        %v954 = vunpack.c.h.b16 %v576
        %v955 = vunpack.c.l.b16 %v577
        %v956 = vunpack.c.h.b16 %v577
        %v957 = vunpack.c.l.b16 %v578
        %v958 = vunpack.c.h.b16 %v578
        %v959 = vunpack.c.l.b16 %v579
        %v960 = vunpack.c.h.b16 %v579
        %v961 = vunpack.c.l.b16 %v580
        %v962 = vunpack.c.h.b16 %v580
        %v963 = vunpack.c.l.b16 %v581
        %v964 = vunpack.c.h.b16 %v581
        %v965 = vunpack.c.l.b16 %v582
        %v966 = vunpack.c.h.b16 %v582
        %v967 = vunpack.c.l.b16 %v583
        %v968 = vunpack.c.h.b16 %v583
        %v969 = vunpack.c.l.b16 %v584
        %v970 = vunpack.c.h.b16 %v584
        %v971 = vunpack.c.l.b16 %v585
        %v972 = vunpack.c.h.b16 %v585
        %v973 = vunpack.c.l.b16 %v586
        %v974 = vunpack.c.h.b16 %v586
        %v975 = vunpack.c.l.b16 %v587
        %v976 = vunpack.c.h.b16 %v587
        %v977 = vunpack.c.l.b16 %v588
        %v978 = vunpack.c.h.b16 %v588
        %v979 = vunpack.c.l.b16 %v589
        %v980 = vunpack.c.h.b16 %v589
        %v981 = vunpack.c.l.b16 %v590
        %v982 = vunpack.c.h.b16 %v590
        %v983 = vunpack.c.l.b16 %v591
        %v984 = vunpack.c.h.b16 %v591
        %v985 = vunpack.c.l.b16 %v592
        %v986 = vunpack.c.h.b16 %v592
        %v987 = vunpack.c.l.b16 %v593
        %v988 = vunpack.c.h.b16 %v593
        %v989 = vunpack.c.l.b16 %v594
        %v990 = vunpack.c.h.b16 %v594
        %v991 = vunpack.c.l.b16 %v595
        %v992 = vunpack.c.h.b16 %v595
        %v993 = vunpack.c.l.b16 %v596
        %v994 = vunpack.c.h.b16 %v596
        %v995 = vunpack.c.l.b16 %v597
        %v996 = vunpack.c.h.b16 %v597
        %v997 = vunpack.c.l.b16 %v598
        %v998 = vunpack.c.h.b16 %v598
        %v999 = vpack.c.b16 %v747, %v743
        %v1000 = vpack.c.b16 %v748, %v744
        %v1001 = vpack.c.b16 %v749, %v745
        %v1002 = vpack.c.b16 %v750, %v746
        %v1003 = vpack.c.b16 %v755, %v751
        %v1004 = vpack.c.b16 %v756, %v752
        %v1005 = vpack.c.b16 %v757, %v753
        %v1006 = vpack.c.b16 %v758, %v754
        %v1007 = vpack.c.b16 %v763, %v759
        %v1008 = vpack.c.b16 %v764, %v760
        %v1009 = vpack.c.b16 %v765, %v761
        %v1010 = vpack.c.b16 %v766, %v762
        %v1011 = vpack.c.b16 %v771, %v767
        %v1012 = vpack.c.b16 %v772, %v768
        %v1013 = vpack.c.b16 %v773, %v769
        %v1014 = vpack.c.b16 %v774, %v770
        %v1015 = vpack.c.b16 %v779, %v775
        %v1016 = vpack.c.b16 %v780, %v776
        %v1017 = vpack.c.b16 %v781, %v777
        %v1018 = vpack.c.b16 %v782, %v778
        %v1019 = vpack.c.b16 %v787, %v783
        %v1020 = vpack.c.b16 %v788, %v784
        %v1021 = vpack.c.b16 %v789, %v785
        %v1022 = vpack.c.b16 %v790, %v786
        %v1023 = vpack.c.b16 %v795, %v791
        %v1024 = vpack.c.b16 %v796, %v792
        %v1025 = vpack.c.b16 %v797, %v793
        %v1026 = vpack.c.b16 %v798, %v794
        %v1027 = vpack.c.b16 %v803, %v799
        %v1028 = vpack.c.b16 %v804, %v800
        %v1029 = vpack.c.b16 %v805, %v801
        %v1030 = vpack.c.b16 %v806, %v802
        %v1031 = vpack.c.b16 %v811, %v807
        %v1032 = vpack.c.b16 %v812, %v808
        %v1033 = vpack.c.b16 %v813, %v809
        %v1034 = vpack.c.b16 %v814, %v810
        %v1035 = vpack.c.b16 %v819, %v815
        %v1036 = vpack.c.b16 %v820, %v816
        %v1037 = vpack.c.b16 %v821, %v817
        %v1038 = vpack.c.b16 %v822, %v818
        %v1039 = vpack.c.b16 %v827, %v823
        %v1040 = vpack.c.b16 %v828, %v824
        %v1041 = vpack.c.b16 %v829, %v825
        %v1042 = vpack.c.b16 %v830, %v826
        %v1043 = vpack.c.b16 %v835, %v831
        %v1044 = vpack.c.b16 %v836, %v832
        %v1045 = vpack.c.b16 %v837, %v833
        %v1046 = vpack.c.b16 %v838, %v834
        %v1047 = vpack.c.b16 %v843, %v839
        %v1048 = vpack.c.b16 %v844, %v840
        %v1049 = vpack.c.b16 %v845, %v841
        %v1050 = vpack.c.b16 %v846, %v842
        %v1051 = vpack.c.b16 %v851, %v847
        %v1052 = vpack.c.b16 %v852, %v848
        %v1053 = vpack.c.b16 %v853, %v849
        %v1054 = vpack.c.b16 %v854, %v850
        %v1055 = vpack.c.b16 %v859, %v855
        %v1056 = vpack.c.b16 %v860, %v856
        %v1057 = vpack.c.b16 %v861, %v857
        %v1058 = vpack.c.b16 %v862, %v858
        %v1059 = vpack.c.b16 %v867, %v863
        %v1060 = vpack.c.b16 %v868, %v864
        %v1061 = vpack.c.b16 %v869, %v865
        %v1062 = vpack.c.b16 %v870, %v866
        %v1063 = vpack.c.b16 %v875, %v871
        %v1064 = vpack.c.b16 %v876, %v872
        %v1065 = vpack.c.b16 %v877, %v873
        %v1066 = vpack.c.b16 %v878, %v874
        %v1067 = vpack.c.b16 %v883, %v879
        %v1068 = vpack.c.b16 %v884, %v880
        %v1069 = vpack.c.b16 %v885, %v881
        %v1070 = vpack.c.b16 %v886, %v882
        %v1071 = vpack.c.b16 %v891, %v887
        %v1072 = vpack.c.b16 %v892, %v888
        %v1073 = vpack.c.b16 %v893, %v889
        %v1074 = vpack.c.b16 %v894, %v890
        %v1075 = vpack.c.b16 %v899, %v895
        %v1076 = vpack.c.b16 %v900, %v896
        %v1077 = vpack.c.b16 %v901, %v897
        %v1078 = vpack.c.b16 %v902, %v898
        %v1079 = vpack.c.b16 %v907, %v903
        %v1080 = vpack.c.b16 %v908, %v904
        %v1081 = vpack.c.b16 %v909, %v905
        %v1082 = vpack.c.b16 %v910, %v906
        %v1083 = vpack.c.b16 %v915, %v911
        %v1084 = vpack.c.b16 %v916, %v912
        %v1085 = vpack.c.b16 %v917, %v913
        %v1086 = vpack.c.b16 %v918, %v914
        %v1087 = vpack.c.b16 %v923, %v919
        %v1088 = vpack.c.b16 %v924, %v920
        %v1089 = vpack.c.b16 %v925, %v921
        %v1090 = vpack.c.b16 %v926, %v922
        %v1091 = vpack.c.b16 %v931, %v927
        %v1092 = vpack.c.b16 %v932, %v928
        %v1093 = vpack.c.b16 %v933, %v929
        %v1094 = vpack.c.b16 %v934, %v930
        %v1095 = vpack.c.b16 %v939, %v935
        %v1096 = vpack.c.b16 %v940, %v936
        %v1097 = vpack.c.b16 %v941, %v937
        %v1098 = vpack.c.b16 %v942, %v938
        %v1099 = vpack.c.b16 %v947, %v943
        %v1100 = vpack.c.b16 %v948, %v944
        %v1101 = vpack.c.b16 %v949, %v945
        %v1102 = vpack.c.b16 %v950, %v946
        %v1103 = vpack.c.b16 %v955, %v951
        %v1104 = vpack.c.b16 %v956, %v952
        %v1105 = vpack.c.b16 %v957, %v953
        %v1106 = vpack.c.b16 %v958, %v954
        %v1107 = vpack.c.b16 %v963, %v959
        %v1108 = vpack.c.b16 %v964, %v960
        %v1109 = vpack.c.b16 %v965, %v961
        %v1110 = vpack.c.b16 %v966, %v962
        %v1111 = vpack.c.b16 %v971, %v967
        %v1112 = vpack.c.b16 %v972, %v968
        %v1113 = vpack.c.b16 %v973, %v969
        %v1114 = vpack.c.b16 %v974, %v970
        %v1115 = vpack.c.b16 %v979, %v975
        %v1116 = vpack.c.b16 %v980, %v976
        %v1117 = vpack.c.b16 %v981, %v977
        %v1118 = vpack.c.b16 %v982, %v978
        %v1119 = vpack.c.b16 %v987, %v983
        %v1120 = vpack.c.b16 %v988, %v984
        %v1121 = vpack.c.b16 %v989, %v985
        %v1122 = vpack.c.b16 %v990, %v986
        %v1123 = vpack.c.b16 %v995, %v991
        %v1124 = vpack.c.b16 %v996, %v992
        %v1125 = vpack.c.b16 %v997, %v993
        %v1126 = vpack.c.b16 %v998, %v994
        %1255 = vmatprep.subr.bf16.mxu0 %v1000
        %1256 = vmatpush1.bf16.msra.mxu0 %v999
        %1257 = vmatprep.subr.bf16.mxu0 %v1004
        %1258 = vmatpush1.bf16.msra.mxu0 %v1003
        %1259 = vmatprep.subr.bf16.mxu0 %v1008
        %1260 = vmatpush1.bf16.msra.mxu0 %v1007
        %1261 = vmatprep.subr.bf16.mxu0 %v1012
        %1262 = vmatpush1.bf16.msra.mxu0 %v1011
        %1263 = vmatprep.subr.bf16.mxu0 %v1016
        %1264 = vmatpush1.bf16.msra.mxu0 %v1015
        %1265 = vmatprep.subr.bf16.mxu0 %v1020
        %1266 = vmatpush1.bf16.msra.mxu0 %v1019
        %1267 = vmatprep.subr.bf16.mxu0 %v1024
        %1268 = vmatpush1.bf16.msra.mxu0 %v1023
        %1269 = vmatprep.subr.bf16.mxu0 %v1028
        %1270 = vmatpush1.bf16.msra.mxu0 %v1027
        %1271 = vmatprep.subr.bf16.mxu0 %v1032
        %1272 = vmatpush1.bf16.msra.mxu0 %v1031
        %1273 = vmatprep.subr.bf16.mxu0 %v1036
        %1274 = vmatpush1.bf16.msra.mxu0 %v1035
        %1275 = vmatprep.subr.bf16.mxu0 %v1040
        %1276 = vmatpush1.bf16.msra.mxu0 %v1039
        %1277 = vmatprep.subr.bf16.mxu0 %v1044
        %1278 = vmatpush1.bf16.msra.mxu0 %v1043
        %1279 = vmatprep.subr.bf16.mxu0 %v1048
        %1280 = vmatpush1.bf16.msra.mxu0 %v1047
        %1281 = vmatprep.subr.bf16.mxu0 %v1052
        %1282 = vmatpush1.bf16.msra.mxu0 %v1051
        %1283 = vmatprep.subr.bf16.mxu0 %v1056
        %1284 = vmatpush1.bf16.msra.mxu0 %v1055
        %1285 = vmatprep.subr.bf16.mxu0 %v1060
        %1286 = vmatpush1.bf16.msra.mxu0 %v1059
        %1287 = vmatprep.mubr.bf16.mxu0 %v453
        %1288 = vmatmul.mubr.bf16.gmra.mrb[0].mxu0 %v452
        %v1289 = vpop.f32.mrb[0].mxu0
        %v1290 = vadd.f32 %v602, %v1289
        %v1291 = vpop.f32.mrb[0].mxu0
        %v1292 = vadd.f32 %v606, %v1291
        %v1293 = vpop.f32.mrb[0].mxu0
        %v1294 = vadd.f32 %v602, %v1293
        %v1295 = vpop.f32.mrb[0].mxu0
        %v1296 = vadd.f32 %v606, %v1295
        %1297 = vmatprep.mubr.bf16.mxu0 %v457
        %1298 = vmatmul.mubr.bf16.gmra.mrb[0].mxu0 %v456
        %v1299 = vpop.f32.mrb[0].mxu0
        %v1300 = vadd.f32 %v602, %v1299
        %v1301 = vpop.f32.mrb[0].mxu0
        %v1302 = vadd.f32 %v606, %v1301
        %v1303 = vpop.f32.mrb[0].mxu0
        %v1304 = vadd.f32 %v602, %v1303
        %v1305 = vpop.f32.mrb[0].mxu0
        %v1306 = vadd.f32 %v606, %v1305
        %1307 = vmatprep.mubr.bf16.mxu0 %v461
        %1308 = vmatmul.mubr.bf16.gmra.mrb[0].mxu0 %v460
        %v1309 = vpop.f32.mrb[0].mxu0
        %v1310 = vadd.f32 %v602, %v1309
        %v1311 = vpop.f32.mrb[0].mxu0
        %v1312 = vadd.f32 %v606, %v1311
        %v1313 = vpop.f32.mrb[0].mxu0
        %v1314 = vadd.f32 %v602, %v1313
        %v1315 = vpop.f32.mrb[0].mxu0
        %v1316 = vadd.f32 %v606, %v1315
        %1317 = vmatprep.mubr.bf16.mxu0 %v465
        %1318 = vmatmul.mubr.bf16.gmra.mrb[0].mxu0 %v464
        %v1319 = vpop.f32.mrb[0].mxu0
        %v1320 = vadd.f32 %v602, %v1319
        %v1321 = vpop.f32.mrb[0].mxu0
        %v1322 = vadd.f32 %v606, %v1321
        %v1323 = vpop.f32.mrb[0].mxu0
        %v1324 = vadd.f32 %v602, %v1323
        %v1325 = vpop.f32.mrb[0].mxu0
        %v1326 = vadd.f32 %v606, %v1325
        %1327 = vdwg.mxu0
        %1328 = vmatprep.subr.bf16.mxu0 %v1064
        %1329 = vmatpush1.bf16.msra.mxu0 %v1063
        %1330 = vmatprep.subr.bf16.mxu0 %v1068
        %1331 = vmatpush1.bf16.msra.mxu0 %v1067
        %1332 = vmatprep.subr.bf16.mxu0 %v1072
        %1333 = vmatpush1.bf16.msra.mxu0 %v1071
        %1334 = vmatprep.subr.bf16.mxu0 %v1076
        %1335 = vmatpush1.bf16.msra.mxu0 %v1075
        %1336 = vmatprep.subr.bf16.mxu0 %v1080
        %1337 = vmatpush1.bf16.msra.mxu0 %v1079
        %1338 = vmatprep.subr.bf16.mxu0 %v1084
        %1339 = vmatpush1.bf16.msra.mxu0 %v1083
        %1340 = vmatprep.subr.bf16.mxu0 %v1088
        %1341 = vmatpush1.bf16.msra.mxu0 %v1087
        %1342 = vmatprep.subr.bf16.mxu0 %v1092
        %1343 = vmatpush1.bf16.msra.mxu0 %v1091
        %1344 = vmatprep.subr.bf16.mxu0 %v1096
        %1345 = vmatpush1.bf16.msra.mxu0 %v1095
        %1346 = vmatprep.subr.bf16.mxu0 %v1100
        %1347 = vmatpush1.bf16.msra.mxu0 %v1099
        %1348 = vmatprep.subr.bf16.mxu0 %v1104
        %1349 = vmatpush1.bf16.msra.mxu0 %v1103
        %1350 = vmatprep.subr.bf16.mxu0 %v1108
        %1351 = vmatpush1.bf16.msra.mxu0 %v1107
        %1352 = vmatprep.subr.bf16.mxu0 %v1112
        %1353 = vmatpush1.bf16.msra.mxu0 %v1111
        %1354 = vmatprep.subr.bf16.mxu0 %v1116
        %1355 = vmatpush1.bf16.msra.mxu0 %v1115
        %1356 = vmatprep.subr.bf16.mxu0 %v1120
        %1357 = vmatpush1.bf16.msra.mxu0 %v1119
        %1358 = vmatprep.subr.bf16.mxu0 %v1124
        %1359 = vmatpush1.bf16.msra.mxu0 %v1123
        %1360 = vmatprep.mubr.bf16.mxu0 %v455
        %1361 = vmatmul.mubr.bf16.gmra.mrb[0].mxu0 %v454
        %v1362 = vpop.f32.mrb[0].mxu0
        %v1363 = vadd.f32 %v1290, %v1362
        %v1364 = vpop.f32.mrb[0].mxu0
        %v1365 = vadd.f32 %v1292, %v1364
        %v1366 = vpop.f32.mrb[0].mxu0
        %v1367 = vadd.f32 %v1294, %v1366
        %v1368 = vpop.f32.mrb[0].mxu0
        %v1369 = vadd.f32 %v1296, %v1368
        %1370 = vmatprep.mubr.bf16.mxu0 %v459
        %1371 = vmatmul.mubr.bf16.gmra.mrb[0].mxu0 %v458
        %v1372 = vpop.f32.mrb[0].mxu0
        %v1373 = vadd.f32 %v1300, %v1372
        %v1374 = vpop.f32.mrb[0].mxu0
        %v1375 = vadd.f32 %v1302, %v1374
        %v1376 = vpop.f32.mrb[0].mxu0
        %v1377 = vadd.f32 %v1304, %v1376
        %v1378 = vpop.f32.mrb[0].mxu0
        %v1379 = vadd.f32 %v1306, %v1378
        %1380 = vmatprep.mubr.bf16.mxu0 %v463
        %1381 = vmatmul.mubr.bf16.gmra.mrb[0].mxu0 %v462
        %v1382 = vpop.f32.mrb[0].mxu0
        %v1383 = vadd.f32 %v1310, %v1382
        %v1384 = vpop.f32.mrb[0].mxu0
        %v1385 = vadd.f32 %v1312, %v1384
        %v1386 = vpop.f32.mrb[0].mxu0
        %v1387 = vadd.f32 %v1314, %v1386
        %v1388 = vpop.f32.mrb[0].mxu0
        %v1389 = vadd.f32 %v1316, %v1388
        %1390 = vmatprep.mubr.bf16.mxu0 %v467
        %1391 = vmatmul.mubr.bf16.gmra.mrb[0].mxu0 %v466
        %v1392 = vpop.f32.mrb[0].mxu0
        %v1393 = vadd.f32 %v1320, %v1392
        %v1394 = vpop.f32.mrb[0].mxu0
        %v1395 = vadd.f32 %v1322, %v1394
        %v1396 = vpop.f32.mrb[0].mxu0
        %v1397 = vadd.f32 %v1324, %v1396
        %v1398 = vpop.f32.mrb[0].mxu0
        %v1399 = vadd.f32 %v1326, %v1398
        %1400 = vdwg.mxu0
        %1401 = vmatprep.subr.bf16.mxu0 %v1002
        %1402 = vmatpush1.bf16.msra.mxu0 %v1001
        %1403 = vmatprep.subr.bf16.mxu0 %v1006
        %1404 = vmatpush1.bf16.msra.mxu0 %v1005
        %1405 = vmatprep.subr.bf16.mxu0 %v1010
        %1406 = vmatpush1.bf16.msra.mxu0 %v1009
        %1407 = vmatprep.subr.bf16.mxu0 %v1014
        %1408 = vmatpush1.bf16.msra.mxu0 %v1013
        %1409 = vmatprep.subr.bf16.mxu0 %v1018
        %1410 = vmatpush1.bf16.msra.mxu0 %v1017
        %1411 = vmatprep.subr.bf16.mxu0 %v1022
        %1412 = vmatpush1.bf16.msra.mxu0 %v1021
        %1413 = vmatprep.subr.bf16.mxu0 %v1026
        %1414 = vmatpush1.bf16.msra.mxu0 %v1025
        %1415 = vmatprep.subr.bf16.mxu0 %v1030
        %1416 = vmatpush1.bf16.msra.mxu0 %v1029
        %1417 = vmatprep.subr.bf16.mxu0 %v1034
        %1418 = vmatpush1.bf16.msra.mxu0 %v1033
        %1419 = vmatprep.subr.bf16.mxu0 %v1038
        %1420 = vmatpush1.bf16.msra.mxu0 %v1037
        %1421 = vmatprep.subr.bf16.mxu0 %v1042
        %1422 = vmatpush1.bf16.msra.mxu0 %v1041
        %1423 = vmatprep.subr.bf16.mxu0 %v1046
        %1424 = vmatpush1.bf16.msra.mxu0 %v1045
        %1425 = vmatprep.subr.bf16.mxu0 %v1050
        %1426 = vmatpush1.bf16.msra.mxu0 %v1049
        %1427 = vmatprep.subr.bf16.mxu0 %v1054
        %1428 = vmatpush1.bf16.msra.mxu0 %v1053
        %1429 = vmatprep.subr.bf16.mxu0 %v1058
        %1430 = vmatpush1.bf16.msra.mxu0 %v1057
        %1431 = vmatprep.subr.bf16.mxu0 %v1062
        %1432 = vmatpush1.bf16.msra.mxu0 %v1061
        %1433 = vmatprep.mubr.bf16.mxu0 %v453
        %1434 = vmatmul.mubr.bf16.gmra.mrb[0].mxu0 %v452
        %v1435 = vpop.f32.mrb[0].mxu0
        %v1436 = vadd.f32 %v610, %v1435
        %v1437 = vpop.f32.mrb[0].mxu0
        %v1438 = vadd.f32 %v614, %v1437
        %v1439 = vpop.f32.mrb[0].mxu0
        %v1440 = vadd.f32 %v610, %v1439
        %v1441 = vpop.f32.mrb[0].mxu0
        %v1442 = vadd.f32 %v614, %v1441
        %1443 = vmatprep.mubr.bf16.mxu0 %v457
        %1444 = vmatmul.mubr.bf16.gmra.mrb[0].mxu0 %v456
        %v1445 = vpop.f32.mrb[0].mxu0
        %v1446 = vadd.f32 %v610, %v1445
        %v1447 = vpop.f32.mrb[0].mxu0
        %v1448 = vadd.f32 %v614, %v1447
        %v1449 = vpop.f32.mrb[0].mxu0
        %v1450 = vadd.f32 %v610, %v1449
        %v1451 = vpop.f32.mrb[0].mxu0
        %v1452 = vadd.f32 %v614, %v1451
        %1453 = vmatprep.mubr.bf16.mxu0 %v461
        %1454 = vmatmul.mubr.bf16.gmra.mrb[0].mxu0 %v460
        %v1455 = vpop.f32.mrb[0].mxu0
        %v1456 = vadd.f32 %v610, %v1455
        %v1457 = vpop.f32.mrb[0].mxu0
        %v1458 = vadd.f32 %v614, %v1457
        %v1459 = vpop.f32.mrb[0].mxu0
        %v1460 = vadd.f32 %v610, %v1459
        %v1461 = vpop.f32.mrb[0].mxu0
        %v1462 = vadd.f32 %v614, %v1461
        %1463 = vmatprep.mubr.bf16.mxu0 %v465
        %1464 = vmatmul.mubr.bf16.gmra.mrb[0].mxu0 %v464
        %v1465 = vpop.f32.mrb[0].mxu0
        %v1466 = vadd.f32 %v610, %v1465
        %v1467 = vpop.f32.mrb[0].mxu0
        %v1468 = vadd.f32 %v614, %v1467
        %v1469 = vpop.f32.mrb[0].mxu0
        %v1470 = vadd.f32 %v610, %v1469
        %v1471 = vpop.f32.mrb[0].mxu0
        %v1472 = vadd.f32 %v614, %v1471
        %1473 = vdwg.mxu0
        %1474 = vmatprep.subr.bf16.mxu0 %v1066
        %1475 = vmatpush1.bf16.msra.mxu0 %v1065
        %1476 = vmatprep.subr.bf16.mxu0 %v1070
        %1477 = vmatpush1.bf16.msra.mxu0 %v1069
        %1478 = vmatprep.subr.bf16.mxu0 %v1074
        %1479 = vmatpush1.bf16.msra.mxu0 %v1073
        %1480 = vmatprep.subr.bf16.mxu0 %v1078
        %1481 = vmatpush1.bf16.msra.mxu0 %v1077
        %1482 = vmatprep.subr.bf16.mxu0 %v1082
        %1483 = vmatpush1.bf16.msra.mxu0 %v1081
        %1484 = vmatprep.subr.bf16.mxu0 %v1086
        %1485 = vmatpush1.bf16.msra.mxu0 %v1085
        %1486 = vmatprep.subr.bf16.mxu0 %v1090
        %1487 = vmatpush1.bf16.msra.mxu0 %v1089
        %1488 = vmatprep.subr.bf16.mxu0 %v1094
        %1489 = vmatpush1.bf16.msra.mxu0 %v1093
        %1490 = vmatprep.subr.bf16.mxu0 %v1098
        %1491 = vmatpush1.bf16.msra.mxu0 %v1097
        %1492 = vmatprep.subr.bf16.mxu0 %v1102
        %1493 = vmatpush1.bf16.msra.mxu0 %v1101
        %1494 = vmatprep.subr.bf16.mxu0 %v1106
        %1495 = vmatpush1.bf16.msra.mxu0 %v1105
        %1496 = vmatprep.subr.bf16.mxu0 %v1110
        %1497 = vmatpush1.bf16.msra.mxu0 %v1109
        %1498 = vmatprep.subr.bf16.mxu0 %v1114
        %1499 = vmatpush1.bf16.msra.mxu0 %v1113
        %1500 = vmatprep.subr.bf16.mxu0 %v1118
        %1501 = vmatpush1.bf16.msra.mxu0 %v1117
        %1502 = vmatprep.subr.bf16.mxu0 %v1122
        %1503 = vmatpush1.bf16.msra.mxu0 %v1121
        %1504 = vmatprep.subr.bf16.mxu0 %v1126
        %1505 = vmatpush1.bf16.msra.mxu0 %v1125
        %1506 = vmatprep.mubr.bf16.mxu0 %v455
        %1507 = vmatmul.mubr.bf16.gmra.mrb[0].mxu0 %v454
        %v1508 = vpop.f32.mrb[0].mxu0
        %v1509 = vadd.f32 %v1436, %v1508
        %v1510 = vpop.f32.mrb[0].mxu0
        %v1511 = vadd.f32 %v1438, %v1510
        %v1512 = vpop.f32.mrb[0].mxu0
        %v1513 = vadd.f32 %v1440, %v1512
        %v1514 = vpop.f32.mrb[0].mxu0
        %v1515 = vadd.f32 %v1442, %v1514
        %1516 = vmatprep.mubr.bf16.mxu0 %v459
        %1517 = vmatmul.mubr.bf16.gmra.mrb[0].mxu0 %v458
        %v1518 = vpop.f32.mrb[0].mxu0
        %v1519 = vadd.f32 %v1446, %v1518
        %v1520 = vpop.f32.mrb[0].mxu0
        %v1521 = vadd.f32 %v1448, %v1520
        %v1522 = vpop.f32.mrb[0].mxu0
        %v1523 = vadd.f32 %v1450, %v1522
        %v1524 = vpop.f32.mrb[0].mxu0
        %v1525 = vadd.f32 %v1452, %v1524
        %1526 = vmatprep.mubr.bf16.mxu0 %v463
        %1527 = vmatmul.mubr.bf16.gmra.mrb[0].mxu0 %v462
        %v1528 = vpop.f32.mrb[0].mxu0
        %v1529 = vadd.f32 %v1456, %v1528
        %v1530 = vpop.f32.mrb[0].mxu0
        %v1531 = vadd.f32 %v1458, %v1530
        %v1532 = vpop.f32.mrb[0].mxu0
        %v1533 = vadd.f32 %v1460, %v1532
        %v1534 = vpop.f32.mrb[0].mxu0
        %v1535 = vadd.f32 %v1462, %v1534
        %1536 = vmatprep.mubr.bf16.mxu0 %v467
        %1537 = vmatmul.mubr.bf16.gmra.mrb[0].mxu0 %v466
        %v1538 = vpop.f32.mrb[0].mxu0
        %v1539 = vadd.f32 %v1466, %v1538
        %v1540 = vpop.f32.mrb[0].mxu0
        %v1541 = vadd.f32 %v1468, %v1540
        %v1542 = vpop.f32.mrb[0].mxu0
        %v1543 = vadd.f32 %v1470, %v1542
        %v1544 = vpop.f32.mrb[0].mxu0
        %v1545 = vadd.f32 %v1472, %v1544
        %1546 = vdwg.mxu0
        %v1547 = vpack.c.bf16 %v1367, %v1363
        %v1548 = vpack.c.bf16 %v1369, %v1365
        %v1549 = vpack.c.bf16 %v1513, %v1509
        %v1550 = vpack.c.bf16 %v1515, %v1511
        %v1551 = vpack.c.bf16 %v1377, %v1373
        %v1552 = vpack.c.bf16 %v1379, %v1375
        %v1553 = vpack.c.bf16 %v1523, %v1519
        %v1554 = vpack.c.bf16 %v1525, %v1521
        %v1555 = vpack.c.bf16 %v1387, %v1383
        %v1556 = vpack.c.bf16 %v1389, %v1385
        %v1557 = vpack.c.bf16 %v1533, %v1529
        %v1558 = vpack.c.bf16 %v1535, %v1531
        %v1559 = vpack.c.bf16 %v1397, %v1393
        %v1560 = vpack.c.bf16 %v1399, %v1395
        %v1561 = vpack.c.bf16 %v1543, %v1539
        %v1562 = vpack.c.bf16 %v1545, %v1541
        %v1579 = vunpack.c.l.b16 %v1547
        %v1580 = vunpack.c.l.b16 %v1548
        %v1581 = vunpack.c.l.b16 %v1549
        %v1582 = vunpack.c.l.b16 %v1550
        %v1583 = vunpack.c.h.b16 %v1547
        %v1584 = vunpack.c.h.b16 %v1548
        %v1585 = vunpack.c.h.b16 %v1549
        %v1586 = vunpack.c.h.b16 %v1550
        %v1587 = vunpack.c.l.b16 %v1551
        %v1588 = vunpack.c.l.b16 %v1552
        %v1589 = vunpack.c.l.b16 %v1553
        %v1590 = vunpack.c.l.b16 %v1554
        %v1591 = vunpack.c.h.b16 %v1551
        %v1592 = vunpack.c.h.b16 %v1552
        %v1593 = vunpack.c.h.b16 %v1553
        %v1594 = vunpack.c.h.b16 %v1554
        %v1595 = vunpack.c.l.b16 %v1555
        %v1596 = vunpack.c.l.b16 %v1556
        %v1597 = vunpack.c.l.b16 %v1557
        %v1598 = vunpack.c.l.b16 %v1558
        %v1599 = vunpack.c.h.b16 %v1555
        %v1600 = vunpack.c.h.b16 %v1556
        %v1601 = vunpack.c.h.b16 %v1557
        %v1602 = vunpack.c.h.b16 %v1558
        %v1603 = vunpack.c.l.b16 %v1559
        %v1604 = vunpack.c.l.b16 %v1560
        %v1605 = vunpack.c.l.b16 %v1561
        %v1606 = vunpack.c.l.b16 %v1562
        %v1607 = vunpack.c.h.b16 %v1559
        %v1608 = vunpack.c.h.b16 %v1560
        %v1609 = vunpack.c.h.b16 %v1561
        %v1610 = vunpack.c.h.b16 %v1562
        %v1611 = vpack.c.b16 %v1580, %v1579
        %v1612 = vpack.c.b16 %v1582, %v1581
        %v1613 = vpack.c.b16 %v1584, %v1583
        %v1614 = vpack.c.b16 %v1586, %v1585
        %v1615 = vpack.c.b16 %v1588, %v1587
        %v1616 = vpack.c.b16 %v1590, %v1589
        %v1617 = vpack.c.b16 %v1592, %v1591
        %v1618 = vpack.c.b16 %v1594, %v1593
        %v1619 = vpack.c.b16 %v1596, %v1595
        %v1620 = vpack.c.b16 %v1598, %v1597
        %v1621 = vpack.c.b16 %v1600, %v1599
        %v1622 = vpack.c.b16 %v1602, %v1601
        %v1623 = vpack.c.b16 %v1604, %v1603
        %v1624 = vpack.c.b16 %v1606, %v1605
        %v1625 = vpack.c.b16 %v1608, %v1607
        %v1626 = vpack.c.b16 %v1610, %v1609
        %v1643 = vld [vmem:[#allocation6] sm:$0xff]
        %v1644 = vld [vmem:[#allocation6 + $0x8] sm:$0xff]
        %v1645 = vld [vmem:[#allocation6 + $0x10] sm:$0xff]
        %v1646 = vld [vmem:[#allocation6 + $0x18] sm:$0xff]
        %v1647 = vld [vmem:[#allocation6 + $0x20] sm:$0xff]
        %v1648 = vld [vmem:[#allocation6 + $0x28] sm:$0xff]
        %v1649 = vld [vmem:[#allocation6 + $0x30] sm:$0xff]
        %v1650 = vld [vmem:[#allocation6 + $0x38] sm:$0xff]
        %v1651 = vld [vmem:[#allocation6 + $0x40] sm:$0xff]
        %v1652 = vld [vmem:[#allocation6 + $0x48] sm:$0xff]
        %v1653 = vld [vmem:[#allocation6 + $0x50] sm:$0xff]
        %v1654 = vld [vmem:[#allocation6 + $0x58] sm:$0xff]
        %v1655 = vld [vmem:[#allocation6 + $0x60] sm:$0xff]
        %v1656 = vld [vmem:[#allocation6 + $0x68] sm:$0xff]
        %v1657 = vld [vmem:[#allocation6 + $0x70] sm:$0xff]
        %v1658 = vld [vmem:[#allocation6 + $0x78] sm:$0xff]
        %v1659 = vld [vmem:[#allocation6 + $0x80] sm:$0xff]
        %v1660 = vld [vmem:[#allocation6 + $0x88] sm:$0xff]
        %v1661 = vld [vmem:[#allocation6 + $0x90] sm:$0xff]
        %v1662 = vld [vmem:[#allocation6 + $0x98] sm:$0xff]
        %v1663 = vld [vmem:[#allocation6 + $0xa0] sm:$0xff]
        %v1664 = vld [vmem:[#allocation6 + $0xa8] sm:$0xff]
        %v1665 = vld [vmem:[#allocation6 + $0xb0] sm:$0xff]
        %v1666 = vld [vmem:[#allocation6 + $0xb8] sm:$0xff]
        %v1667 = vld [vmem:[#allocation6 + $0xc0] sm:$0xff]
        %v1668 = vld [vmem:[#allocation6 + $0xc8] sm:$0xff]
        %v1669 = vld [vmem:[#allocation6 + $0xd0] sm:$0xff]
        %v1670 = vld [vmem:[#allocation6 + $0xd8] sm:$0xff]
        %v1671 = vld [vmem:[#allocation6 + $0xe0] sm:$0xff]
        %v1672 = vld [vmem:[#allocation6 + $0xe8] sm:$0xff]
        %v1673 = vld [vmem:[#allocation6 + $0xf0] sm:$0xff]
        %v1674 = vld [vmem:[#allocation6 + $0xf8] sm:$0xff]
        %v1675 = vpack.c.bf16 %v1647, %v1643
        %v1676 = vpack.c.bf16 %v1648, %v1644
        %v1677 = vpack.c.bf16 %v1649, %v1645
        %v1678 = vpack.c.bf16 %v1650, %v1646
        %v1679 = vpack.c.bf16 %v1655, %v1651
        %v1680 = vpack.c.bf16 %v1656, %v1652
        %v1681 = vpack.c.bf16 %v1657, %v1653
        %v1682 = vpack.c.bf16 %v1658, %v1654
        %v1683 = vpack.c.bf16 %v1663, %v1659
        %v1684 = vpack.c.bf16 %v1664, %v1660
        %v1685 = vpack.c.bf16 %v1665, %v1661
        %v1686 = vpack.c.bf16 %v1666, %v1662
        %v1687 = vpack.c.bf16 %v1671, %v1667
        %v1688 = vpack.c.bf16 %v1672, %v1668
        %v1689 = vpack.c.bf16 %v1673, %v1669
        %v1690 = vpack.c.bf16 %v1674, %v1670
        %s1691 = smul.u32 %s27, 512
        %s1692 = smul.addr %s1691, 4
        %s1693 = scalar_lea.vmem [#allocation9], %s1692
        %v1694 = vld [vmem:[%s1693] sm:$0xff]
        %v1695 = vld [vmem:[%s1693 + $0x8] sm:$0xff]
        %v1696 = vld [vmem:[%s1693 + $0x10] sm:$0xff]
        %v1697 = vld [vmem:[%s1693 + $0x18] sm:$0xff]
        %v1698 = vld [vmem:[%s1693 + $0x20] sm:$0xff]
        %v1699 = vld [vmem:[%s1693 + $0x28] sm:$0xff]
        %v1700 = vld [vmem:[%s1693 + $0x30] sm:$0xff]
        %v1701 = vld [vmem:[%s1693 + $0x38] sm:$0xff]
        %v1702 = vld [vmem:[%s1693 + $0x40] sm:$0xff]
        %v1703 = vld [vmem:[%s1693 + $0x48] sm:$0xff]
        %v1704 = vld [vmem:[%s1693 + $0x50] sm:$0xff]
        %v1705 = vld [vmem:[%s1693 + $0x58] sm:$0xff]
        %v1706 = vld [vmem:[%s1693 + $0x60] sm:$0xff]
        %v1707 = vld [vmem:[%s1693 + $0x68] sm:$0xff]
        %v1708 = vld [vmem:[%s1693 + $0x70] sm:$0xff]
        %v1709 = vld [vmem:[%s1693 + $0x78] sm:$0xff]
        %v1710 = vld [vmem:[%s1693 + $0x80] sm:$0xff]
        %v1711 = vld [vmem:[%s1693 + $0x88] sm:$0xff]
        %v1712 = vld [vmem:[%s1693 + $0x90] sm:$0xff]
        %v1713 = vld [vmem:[%s1693 + $0x98] sm:$0xff]
        %v1714 = vld [vmem:[%s1693 + $0xa0] sm:$0xff]
        %v1715 = vld [vmem:[%s1693 + $0xa8] sm:$0xff]
        %v1716 = vld [vmem:[%s1693 + $0xb0] sm:$0xff]
        %v1717 = vld [vmem:[%s1693 + $0xb8] sm:$0xff]
        %v1718 = vld [vmem:[%s1693 + $0xc0] sm:$0xff]
        %v1719 = vld [vmem:[%s1693 + $0xc8] sm:$0xff]
        %v1720 = vld [vmem:[%s1693 + $0xd0] sm:$0xff]
        %v1721 = vld [vmem:[%s1693 + $0xd8] sm:$0xff]
        %v1722 = vld [vmem:[%s1693 + $0xe0] sm:$0xff]
        %v1723 = vld [vmem:[%s1693 + $0xe8] sm:$0xff]
        %v1724 = vld [vmem:[%s1693 + $0xf0] sm:$0xff]
        %v1725 = vld [vmem:[%s1693 + $0xf8] sm:$0xff]
        %v1726 = vld [vmem:[%s1693 + $0x100] sm:$0xff]
        %v1727 = vld [vmem:[%s1693 + $0x108] sm:$0xff]
        %v1728 = vld [vmem:[%s1693 + $0x110] sm:$0xff]
        %v1729 = vld [vmem:[%s1693 + $0x118] sm:$0xff]
        %v1730 = vld [vmem:[%s1693 + $0x120] sm:$0xff]
        %v1731 = vld [vmem:[%s1693 + $0x128] sm:$0xff]
        %v1732 = vld [vmem:[%s1693 + $0x130] sm:$0xff]
        %v1733 = vld [vmem:[%s1693 + $0x138] sm:$0xff]
        %v1734 = vld [vmem:[%s1693 + $0x140] sm:$0xff]
        %v1735 = vld [vmem:[%s1693 + $0x148] sm:$0xff]
        %v1736 = vld [vmem:[%s1693 + $0x150] sm:$0xff]
        %v1737 = vld [vmem:[%s1693 + $0x158] sm:$0xff]
        %v1738 = vld [vmem:[%s1693 + $0x160] sm:$0xff]
        %v1739 = vld [vmem:[%s1693 + $0x168] sm:$0xff]
        %v1740 = vld [vmem:[%s1693 + $0x170] sm:$0xff]
        %v1741 = vld [vmem:[%s1693 + $0x178] sm:$0xff]
        %v1742 = vld [vmem:[%s1693 + $0x180] sm:$0xff]
        %v1743 = vld [vmem:[%s1693 + $0x188] sm:$0xff]
        %v1744 = vld [vmem:[%s1693 + $0x190] sm:$0xff]
        %v1745 = vld [vmem:[%s1693 + $0x198] sm:$0xff]
        %v1746 = vld [vmem:[%s1693 + $0x1a0] sm:$0xff]
        %v1747 = vld [vmem:[%s1693 + $0x1a8] sm:$0xff]
        %v1748 = vld [vmem:[%s1693 + $0x1b0] sm:$0xff]
        %v1749 = vld [vmem:[%s1693 + $0x1b8] sm:$0xff]
        %v1750 = vld [vmem:[%s1693 + $0x1c0] sm:$0xff]
        %v1751 = vld [vmem:[%s1693 + $0x1c8] sm:$0xff]
        %v1752 = vld [vmem:[%s1693 + $0x1d0] sm:$0xff]
        %v1753 = vld [vmem:[%s1693 + $0x1d8] sm:$0xff]
        %v1754 = vld [vmem:[%s1693 + $0x1e0] sm:$0xff]
        %v1755 = vld [vmem:[%s1693 + $0x1e8] sm:$0xff]
        %v1756 = vld [vmem:[%s1693 + $0x1f0] sm:$0xff]
        %v1757 = vld [vmem:[%s1693 + $0x1f8] sm:$0xff]
        %v1758 = vld [vmem:[%s1693 + $0x200] sm:$0xff]
        %v1759 = vld [vmem:[%s1693 + $0x208] sm:$0xff]
        %v1760 = vld [vmem:[%s1693 + $0x210] sm:$0xff]
        %v1761 = vld [vmem:[%s1693 + $0x218] sm:$0xff]
        %v1762 = vld [vmem:[%s1693 + $0x220] sm:$0xff]
        %v1763 = vld [vmem:[%s1693 + $0x228] sm:$0xff]
        %v1764 = vld [vmem:[%s1693 + $0x230] sm:$0xff]
        %v1765 = vld [vmem:[%s1693 + $0x238] sm:$0xff]
        %v1766 = vld [vmem:[%s1693 + $0x240] sm:$0xff]
        %v1767 = vld [vmem:[%s1693 + $0x248] sm:$0xff]
        %v1768 = vld [vmem:[%s1693 + $0x250] sm:$0xff]
        %v1769 = vld [vmem:[%s1693 + $0x258] sm:$0xff]
        %v1770 = vld [vmem:[%s1693 + $0x260] sm:$0xff]
        %v1771 = vld [vmem:[%s1693 + $0x268] sm:$0xff]
        %v1772 = vld [vmem:[%s1693 + $0x270] sm:$0xff]
        %v1773 = vld [vmem:[%s1693 + $0x278] sm:$0xff]
        %v1774 = vld [vmem:[%s1693 + $0x280] sm:$0xff]
        %v1775 = vld [vmem:[%s1693 + $0x288] sm:$0xff]
        %v1776 = vld [vmem:[%s1693 + $0x290] sm:$0xff]
        %v1777 = vld [vmem:[%s1693 + $0x298] sm:$0xff]
        %v1778 = vld [vmem:[%s1693 + $0x2a0] sm:$0xff]
        %v1779 = vld [vmem:[%s1693 + $0x2a8] sm:$0xff]
        %v1780 = vld [vmem:[%s1693 + $0x2b0] sm:$0xff]
        %v1781 = vld [vmem:[%s1693 + $0x2b8] sm:$0xff]
        %v1782 = vld [vmem:[%s1693 + $0x2c0] sm:$0xff]
        %v1783 = vld [vmem:[%s1693 + $0x2c8] sm:$0xff]
        %v1784 = vld [vmem:[%s1693 + $0x2d0] sm:$0xff]
        %v1785 = vld [vmem:[%s1693 + $0x2d8] sm:$0xff]
        %v1786 = vld [vmem:[%s1693 + $0x2e0] sm:$0xff]
        %v1787 = vld [vmem:[%s1693 + $0x2e8] sm:$0xff]
        %v1788 = vld [vmem:[%s1693 + $0x2f0] sm:$0xff]
        %v1789 = vld [vmem:[%s1693 + $0x2f8] sm:$0xff]
        %v1790 = vld [vmem:[%s1693 + $0x300] sm:$0xff]
        %v1791 = vld [vmem:[%s1693 + $0x308] sm:$0xff]
        %v1792 = vld [vmem:[%s1693 + $0x310] sm:$0xff]
        %v1793 = vld [vmem:[%s1693 + $0x318] sm:$0xff]
        %v1794 = vld [vmem:[%s1693 + $0x320] sm:$0xff]
        %v1795 = vld [vmem:[%s1693 + $0x328] sm:$0xff]
        %v1796 = vld [vmem:[%s1693 + $0x330] sm:$0xff]
        %v1797 = vld [vmem:[%s1693 + $0x338] sm:$0xff]
        %v1798 = vld [vmem:[%s1693 + $0x340] sm:$0xff]
        %v1799 = vld [vmem:[%s1693 + $0x348] sm:$0xff]
        %v1800 = vld [vmem:[%s1693 + $0x350] sm:$0xff]
        %v1801 = vld [vmem:[%s1693 + $0x358] sm:$0xff]
        %v1802 = vld [vmem:[%s1693 + $0x360] sm:$0xff]
        %v1803 = vld [vmem:[%s1693 + $0x368] sm:$0xff]
        %v1804 = vld [vmem:[%s1693 + $0x370] sm:$0xff]
        %v1805 = vld [vmem:[%s1693 + $0x378] sm:$0xff]
        %v1806 = vld [vmem:[%s1693 + $0x380] sm:$0xff]
        %v1807 = vld [vmem:[%s1693 + $0x388] sm:$0xff]
        %v1808 = vld [vmem:[%s1693 + $0x390] sm:$0xff]
        %v1809 = vld [vmem:[%s1693 + $0x398] sm:$0xff]
        %v1810 = vld [vmem:[%s1693 + $0x3a0] sm:$0xff]
        %v1811 = vld [vmem:[%s1693 + $0x3a8] sm:$0xff]
        %v1812 = vld [vmem:[%s1693 + $0x3b0] sm:$0xff]
        %v1813 = vld [vmem:[%s1693 + $0x3b8] sm:$0xff]
        %v1814 = vld [vmem:[%s1693 + $0x3c0] sm:$0xff]
        %v1815 = vld [vmem:[%s1693 + $0x3c8] sm:$0xff]
        %v1816 = vld [vmem:[%s1693 + $0x3d0] sm:$0xff]
        %v1817 = vld [vmem:[%s1693 + $0x3d8] sm:$0xff]
        %v1818 = vld [vmem:[%s1693 + $0x3e0] sm:$0xff]
        %v1819 = vld [vmem:[%s1693 + $0x3e8] sm:$0xff]
        %v1820 = vld [vmem:[%s1693 + $0x3f0] sm:$0xff]
        %v1821 = vld [vmem:[%s1693 + $0x3f8] sm:$0xff]
        %v1822 = vld [vmem:[%s1693 + $0x400] sm:$0xff]
        %v1823 = vld [vmem:[%s1693 + $0x408] sm:$0xff]
        %v1824 = vld [vmem:[%s1693 + $0x410] sm:$0xff]
        %v1825 = vld [vmem:[%s1693 + $0x418] sm:$0xff]
        %v1826 = vld [vmem:[%s1693 + $0x420] sm:$0xff]
        %v1827 = vld [vmem:[%s1693 + $0x428] sm:$0xff]
        %v1828 = vld [vmem:[%s1693 + $0x430] sm:$0xff]
        %v1829 = vld [vmem:[%s1693 + $0x438] sm:$0xff]
        %v1830 = vld [vmem:[%s1693 + $0x440] sm:$0xff]
        %v1831 = vld [vmem:[%s1693 + $0x448] sm:$0xff]
        %v1832 = vld [vmem:[%s1693 + $0x450] sm:$0xff]
        %v1833 = vld [vmem:[%s1693 + $0x458] sm:$0xff]
        %v1834 = vld [vmem:[%s1693 + $0x460] sm:$0xff]
        %v1835 = vld [vmem:[%s1693 + $0x468] sm:$0xff]
        %v1836 = vld [vmem:[%s1693 + $0x470] sm:$0xff]
        %v1837 = vld [vmem:[%s1693 + $0x478] sm:$0xff]
        %v1838 = vld [vmem:[%s1693 + $0x480] sm:$0xff]
        %v1839 = vld [vmem:[%s1693 + $0x488] sm:$0xff]
        %v1840 = vld [vmem:[%s1693 + $0x490] sm:$0xff]
        %v1841 = vld [vmem:[%s1693 + $0x498] sm:$0xff]
        %v1842 = vld [vmem:[%s1693 + $0x4a0] sm:$0xff]
        %v1843 = vld [vmem:[%s1693 + $0x4a8] sm:$0xff]
        %v1844 = vld [vmem:[%s1693 + $0x4b0] sm:$0xff]
        %v1845 = vld [vmem:[%s1693 + $0x4b8] sm:$0xff]
        %v1846 = vld [vmem:[%s1693 + $0x4c0] sm:$0xff]
        %v1847 = vld [vmem:[%s1693 + $0x4c8] sm:$0xff]
        %v1848 = vld [vmem:[%s1693 + $0x4d0] sm:$0xff]
        %v1849 = vld [vmem:[%s1693 + $0x4d8] sm:$0xff]
        %v1850 = vld [vmem:[%s1693 + $0x4e0] sm:$0xff]
        %v1851 = vld [vmem:[%s1693 + $0x4e8] sm:$0xff]
        %v1852 = vld [vmem:[%s1693 + $0x4f0] sm:$0xff]
        %v1853 = vld [vmem:[%s1693 + $0x4f8] sm:$0xff]
        %v1854 = vld [vmem:[%s1693 + $0x500] sm:$0xff]
        %v1855 = vld [vmem:[%s1693 + $0x508] sm:$0xff]
        %v1856 = vld [vmem:[%s1693 + $0x510] sm:$0xff]
        %v1857 = vld [vmem:[%s1693 + $0x518] sm:$0xff]
        %v1858 = vld [vmem:[%s1693 + $0x520] sm:$0xff]
        %v1859 = vld [vmem:[%s1693 + $0x528] sm:$0xff]
        %v1860 = vld [vmem:[%s1693 + $0x530] sm:$0xff]
        %v1861 = vld [vmem:[%s1693 + $0x538] sm:$0xff]
        %v1862 = vld [vmem:[%s1693 + $0x540] sm:$0xff]
        %v1863 = vld [vmem:[%s1693 + $0x548] sm:$0xff]
        %v1864 = vld [vmem:[%s1693 + $0x550] sm:$0xff]
        %v1865 = vld [vmem:[%s1693 + $0x558] sm:$0xff]
        %v1866 = vld [vmem:[%s1693 + $0x560] sm:$0xff]
        %v1867 = vld [vmem:[%s1693 + $0x568] sm:$0xff]
        %v1868 = vld [vmem:[%s1693 + $0x570] sm:$0xff]
        %v1869 = vld [vmem:[%s1693 + $0x578] sm:$0xff]
        %v1870 = vld [vmem:[%s1693 + $0x580] sm:$0xff]
        %v1871 = vld [vmem:[%s1693 + $0x588] sm:$0xff]
        %v1872 = vld [vmem:[%s1693 + $0x590] sm:$0xff]
        %v1873 = vld [vmem:[%s1693 + $0x598] sm:$0xff]
        %v1874 = vld [vmem:[%s1693 + $0x5a0] sm:$0xff]
        %v1875 = vld [vmem:[%s1693 + $0x5a8] sm:$0xff]
        %v1876 = vld [vmem:[%s1693 + $0x5b0] sm:$0xff]
        %v1877 = vld [vmem:[%s1693 + $0x5b8] sm:$0xff]
        %v1878 = vld [vmem:[%s1693 + $0x5c0] sm:$0xff]
        %v1879 = vld [vmem:[%s1693 + $0x5c8] sm:$0xff]
        %v1880 = vld [vmem:[%s1693 + $0x5d0] sm:$0xff]
        %v1881 = vld [vmem:[%s1693 + $0x5d8] sm:$0xff]
        %v1882 = vld [vmem:[%s1693 + $0x5e0] sm:$0xff]
        %v1883 = vld [vmem:[%s1693 + $0x5e8] sm:$0xff]
        %v1884 = vld [vmem:[%s1693 + $0x5f0] sm:$0xff]
        %v1885 = vld [vmem:[%s1693 + $0x5f8] sm:$0xff]
        %v1886 = vld [vmem:[%s1693 + $0x600] sm:$0xff]
        %v1887 = vld [vmem:[%s1693 + $0x608] sm:$0xff]
        %v1888 = vld [vmem:[%s1693 + $0x610] sm:$0xff]
        %v1889 = vld [vmem:[%s1693 + $0x618] sm:$0xff]
        %v1890 = vld [vmem:[%s1693 + $0x620] sm:$0xff]
        %v1891 = vld [vmem:[%s1693 + $0x628] sm:$0xff]
        %v1892 = vld [vmem:[%s1693 + $0x630] sm:$0xff]
        %v1893 = vld [vmem:[%s1693 + $0x638] sm:$0xff]
        %v1894 = vld [vmem:[%s1693 + $0x640] sm:$0xff]
        %v1895 = vld [vmem:[%s1693 + $0x648] sm:$0xff]
        %v1896 = vld [vmem:[%s1693 + $0x650] sm:$0xff]
        %v1897 = vld [vmem:[%s1693 + $0x658] sm:$0xff]
        %v1898 = vld [vmem:[%s1693 + $0x660] sm:$0xff]
        %v1899 = vld [vmem:[%s1693 + $0x668] sm:$0xff]
        %v1900 = vld [vmem:[%s1693 + $0x670] sm:$0xff]
        %v1901 = vld [vmem:[%s1693 + $0x678] sm:$0xff]
        %v1902 = vld [vmem:[%s1693 + $0x680] sm:$0xff]
        %v1903 = vld [vmem:[%s1693 + $0x688] sm:$0xff]
        %v1904 = vld [vmem:[%s1693 + $0x690] sm:$0xff]
        %v1905 = vld [vmem:[%s1693 + $0x698] sm:$0xff]
        %v1906 = vld [vmem:[%s1693 + $0x6a0] sm:$0xff]
        %v1907 = vld [vmem:[%s1693 + $0x6a8] sm:$0xff]
        %v1908 = vld [vmem:[%s1693 + $0x6b0] sm:$0xff]
        %v1909 = vld [vmem:[%s1693 + $0x6b8] sm:$0xff]
        %v1910 = vld [vmem:[%s1693 + $0x6c0] sm:$0xff]
        %v1911 = vld [vmem:[%s1693 + $0x6c8] sm:$0xff]
        %v1912 = vld [vmem:[%s1693 + $0x6d0] sm:$0xff]
        %v1913 = vld [vmem:[%s1693 + $0x6d8] sm:$0xff]
        %v1914 = vld [vmem:[%s1693 + $0x6e0] sm:$0xff]
        %v1915 = vld [vmem:[%s1693 + $0x6e8] sm:$0xff]
        %v1916 = vld [vmem:[%s1693 + $0x6f0] sm:$0xff]
        %v1917 = vld [vmem:[%s1693 + $0x6f8] sm:$0xff]
        %v1918 = vld [vmem:[%s1693 + $0x700] sm:$0xff]
        %v1919 = vld [vmem:[%s1693 + $0x708] sm:$0xff]
        %v1920 = vld [vmem:[%s1693 + $0x710] sm:$0xff]
        %v1921 = vld [vmem:[%s1693 + $0x718] sm:$0xff]
        %v1922 = vld [vmem:[%s1693 + $0x720] sm:$0xff]
        %v1923 = vld [vmem:[%s1693 + $0x728] sm:$0xff]
        %v1924 = vld [vmem:[%s1693 + $0x730] sm:$0xff]
        %v1925 = vld [vmem:[%s1693 + $0x738] sm:$0xff]
        %v1926 = vld [vmem:[%s1693 + $0x740] sm:$0xff]
        %v1927 = vld [vmem:[%s1693 + $0x748] sm:$0xff]
        %v1928 = vld [vmem:[%s1693 + $0x750] sm:$0xff]
        %v1929 = vld [vmem:[%s1693 + $0x758] sm:$0xff]
        %v1930 = vld [vmem:[%s1693 + $0x760] sm:$0xff]
        %v1931 = vld [vmem:[%s1693 + $0x768] sm:$0xff]
        %v1932 = vld [vmem:[%s1693 + $0x770] sm:$0xff]
        %v1933 = vld [vmem:[%s1693 + $0x778] sm:$0xff]
        %v1934 = vld [vmem:[%s1693 + $0x780] sm:$0xff]
        %v1935 = vld [vmem:[%s1693 + $0x788] sm:$0xff]
        %v1936 = vld [vmem:[%s1693 + $0x790] sm:$0xff]
        %v1937 = vld [vmem:[%s1693 + $0x798] sm:$0xff]
        %v1938 = vld [vmem:[%s1693 + $0x7a0] sm:$0xff]
        %v1939 = vld [vmem:[%s1693 + $0x7a8] sm:$0xff]
        %v1940 = vld [vmem:[%s1693 + $0x7b0] sm:$0xff]
        %v1941 = vld [vmem:[%s1693 + $0x7b8] sm:$0xff]
        %v1942 = vld [vmem:[%s1693 + $0x7c0] sm:$0xff]
        %v1943 = vld [vmem:[%s1693 + $0x7c8] sm:$0xff]
        %v1944 = vld [vmem:[%s1693 + $0x7d0] sm:$0xff]
        %v1945 = vld [vmem:[%s1693 + $0x7d8] sm:$0xff]
        %v1946 = vld [vmem:[%s1693 + $0x7e0] sm:$0xff]
        %v1947 = vld [vmem:[%s1693 + $0x7e8] sm:$0xff]
        %v1948 = vld [vmem:[%s1693 + $0x7f0] sm:$0xff]
        %v1949 = vld [vmem:[%s1693 + $0x7f8] sm:$0xff]
        %v2206 = vunpack.c.l.b16 %v1694
        %v2207 = vunpack.c.h.b16 %v1694
        %v2208 = vunpack.c.l.b16 %v1695
        %v2209 = vunpack.c.h.b16 %v1695
        %v2210 = vunpack.c.l.b16 %v1696
        %v2211 = vunpack.c.h.b16 %v1696
        %v2212 = vunpack.c.l.b16 %v1697
        %v2213 = vunpack.c.h.b16 %v1697
        %v2214 = vunpack.c.l.b16 %v1698
        %v2215 = vunpack.c.h.b16 %v1698
        %v2216 = vunpack.c.l.b16 %v1699
        %v2217 = vunpack.c.h.b16 %v1699
        %v2218 = vunpack.c.l.b16 %v1700
        %v2219 = vunpack.c.h.b16 %v1700
        %v2220 = vunpack.c.l.b16 %v1701
        %v2221 = vunpack.c.h.b16 %v1701
        %v2222 = vunpack.c.l.b16 %v1702
        %v2223 = vunpack.c.h.b16 %v1702
        %v2224 = vunpack.c.l.b16 %v1703
        %v2225 = vunpack.c.h.b16 %v1703
        %v2226 = vunpack.c.l.b16 %v1704
        %v2227 = vunpack.c.h.b16 %v1704
        %v2228 = vunpack.c.l.b16 %v1705
        %v2229 = vunpack.c.h.b16 %v1705
        %v2230 = vunpack.c.l.b16 %v1706
        %v2231 = vunpack.c.h.b16 %v1706
        %v2232 = vunpack.c.l.b16 %v1707
        %v2233 = vunpack.c.h.b16 %v1707
        %v2234 = vunpack.c.l.b16 %v1708
        %v2235 = vunpack.c.h.b16 %v1708
        %v2236 = vunpack.c.l.b16 %v1709
        %v2237 = vunpack.c.h.b16 %v1709
        %v2238 = vunpack.c.l.b16 %v1710
        %v2239 = vunpack.c.h.b16 %v1710
        %v2240 = vunpack.c.l.b16 %v1711
        %v2241 = vunpack.c.h.b16 %v1711
        %v2242 = vunpack.c.l.b16 %v1712
        %v2243 = vunpack.c.h.b16 %v1712
        %v2244 = vunpack.c.l.b16 %v1713
        %v2245 = vunpack.c.h.b16 %v1713
        %v2246 = vunpack.c.l.b16 %v1714
        %v2247 = vunpack.c.h.b16 %v1714
        %v2248 = vunpack.c.l.b16 %v1715
        %v2249 = vunpack.c.h.b16 %v1715
        %v2250 = vunpack.c.l.b16 %v1716
        %v2251 = vunpack.c.h.b16 %v1716
        %v2252 = vunpack.c.l.b16 %v1717
        %v2253 = vunpack.c.h.b16 %v1717
        %v2254 = vunpack.c.l.b16 %v1718
        %v2255 = vunpack.c.h.b16 %v1718
        %v2256 = vunpack.c.l.b16 %v1719
        %v2257 = vunpack.c.h.b16 %v1719
        %v2258 = vunpack.c.l.b16 %v1720
        %v2259 = vunpack.c.h.b16 %v1720
        %v2260 = vunpack.c.l.b16 %v1721
        %v2261 = vunpack.c.h.b16 %v1721
        %v2262 = vunpack.c.l.b16 %v1722
        %v2263 = vunpack.c.h.b16 %v1722
        %v2264 = vunpack.c.l.b16 %v1723
        %v2265 = vunpack.c.h.b16 %v1723
        %v2266 = vunpack.c.l.b16 %v1724
        %v2267 = vunpack.c.h.b16 %v1724
        %v2268 = vunpack.c.l.b16 %v1725
        %v2269 = vunpack.c.h.b16 %v1725
        %v2270 = vunpack.c.l.b16 %v1726
        %v2271 = vunpack.c.h.b16 %v1726
        %v2272 = vunpack.c.l.b16 %v1727
        %v2273 = vunpack.c.h.b16 %v1727
        %v2274 = vunpack.c.l.b16 %v1728
        %v2275 = vunpack.c.h.b16 %v1728
        %v2276 = vunpack.c.l.b16 %v1729
        %v2277 = vunpack.c.h.b16 %v1729
        %v2278 = vunpack.c.l.b16 %v1730
        %v2279 = vunpack.c.h.b16 %v1730
        %v2280 = vunpack.c.l.b16 %v1731
        %v2281 = vunpack.c.h.b16 %v1731
        %v2282 = vunpack.c.l.b16 %v1732
        %v2283 = vunpack.c.h.b16 %v1732
        %v2284 = vunpack.c.l.b16 %v1733
        %v2285 = vunpack.c.h.b16 %v1733
        %v2286 = vunpack.c.l.b16 %v1734
        %v2287 = vunpack.c.h.b16 %v1734
        %v2288 = vunpack.c.l.b16 %v1735
        %v2289 = vunpack.c.h.b16 %v1735
        %v2290 = vunpack.c.l.b16 %v1736
        %v2291 = vunpack.c.h.b16 %v1736
        %v2292 = vunpack.c.l.b16 %v1737
        %v2293 = vunpack.c.h.b16 %v1737
        %v2294 = vunpack.c.l.b16 %v1738
        %v2295 = vunpack.c.h.b16 %v1738
        %v2296 = vunpack.c.l.b16 %v1739
        %v2297 = vunpack.c.h.b16 %v1739
        %v2298 = vunpack.c.l.b16 %v1740
        %v2299 = vunpack.c.h.b16 %v1740
        %v2300 = vunpack.c.l.b16 %v1741
        %v2301 = vunpack.c.h.b16 %v1741
        %v2302 = vunpack.c.l.b16 %v1742
        %v2303 = vunpack.c.h.b16 %v1742
        %v2304 = vunpack.c.l.b16 %v1743
        %v2305 = vunpack.c.h.b16 %v1743
        %v2306 = vunpack.c.l.b16 %v1744
        %v2307 = vunpack.c.h.b16 %v1744
        %v2308 = vunpack.c.l.b16 %v1745
        %v2309 = vunpack.c.h.b16 %v1745
        %v2310 = vunpack.c.l.b16 %v1746
        %v2311 = vunpack.c.h.b16 %v1746
        %v2312 = vunpack.c.l.b16 %v1747
        %v2313 = vunpack.c.h.b16 %v1747
        %v2314 = vunpack.c.l.b16 %v1748
        %v2315 = vunpack.c.h.b16 %v1748
        %v2316 = vunpack.c.l.b16 %v1749
        %v2317 = vunpack.c.h.b16 %v1749
        %v2318 = vunpack.c.l.b16 %v1750
        %v2319 = vunpack.c.h.b16 %v1750
        %v2320 = vunpack.c.l.b16 %v1751
        %v2321 = vunpack.c.h.b16 %v1751
        %v2322 = vunpack.c.l.b16 %v1752
        %v2323 = vunpack.c.h.b16 %v1752
        %v2324 = vunpack.c.l.b16 %v1753
        %v2325 = vunpack.c.h.b16 %v1753
        %v2326 = vunpack.c.l.b16 %v1754
        %v2327 = vunpack.c.h.b16 %v1754
        %v2328 = vunpack.c.l.b16 %v1755
        %v2329 = vunpack.c.h.b16 %v1755
        %v2330 = vunpack.c.l.b16 %v1756
        %v2331 = vunpack.c.h.b16 %v1756
        %v2332 = vunpack.c.l.b16 %v1757
        %v2333 = vunpack.c.h.b16 %v1757
        %v2334 = vunpack.c.l.b16 %v1758
        %v2335 = vunpack.c.h.b16 %v1758
        %v2336 = vunpack.c.l.b16 %v1759
        %v2337 = vunpack.c.h.b16 %v1759
        %v2338 = vunpack.c.l.b16 %v1760
        %v2339 = vunpack.c.h.b16 %v1760
        %v2340 = vunpack.c.l.b16 %v1761
        %v2341 = vunpack.c.h.b16 %v1761
        %v2342 = vunpack.c.l.b16 %v1762
        %v2343 = vunpack.c.h.b16 %v1762
        %v2344 = vunpack.c.l.b16 %v1763
        %v2345 = vunpack.c.h.b16 %v1763
        %v2346 = vunpack.c.l.b16 %v1764
        %v2347 = vunpack.c.h.b16 %v1764
        %v2348 = vunpack.c.l.b16 %v1765
        %v2349 = vunpack.c.h.b16 %v1765
        %v2350 = vunpack.c.l.b16 %v1766
        %v2351 = vunpack.c.h.b16 %v1766
        %v2352 = vunpack.c.l.b16 %v1767
        %v2353 = vunpack.c.h.b16 %v1767
        %v2354 = vunpack.c.l.b16 %v1768
        %v2355 = vunpack.c.h.b16 %v1768
        %v2356 = vunpack.c.l.b16 %v1769
        %v2357 = vunpack.c.h.b16 %v1769
        %v2358 = vunpack.c.l.b16 %v1770
        %v2359 = vunpack.c.h.b16 %v1770
        %v2360 = vunpack.c.l.b16 %v1771
        %v2361 = vunpack.c.h.b16 %v1771
        %v2362 = vunpack.c.l.b16 %v1772
        %v2363 = vunpack.c.h.b16 %v1772
        %v2364 = vunpack.c.l.b16 %v1773
        %v2365 = vunpack.c.h.b16 %v1773
        %v2366 = vunpack.c.l.b16 %v1774
        %v2367 = vunpack.c.h.b16 %v1774
        %v2368 = vunpack.c.l.b16 %v1775
        %v2369 = vunpack.c.h.b16 %v1775
        %v2370 = vunpack.c.l.b16 %v1776
        %v2371 = vunpack.c.h.b16 %v1776
        %v2372 = vunpack.c.l.b16 %v1777
        %v2373 = vunpack.c.h.b16 %v1777
        %v2374 = vunpack.c.l.b16 %v1778
        %v2375 = vunpack.c.h.b16 %v1778
        %v2376 = vunpack.c.l.b16 %v1779
        %v2377 = vunpack.c.h.b16 %v1779
        %v2378 = vunpack.c.l.b16 %v1780
        %v2379 = vunpack.c.h.b16 %v1780
        %v2380 = vunpack.c.l.b16 %v1781
        %v2381 = vunpack.c.h.b16 %v1781
        %v2382 = vunpack.c.l.b16 %v1782
        %v2383 = vunpack.c.h.b16 %v1782
        %v2384 = vunpack.c.l.b16 %v1783
        %v2385 = vunpack.c.h.b16 %v1783
        %v2386 = vunpack.c.l.b16 %v1784
        %v2387 = vunpack.c.h.b16 %v1784
        %v2388 = vunpack.c.l.b16 %v1785
        %v2389 = vunpack.c.h.b16 %v1785
        %v2390 = vunpack.c.l.b16 %v1786
        %v2391 = vunpack.c.h.b16 %v1786
        %v2392 = vunpack.c.l.b16 %v1787
        %v2393 = vunpack.c.h.b16 %v1787
        %v2394 = vunpack.c.l.b16 %v1788
        %v2395 = vunpack.c.h.b16 %v1788
        %v2396 = vunpack.c.l.b16 %v1789
        %v2397 = vunpack.c.h.b16 %v1789
        %v2398 = vunpack.c.l.b16 %v1790
        %v2399 = vunpack.c.h.b16 %v1790
        %v2400 = vunpack.c.l.b16 %v1791
        %v2401 = vunpack.c.h.b16 %v1791
        %v2402 = vunpack.c.l.b16 %v1792
        %v2403 = vunpack.c.h.b16 %v1792
        %v2404 = vunpack.c.l.b16 %v1793
        %v2405 = vunpack.c.h.b16 %v1793
        %v2406 = vunpack.c.l.b16 %v1794
        %v2407 = vunpack.c.h.b16 %v1794
        %v2408 = vunpack.c.l.b16 %v1795
        %v2409 = vunpack.c.h.b16 %v1795
        %v2410 = vunpack.c.l.b16 %v1796
        %v2411 = vunpack.c.h.b16 %v1796
        %v2412 = vunpack.c.l.b16 %v1797
        %v2413 = vunpack.c.h.b16 %v1797
        %v2414 = vunpack.c.l.b16 %v1798
        %v2415 = vunpack.c.h.b16 %v1798
        %v2416 = vunpack.c.l.b16 %v1799
        %v2417 = vunpack.c.h.b16 %v1799
        %v2418 = vunpack.c.l.b16 %v1800
        %v2419 = vunpack.c.h.b16 %v1800
        %v2420 = vunpack.c.l.b16 %v1801
        %v2421 = vunpack.c.h.b16 %v1801
        %v2422 = vunpack.c.l.b16 %v1802
        %v2423 = vunpack.c.h.b16 %v1802
        %v2424 = vunpack.c.l.b16 %v1803
        %v2425 = vunpack.c.h.b16 %v1803
        %v2426 = vunpack.c.l.b16 %v1804
        %v2427 = vunpack.c.h.b16 %v1804
        %v2428 = vunpack.c.l.b16 %v1805
        %v2429 = vunpack.c.h.b16 %v1805
        %v2430 = vunpack.c.l.b16 %v1806
        %v2431 = vunpack.c.h.b16 %v1806
        %v2432 = vunpack.c.l.b16 %v1807
        %v2433 = vunpack.c.h.b16 %v1807
        %v2434 = vunpack.c.l.b16 %v1808
        %v2435 = vunpack.c.h.b16 %v1808
        %v2436 = vunpack.c.l.b16 %v1809
        %v2437 = vunpack.c.h.b16 %v1809
        %v2438 = vunpack.c.l.b16 %v1810
        %v2439 = vunpack.c.h.b16 %v1810
        %v2440 = vunpack.c.l.b16 %v1811
        %v2441 = vunpack.c.h.b16 %v1811
        %v2442 = vunpack.c.l.b16 %v1812
        %v2443 = vunpack.c.h.b16 %v1812
        %v2444 = vunpack.c.l.b16 %v1813
        %v2445 = vunpack.c.h.b16 %v1813
        %v2446 = vunpack.c.l.b16 %v1814
        %v2447 = vunpack.c.h.b16 %v1814
        %v2448 = vunpack.c.l.b16 %v1815
        %v2449 = vunpack.c.h.b16 %v1815
        %v2450 = vunpack.c.l.b16 %v1816
        %v2451 = vunpack.c.h.b16 %v1816
        %v2452 = vunpack.c.l.b16 %v1817
        %v2453 = vunpack.c.h.b16 %v1817
        %v2454 = vunpack.c.l.b16 %v1818
        %v2455 = vunpack.c.h.b16 %v1818
        %v2456 = vunpack.c.l.b16 %v1819
        %v2457 = vunpack.c.h.b16 %v1819
        %v2458 = vunpack.c.l.b16 %v1820
        %v2459 = vunpack.c.h.b16 %v1820
        %v2460 = vunpack.c.l.b16 %v1821
        %v2461 = vunpack.c.h.b16 %v1821
        %v2462 = vunpack.c.l.b16 %v1822
        %v2463 = vunpack.c.h.b16 %v1822
        %v2464 = vunpack.c.l.b16 %v1823
        %v2465 = vunpack.c.h.b16 %v1823
        %v2466 = vunpack.c.l.b16 %v1824
        %v2467 = vunpack.c.h.b16 %v1824
        %v2468 = vunpack.c.l.b16 %v1825
        %v2469 = vunpack.c.h.b16 %v1825
        %v2470 = vunpack.c.l.b16 %v1826
        %v2471 = vunpack.c.h.b16 %v1826
        %v2472 = vunpack.c.l.b16 %v1827
        %v2473 = vunpack.c.h.b16 %v1827
        %v2474 = vunpack.c.l.b16 %v1828
        %v2475 = vunpack.c.h.b16 %v1828
        %v2476 = vunpack.c.l.b16 %v1829
        %v2477 = vunpack.c.h.b16 %v1829
        %v2478 = vunpack.c.l.b16 %v1830
        %v2479 = vunpack.c.h.b16 %v1830
        %v2480 = vunpack.c.l.b16 %v1831
        %v2481 = vunpack.c.h.b16 %v1831
        %v2482 = vunpack.c.l.b16 %v1832
        %v2483 = vunpack.c.h.b16 %v1832
        %v2484 = vunpack.c.l.b16 %v1833
        %v2485 = vunpack.c.h.b16 %v1833
        %v2486 = vunpack.c.l.b16 %v1834
        %v2487 = vunpack.c.h.b16 %v1834
        %v2488 = vunpack.c.l.b16 %v1835
        %v2489 = vunpack.c.h.b16 %v1835
        %v2490 = vunpack.c.l.b16 %v1836
        %v2491 = vunpack.c.h.b16 %v1836
        %v2492 = vunpack.c.l.b16 %v1837
        %v2493 = vunpack.c.h.b16 %v1837
        %v2494 = vunpack.c.l.b16 %v1838
        %v2495 = vunpack.c.h.b16 %v1838
        %v2496 = vunpack.c.l.b16 %v1839
        %v2497 = vunpack.c.h.b16 %v1839
        %v2498 = vunpack.c.l.b16 %v1840
        %v2499 = vunpack.c.h.b16 %v1840
        %v2500 = vunpack.c.l.b16 %v1841
        %v2501 = vunpack.c.h.b16 %v1841
        %v2502 = vunpack.c.l.b16 %v1842
        %v2503 = vunpack.c.h.b16 %v1842
        %v2504 = vunpack.c.l.b16 %v1843
        %v2505 = vunpack.c.h.b16 %v1843
        %v2506 = vunpack.c.l.b16 %v1844
        %v2507 = vunpack.c.h.b16 %v1844
        %v2508 = vunpack.c.l.b16 %v1845
        %v2509 = vunpack.c.h.b16 %v1845
        %v2510 = vunpack.c.l.b16 %v1846
        %v2511 = vunpack.c.h.b16 %v1846
        %v2512 = vunpack.c.l.b16 %v1847
        %v2513 = vunpack.c.h.b16 %v1847
        %v2514 = vunpack.c.l.b16 %v1848
        %v2515 = vunpack.c.h.b16 %v1848
        %v2516 = vunpack.c.l.b16 %v1849
        %v2517 = vunpack.c.h.b16 %v1849
        %v2518 = vunpack.c.l.b16 %v1850
        %v2519 = vunpack.c.h.b16 %v1850
        %v2520 = vunpack.c.l.b16 %v1851
        %v2521 = vunpack.c.h.b16 %v1851
        %v2522 = vunpack.c.l.b16 %v1852
        %v2523 = vunpack.c.h.b16 %v1852
        %v2524 = vunpack.c.l.b16 %v1853
        %v2525 = vunpack.c.h.b16 %v1853
        %v2526 = vunpack.c.l.b16 %v1854
        %v2527 = vunpack.c.h.b16 %v1854
        %v2528 = vunpack.c.l.b16 %v1855
        %v2529 = vunpack.c.h.b16 %v1855
        %v2530 = vunpack.c.l.b16 %v1856
        %v2531 = vunpack.c.h.b16 %v1856
        %v2532 = vunpack.c.l.b16 %v1857
        %v2533 = vunpack.c.h.b16 %v1857
        %v2534 = vunpack.c.l.b16 %v1858
        %v2535 = vunpack.c.h.b16 %v1858
        %v2536 = vunpack.c.l.b16 %v1859
        %v2537 = vunpack.c.h.b16 %v1859
        %v2538 = vunpack.c.l.b16 %v1860
        %v2539 = vunpack.c.h.b16 %v1860
        %v2540 = vunpack.c.l.b16 %v1861
        %v2541 = vunpack.c.h.b16 %v1861
        %v2542 = vunpack.c.l.b16 %v1862
        %v2543 = vunpack.c.h.b16 %v1862
        %v2544 = vunpack.c.l.b16 %v1863
        %v2545 = vunpack.c.h.b16 %v1863
        %v2546 = vunpack.c.l.b16 %v1864
        %v2547 = vunpack.c.h.b16 %v1864
        %v2548 = vunpack.c.l.b16 %v1865
        %v2549 = vunpack.c.h.b16 %v1865
        %v2550 = vunpack.c.l.b16 %v1866
        %v2551 = vunpack.c.h.b16 %v1866
        %v2552 = vunpack.c.l.b16 %v1867
        %v2553 = vunpack.c.h.b16 %v1867
        %v2554 = vunpack.c.l.b16 %v1868
        %v2555 = vunpack.c.h.b16 %v1868
        %v2556 = vunpack.c.l.b16 %v1869
        %v2557 = vunpack.c.h.b16 %v1869
        %v2558 = vunpack.c.l.b16 %v1870
        %v2559 = vunpack.c.h.b16 %v1870
        %v2560 = vunpack.c.l.b16 %v1871
        %v2561 = vunpack.c.h.b16 %v1871
        %v2562 = vunpack.c.l.b16 %v1872
        %v2563 = vunpack.c.h.b16 %v1872
        %v2564 = vunpack.c.l.b16 %v1873
        %v2565 = vunpack.c.h.b16 %v1873
        %v2566 = vunpack.c.l.b16 %v1874
        %v2567 = vunpack.c.h.b16 %v1874
        %v2568 = vunpack.c.l.b16 %v1875
        %v2569 = vunpack.c.h.b16 %v1875
        %v2570 = vunpack.c.l.b16 %v1876
        %v2571 = vunpack.c.h.b16 %v1876
        %v2572 = vunpack.c.l.b16 %v1877
        %v2573 = vunpack.c.h.b16 %v1877
        %v2574 = vunpack.c.l.b16 %v1878
        %v2575 = vunpack.c.h.b16 %v1878
        %v2576 = vunpack.c.l.b16 %v1879
        %v2577 = vunpack.c.h.b16 %v1879
        %v2578 = vunpack.c.l.b16 %v1880
        %v2579 = vunpack.c.h.b16 %v1880
        %v2580 = vunpack.c.l.b16 %v1881
        %v2581 = vunpack.c.h.b16 %v1881
        %v2582 = vunpack.c.l.b16 %v1882
        %v2583 = vunpack.c.h.b16 %v1882
        %v2584 = vunpack.c.l.b16 %v1883
        %v2585 = vunpack.c.h.b16 %v1883
        %v2586 = vunpack.c.l.b16 %v1884
        %v2587 = vunpack.c.h.b16 %v1884
        %v2588 = vunpack.c.l.b16 %v1885
        %v2589 = vunpack.c.h.b16 %v1885
        %v2590 = vunpack.c.l.b16 %v1886
        %v2591 = vunpack.c.h.b16 %v1886
        %v2592 = vunpack.c.l.b16 %v1887
        %v2593 = vunpack.c.h.b16 %v1887
        %v2594 = vunpack.c.l.b16 %v1888
        %v2595 = vunpack.c.h.b16 %v1888
        %v2596 = vunpack.c.l.b16 %v1889
        %v2597 = vunpack.c.h.b16 %v1889
        %v2598 = vunpack.c.l.b16 %v1890
        %v2599 = vunpack.c.h.b16 %v1890
        %v2600 = vunpack.c.l.b16 %v1891
        %v2601 = vunpack.c.h.b16 %v1891
        %v2602 = vunpack.c.l.b16 %v1892
        %v2603 = vunpack.c.h.b16 %v1892
        %v2604 = vunpack.c.l.b16 %v1893
        %v2605 = vunpack.c.h.b16 %v1893
        %v2606 = vunpack.c.l.b16 %v1894
        %v2607 = vunpack.c.h.b16 %v1894
        %v2608 = vunpack.c.l.b16 %v1895
        %v2609 = vunpack.c.h.b16 %v1895
        %v2610 = vunpack.c.l.b16 %v1896
        %v2611 = vunpack.c.h.b16 %v1896
        %v2612 = vunpack.c.l.b16 %v1897
        %v2613 = vunpack.c.h.b16 %v1897
        %v2614 = vunpack.c.l.b16 %v1898
        %v2615 = vunpack.c.h.b16 %v1898
        %v2616 = vunpack.c.l.b16 %v1899
        %v2617 = vunpack.c.h.b16 %v1899
        %v2618 = vunpack.c.l.b16 %v1900
        %v2619 = vunpack.c.h.b16 %v1900
        %v2620 = vunpack.c.l.b16 %v1901
        %v2621 = vunpack.c.h.b16 %v1901
        %v2622 = vunpack.c.l.b16 %v1902
        %v2623 = vunpack.c.h.b16 %v1902
        %v2624 = vunpack.c.l.b16 %v1903
        %v2625 = vunpack.c.h.b16 %v1903
        %v2626 = vunpack.c.l.b16 %v1904
        %v2627 = vunpack.c.h.b16 %v1904
        %v2628 = vunpack.c.l.b16 %v1905
        %v2629 = vunpack.c.h.b16 %v1905
        %v2630 = vunpack.c.l.b16 %v1906
        %v2631 = vunpack.c.h.b16 %v1906
        %v2632 = vunpack.c.l.b16 %v1907
        %v2633 = vunpack.c.h.b16 %v1907
        %v2634 = vunpack.c.l.b16 %v1908
        %v2635 = vunpack.c.h.b16 %v1908
        %v2636 = vunpack.c.l.b16 %v1909
        %v2637 = vunpack.c.h.b16 %v1909
        %v2638 = vunpack.c.l.b16 %v1910
        %v2639 = vunpack.c.h.b16 %v1910
        %v2640 = vunpack.c.l.b16 %v1911
        %v2641 = vunpack.c.h.b16 %v1911
        %v2642 = vunpack.c.l.b16 %v1912
        %v2643 = vunpack.c.h.b16 %v1912
        %v2644 = vunpack.c.l.b16 %v1913
        %v2645 = vunpack.c.h.b16 %v1913
        %v2646 = vunpack.c.l.b16 %v1914
        %v2647 = vunpack.c.h.b16 %v1914
        %v2648 = vunpack.c.l.b16 %v1915
        %v2649 = vunpack.c.h.b16 %v1915
        %v2650 = vunpack.c.l.b16 %v1916
        %v2651 = vunpack.c.h.b16 %v1916
        %v2652 = vunpack.c.l.b16 %v1917
        %v2653 = vunpack.c.h.b16 %v1917
        %v2654 = vunpack.c.l.b16 %v1918
        %v2655 = vunpack.c.h.b16 %v1918
        %v2656 = vunpack.c.l.b16 %v1919
        %v2657 = vunpack.c.h.b16 %v1919
        %v2658 = vunpack.c.l.b16 %v1920
        %v2659 = vunpack.c.h.b16 %v1920
        %v2660 = vunpack.c.l.b16 %v1921
        %v2661 = vunpack.c.h.b16 %v1921
        %v2662 = vunpack.c.l.b16 %v1922
        %v2663 = vunpack.c.h.b16 %v1922
        %v2664 = vunpack.c.l.b16 %v1923
        %v2665 = vunpack.c.h.b16 %v1923
        %v2666 = vunpack.c.l.b16 %v1924
        %v2667 = vunpack.c.h.b16 %v1924
        %v2668 = vunpack.c.l.b16 %v1925
        %v2669 = vunpack.c.h.b16 %v1925
        %v2670 = vunpack.c.l.b16 %v1926
        %v2671 = vunpack.c.h.b16 %v1926
        %v2672 = vunpack.c.l.b16 %v1927
        %v2673 = vunpack.c.h.b16 %v1927
        %v2674 = vunpack.c.l.b16 %v1928
        %v2675 = vunpack.c.h.b16 %v1928
        %v2676 = vunpack.c.l.b16 %v1929
        %v2677 = vunpack.c.h.b16 %v1929
        %v2678 = vunpack.c.l.b16 %v1930
        %v2679 = vunpack.c.h.b16 %v1930
        %v2680 = vunpack.c.l.b16 %v1931
        %v2681 = vunpack.c.h.b16 %v1931
        %v2682 = vunpack.c.l.b16 %v1932
        %v2683 = vunpack.c.h.b16 %v1932
        %v2684 = vunpack.c.l.b16 %v1933
        %v2685 = vunpack.c.h.b16 %v1933
        %v2686 = vunpack.c.l.b16 %v1934
        %v2687 = vunpack.c.h.b16 %v1934
        %v2688 = vunpack.c.l.b16 %v1935
        %v2689 = vunpack.c.h.b16 %v1935
        %v2690 = vunpack.c.l.b16 %v1936
        %v2691 = vunpack.c.h.b16 %v1936
        %v2692 = vunpack.c.l.b16 %v1937
        %v2693 = vunpack.c.h.b16 %v1937
        %v2694 = vunpack.c.l.b16 %v1938
        %v2695 = vunpack.c.h.b16 %v1938
        %v2696 = vunpack.c.l.b16 %v1939
        %v2697 = vunpack.c.h.b16 %v1939
        %v2698 = vunpack.c.l.b16 %v1940
        %v2699 = vunpack.c.h.b16 %v1940
        %v2700 = vunpack.c.l.b16 %v1941
        %v2701 = vunpack.c.h.b16 %v1941
        %v2702 = vunpack.c.l.b16 %v1942
        %v2703 = vunpack.c.h.b16 %v1942
        %v2704 = vunpack.c.l.b16 %v1943
        %v2705 = vunpack.c.h.b16 %v1943
        %v2706 = vunpack.c.l.b16 %v1944
        %v2707 = vunpack.c.h.b16 %v1944
        %v2708 = vunpack.c.l.b16 %v1945
        %v2709 = vunpack.c.h.b16 %v1945
        %v2710 = vunpack.c.l.b16 %v1946
        %v2711 = vunpack.c.h.b16 %v1946
        %v2712 = vunpack.c.l.b16 %v1947
        %v2713 = vunpack.c.h.b16 %v1947
        %v2714 = vunpack.c.l.b16 %v1948
        %v2715 = vunpack.c.h.b16 %v1948
        %v2716 = vunpack.c.l.b16 %v1949
        %v2717 = vunpack.c.h.b16 %v1949
        %v2718 = vpack.c.b16 %v2214, %v2206
        %v2719 = vpack.c.b16 %v2215, %v2207
        %v2720 = vpack.c.b16 %v2216, %v2208
        %v2721 = vpack.c.b16 %v2217, %v2209
        %v2722 = vpack.c.b16 %v2218, %v2210
        %v2723 = vpack.c.b16 %v2219, %v2211
        %v2724 = vpack.c.b16 %v2220, %v2212
        %v2725 = vpack.c.b16 %v2221, %v2213
        %v2726 = vpack.c.b16 %v2230, %v2222
        %v2727 = vpack.c.b16 %v2231, %v2223
        %v2728 = vpack.c.b16 %v2232, %v2224
        %v2729 = vpack.c.b16 %v2233, %v2225
        %v2730 = vpack.c.b16 %v2234, %v2226
        %v2731 = vpack.c.b16 %v2235, %v2227
        %v2732 = vpack.c.b16 %v2236, %v2228
        %v2733 = vpack.c.b16 %v2237, %v2229
        %v2734 = vpack.c.b16 %v2246, %v2238
        %v2735 = vpack.c.b16 %v2247, %v2239
        %v2736 = vpack.c.b16 %v2248, %v2240
        %v2737 = vpack.c.b16 %v2249, %v2241
        %v2738 = vpack.c.b16 %v2250, %v2242
        %v2739 = vpack.c.b16 %v2251, %v2243
        %v2740 = vpack.c.b16 %v2252, %v2244
        %v2741 = vpack.c.b16 %v2253, %v2245
        %v2742 = vpack.c.b16 %v2262, %v2254
        %v2743 = vpack.c.b16 %v2263, %v2255
        %v2744 = vpack.c.b16 %v2264, %v2256
        %v2745 = vpack.c.b16 %v2265, %v2257
        %v2746 = vpack.c.b16 %v2266, %v2258
        %v2747 = vpack.c.b16 %v2267, %v2259
        %v2748 = vpack.c.b16 %v2268, %v2260
        %v2749 = vpack.c.b16 %v2269, %v2261
        %v2750 = vpack.c.b16 %v2278, %v2270
        %v2751 = vpack.c.b16 %v2279, %v2271
        %v2752 = vpack.c.b16 %v2280, %v2272
        %v2753 = vpack.c.b16 %v2281, %v2273
        %v2754 = vpack.c.b16 %v2282, %v2274
        %v2755 = vpack.c.b16 %v2283, %v2275
        %v2756 = vpack.c.b16 %v2284, %v2276
        %v2757 = vpack.c.b16 %v2285, %v2277
        %v2758 = vpack.c.b16 %v2294, %v2286
        %v2759 = vpack.c.b16 %v2295, %v2287
        %v2760 = vpack.c.b16 %v2296, %v2288
        %v2761 = vpack.c.b16 %v2297, %v2289
        %v2762 = vpack.c.b16 %v2298, %v2290
        %v2763 = vpack.c.b16 %v2299, %v2291
        %v2764 = vpack.c.b16 %v2300, %v2292
        %v2765 = vpack.c.b16 %v2301, %v2293
        %v2766 = vpack.c.b16 %v2310, %v2302
        %v2767 = vpack.c.b16 %v2311, %v2303
        %v2768 = vpack.c.b16 %v2312, %v2304
        %v2769 = vpack.c.b16 %v2313, %v2305
        %v2770 = vpack.c.b16 %v2314, %v2306
        %v2771 = vpack.c.b16 %v2315, %v2307
        %v2772 = vpack.c.b16 %v2316, %v2308
        %v2773 = vpack.c.b16 %v2317, %v2309
        %v2774 = vpack.c.b16 %v2326, %v2318
        %v2775 = vpack.c.b16 %v2327, %v2319
        %v2776 = vpack.c.b16 %v2328, %v2320
        %v2777 = vpack.c.b16 %v2329, %v2321
        %v2778 = vpack.c.b16 %v2330, %v2322
        %v2779 = vpack.c.b16 %v2331, %v2323
        %v2780 = vpack.c.b16 %v2332, %v2324
        %v2781 = vpack.c.b16 %v2333, %v2325
        %v2782 = vpack.c.b16 %v2342, %v2334
        %v2783 = vpack.c.b16 %v2343, %v2335
        %v2784 = vpack.c.b16 %v2344, %v2336
        %v2785 = vpack.c.b16 %v2345, %v2337
        %v2786 = vpack.c.b16 %v2346, %v2338
        %v2787 = vpack.c.b16 %v2347, %v2339
        %v2788 = vpack.c.b16 %v2348, %v2340
        %v2789 = vpack.c.b16 %v2349, %v2341
        %v2790 = vpack.c.b16 %v2358, %v2350
        %v2791 = vpack.c.b16 %v2359, %v2351
        %v2792 = vpack.c.b16 %v2360, %v2352
        %v2793 = vpack.c.b16 %v2361, %v2353
        %v2794 = vpack.c.b16 %v2362, %v2354
        %v2795 = vpack.c.b16 %v2363, %v2355
        %v2796 = vpack.c.b16 %v2364, %v2356
        %v2797 = vpack.c.b16 %v2365, %v2357
        %v2798 = vpack.c.b16 %v2374, %v2366
        %v2799 = vpack.c.b16 %v2375, %v2367
        %v2800 = vpack.c.b16 %v2376, %v2368
        %v2801 = vpack.c.b16 %v2377, %v2369
        %v2802 = vpack.c.b16 %v2378, %v2370
        %v2803 = vpack.c.b16 %v2379, %v2371
        %v2804 = vpack.c.b16 %v2380, %v2372
        %v2805 = vpack.c.b16 %v2381, %v2373
        %v2806 = vpack.c.b16 %v2390, %v2382
        %v2807 = vpack.c.b16 %v2391, %v2383
        %v2808 = vpack.c.b16 %v2392, %v2384
        %v2809 = vpack.c.b16 %v2393, %v2385
        %v2810 = vpack.c.b16 %v2394, %v2386
        %v2811 = vpack.c.b16 %v2395, %v2387
        %v2812 = vpack.c.b16 %v2396, %v2388
        %v2813 = vpack.c.b16 %v2397, %v2389
        %v2814 = vpack.c.b16 %v2406, %v2398
        %v2815 = vpack.c.b16 %v2407, %v2399
        %v2816 = vpack.c.b16 %v2408, %v2400
        %v2817 = vpack.c.b16 %v2409, %v2401
        %v2818 = vpack.c.b16 %v2410, %v2402
        %v2819 = vpack.c.b16 %v2411, %v2403
        %v2820 = vpack.c.b16 %v2412, %v2404
        %v2821 = vpack.c.b16 %v2413, %v2405
        %v2822 = vpack.c.b16 %v2422, %v2414
        %v2823 = vpack.c.b16 %v2423, %v2415
        %v2824 = vpack.c.b16 %v2424, %v2416
        %v2825 = vpack.c.b16 %v2425, %v2417
        %v2826 = vpack.c.b16 %v2426, %v2418
        %v2827 = vpack.c.b16 %v2427, %v2419
        %v2828 = vpack.c.b16 %v2428, %v2420
        %v2829 = vpack.c.b16 %v2429, %v2421
        %v2830 = vpack.c.b16 %v2438, %v2430
        %v2831 = vpack.c.b16 %v2439, %v2431
        %v2832 = vpack.c.b16 %v2440, %v2432
        %v2833 = vpack.c.b16 %v2441, %v2433
        %v2834 = vpack.c.b16 %v2442, %v2434
        %v2835 = vpack.c.b16 %v2443, %v2435
        %v2836 = vpack.c.b16 %v2444, %v2436
        %v2837 = vpack.c.b16 %v2445, %v2437
        %v2838 = vpack.c.b16 %v2454, %v2446
        %v2839 = vpack.c.b16 %v2455, %v2447
        %v2840 = vpack.c.b16 %v2456, %v2448
        %v2841 = vpack.c.b16 %v2457, %v2449
        %v2842 = vpack.c.b16 %v2458, %v2450
        %v2843 = vpack.c.b16 %v2459, %v2451
        %v2844 = vpack.c.b16 %v2460, %v2452
        %v2845 = vpack.c.b16 %v2461, %v2453
        %v2846 = vpack.c.b16 %v2470, %v2462
        %v2847 = vpack.c.b16 %v2471, %v2463
        %v2848 = vpack.c.b16 %v2472, %v2464
        %v2849 = vpack.c.b16 %v2473, %v2465
        %v2850 = vpack.c.b16 %v2474, %v2466
        %v2851 = vpack.c.b16 %v2475, %v2467
        %v2852 = vpack.c.b16 %v2476, %v2468
        %v2853 = vpack.c.b16 %v2477, %v2469
        %v2854 = vpack.c.b16 %v2486, %v2478
        %v2855 = vpack.c.b16 %v2487, %v2479
        %v2856 = vpack.c.b16 %v2488, %v2480
        %v2857 = vpack.c.b16 %v2489, %v2481
        %v2858 = vpack.c.b16 %v2490, %v2482
        %v2859 = vpack.c.b16 %v2491, %v2483
        %v2860 = vpack.c.b16 %v2492, %v2484
        %v2861 = vpack.c.b16 %v2493, %v2485
        %v2862 = vpack.c.b16 %v2502, %v2494
        %v2863 = vpack.c.b16 %v2503, %v2495
        %v2864 = vpack.c.b16 %v2504, %v2496
        %v2865 = vpack.c.b16 %v2505, %v2497
        %v2866 = vpack.c.b16 %v2506, %v2498
        %v2867 = vpack.c.b16 %v2507, %v2499
        %v2868 = vpack.c.b16 %v2508, %v2500
        %v2869 = vpack.c.b16 %v2509, %v2501
        %v2870 = vpack.c.b16 %v2518, %v2510
        %v2871 = vpack.c.b16 %v2519, %v2511
        %v2872 = vpack.c.b16 %v2520, %v2512
        %v2873 = vpack.c.b16 %v2521, %v2513
        %v2874 = vpack.c.b16 %v2522, %v2514
        %v2875 = vpack.c.b16 %v2523, %v2515
        %v2876 = vpack.c.b16 %v2524, %v2516
        %v2877 = vpack.c.b16 %v2525, %v2517
        %v2878 = vpack.c.b16 %v2534, %v2526
        %v2879 = vpack.c.b16 %v2535, %v2527
        %v2880 = vpack.c.b16 %v2536, %v2528
        %v2881 = vpack.c.b16 %v2537, %v2529
        %v2882 = vpack.c.b16 %v2538, %v2530
        %v2883 = vpack.c.b16 %v2539, %v2531
        %v2884 = vpack.c.b16 %v2540, %v2532
        %v2885 = vpack.c.b16 %v2541, %v2533
        %v2886 = vpack.c.b16 %v2550, %v2542
        %v2887 = vpack.c.b16 %v2551, %v2543
        %v2888 = vpack.c.b16 %v2552, %v2544
        %v2889 = vpack.c.b16 %v2553, %v2545
        %v2890 = vpack.c.b16 %v2554, %v2546
        %v2891 = vpack.c.b16 %v2555, %v2547
        %v2892 = vpack.c.b16 %v2556, %v2548
        %v2893 = vpack.c.b16 %v2557, %v2549
        %v2894 = vpack.c.b16 %v2566, %v2558
        %v2895 = vpack.c.b16 %v2567, %v2559
        %v2896 = vpack.c.b16 %v2568, %v2560
        %v2897 = vpack.c.b16 %v2569, %v2561
        %v2898 = vpack.c.b16 %v2570, %v2562
        %v2899 = vpack.c.b16 %v2571, %v2563
        %v2900 = vpack.c.b16 %v2572, %v2564
        %v2901 = vpack.c.b16 %v2573, %v2565
        %v2902 = vpack.c.b16 %v2582, %v2574
        %v2903 = vpack.c.b16 %v2583, %v2575
        %v2904 = vpack.c.b16 %v2584, %v2576
        %v2905 = vpack.c.b16 %v2585, %v2577
        %v2906 = vpack.c.b16 %v2586, %v2578
        %v2907 = vpack.c.b16 %v2587, %v2579
        %v2908 = vpack.c.b16 %v2588, %v2580
        %v2909 = vpack.c.b16 %v2589, %v2581
        %v2910 = vpack.c.b16 %v2598, %v2590
        %v2911 = vpack.c.b16 %v2599, %v2591
        %v2912 = vpack.c.b16 %v2600, %v2592
        %v2913 = vpack.c.b16 %v2601, %v2593
        %v2914 = vpack.c.b16 %v2602, %v2594
        %v2915 = vpack.c.b16 %v2603, %v2595
        %v2916 = vpack.c.b16 %v2604, %v2596
        %v2917 = vpack.c.b16 %v2605, %v2597
        %v2918 = vpack.c.b16 %v2614, %v2606
        %v2919 = vpack.c.b16 %v2615, %v2607
        %v2920 = vpack.c.b16 %v2616, %v2608
        %v2921 = vpack.c.b16 %v2617, %v2609
        %v2922 = vpack.c.b16 %v2618, %v2610
        %v2923 = vpack.c.b16 %v2619, %v2611
        %v2924 = vpack.c.b16 %v2620, %v2612
        %v2925 = vpack.c.b16 %v2621, %v2613
        %v2926 = vpack.c.b16 %v2630, %v2622
        %v2927 = vpack.c.b16 %v2631, %v2623
        %v2928 = vpack.c.b16 %v2632, %v2624
        %v2929 = vpack.c.b16 %v2633, %v2625
        %v2930 = vpack.c.b16 %v2634, %v2626
        %v2931 = vpack.c.b16 %v2635, %v2627
        %v2932 = vpack.c.b16 %v2636, %v2628
        %v2933 = vpack.c.b16 %v2637, %v2629
        %v2934 = vpack.c.b16 %v2646, %v2638
        %v2935 = vpack.c.b16 %v2647, %v2639
        %v2936 = vpack.c.b16 %v2648, %v2640
        %v2937 = vpack.c.b16 %v2649, %v2641
        %v2938 = vpack.c.b16 %v2650, %v2642
        %v2939 = vpack.c.b16 %v2651, %v2643
        %v2940 = vpack.c.b16 %v2652, %v2644
        %v2941 = vpack.c.b16 %v2653, %v2645
        %v2942 = vpack.c.b16 %v2662, %v2654
        %v2943 = vpack.c.b16 %v2663, %v2655
        %v2944 = vpack.c.b16 %v2664, %v2656
        %v2945 = vpack.c.b16 %v2665, %v2657
        %v2946 = vpack.c.b16 %v2666, %v2658
        %v2947 = vpack.c.b16 %v2667, %v2659
        %v2948 = vpack.c.b16 %v2668, %v2660
        %v2949 = vpack.c.b16 %v2669, %v2661
        %v2950 = vpack.c.b16 %v2678, %v2670
        %v2951 = vpack.c.b16 %v2679, %v2671
        %v2952 = vpack.c.b16 %v2680, %v2672
        %v2953 = vpack.c.b16 %v2681, %v2673
        %v2954 = vpack.c.b16 %v2682, %v2674
        %v2955 = vpack.c.b16 %v2683, %v2675
        %v2956 = vpack.c.b16 %v2684, %v2676
        %v2957 = vpack.c.b16 %v2685, %v2677
        %v2958 = vpack.c.b16 %v2694, %v2686
        %v2959 = vpack.c.b16 %v2695, %v2687
        %v2960 = vpack.c.b16 %v2696, %v2688
        %v2961 = vpack.c.b16 %v2697, %v2689
        %v2962 = vpack.c.b16 %v2698, %v2690
        %v2963 = vpack.c.b16 %v2699, %v2691
        %v2964 = vpack.c.b16 %v2700, %v2692
        %v2965 = vpack.c.b16 %v2701, %v2693
        %v2966 = vpack.c.b16 %v2710, %v2702
        %v2967 = vpack.c.b16 %v2711, %v2703
        %v2968 = vpack.c.b16 %v2712, %v2704
        %v2969 = vpack.c.b16 %v2713, %v2705
        %v2970 = vpack.c.b16 %v2714, %v2706
        %v2971 = vpack.c.b16 %v2715, %v2707
        %v2972 = vpack.c.b16 %v2716, %v2708
        %v2973 = vpack.c.b16 %v2717, %v2709
        %3230 = vmatprep.subr.bf16.mxu0 %v2719
        %3231 = vmatpush1.bf16.msra.mxu0 %v2718
        %3232 = vmatprep.subr.bf16.mxu0 %v2727
        %3233 = vmatpush1.bf16.msra.mxu0 %v2726
        %3234 = vmatprep.subr.bf16.mxu0 %v2735
        %3235 = vmatpush1.bf16.msra.mxu0 %v2734
        %3236 = vmatprep.subr.bf16.mxu0 %v2743
        %3237 = vmatpush1.bf16.msra.mxu0 %v2742
        %3238 = vmatprep.subr.bf16.mxu0 %v2751
        %3239 = vmatpush1.bf16.msra.mxu0 %v2750
        %3240 = vmatprep.subr.bf16.mxu0 %v2759
        %3241 = vmatpush1.bf16.msra.mxu0 %v2758
        %3242 = vmatprep.subr.bf16.mxu0 %v2767
        %3243 = vmatpush1.bf16.msra.mxu0 %v2766
        %3244 = vmatprep.subr.bf16.mxu0 %v2775
        %3245 = vmatpush1.bf16.msra.mxu0 %v2774
        %3246 = vmatprep.subr.bf16.mxu0 %v2783
        %3247 = vmatpush1.bf16.msra.mxu0 %v2782
        %3248 = vmatprep.subr.bf16.mxu0 %v2791
        %3249 = vmatpush1.bf16.msra.mxu0 %v2790
        %3250 = vmatprep.subr.bf16.mxu0 %v2799
        %3251 = vmatpush1.bf16.msra.mxu0 %v2798
        %3252 = vmatprep.subr.bf16.mxu0 %v2807
        %3253 = vmatpush1.bf16.msra.mxu0 %v2806
        %3254 = vmatprep.subr.bf16.mxu0 %v2815
        %3255 = vmatpush1.bf16.msra.mxu0 %v2814
        %3256 = vmatprep.subr.bf16.mxu0 %v2823
        %3257 = vmatpush1.bf16.msra.mxu0 %v2822
        %3258 = vmatprep.subr.bf16.mxu0 %v2831
        %3259 = vmatpush1.bf16.msra.mxu0 %v2830
        %3260 = vmatprep.subr.bf16.mxu0 %v2839
        %3261 = vmatpush1.bf16.msra.mxu0 %v2838
        %3262 = vmatprep.mubr.bf16.mxu0 %v1676
        %3263 = vmatmul.mubr.bf16.gmra.mrb[0].mxu0 %v1675
        %v3264 = vpop.f32.mrb[0].mxu0
        %v3265 = vadd.f32 0.0, %v3264
        %v3266 = vpop.f32.mrb[0].mxu0
        %v3267 = vadd.f32 0.0, %v3266
        %v3268 = vpop.f32.mrb[0].mxu0
        %v3269 = vadd.f32 0.0, %v3268
        %v3270 = vpop.f32.mrb[0].mxu0
        %v3271 = vadd.f32 0.0, %v3270
        %3272 = vmatprep.mubr.bf16.mxu0 %v1680
        %3273 = vmatmul.mubr.bf16.gmra.mrb[0].mxu0 %v1679
        %v3274 = vpop.f32.mrb[0].mxu0
        %v3275 = vadd.f32 0.0, %v3274
        %v3276 = vpop.f32.mrb[0].mxu0
        %v3277 = vadd.f32 0.0, %v3276
        %v3278 = vpop.f32.mrb[0].mxu0
        %v3279 = vadd.f32 0.0, %v3278
        %v3280 = vpop.f32.mrb[0].mxu0
        %v3281 = vadd.f32 0.0, %v3280
        %3282 = vmatprep.mubr.bf16.mxu0 %v1684
        %3283 = vmatmul.mubr.bf16.gmra.mrb[0].mxu0 %v1683
        %v3284 = vpop.f32.mrb[0].mxu0
        %v3285 = vadd.f32 0.0, %v3284
        %v3286 = vpop.f32.mrb[0].mxu0
        %v3287 = vadd.f32 0.0, %v3286
        %v3288 = vpop.f32.mrb[0].mxu0
        %v3289 = vadd.f32 0.0, %v3288
        %v3290 = vpop.f32.mrb[0].mxu0
        %v3291 = vadd.f32 0.0, %v3290
        %3292 = vmatprep.mubr.bf16.mxu0 %v1688
        %3293 = vmatmul.mubr.bf16.gmra.mrb[0].mxu0 %v1687
        %v3294 = vpop.f32.mrb[0].mxu0
        %v3295 = vadd.f32 0.0, %v3294
        %v3296 = vpop.f32.mrb[0].mxu0
        %v3297 = vadd.f32 0.0, %v3296
        %v3298 = vpop.f32.mrb[0].mxu0
        %v3299 = vadd.f32 0.0, %v3298
        %v3300 = vpop.f32.mrb[0].mxu0
        %v3301 = vadd.f32 0.0, %v3300
        %3302 = vdwg.mxu0
        %3303 = vmatprep.subr.bf16.mxu0 %v2847
        %3304 = vmatpush1.bf16.msra.mxu0 %v2846
        %3305 = vmatprep.subr.bf16.mxu0 %v2855
        %3306 = vmatpush1.bf16.msra.mxu0 %v2854
        %3307 = vmatprep.subr.bf16.mxu0 %v2863
        %3308 = vmatpush1.bf16.msra.mxu0 %v2862
        %3309 = vmatprep.subr.bf16.mxu0 %v2871
        %3310 = vmatpush1.bf16.msra.mxu0 %v2870
        %3311 = vmatprep.subr.bf16.mxu0 %v2879
        %3312 = vmatpush1.bf16.msra.mxu0 %v2878
        %3313 = vmatprep.subr.bf16.mxu0 %v2887
        %3314 = vmatpush1.bf16.msra.mxu0 %v2886
        %3315 = vmatprep.subr.bf16.mxu0 %v2895
        %3316 = vmatpush1.bf16.msra.mxu0 %v2894
        %3317 = vmatprep.subr.bf16.mxu0 %v2903
        %3318 = vmatpush1.bf16.msra.mxu0 %v2902
        %3319 = vmatprep.subr.bf16.mxu0 %v2911
        %3320 = vmatpush1.bf16.msra.mxu0 %v2910
        %3321 = vmatprep.subr.bf16.mxu0 %v2919
        %3322 = vmatpush1.bf16.msra.mxu0 %v2918
        %3323 = vmatprep.subr.bf16.mxu0 %v2927
        %3324 = vmatpush1.bf16.msra.mxu0 %v2926
        %3325 = vmatprep.subr.bf16.mxu0 %v2935
        %3326 = vmatpush1.bf16.msra.mxu0 %v2934
        %3327 = vmatprep.subr.bf16.mxu0 %v2943
        %3328 = vmatpush1.bf16.msra.mxu0 %v2942
        %3329 = vmatprep.subr.bf16.mxu0 %v2951
        %3330 = vmatpush1.bf16.msra.mxu0 %v2950
        %3331 = vmatprep.subr.bf16.mxu0 %v2959
        %3332 = vmatpush1.bf16.msra.mxu0 %v2958
        %3333 = vmatprep.subr.bf16.mxu0 %v2967
        %3334 = vmatpush1.bf16.msra.mxu0 %v2966
        %3335 = vmatprep.mubr.bf16.mxu0 %v1678
        %3336 = vmatmul.mubr.bf16.gmra.mrb[0].mxu0 %v1677
        %v3337 = vpop.f32.mrb[0].mxu0
        %v3338 = vadd.f32 %v3265, %v3337
        %v3339 = vpop.f32.mrb[0].mxu0
        %v3340 = vadd.f32 %v3267, %v3339
        %v3341 = vpop.f32.mrb[0].mxu0
        %v3342 = vadd.f32 %v3269, %v3341
        %v3343 = vpop.f32.mrb[0].mxu0
        %v3344 = vadd.f32 %v3271, %v3343
        %3345 = vmatprep.mubr.bf16.mxu0 %v1682
        %3346 = vmatmul.mubr.bf16.gmra.mrb[0].mxu0 %v1681
        %v3347 = vpop.f32.mrb[0].mxu0
        %v3348 = vadd.f32 %v3275, %v3347
        %v3349 = vpop.f32.mrb[0].mxu0
        %v3350 = vadd.f32 %v3277, %v3349
        %v3351 = vpop.f32.mrb[0].mxu0
        %v3352 = vadd.f32 %v3279, %v3351
        %v3353 = vpop.f32.mrb[0].mxu0
        %v3354 = vadd.f32 %v3281, %v3353
        %3355 = vmatprep.mubr.bf16.mxu0 %v1686
        %3356 = vmatmul.mubr.bf16.gmra.mrb[0].mxu0 %v1685
        %v3357 = vpop.f32.mrb[0].mxu0
        %v3358 = vadd.f32 %v3285, %v3357
        %v3359 = vpop.f32.mrb[0].mxu0
        %v3360 = vadd.f32 %v3287, %v3359
        %v3361 = vpop.f32.mrb[0].mxu0
        %v3362 = vadd.f32 %v3289, %v3361
        %v3363 = vpop.f32.mrb[0].mxu0
        %v3364 = vadd.f32 %v3291, %v3363
        %3365 = vmatprep.mubr.bf16.mxu0 %v1690
        %3366 = vmatmul.mubr.bf16.gmra.mrb[0].mxu0 %v1689
        %v3367 = vpop.f32.mrb[0].mxu0
        %v3368 = vadd.f32 %v3295, %v3367
        %v3369 = vpop.f32.mrb[0].mxu0
        %v3370 = vadd.f32 %v3297, %v3369
        %v3371 = vpop.f32.mrb[0].mxu0
        %v3372 = vadd.f32 %v3299, %v3371
        %v3373 = vpop.f32.mrb[0].mxu0
        %v3374 = vadd.f32 %v3301, %v3373
        %3375 = vdwg.mxu0
        %3376 = vmatprep.subr.bf16.mxu0 %v2721
        %3377 = vmatpush1.bf16.msra.mxu0 %v2720
        %3378 = vmatprep.subr.bf16.mxu0 %v2729
        %3379 = vmatpush1.bf16.msra.mxu0 %v2728
        %3380 = vmatprep.subr.bf16.mxu0 %v2737
        %3381 = vmatpush1.bf16.msra.mxu0 %v2736
        %3382 = vmatprep.subr.bf16.mxu0 %v2745
        %3383 = vmatpush1.bf16.msra.mxu0 %v2744
        %3384 = vmatprep.subr.bf16.mxu0 %v2753
        %3385 = vmatpush1.bf16.msra.mxu0 %v2752
        %3386 = vmatprep.subr.bf16.mxu0 %v2761
        %3387 = vmatpush1.bf16.msra.mxu0 %v2760
        %3388 = vmatprep.subr.bf16.mxu0 %v2769
        %3389 = vmatpush1.bf16.msra.mxu0 %v2768
        %3390 = vmatprep.subr.bf16.mxu0 %v2777
        %3391 = vmatpush1.bf16.msra.mxu0 %v2776
        %3392 = vmatprep.subr.bf16.mxu0 %v2785
        %3393 = vmatpush1.bf16.msra.mxu0 %v2784
        %3394 = vmatprep.subr.bf16.mxu0 %v2793
        %3395 = vmatpush1.bf16.msra.mxu0 %v2792
        %3396 = vmatprep.subr.bf16.mxu0 %v2801
        %3397 = vmatpush1.bf16.msra.mxu0 %v2800
        %3398 = vmatprep.subr.bf16.mxu0 %v2809
        %3399 = vmatpush1.bf16.msra.mxu0 %v2808
        %3400 = vmatprep.subr.bf16.mxu0 %v2817
        %3401 = vmatpush1.bf16.msra.mxu0 %v2816
        %3402 = vmatprep.subr.bf16.mxu0 %v2825
        %3403 = vmatpush1.bf16.msra.mxu0 %v2824
        %3404 = vmatprep.subr.bf16.mxu0 %v2833
        %3405 = vmatpush1.bf16.msra.mxu0 %v2832
        %3406 = vmatprep.subr.bf16.mxu0 %v2841
        %3407 = vmatpush1.bf16.msra.mxu0 %v2840
        %3408 = vmatprep.mubr.bf16.mxu0 %v1676
        %3409 = vmatmul.mubr.bf16.gmra.mrb[0].mxu0 %v1675
        %v3410 = vpop.f32.mrb[0].mxu0
        %v3411 = vadd.f32 0.0, %v3410
        %v3412 = vpop.f32.mrb[0].mxu0
        %v3413 = vadd.f32 0.0, %v3412
        %v3414 = vpop.f32.mrb[0].mxu0
        %v3415 = vadd.f32 0.0, %v3414
        %v3416 = vpop.f32.mrb[0].mxu0
        %v3417 = vadd.f32 0.0, %v3416
        %3418 = vmatprep.mubr.bf16.mxu0 %v1680
        %3419 = vmatmul.mubr.bf16.gmra.mrb[0].mxu0 %v1679
        %v3420 = vpop.f32.mrb[0].mxu0
        %v3421 = vadd.f32 0.0, %v3420
        %v3422 = vpop.f32.mrb[0].mxu0
        %v3423 = vadd.f32 0.0, %v3422
        %v3424 = vpop.f32.mrb[0].mxu0
        %v3425 = vadd.f32 0.0, %v3424
        %v3426 = vpop.f32.mrb[0].mxu0
        %v3427 = vadd.f32 0.0, %v3426
        %3428 = vmatprep.mubr.bf16.mxu0 %v1684
        %3429 = vmatmul.mubr.bf16.gmra.mrb[0].mxu0 %v1683
        %v3430 = vpop.f32.mrb[0].mxu0
        %v3431 = vadd.f32 0.0, %v3430
        %v3432 = vpop.f32.mrb[0].mxu0
        %v3433 = vadd.f32 0.0, %v3432
        %v3434 = vpop.f32.mrb[0].mxu0
        %v3435 = vadd.f32 0.0, %v3434
        %v3436 = vpop.f32.mrb[0].mxu0
        %v3437 = vadd.f32 0.0, %v3436
        %3438 = vmatprep.mubr.bf16.mxu0 %v1688
        %3439 = vmatmul.mubr.bf16.gmra.mrb[0].mxu0 %v1687
        %v3440 = vpop.f32.mrb[0].mxu0
        %v3441 = vadd.f32 0.0, %v3440
        %v3442 = vpop.f32.mrb[0].mxu0
        %v3443 = vadd.f32 0.0, %v3442
        %v3444 = vpop.f32.mrb[0].mxu0
        %v3445 = vadd.f32 0.0, %v3444
        %v3446 = vpop.f32.mrb[0].mxu0
        %v3447 = vadd.f32 0.0, %v3446
        %3448 = vdwg.mxu0
        %3449 = vmatprep.subr.bf16.mxu0 %v2849
        %3450 = vmatpush1.bf16.msra.mxu0 %v2848
        %3451 = vmatprep.subr.bf16.mxu0 %v2857
        %3452 = vmatpush1.bf16.msra.mxu0 %v2856
        %3453 = vmatprep.subr.bf16.mxu0 %v2865
        %3454 = vmatpush1.bf16.msra.mxu0 %v2864
        %3455 = vmatprep.subr.bf16.mxu0 %v2873
        %3456 = vmatpush1.bf16.msra.mxu0 %v2872
        %3457 = vmatprep.subr.bf16.mxu0 %v2881
        %3458 = vmatpush1.bf16.msra.mxu0 %v2880
        %3459 = vmatprep.subr.bf16.mxu0 %v2889
        %3460 = vmatpush1.bf16.msra.mxu0 %v2888
        %3461 = vmatprep.subr.bf16.mxu0 %v2897
        %3462 = vmatpush1.bf16.msra.mxu0 %v2896
        %3463 = vmatprep.subr.bf16.mxu0 %v2905
        %3464 = vmatpush1.bf16.msra.mxu0 %v2904
        %3465 = vmatprep.subr.bf16.mxu0 %v2913
        %3466 = vmatpush1.bf16.msra.mxu0 %v2912
        %3467 = vmatprep.subr.bf16.mxu0 %v2921
        %3468 = vmatpush1.bf16.msra.mxu0 %v2920
        %3469 = vmatprep.subr.bf16.mxu0 %v2929
        %3470 = vmatpush1.bf16.msra.mxu0 %v2928
        %3471 = vmatprep.subr.bf16.mxu0 %v2937
        %3472 = vmatpush1.bf16.msra.mxu0 %v2936
        %3473 = vmatprep.subr.bf16.mxu0 %v2945
        %3474 = vmatpush1.bf16.msra.mxu0 %v2944
        %3475 = vmatprep.subr.bf16.mxu0 %v2953
        %3476 = vmatpush1.bf16.msra.mxu0 %v2952
        %3477 = vmatprep.subr.bf16.mxu0 %v2961
        %3478 = vmatpush1.bf16.msra.mxu0 %v2960
        %3479 = vmatprep.subr.bf16.mxu0 %v2969
        %3480 = vmatpush1.bf16.msra.mxu0 %v2968
        %3481 = vmatprep.mubr.bf16.mxu0 %v1678
        %3482 = vmatmul.mubr.bf16.gmra.mrb[0].mxu0 %v1677
        %v3483 = vpop.f32.mrb[0].mxu0
        %v3484 = vadd.f32 %v3411, %v3483
        %v3485 = vpop.f32.mrb[0].mxu0
        %v3486 = vadd.f32 %v3413, %v3485
        %v3487 = vpop.f32.mrb[0].mxu0
        %v3488 = vadd.f32 %v3415, %v3487
        %v3489 = vpop.f32.mrb[0].mxu0
        %v3490 = vadd.f32 %v3417, %v3489
        %3491 = vmatprep.mubr.bf16.mxu0 %v1682
        %3492 = vmatmul.mubr.bf16.gmra.mrb[0].mxu0 %v1681
        %v3493 = vpop.f32.mrb[0].mxu0
        %v3494 = vadd.f32 %v3421, %v3493
        %v3495 = vpop.f32.mrb[0].mxu0
        %v3496 = vadd.f32 %v3423, %v3495
        %v3497 = vpop.f32.mrb[0].mxu0
        %v3498 = vadd.f32 %v3425, %v3497
        %v3499 = vpop.f32.mrb[0].mxu0
        %v3500 = vadd.f32 %v3427, %v3499
        %3501 = vmatprep.mubr.bf16.mxu0 %v1686
        %3502 = vmatmul.mubr.bf16.gmra.mrb[0].mxu0 %v1685
        %v3503 = vpop.f32.mrb[0].mxu0
        %v3504 = vadd.f32 %v3431, %v3503
        %v3505 = vpop.f32.mrb[0].mxu0
        %v3506 = vadd.f32 %v3433, %v3505
        %v3507 = vpop.f32.mrb[0].mxu0
        %v3508 = vadd.f32 %v3435, %v3507
        %v3509 = vpop.f32.mrb[0].mxu0
        %v3510 = vadd.f32 %v3437, %v3509
        %3511 = vmatprep.mubr.bf16.mxu0 %v1690
        %3512 = vmatmul.mubr.bf16.gmra.mrb[0].mxu0 %v1689
        %v3513 = vpop.f32.mrb[0].mxu0
        %v3514 = vadd.f32 %v3441, %v3513
        %v3515 = vpop.f32.mrb[0].mxu0
        %v3516 = vadd.f32 %v3443, %v3515
        %v3517 = vpop.f32.mrb[0].mxu0
        %v3518 = vadd.f32 %v3445, %v3517
        %v3519 = vpop.f32.mrb[0].mxu0
        %v3520 = vadd.f32 %v3447, %v3519
        %3521 = vdwg.mxu0
        %3522 = vmatprep.subr.bf16.mxu0 %v2723
        %3523 = vmatpush1.bf16.msra.mxu0 %v2722
        %3524 = vmatprep.subr.bf16.mxu0 %v2731
        %3525 = vmatpush1.bf16.msra.mxu0 %v2730
        %3526 = vmatprep.subr.bf16.mxu0 %v2739
        %3527 = vmatpush1.bf16.msra.mxu0 %v2738
        %3528 = vmatprep.subr.bf16.mxu0 %v2747
        %3529 = vmatpush1.bf16.msra.mxu0 %v2746
        %3530 = vmatprep.subr.bf16.mxu0 %v2755
        %3531 = vmatpush1.bf16.msra.mxu0 %v2754
        %3532 = vmatprep.subr.bf16.mxu0 %v2763
        %3533 = vmatpush1.bf16.msra.mxu0 %v2762
        %3534 = vmatprep.subr.bf16.mxu0 %v2771
        %3535 = vmatpush1.bf16.msra.mxu0 %v2770
        %3536 = vmatprep.subr.bf16.mxu0 %v2779
        %3537 = vmatpush1.bf16.msra.mxu0 %v2778
        %3538 = vmatprep.subr.bf16.mxu0 %v2787
        %3539 = vmatpush1.bf16.msra.mxu0 %v2786
        %3540 = vmatprep.subr.bf16.mxu0 %v2795
        %3541 = vmatpush1.bf16.msra.mxu0 %v2794
        %3542 = vmatprep.subr.bf16.mxu0 %v2803
        %3543 = vmatpush1.bf16.msra.mxu0 %v2802
        %3544 = vmatprep.subr.bf16.mxu0 %v2811
        %3545 = vmatpush1.bf16.msra.mxu0 %v2810
        %3546 = vmatprep.subr.bf16.mxu0 %v2819
        %3547 = vmatpush1.bf16.msra.mxu0 %v2818
        %3548 = vmatprep.subr.bf16.mxu0 %v2827
        %3549 = vmatpush1.bf16.msra.mxu0 %v2826
        %3550 = vmatprep.subr.bf16.mxu0 %v2835
        %3551 = vmatpush1.bf16.msra.mxu0 %v2834
        %3552 = vmatprep.subr.bf16.mxu0 %v2843
        %3553 = vmatpush1.bf16.msra.mxu0 %v2842
        %3554 = vmatprep.mubr.bf16.mxu0 %v1676
        %3555 = vmatmul.mubr.bf16.gmra.mrb[0].mxu0 %v1675
        %v3556 = vpop.f32.mrb[0].mxu0
        %v3557 = vadd.f32 0.0, %v3556
        %v3558 = vpop.f32.mrb[0].mxu0
        %v3559 = vadd.f32 0.0, %v3558
        %v3560 = vpop.f32.mrb[0].mxu0
        %v3561 = vadd.f32 0.0, %v3560
        %v3562 = vpop.f32.mrb[0].mxu0
        %v3563 = vadd.f32 0.0, %v3562
        %3564 = vmatprep.mubr.bf16.mxu0 %v1680
        %3565 = vmatmul.mubr.bf16.gmra.mrb[0].mxu0 %v1679
        %v3566 = vpop.f32.mrb[0].mxu0
        %v3567 = vadd.f32 0.0, %v3566
        %v3568 = vpop.f32.mrb[0].mxu0
        %v3569 = vadd.f32 0.0, %v3568
        %v3570 = vpop.f32.mrb[0].mxu0
        %v3571 = vadd.f32 0.0, %v3570
        %v3572 = vpop.f32.mrb[0].mxu0
        %v3573 = vadd.f32 0.0, %v3572
        %3574 = vmatprep.mubr.bf16.mxu0 %v1684
        %3575 = vmatmul.mubr.bf16.gmra.mrb[0].mxu0 %v1683
        %v3576 = vpop.f32.mrb[0].mxu0
        %v3577 = vadd.f32 0.0, %v3576
        %v3578 = vpop.f32.mrb[0].mxu0
        %v3579 = vadd.f32 0.0, %v3578
        %v3580 = vpop.f32.mrb[0].mxu0
        %v3581 = vadd.f32 0.0, %v3580
        %v3582 = vpop.f32.mrb[0].mxu0
        %v3583 = vadd.f32 0.0, %v3582
        %3584 = vmatprep.mubr.bf16.mxu0 %v1688
        %3585 = vmatmul.mubr.bf16.gmra.mrb[0].mxu0 %v1687
        %v3586 = vpop.f32.mrb[0].mxu0
        %v3587 = vadd.f32 0.0, %v3586
        %v3588 = vpop.f32.mrb[0].mxu0
        %v3589 = vadd.f32 0.0, %v3588
        %v3590 = vpop.f32.mrb[0].mxu0
        %v3591 = vadd.f32 0.0, %v3590
        %v3592 = vpop.f32.mrb[0].mxu0
        %v3593 = vadd.f32 0.0, %v3592
        %3594 = vdwg.mxu0
        %3595 = vmatprep.subr.bf16.mxu0 %v2851
        %3596 = vmatpush1.bf16.msra.mxu0 %v2850
        %3597 = vmatprep.subr.bf16.mxu0 %v2859
        %3598 = vmatpush1.bf16.msra.mxu0 %v2858
        %3599 = vmatprep.subr.bf16.mxu0 %v2867
        %3600 = vmatpush1.bf16.msra.mxu0 %v2866
        %3601 = vmatprep.subr.bf16.mxu0 %v2875
        %3602 = vmatpush1.bf16.msra.mxu0 %v2874
        %3603 = vmatprep.subr.bf16.mxu0 %v2883
        %3604 = vmatpush1.bf16.msra.mxu0 %v2882
        %3605 = vmatprep.subr.bf16.mxu0 %v2891
        %3606 = vmatpush1.bf16.msra.mxu0 %v2890
        %3607 = vmatprep.subr.bf16.mxu0 %v2899
        %3608 = vmatpush1.bf16.msra.mxu0 %v2898
        %3609 = vmatprep.subr.bf16.mxu0 %v2907
        %3610 = vmatpush1.bf16.msra.mxu0 %v2906
        %3611 = vmatprep.subr.bf16.mxu0 %v2915
        %3612 = vmatpush1.bf16.msra.mxu0 %v2914
        %3613 = vmatprep.subr.bf16.mxu0 %v2923
        %3614 = vmatpush1.bf16.msra.mxu0 %v2922
        %3615 = vmatprep.subr.bf16.mxu0 %v2931
        %3616 = vmatpush1.bf16.msra.mxu0 %v2930
        %3617 = vmatprep.subr.bf16.mxu0 %v2939
        %3618 = vmatpush1.bf16.msra.mxu0 %v2938
        %3619 = vmatprep.subr.bf16.mxu0 %v2947
        %3620 = vmatpush1.bf16.msra.mxu0 %v2946
        %3621 = vmatprep.subr.bf16.mxu0 %v2955
        %3622 = vmatpush1.bf16.msra.mxu0 %v2954
        %3623 = vmatprep.subr.bf16.mxu0 %v2963
        %3624 = vmatpush1.bf16.msra.mxu0 %v2962
        %3625 = vmatprep.subr.bf16.mxu0 %v2971
        %3626 = vmatpush1.bf16.msra.mxu0 %v2970
        %3627 = vmatprep.mubr.bf16.mxu0 %v1678
        %3628 = vmatmul.mubr.bf16.gmra.mrb[0].mxu0 %v1677
        %v3629 = vpop.f32.mrb[0].mxu0
        %v3630 = vadd.f32 %v3557, %v3629
        %v3631 = vpop.f32.mrb[0].mxu0
        %v3632 = vadd.f32 %v3559, %v3631
        %v3633 = vpop.f32.mrb[0].mxu0
        %v3634 = vadd.f32 %v3561, %v3633
        %v3635 = vpop.f32.mrb[0].mxu0
        %v3636 = vadd.f32 %v3563, %v3635
        %3637 = vmatprep.mubr.bf16.mxu0 %v1682
        %3638 = vmatmul.mubr.bf16.gmra.mrb[0].mxu0 %v1681
        %v3639 = vpop.f32.mrb[0].mxu0
        %v3640 = vadd.f32 %v3567, %v3639
        %v3641 = vpop.f32.mrb[0].mxu0
        %v3642 = vadd.f32 %v3569, %v3641
        %v3643 = vpop.f32.mrb[0].mxu0
        %v3644 = vadd.f32 %v3571, %v3643
        %v3645 = vpop.f32.mrb[0].mxu0
        %v3646 = vadd.f32 %v3573, %v3645
        %3647 = vmatprep.mubr.bf16.mxu0 %v1686
        %3648 = vmatmul.mubr.bf16.gmra.mrb[0].mxu0 %v1685
        %v3649 = vpop.f32.mrb[0].mxu0
        %v3650 = vadd.f32 %v3577, %v3649
        %v3651 = vpop.f32.mrb[0].mxu0
        %v3652 = vadd.f32 %v3579, %v3651
        %v3653 = vpop.f32.mrb[0].mxu0
        %v3654 = vadd.f32 %v3581, %v3653
        %v3655 = vpop.f32.mrb[0].mxu0
        %v3656 = vadd.f32 %v3583, %v3655
        %3657 = vmatprep.mubr.bf16.mxu0 %v1690
        %3658 = vmatmul.mubr.bf16.gmra.mrb[0].mxu0 %v1689
        %v3659 = vpop.f32.mrb[0].mxu0
        %v3660 = vadd.f32 %v3587, %v3659
        %v3661 = vpop.f32.mrb[0].mxu0
        %v3662 = vadd.f32 %v3589, %v3661
        %v3663 = vpop.f32.mrb[0].mxu0
        %v3664 = vadd.f32 %v3591, %v3663
        %v3665 = vpop.f32.mrb[0].mxu0
        %v3666 = vadd.f32 %v3593, %v3665
        %3667 = vdwg.mxu0
        %3668 = vmatprep.subr.bf16.mxu0 %v2725
        %3669 = vmatpush1.bf16.msra.mxu0 %v2724
        %3670 = vmatprep.subr.bf16.mxu0 %v2733
        %3671 = vmatpush1.bf16.msra.mxu0 %v2732
        %3672 = vmatprep.subr.bf16.mxu0 %v2741
        %3673 = vmatpush1.bf16.msra.mxu0 %v2740
        %3674 = vmatprep.subr.bf16.mxu0 %v2749
        %3675 = vmatpush1.bf16.msra.mxu0 %v2748
        %3676 = vmatprep.subr.bf16.mxu0 %v2757
        %3677 = vmatpush1.bf16.msra.mxu0 %v2756
        %3678 = vmatprep.subr.bf16.mxu0 %v2765
        %3679 = vmatpush1.bf16.msra.mxu0 %v2764
        %3680 = vmatprep.subr.bf16.mxu0 %v2773
        %3681 = vmatpush1.bf16.msra.mxu0 %v2772
        %3682 = vmatprep.subr.bf16.mxu0 %v2781
        %3683 = vmatpush1.bf16.msra.mxu0 %v2780
        %3684 = vmatprep.subr.bf16.mxu0 %v2789
        %3685 = vmatpush1.bf16.msra.mxu0 %v2788
        %3686 = vmatprep.subr.bf16.mxu0 %v2797
        %3687 = vmatpush1.bf16.msra.mxu0 %v2796
        %3688 = vmatprep.subr.bf16.mxu0 %v2805
        %3689 = vmatpush1.bf16.msra.mxu0 %v2804
        %3690 = vmatprep.subr.bf16.mxu0 %v2813
        %3691 = vmatpush1.bf16.msra.mxu0 %v2812
        %3692 = vmatprep.subr.bf16.mxu0 %v2821
        %3693 = vmatpush1.bf16.msra.mxu0 %v2820
        %3694 = vmatprep.subr.bf16.mxu0 %v2829
        %3695 = vmatpush1.bf16.msra.mxu0 %v2828
        %3696 = vmatprep.subr.bf16.mxu0 %v2837
        %3697 = vmatpush1.bf16.msra.mxu0 %v2836
        %3698 = vmatprep.subr.bf16.mxu0 %v2845
        %3699 = vmatpush1.bf16.msra.mxu0 %v2844
        %3700 = vmatprep.mubr.bf16.mxu0 %v1676
        %3701 = vmatmul.mubr.bf16.gmra.mrb[0].mxu0 %v1675
        %v3702 = vpop.f32.mrb[0].mxu0
        %v3703 = vadd.f32 0.0, %v3702
        %v3704 = vpop.f32.mrb[0].mxu0
        %v3705 = vadd.f32 0.0, %v3704
        %v3706 = vpop.f32.mrb[0].mxu0
        %v3707 = vadd.f32 0.0, %v3706
        %v3708 = vpop.f32.mrb[0].mxu0
        %v3709 = vadd.f32 0.0, %v3708
        %3710 = vmatprep.mubr.bf16.mxu0 %v1680
        %3711 = vmatmul.mubr.bf16.gmra.mrb[0].mxu0 %v1679
        %v3712 = vpop.f32.mrb[0].mxu0
        %v3713 = vadd.f32 0.0, %v3712
        %v3714 = vpop.f32.mrb[0].mxu0
        %v3715 = vadd.f32 0.0, %v3714
        %v3716 = vpop.f32.mrb[0].mxu0
        %v3717 = vadd.f32 0.0, %v3716
        %v3718 = vpop.f32.mrb[0].mxu0
        %v3719 = vadd.f32 0.0, %v3718
        %3720 = vmatprep.mubr.bf16.mxu0 %v1684
        %3721 = vmatmul.mubr.bf16.gmra.mrb[0].mxu0 %v1683
        %v3722 = vpop.f32.mrb[0].mxu0
        %v3723 = vadd.f32 0.0, %v3722
        %v3724 = vpop.f32.mrb[0].mxu0
        %v3725 = vadd.f32 0.0, %v3724
        %v3726 = vpop.f32.mrb[0].mxu0
        %v3727 = vadd.f32 0.0, %v3726
        %v3728 = vpop.f32.mrb[0].mxu0
        %v3729 = vadd.f32 0.0, %v3728
        %3730 = vmatprep.mubr.bf16.mxu0 %v1688
        %3731 = vmatmul.mubr.bf16.gmra.mrb[0].mxu0 %v1687
        %v3732 = vpop.f32.mrb[0].mxu0
        %v3733 = vadd.f32 0.0, %v3732
        %v3734 = vpop.f32.mrb[0].mxu0
        %v3735 = vadd.f32 0.0, %v3734
        %v3736 = vpop.f32.mrb[0].mxu0
        %v3737 = vadd.f32 0.0, %v3736
        %v3738 = vpop.f32.mrb[0].mxu0
        %v3739 = vadd.f32 0.0, %v3738
        %3740 = vdwg.mxu0
        %3741 = vmatprep.subr.bf16.mxu0 %v2853
        %3742 = vmatpush1.bf16.msra.mxu0 %v2852
        %3743 = vmatprep.subr.bf16.mxu0 %v2861
        %3744 = vmatpush1.bf16.msra.mxu0 %v2860
        %3745 = vmatprep.subr.bf16.mxu0 %v2869
        %3746 = vmatpush1.bf16.msra.mxu0 %v2868
        %3747 = vmatprep.subr.bf16.mxu0 %v2877
        %3748 = vmatpush1.bf16.msra.mxu0 %v2876
        %3749 = vmatprep.subr.bf16.mxu0 %v2885
        %3750 = vmatpush1.bf16.msra.mxu0 %v2884
        %3751 = vmatprep.subr.bf16.mxu0 %v2893
        %3752 = vmatpush1.bf16.msra.mxu0 %v2892
        %3753 = vmatprep.subr.bf16.mxu0 %v2901
        %3754 = vmatpush1.bf16.msra.mxu0 %v2900
        %3755 = vmatprep.subr.bf16.mxu0 %v2909
        %3756 = vmatpush1.bf16.msra.mxu0 %v2908
        %3757 = vmatprep.subr.bf16.mxu0 %v2917
        %3758 = vmatpush1.bf16.msra.mxu0 %v2916
        %3759 = vmatprep.subr.bf16.mxu0 %v2925
        %3760 = vmatpush1.bf16.msra.mxu0 %v2924
        %3761 = vmatprep.subr.bf16.mxu0 %v2933
        %3762 = vmatpush1.bf16.msra.mxu0 %v2932
        %3763 = vmatprep.subr.bf16.mxu0 %v2941
        %3764 = vmatpush1.bf16.msra.mxu0 %v2940
        %3765 = vmatprep.subr.bf16.mxu0 %v2949
        %3766 = vmatpush1.bf16.msra.mxu0 %v2948
        %3767 = vmatprep.subr.bf16.mxu0 %v2957
        %3768 = vmatpush1.bf16.msra.mxu0 %v2956
        %3769 = vmatprep.subr.bf16.mxu0 %v2965
        %3770 = vmatpush1.bf16.msra.mxu0 %v2964
        %3771 = vmatprep.subr.bf16.mxu0 %v2973
        %3772 = vmatpush1.bf16.msra.mxu0 %v2972
        %3773 = vmatprep.mubr.bf16.mxu0 %v1678
        %3774 = vmatmul.mubr.bf16.gmra.mrb[0].mxu0 %v1677
        %v3775 = vpop.f32.mrb[0].mxu0
        %v3776 = vadd.f32 %v3703, %v3775
        %v3777 = vpop.f32.mrb[0].mxu0
        %v3778 = vadd.f32 %v3705, %v3777
        %v3779 = vpop.f32.mrb[0].mxu0
        %v3780 = vadd.f32 %v3707, %v3779
        %v3781 = vpop.f32.mrb[0].mxu0
        %v3782 = vadd.f32 %v3709, %v3781
        %3783 = vmatprep.mubr.bf16.mxu0 %v1682
        %3784 = vmatmul.mubr.bf16.gmra.mrb[0].mxu0 %v1681
        %v3785 = vpop.f32.mrb[0].mxu0
        %v3786 = vadd.f32 %v3713, %v3785
        %v3787 = vpop.f32.mrb[0].mxu0
        %v3788 = vadd.f32 %v3715, %v3787
        %v3789 = vpop.f32.mrb[0].mxu0
        %v3790 = vadd.f32 %v3717, %v3789
        %v3791 = vpop.f32.mrb[0].mxu0
        %v3792 = vadd.f32 %v3719, %v3791
        %3793 = vmatprep.mubr.bf16.mxu0 %v1686
        %3794 = vmatmul.mubr.bf16.gmra.mrb[0].mxu0 %v1685
        %v3795 = vpop.f32.mrb[0].mxu0
        %v3796 = vadd.f32 %v3723, %v3795
        %v3797 = vpop.f32.mrb[0].mxu0
        %v3798 = vadd.f32 %v3725, %v3797
        %v3799 = vpop.f32.mrb[0].mxu0
        %v3800 = vadd.f32 %v3727, %v3799
        %v3801 = vpop.f32.mrb[0].mxu0
        %v3802 = vadd.f32 %v3729, %v3801
        %3803 = vmatprep.mubr.bf16.mxu0 %v1690
        %3804 = vmatmul.mubr.bf16.gmra.mrb[0].mxu0 %v1689
        %v3805 = vpop.f32.mrb[0].mxu0
        %v3806 = vadd.f32 %v3733, %v3805
        %v3807 = vpop.f32.mrb[0].mxu0
        %v3808 = vadd.f32 %v3735, %v3807
        %v3809 = vpop.f32.mrb[0].mxu0
        %v3810 = vadd.f32 %v3737, %v3809
        %v3811 = vpop.f32.mrb[0].mxu0
        %v3812 = vadd.f32 %v3739, %v3811
        %3813 = vdwg.mxu0
        %v3814 = vlaneseq
        %v3815 = vshrl.u32 %v3814, 7
        %v3816 = vsub.s32 1, %v3815
        %v3817 = vrot.slane %v416, %v3816
        %v3818 = vlaneseq
        %v3819 = vshrl.u32 %v3818, 7
        %v3820 = vsub.s32 1, %v3819
        %v3821 = vrot.slane %v417, %v3820
        %v3822 = vlaneseq
        %v3823 = vshrl.u32 %v3822, 7
        %v3824 = vsub.s32 1, %v3823
        %v3825 = vrot.slane %v418, %v3824
        %v3826 = vlaneseq
        %v3827 = vshrl.u32 %v3826, 7
        %v3828 = vsub.s32 1, %v3827
        %v3829 = vrot.slane %v419, %v3828
        %v3830 = vadd.f32 %v3338, %v3817
        %v3831 = vadd.f32 %v3340, %v3821
        %v3832 = vadd.f32 %v3484, %v3825
        %v3833 = vadd.f32 %v3486, %v3829
        %v3834 = vadd.f32 %v3342, %v3817
        %v3835 = vadd.f32 %v3344, %v3821
        %v3836 = vadd.f32 %v3488, %v3825
        %v3837 = vadd.f32 %v3490, %v3829
        %v3838 = vadd.f32 %v3348, %v3817
        %v3839 = vadd.f32 %v3350, %v3821
        %v3840 = vadd.f32 %v3494, %v3825
        %v3841 = vadd.f32 %v3496, %v3829
        %v3842 = vadd.f32 %v3352, %v3817
        %v3843 = vadd.f32 %v3354, %v3821
        %v3844 = vadd.f32 %v3498, %v3825
        %v3845 = vadd.f32 %v3500, %v3829
        %v3846 = vadd.f32 %v3358, %v3817
        %v3847 = vadd.f32 %v3360, %v3821
        %v3848 = vadd.f32 %v3504, %v3825
        %v3849 = vadd.f32 %v3506, %v3829
        %v3850 = vadd.f32 %v3362, %v3817
        %v3851 = vadd.f32 %v3364, %v3821
        %v3852 = vadd.f32 %v3508, %v3825
        %v3853 = vadd.f32 %v3510, %v3829
        %v3854 = vadd.f32 %v3368, %v3817
        %v3855 = vadd.f32 %v3370, %v3821
        %v3856 = vadd.f32 %v3514, %v3825
        %v3857 = vadd.f32 %v3516, %v3829
        %v3858 = vadd.f32 %v3372, %v3817
        %v3859 = vadd.f32 %v3374, %v3821
        %v3860 = vadd.f32 %v3518, %v3825
        %v3861 = vadd.f32 %v3520, %v3829
        %v3862 = vpack.c.bf16 %v3834, %v3830
        %v3863 = vpack.c.bf16 %v3835, %v3831
        %v3864 = vpack.c.bf16 %v3836, %v3832
        %v3865 = vpack.c.bf16 %v3837, %v3833
        %v3866 = vpack.c.bf16 %v3842, %v3838
        %v3867 = vpack.c.bf16 %v3843, %v3839
        %v3868 = vpack.c.bf16 %v3844, %v3840
        %v3869 = vpack.c.bf16 %v3845, %v3841
        %v3870 = vpack.c.bf16 %v3850, %v3846
        %v3871 = vpack.c.bf16 %v3851, %v3847
        %v3872 = vpack.c.bf16 %v3852, %v3848
        %v3873 = vpack.c.bf16 %v3853, %v3849
        %v3874 = vpack.c.bf16 %v3858, %v3854
        %v3875 = vpack.c.bf16 %v3859, %v3855
        %v3876 = vpack.c.bf16 %v3860, %v3856
        %v3877 = vpack.c.bf16 %v3861, %v3857
        %v3894 = vunpack.c.l.b16 %v3862
        %v3895 = vunpack.c.l.b16 %v3863
        %v3896 = vunpack.c.l.b16 %v3864
        %v3897 = vunpack.c.l.b16 %v3865
        %v3898 = vunpack.c.h.b16 %v3862
        %v3899 = vunpack.c.h.b16 %v3863
        %v3900 = vunpack.c.h.b16 %v3864
        %v3901 = vunpack.c.h.b16 %v3865
        %v3902 = vunpack.c.l.b16 %v3866
        %v3903 = vunpack.c.l.b16 %v3867
        %v3904 = vunpack.c.l.b16 %v3868
        %v3905 = vunpack.c.l.b16 %v3869
        %v3906 = vunpack.c.h.b16 %v3866
        %v3907 = vunpack.c.h.b16 %v3867
        %v3908 = vunpack.c.h.b16 %v3868
        %v3909 = vunpack.c.h.b16 %v3869
        %v3910 = vunpack.c.l.b16 %v3870
        %v3911 = vunpack.c.l.b16 %v3871
        %v3912 = vunpack.c.l.b16 %v3872
        %v3913 = vunpack.c.l.b16 %v3873
        %v3914 = vunpack.c.h.b16 %v3870
        %v3915 = vunpack.c.h.b16 %v3871
        %v3916 = vunpack.c.h.b16 %v3872
        %v3917 = vunpack.c.h.b16 %v3873
        %v3918 = vunpack.c.l.b16 %v3874
        %v3919 = vunpack.c.l.b16 %v3875
        %v3920 = vunpack.c.l.b16 %v3876
        %v3921 = vunpack.c.l.b16 %v3877
        %v3922 = vunpack.c.h.b16 %v3874
        %v3923 = vunpack.c.h.b16 %v3875
        %v3924 = vunpack.c.h.b16 %v3876
        %v3925 = vunpack.c.h.b16 %v3877
        %v3926 = vpack.c.b16 %v3895, %v3894
        %v3927 = vpack.c.b16 %v3897, %v3896
        %v3928 = vpack.c.b16 %v3899, %v3898
        %v3929 = vpack.c.b16 %v3901, %v3900
        %v3930 = vpack.c.b16 %v3903, %v3902
        %v3931 = vpack.c.b16 %v3905, %v3904
        %v3932 = vpack.c.b16 %v3907, %v3906
        %v3933 = vpack.c.b16 %v3909, %v3908
        %v3934 = vpack.c.b16 %v3911, %v3910
        %v3935 = vpack.c.b16 %v3913, %v3912
        %v3936 = vpack.c.b16 %v3915, %v3914
        %v3937 = vpack.c.b16 %v3917, %v3916
        %v3938 = vpack.c.b16 %v3919, %v3918
        %v3939 = vpack.c.b16 %v3921, %v3920
        %v3940 = vpack.c.b16 %v3923, %v3922
        %v3941 = vpack.c.b16 %v3925, %v3924
        %v3958 = vlaneseq
        %v3959 = vshrl.u32 %v3958, 7
        %v3960 = vsub.s32 2, %v3959
        %v3961 = vrot.slane %v416, %v3960
        %v3962 = vlaneseq
        %v3963 = vshrl.u32 %v3962, 7
        %v3964 = vsub.s32 2, %v3963
        %v3965 = vrot.slane %v417, %v3964
        %v3966 = vlaneseq
        %v3967 = vshrl.u32 %v3966, 7
        %v3968 = vsub.s32 2, %v3967
        %v3969 = vrot.slane %v418, %v3968
        %v3970 = vlaneseq
        %v3971 = vshrl.u32 %v3970, 7
        %v3972 = vsub.s32 2, %v3971
        %v3973 = vrot.slane %v419, %v3972
        %v3974 = vadd.f32 %v3630, %v3961
        %v3975 = vadd.f32 %v3632, %v3965
        %v3976 = vadd.f32 %v3776, %v3969
        %v3977 = vadd.f32 %v3778, %v3973
        %v3978 = vadd.f32 %v3634, %v3961
        %v3979 = vadd.f32 %v3636, %v3965
        %v3980 = vadd.f32 %v3780, %v3969
        %v3981 = vadd.f32 %v3782, %v3973
        %v3982 = vadd.f32 %v3640, %v3961
        %v3983 = vadd.f32 %v3642, %v3965
        %v3984 = vadd.f32 %v3786, %v3969
        %v3985 = vadd.f32 %v3788, %v3973
        %v3986 = vadd.f32 %v3644, %v3961
        %v3987 = vadd.f32 %v3646, %v3965
        %v3988 = vadd.f32 %v3790, %v3969
        %v3989 = vadd.f32 %v3792, %v3973
        %v3990 = vadd.f32 %v3650, %v3961
        %v3991 = vadd.f32 %v3652, %v3965
        %v3992 = vadd.f32 %v3796, %v3969
        %v3993 = vadd.f32 %v3798, %v3973
        %v3994 = vadd.f32 %v3654, %v3961
        %v3995 = vadd.f32 %v3656, %v3965
        %v3996 = vadd.f32 %v3800, %v3969
        %v3997 = vadd.f32 %v3802, %v3973
        %v3998 = vadd.f32 %v3660, %v3961
        %v3999 = vadd.f32 %v3662, %v3965
        %v4000 = vadd.f32 %v3806, %v3969
        %v4001 = vadd.f32 %v3808, %v3973
        %v4002 = vadd.f32 %v3664, %v3961
        %v4003 = vadd.f32 %v3666, %v3965
        %v4004 = vadd.f32 %v3810, %v3969
        %v4005 = vadd.f32 %v3812, %v3973
        %v4006 = vpack.c.bf16 %v3978, %v3974
        %v4007 = vpack.c.bf16 %v3979, %v3975
        %v4008 = vpack.c.bf16 %v3980, %v3976
        %v4009 = vpack.c.bf16 %v3981, %v3977
        %v4010 = vpack.c.bf16 %v3986, %v3982
        %v4011 = vpack.c.bf16 %v3987, %v3983
        %v4012 = vpack.c.bf16 %v3988, %v3984
        %v4013 = vpack.c.bf16 %v3989, %v3985
        %v4014 = vpack.c.bf16 %v3994, %v3990
        %v4015 = vpack.c.bf16 %v3995, %v3991
        %v4016 = vpack.c.bf16 %v3996, %v3992
        %v4017 = vpack.c.bf16 %v3997, %v3993
        %v4018 = vpack.c.bf16 %v4002, %v3998
        %v4019 = vpack.c.bf16 %v4003, %v3999
        %v4020 = vpack.c.bf16 %v4004, %v4000
        %v4021 = vpack.c.bf16 %v4005, %v4001
        %v4038 = vunpack.c.l.b16 %v4006
        %v4039 = vunpack.c.l.b16 %v4007
        %v4040 = vunpack.c.l.b16 %v4008
        %v4041 = vunpack.c.l.b16 %v4009
        %v4042 = vunpack.c.h.b16 %v4006
        %v4043 = vunpack.c.h.b16 %v4007
        %v4044 = vunpack.c.h.b16 %v4008
        %v4045 = vunpack.c.h.b16 %v4009
        %v4046 = vunpack.c.l.b16 %v4010
        %v4047 = vunpack.c.l.b16 %v4011
        %v4048 = vunpack.c.l.b16 %v4012
        %v4049 = vunpack.c.l.b16 %v4013
        %v4050 = vunpack.c.h.b16 %v4010
        %v4051 = vunpack.c.h.b16 %v4011
        %v4052 = vunpack.c.h.b16 %v4012
        %v4053 = vunpack.c.h.b16 %v4013
        %v4054 = vunpack.c.l.b16 %v4014
        %v4055 = vunpack.c.l.b16 %v4015
        %v4056 = vunpack.c.l.b16 %v4016
        %v4057 = vunpack.c.l.b16 %v4017
        %v4058 = vunpack.c.h.b16 %v4014
        %v4059 = vunpack.c.h.b16 %v4015
        %v4060 = vunpack.c.h.b16 %v4016
        %v4061 = vunpack.c.h.b16 %v4017
        %v4062 = vunpack.c.l.b16 %v4018
        %v4063 = vunpack.c.l.b16 %v4019
        %v4064 = vunpack.c.l.b16 %v4020
        %v4065 = vunpack.c.l.b16 %v4021
        %v4066 = vunpack.c.h.b16 %v4018
        %v4067 = vunpack.c.h.b16 %v4019
        %v4068 = vunpack.c.h.b16 %v4020
        %v4069 = vunpack.c.h.b16 %v4021
        %v4070 = vpack.c.b16 %v4039, %v4038
        %v4071 = vpack.c.b16 %v4041, %v4040
        %v4072 = vpack.c.b16 %v4043, %v4042
        %v4073 = vpack.c.b16 %v4045, %v4044
        %v4074 = vpack.c.b16 %v4047, %v4046
        %v4075 = vpack.c.b16 %v4049, %v4048
        %v4076 = vpack.c.b16 %v4051, %v4050
        %v4077 = vpack.c.b16 %v4053, %v4052
        %v4078 = vpack.c.b16 %v4055, %v4054
        %v4079 = vpack.c.b16 %v4057, %v4056
        %v4080 = vpack.c.b16 %v4059, %v4058
        %v4081 = vpack.c.b16 %v4061, %v4060
        %v4082 = vpack.c.b16 %v4063, %v4062
        %v4083 = vpack.c.b16 %v4065, %v4064
        %v4084 = vpack.c.b16 %v4067, %v4066
        %v4085 = vpack.c.b16 %v4069, %v4068
        %4086 = vmatprep.subr.bf16.mxu0 0
        %4087 = vmatpush1.bf16.xpose.msra.mxu0 %v3926
        %4088 = vmatprep.subr.bf16.mxu0 0
        %4089 = vmatpush1.bf16.xpose.msra.mxu0 0
        %4090 = vmatprep.subr.bf16.mxu0 0
        %4091 = vmatpush1.bf16.xpose.msra.mxu0 0
        %4092 = vmatprep.subr.bf16.mxu0 0
        %4093 = vmatpush1.bf16.xpose.msra.mxu0 0
        %4094 = vmatprep.subr.bf16.mxu0 0
        %4095 = vmatpush1.bf16.xpose.msra.mxu0 0
        %4096 = vmatprep.subr.bf16.mxu0 0
        %4097 = vmatpush1.bf16.xpose.msra.mxu0 0
        %4098 = vmatprep.subr.bf16.mxu0 0
        %4099 = vmatpush1.bf16.xpose.msra.mxu0 0
        %4100 = vmatprep.subr.bf16.mxu0 0
        %4101 = vmatpush1.bf16.xpose.msra.mxu0 0
        %4102 = vmatprep.subr.bf16.mxu0 0
        %4103 = vmatpush1.bf16.xpose.msra.mxu0 0
        %4104 = vmatprep.subr.bf16.mxu0 0
        %4105 = vmatpush1.bf16.xpose.msra.mxu0 0
        %4106 = vmatprep.subr.bf16.mxu0 0
        %4107 = vmatpush1.bf16.xpose.msra.mxu0 0
        %4108 = vmatprep.subr.bf16.mxu0 0
        %4109 = vmatpush1.bf16.xpose.msra.mxu0 0
        %4110 = vmatprep.subr.bf16.mxu0 0
        %4111 = vmatpush1.bf16.xpose.msra.mxu0 0
        %4112 = vmatprep.subr.bf16.mxu0 0
        %4113 = vmatpush1.bf16.xpose.msra.mxu0 0
        %4114 = vmatprep.subr.bf16.mxu0 0
        %4115 = vmatpush1.bf16.xpose.msra.mxu0 0
        %4116 = vmatprep.subr.bf16.mxu0 0
        %4117 = vmatpush1.bf16.xpose.msra.mxu0 0
        %4118 = vmatprep.mubr.bf16.mxu0 0
        %4119 = vmatmul.mubr.bf16.gmra.mrb[0].mxu0 %v1611
        %v4120 = vpop.f32.mrb[0].mxu0
        %v4121 = vadd.f32 0.0, %v4120
        %v4122 = vpop.f32.mrb[0].mxu0
        %v4123 = vpop.f32.mrb[0].mxu0
        %v4124 = vpop.f32.mrb[0].mxu0
        %4125 = vdwg.mxu0
        %4126 = vmatprep.subr.bf16.mxu0 0
        %4127 = vmatpush1.bf16.xpose.msra.mxu0 %v3928
        %4128 = vmatprep.subr.bf16.mxu0 0
        %4129 = vmatpush1.bf16.xpose.msra.mxu0 0
        %4130 = vmatprep.subr.bf16.mxu0 0
        %4131 = vmatpush1.bf16.xpose.msra.mxu0 0
        %4132 = vmatprep.subr.bf16.mxu0 0
        %4133 = vmatpush1.bf16.xpose.msra.mxu0 0
        %4134 = vmatprep.subr.bf16.mxu0 0
        %4135 = vmatpush1.bf16.xpose.msra.mxu0 0
        %4136 = vmatprep.subr.bf16.mxu0 0
        %4137 = vmatpush1.bf16.xpose.msra.mxu0 0
        %4138 = vmatprep.subr.bf16.mxu0 0
        %4139 = vmatpush1.bf16.xpose.msra.mxu0 0
        %4140 = vmatprep.subr.bf16.mxu0 0
        %4141 = vmatpush1.bf16.xpose.msra.mxu0 0
        %4142 = vmatprep.subr.bf16.mxu0 0
        %4143 = vmatpush1.bf16.xpose.msra.mxu0 0
        %4144 = vmatprep.subr.bf16.mxu0 0
        %4145 = vmatpush1.bf16.xpose.msra.mxu0 0
        %4146 = vmatprep.subr.bf16.mxu0 0
        %4147 = vmatpush1.bf16.xpose.msra.mxu0 0
        %4148 = vmatprep.subr.bf16.mxu0 0
        %4149 = vmatpush1.bf16.xpose.msra.mxu0 0
        %4150 = vmatprep.subr.bf16.mxu0 0
        %4151 = vmatpush1.bf16.xpose.msra.mxu0 0
        %4152 = vmatprep.subr.bf16.mxu0 0
        %4153 = vmatpush1.bf16.xpose.msra.mxu0 0
        %4154 = vmatprep.subr.bf16.mxu0 0
        %4155 = vmatpush1.bf16.xpose.msra.mxu0 0
        %4156 = vmatprep.subr.bf16.mxu0 0
        %4157 = vmatpush1.bf16.xpose.msra.mxu0 0
        %4158 = vmatprep.mubr.bf16.mxu0 0
        %4159 = vmatmul.mubr.bf16.gmra.mrb[0].mxu0 %v1613
        %v4160 = vpop.f32.mrb[0].mxu0
        %v4161 = vadd.f32 0.0, %v4160
        %v4162 = vpop.f32.mrb[0].mxu0
        %v4163 = vpop.f32.mrb[0].mxu0
        %v4164 = vpop.f32.mrb[0].mxu0
        %4165 = vdwg.mxu0
        %4166 = vmatprep.subr.bf16.mxu0 0
        %4167 = vmatpush1.bf16.xpose.msra.mxu0 %v3930
        %4168 = vmatprep.subr.bf16.mxu0 0
        %4169 = vmatpush1.bf16.xpose.msra.mxu0 0
        %4170 = vmatprep.subr.bf16.mxu0 0
        %4171 = vmatpush1.bf16.xpose.msra.mxu0 0
        %4172 = vmatprep.subr.bf16.mxu0 0
        %4173 = vmatpush1.bf16.xpose.msra.mxu0 0
        %4174 = vmatprep.subr.bf16.mxu0 0
        %4175 = vmatpush1.bf16.xpose.msra.mxu0 0
        %4176 = vmatprep.subr.bf16.mxu0 0
        %4177 = vmatpush1.bf16.xpose.msra.mxu0 0
        %4178 = vmatprep.subr.bf16.mxu0 0
        %4179 = vmatpush1.bf16.xpose.msra.mxu0 0
        %4180 = vmatprep.subr.bf16.mxu0 0
        %4181 = vmatpush1.bf16.xpose.msra.mxu0 0
        %4182 = vmatprep.subr.bf16.mxu0 0
        %4183 = vmatpush1.bf16.xpose.msra.mxu0 0
        %4184 = vmatprep.subr.bf16.mxu0 0
        %4185 = vmatpush1.bf16.xpose.msra.mxu0 0
        %4186 = vmatprep.subr.bf16.mxu0 0
        %4187 = vmatpush1.bf16.xpose.msra.mxu0 0
        %4188 = vmatprep.subr.bf16.mxu0 0
        %4189 = vmatpush1.bf16.xpose.msra.mxu0 0
        %4190 = vmatprep.subr.bf16.mxu0 0
        %4191 = vmatpush1.bf16.xpose.msra.mxu0 0
        %4192 = vmatprep.subr.bf16.mxu0 0
        %4193 = vmatpush1.bf16.xpose.msra.mxu0 0
        %4194 = vmatprep.subr.bf16.mxu0 0
        %4195 = vmatpush1.bf16.xpose.msra.mxu0 0
        %4196 = vmatprep.subr.bf16.mxu0 0
        %4197 = vmatpush1.bf16.xpose.msra.mxu0 0
        %4198 = vmatprep.mubr.bf16.mxu0 0
        %4199 = vmatmul.mubr.bf16.gmra.mrb[0].mxu0 %v1615
        %v4200 = vpop.f32.mrb[0].mxu0
        %v4201 = vadd.f32 0.0, %v4200
        %v4202 = vpop.f32.mrb[0].mxu0
        %v4203 = vpop.f32.mrb[0].mxu0
        %v4204 = vpop.f32.mrb[0].mxu0
        %4205 = vdwg.mxu0
        %4206 = vmatprep.subr.bf16.mxu0 0
        %4207 = vmatpush1.bf16.xpose.msra.mxu0 %v3932
        %4208 = vmatprep.subr.bf16.mxu0 0
        %4209 = vmatpush1.bf16.xpose.msra.mxu0 0
        %4210 = vmatprep.subr.bf16.mxu0 0
        %4211 = vmatpush1.bf16.xpose.msra.mxu0 0
        %4212 = vmatprep.subr.bf16.mxu0 0
        %4213 = vmatpush1.bf16.xpose.msra.mxu0 0
        %4214 = vmatprep.subr.bf16.mxu0 0
        %4215 = vmatpush1.bf16.xpose.msra.mxu0 0
        %4216 = vmatprep.subr.bf16.mxu0 0
        %4217 = vmatpush1.bf16.xpose.msra.mxu0 0
        %4218 = vmatprep.subr.bf16.mxu0 0
        %4219 = vmatpush1.bf16.xpose.msra.mxu0 0
        %4220 = vmatprep.subr.bf16.mxu0 0
        %4221 = vmatpush1.bf16.xpose.msra.mxu0 0
        %4222 = vmatprep.subr.bf16.mxu0 0
        %4223 = vmatpush1.bf16.xpose.msra.mxu0 0
        %4224 = vmatprep.subr.bf16.mxu0 0
        %4225 = vmatpush1.bf16.xpose.msra.mxu0 0
        %4226 = vmatprep.subr.bf16.mxu0 0
        %4227 = vmatpush1.bf16.xpose.msra.mxu0 0
        %4228 = vmatprep.subr.bf16.mxu0 0
        %4229 = vmatpush1.bf16.xpose.msra.mxu0 0
        %4230 = vmatprep.subr.bf16.mxu0 0
        %4231 = vmatpush1.bf16.xpose.msra.mxu0 0
        %4232 = vmatprep.subr.bf16.mxu0 0
        %4233 = vmatpush1.bf16.xpose.msra.mxu0 0
        %4234 = vmatprep.subr.bf16.mxu0 0
        %4235 = vmatpush1.bf16.xpose.msra.mxu0 0
        %4236 = vmatprep.subr.bf16.mxu0 0
        %4237 = vmatpush1.bf16.xpose.msra.mxu0 0
        %4238 = vmatprep.mubr.bf16.mxu0 0
        %4239 = vmatmul.mubr.bf16.gmra.mrb[0].mxu0 %v1617
        %v4240 = vpop.f32.mrb[0].mxu0
        %v4241 = vadd.f32 0.0, %v4240
        %v4242 = vpop.f32.mrb[0].mxu0
        %v4243 = vpop.f32.mrb[0].mxu0
        %v4244 = vpop.f32.mrb[0].mxu0
        %4245 = vdwg.mxu0
        %4246 = vmatprep.subr.bf16.mxu0 0
        %4247 = vmatpush1.bf16.xpose.msra.mxu0 %v3934
        %4248 = vmatprep.subr.bf16.mxu0 0
        %4249 = vmatpush1.bf16.xpose.msra.mxu0 0
        %4250 = vmatprep.subr.bf16.mxu0 0
        %4251 = vmatpush1.bf16.xpose.msra.mxu0 0
        %4252 = vmatprep.subr.bf16.mxu0 0
        %4253 = vmatpush1.bf16.xpose.msra.mxu0 0
        %4254 = vmatprep.subr.bf16.mxu0 0
        %4255 = vmatpush1.bf16.xpose.msra.mxu0 0
        %4256 = vmatprep.subr.bf16.mxu0 0
        %4257 = vmatpush1.bf16.xpose.msra.mxu0 0
        %4258 = vmatprep.subr.bf16.mxu0 0
        %4259 = vmatpush1.bf16.xpose.msra.mxu0 0
        %4260 = vmatprep.subr.bf16.mxu0 0
        %4261 = vmatpush1.bf16.xpose.msra.mxu0 0
        %4262 = vmatprep.subr.bf16.mxu0 0
        %4263 = vmatpush1.bf16.xpose.msra.mxu0 0
        %4264 = vmatprep.subr.bf16.mxu0 0
        %4265 = vmatpush1.bf16.xpose.msra.mxu0 0
        %4266 = vmatprep.subr.bf16.mxu0 0
        %4267 = vmatpush1.bf16.xpose.msra.mxu0 0
        %4268 = vmatprep.subr.bf16.mxu0 0
        %4269 = vmatpush1.bf16.xpose.msra.mxu0 0
        %4270 = vmatprep.subr.bf16.mxu0 0
        %4271 = vmatpush1.bf16.xpose.msra.mxu0 0
        %4272 = vmatprep.subr.bf16.mxu0 0
        %4273 = vmatpush1.bf16.xpose.msra.mxu0 0
        %4274 = vmatprep.subr.bf16.mxu0 0
        %4275 = vmatpush1.bf16.xpose.msra.mxu0 0
        %4276 = vmatprep.subr.bf16.mxu0 0
        %4277 = vmatpush1.bf16.xpose.msra.mxu0 0
        %4278 = vmatprep.mubr.bf16.mxu0 0
        %4279 = vmatmul.mubr.bf16.gmra.mrb[0].mxu0 %v1619
        %v4280 = vpop.f32.mrb[0].mxu0
        %v4281 = vadd.f32 0.0, %v4280
        %v4282 = vpop.f32.mrb[0].mxu0
        %v4283 = vpop.f32.mrb[0].mxu0
        %v4284 = vpop.f32.mrb[0].mxu0
        %4285 = vdwg.mxu0
        %4286 = vmatprep.subr.bf16.mxu0 0
        %4287 = vmatpush1.bf16.xpose.msra.mxu0 %v3936
        %4288 = vmatprep.subr.bf16.mxu0 0
        %4289 = vmatpush1.bf16.xpose.msra.mxu0 0
        %4290 = vmatprep.subr.bf16.mxu0 0
        %4291 = vmatpush1.bf16.xpose.msra.mxu0 0
        %4292 = vmatprep.subr.bf16.mxu0 0
        %4293 = vmatpush1.bf16.xpose.msra.mxu0 0
        %4294 = vmatprep.subr.bf16.mxu0 0
        %4295 = vmatpush1.bf16.xpose.msra.mxu0 0
        %4296 = vmatprep.subr.bf16.mxu0 0
        %4297 = vmatpush1.bf16.xpose.msra.mxu0 0
        %4298 = vmatprep.subr.bf16.mxu0 0
        %4299 = vmatpush1.bf16.xpose.msra.mxu0 0
        %4300 = vmatprep.subr.bf16.mxu0 0
        %4301 = vmatpush1.bf16.xpose.msra.mxu0 0
        %4302 = vmatprep.subr.bf16.mxu0 0
        %4303 = vmatpush1.bf16.xpose.msra.mxu0 0
        %4304 = vmatprep.subr.bf16.mxu0 0
        %4305 = vmatpush1.bf16.xpose.msra.mxu0 0
        %4306 = vmatprep.subr.bf16.mxu0 0
        %4307 = vmatpush1.bf16.xpose.msra.mxu0 0
        %4308 = vmatprep.subr.bf16.mxu0 0
        %4309 = vmatpush1.bf16.xpose.msra.mxu0 0
        %4310 = vmatprep.subr.bf16.mxu0 0
        %4311 = vmatpush1.bf16.xpose.msra.mxu0 0
        %4312 = vmatprep.subr.bf16.mxu0 0
        %4313 = vmatpush1.bf16.xpose.msra.mxu0 0
        %4314 = vmatprep.subr.bf16.mxu0 0
        %4315 = vmatpush1.bf16.xpose.msra.mxu0 0
        %4316 = vmatprep.subr.bf16.mxu0 0
        %4317 = vmatpush1.bf16.xpose.msra.mxu0 0
        %4318 = vmatprep.mubr.bf16.mxu0 0
        %4319 = vmatmul.mubr.bf16.gmra.mrb[0].mxu0 %v1621
        %v4320 = vpop.f32.mrb[0].mxu0
        %v4321 = vadd.f32 0.0, %v4320
        %v4322 = vpop.f32.mrb[0].mxu0
        %v4323 = vpop.f32.mrb[0].mxu0
        %v4324 = vpop.f32.mrb[0].mxu0
        %4325 = vdwg.mxu0
        %4326 = vmatprep.subr.bf16.mxu0 0
        %4327 = vmatpush1.bf16.xpose.msra.mxu0 %v3938
        %4328 = vmatprep.subr.bf16.mxu0 0
        %4329 = vmatpush1.bf16.xpose.msra.mxu0 0
        %4330 = vmatprep.subr.bf16.mxu0 0
        %4331 = vmatpush1.bf16.xpose.msra.mxu0 0
        %4332 = vmatprep.subr.bf16.mxu0 0
        %4333 = vmatpush1.bf16.xpose.msra.mxu0 0
        %4334 = vmatprep.subr.bf16.mxu0 0
        %4335 = vmatpush1.bf16.xpose.msra.mxu0 0
        %4336 = vmatprep.subr.bf16.mxu0 0
        %4337 = vmatpush1.bf16.xpose.msra.mxu0 0
        %4338 = vmatprep.subr.bf16.mxu0 0
        %4339 = vmatpush1.bf16.xpose.msra.mxu0 0
        %4340 = vmatprep.subr.bf16.mxu0 0
        %4341 = vmatpush1.bf16.xpose.msra.mxu0 0
        %4342 = vmatprep.subr.bf16.mxu0 0
        %4343 = vmatpush1.bf16.xpose.msra.mxu0 0
        %4344 = vmatprep.subr.bf16.mxu0 0
        %4345 = vmatpush1.bf16.xpose.msra.mxu0 0
        %4346 = vmatprep.subr.bf16.mxu0 0
        %4347 = vmatpush1.bf16.xpose.msra.mxu0 0
        %4348 = vmatprep.subr.bf16.mxu0 0
        %4349 = vmatpush1.bf16.xpose.msra.mxu0 0
        %4350 = vmatprep.subr.bf16.mxu0 0
        %4351 = vmatpush1.bf16.xpose.msra.mxu0 0
        %4352 = vmatprep.subr.bf16.mxu0 0
        %4353 = vmatpush1.bf16.xpose.msra.mxu0 0
        %4354 = vmatprep.subr.bf16.mxu0 0
        %4355 = vmatpush1.bf16.xpose.msra.mxu0 0
        %4356 = vmatprep.subr.bf16.mxu0 0
        %4357 = vmatpush1.bf16.xpose.msra.mxu0 0
        %4358 = vmatprep.mubr.bf16.mxu0 0
        %4359 = vmatmul.mubr.bf16.gmra.mrb[0].mxu0 %v1623
        %v4360 = vpop.f32.mrb[0].mxu0
        %v4361 = vadd.f32 0.0, %v4360
        %v4362 = vpop.f32.mrb[0].mxu0
        %v4363 = vpop.f32.mrb[0].mxu0
        %v4364 = vpop.f32.mrb[0].mxu0
        %4365 = vdwg.mxu0
        %4366 = vmatprep.subr.bf16.mxu0 0
        %4367 = vmatpush1.bf16.xpose.msra.mxu0 %v3940
        %4368 = vmatprep.subr.bf16.mxu0 0
        %4369 = vmatpush1.bf16.xpose.msra.mxu0 0
        %4370 = vmatprep.subr.bf16.mxu0 0
        %4371 = vmatpush1.bf16.xpose.msra.mxu0 0
        %4372 = vmatprep.subr.bf16.mxu0 0
        %4373 = vmatpush1.bf16.xpose.msra.mxu0 0
        %4374 = vmatprep.subr.bf16.mxu0 0
        %4375 = vmatpush1.bf16.xpose.msra.mxu0 0
        %4376 = vmatprep.subr.bf16.mxu0 0
        %4377 = vmatpush1.bf16.xpose.msra.mxu0 0
        %4378 = vmatprep.subr.bf16.mxu0 0
        %4379 = vmatpush1.bf16.xpose.msra.mxu0 0
        %4380 = vmatprep.subr.bf16.mxu0 0
        %4381 = vmatpush1.bf16.xpose.msra.mxu0 0
        %4382 = vmatprep.subr.bf16.mxu0 0
        %4383 = vmatpush1.bf16.xpose.msra.mxu0 0
        %4384 = vmatprep.subr.bf16.mxu0 0
        %4385 = vmatpush1.bf16.xpose.msra.mxu0 0
        %4386 = vmatprep.subr.bf16.mxu0 0
        %4387 = vmatpush1.bf16.xpose.msra.mxu0 0
        %4388 = vmatprep.subr.bf16.mxu0 0
        %4389 = vmatpush1.bf16.xpose.msra.mxu0 0
        %4390 = vmatprep.subr.bf16.mxu0 0
        %4391 = vmatpush1.bf16.xpose.msra.mxu0 0
        %4392 = vmatprep.subr.bf16.mxu0 0
        %4393 = vmatpush1.bf16.xpose.msra.mxu0 0
        %4394 = vmatprep.subr.bf16.mxu0 0
        %4395 = vmatpush1.bf16.xpose.msra.mxu0 0
        %4396 = vmatprep.subr.bf16.mxu0 0
        %4397 = vmatpush1.bf16.xpose.msra.mxu0 0
        %4398 = vmatprep.mubr.bf16.mxu0 0
        %4399 = vmatmul.mubr.bf16.gmra.mrb[0].mxu0 %v1625
        %v4400 = vpop.f32.mrb[0].mxu0
        %v4401 = vadd.f32 0.0, %v4400
        %v4402 = vpop.f32.mrb[0].mxu0
        %v4403 = vpop.f32.mrb[0].mxu0
        %v4404 = vpop.f32.mrb[0].mxu0
        %4405 = vdwg.mxu0
        %vm4406 = vcmask 64512
        %v4407 = vsel %vm4406, %v4121, -inf
        %4408 = vmax.xlane.f32.xlu0 %v4407
        %v4409 = vpop.xlane.xlu0 %4408
        %v4410 = vsel %vm4406, %v4161, -inf
        %4411 = vmax.xlane.f32.xlu0 %v4410
        %v4412 = vpop.xlane.xlu0 %4411
        %v4413 = vsel %vm4406, %v4201, -inf
        %4414 = vmax.xlane.f32.xlu0 %v4413
        %v4415 = vpop.xlane.xlu0 %4414
        %v4416 = vsel %vm4406, %v4241, -inf
        %4417 = vmax.xlane.f32.xlu0 %v4416
        %v4418 = vpop.xlane.xlu0 %4417
        %v4419 = vsel %vm4406, %v4281, -inf
        %4420 = vmax.xlane.f32.xlu0 %v4419
        %v4421 = vpop.xlane.xlu0 %4420
        %v4422 = vsel %vm4406, %v4321, -inf
        %4423 = vmax.xlane.f32.xlu0 %v4422
        %v4424 = vpop.xlane.xlu0 %4423
        %v4425 = vsel %vm4406, %v4361, -inf
        %4426 = vmax.xlane.f32.xlu0 %v4425
        %v4427 = vpop.xlane.xlu0 %4426
        %v4428 = vsel %vm4406, %v4401, -inf
        %4429 = vmax.xlane.f32.xlu0 %v4428
        %v4430 = vpop.xlane.xlu0 %4429
        %v4431 = vsub.f32 %v4121, %v4409
        %v4432 = vsub.f32 %v4161, %v4412
        %v4433 = vsub.f32 %v4201, %v4415
        %v4434 = vsub.f32 %v4241, %v4418
        %v4435 = vsub.f32 %v4281, %v4421
        %v4436 = vsub.f32 %v4321, %v4424
        %v4437 = vsub.f32 %v4361, %v4427
        %v4438 = vsub.f32 %v4401, %v4430
        %v4439 = vmul.f32 %v4431, 1.442695
        %v4440 = vpow.pop %v4439
        %v4441 = vmul.f32 %v4432, 1.442695
        %v4442 = vpow.pop %v4441
        %v4443 = vmul.f32 %v4433, 1.442695
        %v4444 = vpow.pop %v4443
        %v4445 = vmul.f32 %v4434, 1.442695
        %v4446 = vpow.pop %v4445
        %v4447 = vmul.f32 %v4435, 1.442695
        %v4448 = vpow.pop %v4447
        %v4449 = vmul.f32 %v4436, 1.442695
        %v4450 = vpow.pop %v4449
        %v4451 = vmul.f32 %v4437, 1.442695
        %v4452 = vpow.pop %v4451
        %v4453 = vmul.f32 %v4438, 1.442695
        %v4454 = vpow.pop %v4453
        %v4455 = vsel %vm4406, %v4440, 0.0
        %4456 = vadd.xlane.f32.xlu0 %v4455
        %v4457 = vpop.xlane.xlu0 %4456
        %v4458 = vsel %vm4406, %v4442, 0.0
        %4459 = vadd.xlane.f32.xlu0 %v4458
        %v4460 = vpop.xlane.xlu0 %4459
        %v4461 = vsel %vm4406, %v4444, 0.0
        %4462 = vadd.xlane.f32.xlu0 %v4461
        %v4463 = vpop.xlane.xlu0 %4462
        %v4464 = vsel %vm4406, %v4446, 0.0
        %4465 = vadd.xlane.f32.xlu0 %v4464
        %v4466 = vpop.xlane.xlu0 %4465
        %v4467 = vsel %vm4406, %v4448, 0.0
        %4468 = vadd.xlane.f32.xlu0 %v4467
        %v4469 = vpop.xlane.xlu0 %4468
        %v4470 = vsel %vm4406, %v4450, 0.0
        %4471 = vadd.xlane.f32.xlu0 %v4470
        %v4472 = vpop.xlane.xlu0 %4471
        %v4473 = vsel %vm4406, %v4452, 0.0
        %4474 = vadd.xlane.f32.xlu0 %v4473
        %v4475 = vpop.xlane.xlu0 %4474
        %v4476 = vsel %vm4406, %v4454, 0.0
        %4477 = vadd.xlane.f32.xlu0 %v4476
        %v4478 = vpop.xlane.xlu0 %4477
        %v4479 = vrcp.pop %v4457
        %v4480 = vrcp.pop %v4460
        %v4481 = vrcp.pop %v4463
        %v4482 = vrcp.pop %v4466
        %v4483 = vrcp.pop %v4469
        %v4484 = vrcp.pop %v4472
        %v4485 = vrcp.pop %v4475
        %v4486 = vrcp.pop %v4478
        %v4487 = vmul.f32 %v4440, %v4479
        %v4488 = vmul.f32 %v4442, %v4480
        %v4489 = vmul.f32 %v4444, %v4481
        %v4490 = vmul.f32 %v4446, %v4482
        %v4491 = vmul.f32 %v4448, %v4483
        %v4492 = vmul.f32 %v4450, %v4484
        %v4493 = vmul.f32 %v4452, %v4485
        %v4494 = vmul.f32 %v4454, %v4486
        %v4495 = vpack.c.bf16 %v4487, %v4487
        %v4496 = vpack.c.bf16 %v4488, %v4488
        %v4497 = vpack.c.bf16 %v4489, %v4489
        %v4498 = vpack.c.bf16 %v4490, %v4490
        %v4499 = vpack.c.bf16 %v4491, %v4491
        %v4500 = vpack.c.bf16 %v4492, %v4492
        %v4501 = vpack.c.bf16 %v4493, %v4493
        %v4502 = vpack.c.bf16 %v4494, %v4494
        %v4504 = vsel %vm4406, %v4495, 0
        %vm4506 = vcmask 1043456
        %v4508 = vsel %vm4506, %v4070, 0
        %4510 = vmatprep.subr.bf16.mxu0 0
        %4511 = vmatpush1.bf16.msra.mxu0 %v4508
        %4512 = vmatprep.subr.bf16.mxu0 0
        %4513 = vmatpush1.bf16.msra.mxu0 0
        %4514 = vmatprep.subr.bf16.mxu0 0
        %4515 = vmatpush1.bf16.msra.mxu0 0
        %4516 = vmatprep.subr.bf16.mxu0 0
        %4517 = vmatpush1.bf16.msra.mxu0 0
        %4518 = vmatprep.subr.bf16.mxu0 0
        %4519 = vmatpush1.bf16.msra.mxu0 0
        %4520 = vmatprep.subr.bf16.mxu0 0
        %4521 = vmatpush1.bf16.msra.mxu0 0
        %4522 = vmatprep.subr.bf16.mxu0 0
        %4523 = vmatpush1.bf16.msra.mxu0 0
        %4524 = vmatprep.subr.bf16.mxu0 0
        %4525 = vmatpush1.bf16.msra.mxu0 0
        %4526 = vmatprep.subr.bf16.mxu0 0
        %4527 = vmatpush1.bf16.msra.mxu0 0
        %4528 = vmatprep.subr.bf16.mxu0 0
        %4529 = vmatpush1.bf16.msra.mxu0 0
        %4530 = vmatprep.subr.bf16.mxu0 0
        %4531 = vmatpush1.bf16.msra.mxu0 0
        %4532 = vmatprep.subr.bf16.mxu0 0
        %4533 = vmatpush1.bf16.msra.mxu0 0
        %4534 = vmatprep.subr.bf16.mxu0 0
        %4535 = vmatpush1.bf16.msra.mxu0 0
        %4536 = vmatprep.subr.bf16.mxu0 0
        %4537 = vmatpush1.bf16.msra.mxu0 0
        %4538 = vmatprep.subr.bf16.mxu0 0
        %4539 = vmatpush1.bf16.msra.mxu0 0
        %4540 = vmatprep.subr.bf16.mxu0 0
        %4541 = vmatpush1.bf16.msra.mxu0 0
        %4542 = vmatprep.mubr.bf16.mxu0 0
        %4543 = vmatmul.mubr.bf16.gmra.mrb[0].mxu0 %v4504
        %v4544 = vpop.f32.mrb[0].mxu0
        %v4545 = vadd.f32 0.0, %v4544
        %v4546 = vpop.f32.mrb[0].mxu0
        %v4547 = vpop.f32.mrb[0].mxu0
        %v4548 = vpop.f32.mrb[0].mxu0
        %4549 = vdwg.mxu0
        %v4551 = vsel %vm4406, %v4496, 0
        %v4554 = vsel %vm4506, %v4072, 0
        %4556 = vmatprep.subr.bf16.mxu0 0
        %4557 = vmatpush1.bf16.msra.mxu0 %v4554
        %4558 = vmatprep.subr.bf16.mxu0 0
        %4559 = vmatpush1.bf16.msra.mxu0 0
        %4560 = vmatprep.subr.bf16.mxu0 0
        %4561 = vmatpush1.bf16.msra.mxu0 0
        %4562 = vmatprep.subr.bf16.mxu0 0
        %4563 = vmatpush1.bf16.msra.mxu0 0
        %4564 = vmatprep.subr.bf16.mxu0 0
        %4565 = vmatpush1.bf16.msra.mxu0 0
        %4566 = vmatprep.subr.bf16.mxu0 0
        %4567 = vmatpush1.bf16.msra.mxu0 0
        %4568 = vmatprep.subr.bf16.mxu0 0
        %4569 = vmatpush1.bf16.msra.mxu0 0
        %4570 = vmatprep.subr.bf16.mxu0 0
        %4571 = vmatpush1.bf16.msra.mxu0 0
        %4572 = vmatprep.subr.bf16.mxu0 0
        %4573 = vmatpush1.bf16.msra.mxu0 0
        %4574 = vmatprep.subr.bf16.mxu0 0
        %4575 = vmatpush1.bf16.msra.mxu0 0
        %4576 = vmatprep.subr.bf16.mxu0 0
        %4577 = vmatpush1.bf16.msra.mxu0 0
        %4578 = vmatprep.subr.bf16.mxu0 0
        %4579 = vmatpush1.bf16.msra.mxu0 0
        %4580 = vmatprep.subr.bf16.mxu0 0
        %4581 = vmatpush1.bf16.msra.mxu0 0
        %4582 = vmatprep.subr.bf16.mxu0 0
        %4583 = vmatpush1.bf16.msra.mxu0 0
        %4584 = vmatprep.subr.bf16.mxu0 0
        %4585 = vmatpush1.bf16.msra.mxu0 0
        %4586 = vmatprep.subr.bf16.mxu0 0
        %4587 = vmatpush1.bf16.msra.mxu0 0
        %4588 = vmatprep.mubr.bf16.mxu0 0
        %4589 = vmatmul.mubr.bf16.gmra.mrb[0].mxu0 %v4551
        %v4590 = vpop.f32.mrb[0].mxu0
        %v4591 = vadd.f32 0.0, %v4590
        %v4592 = vpop.f32.mrb[0].mxu0
        %v4593 = vpop.f32.mrb[0].mxu0
        %v4594 = vpop.f32.mrb[0].mxu0
        %4595 = vdwg.mxu0
        %v4597 = vsel %vm4406, %v4497, 0
        %v4600 = vsel %vm4506, %v4074, 0
        %4602 = vmatprep.subr.bf16.mxu0 0
        %4603 = vmatpush1.bf16.msra.mxu0 %v4600
        %4604 = vmatprep.subr.bf16.mxu0 0
        %4605 = vmatpush1.bf16.msra.mxu0 0
        %4606 = vmatprep.subr.bf16.mxu0 0
        %4607 = vmatpush1.bf16.msra.mxu0 0
        %4608 = vmatprep.subr.bf16.mxu0 0
        %4609 = vmatpush1.bf16.msra.mxu0 0
        %4610 = vmatprep.subr.bf16.mxu0 0
        %4611 = vmatpush1.bf16.msra.mxu0 0
        %4612 = vmatprep.subr.bf16.mxu0 0
        %4613 = vmatpush1.bf16.msra.mxu0 0
        %4614 = vmatprep.subr.bf16.mxu0 0
        %4615 = vmatpush1.bf16.msra.mxu0 0
        %4616 = vmatprep.subr.bf16.mxu0 0
        %4617 = vmatpush1.bf16.msra.mxu0 0
        %4618 = vmatprep.subr.bf16.mxu0 0
        %4619 = vmatpush1.bf16.msra.mxu0 0
        %4620 = vmatprep.subr.bf16.mxu0 0
        %4621 = vmatpush1.bf16.msra.mxu0 0
        %4622 = vmatprep.subr.bf16.mxu0 0
        %4623 = vmatpush1.bf16.msra.mxu0 0
        %4624 = vmatprep.subr.bf16.mxu0 0
        %4625 = vmatpush1.bf16.msra.mxu0 0
        %4626 = vmatprep.subr.bf16.mxu0 0
        %4627 = vmatpush1.bf16.msra.mxu0 0
        %4628 = vmatprep.subr.bf16.mxu0 0
        %4629 = vmatpush1.bf16.msra.mxu0 0
        %4630 = vmatprep.subr.bf16.mxu0 0
        %4631 = vmatpush1.bf16.msra.mxu0 0
        %4632 = vmatprep.subr.bf16.mxu0 0
        %4633 = vmatpush1.bf16.msra.mxu0 0
        %4634 = vmatprep.mubr.bf16.mxu0 0
        %4635 = vmatmul.mubr.bf16.gmra.mrb[0].mxu0 %v4597
        %v4636 = vpop.f32.mrb[0].mxu0
        %v4637 = vadd.f32 0.0, %v4636
        %v4638 = vpop.f32.mrb[0].mxu0
        %v4639 = vpop.f32.mrb[0].mxu0
        %v4640 = vpop.f32.mrb[0].mxu0
        %4641 = vdwg.mxu0
        %v4643 = vsel %vm4406, %v4498, 0
        %v4646 = vsel %vm4506, %v4076, 0
        %4648 = vmatprep.subr.bf16.mxu0 0
        %4649 = vmatpush1.bf16.msra.mxu0 %v4646
        %4650 = vmatprep.subr.bf16.mxu0 0
        %4651 = vmatpush1.bf16.msra.mxu0 0
        %4652 = vmatprep.subr.bf16.mxu0 0
        %4653 = vmatpush1.bf16.msra.mxu0 0
        %4654 = vmatprep.subr.bf16.mxu0 0
        %4655 = vmatpush1.bf16.msra.mxu0 0
        %4656 = vmatprep.subr.bf16.mxu0 0
        %4657 = vmatpush1.bf16.msra.mxu0 0
        %4658 = vmatprep.subr.bf16.mxu0 0
        %4659 = vmatpush1.bf16.msra.mxu0 0
        %4660 = vmatprep.subr.bf16.mxu0 0
        %4661 = vmatpush1.bf16.msra.mxu0 0
        %4662 = vmatprep.subr.bf16.mxu0 0
        %4663 = vmatpush1.bf16.msra.mxu0 0
        %4664 = vmatprep.subr.bf16.mxu0 0
        %4665 = vmatpush1.bf16.msra.mxu0 0
        %4666 = vmatprep.subr.bf16.mxu0 0
        %4667 = vmatpush1.bf16.msra.mxu0 0
        %4668 = vmatprep.subr.bf16.mxu0 0
        %4669 = vmatpush1.bf16.msra.mxu0 0
        %4670 = vmatprep.subr.bf16.mxu0 0
        %4671 = vmatpush1.bf16.msra.mxu0 0
        %4672 = vmatprep.subr.bf16.mxu0 0
        %4673 = vmatpush1.bf16.msra.mxu0 0
        %4674 = vmatprep.subr.bf16.mxu0 0
        %4675 = vmatpush1.bf16.msra.mxu0 0
        %4676 = vmatprep.subr.bf16.mxu0 0
        %4677 = vmatpush1.bf16.msra.mxu0 0
        %4678 = vmatprep.subr.bf16.mxu0 0
        %4679 = vmatpush1.bf16.msra.mxu0 0
        %4680 = vmatprep.mubr.bf16.mxu0 0
        %4681 = vmatmul.mubr.bf16.gmra.mrb[0].mxu0 %v4643
        %v4682 = vpop.f32.mrb[0].mxu0
        %v4683 = vadd.f32 0.0, %v4682
        %v4684 = vpop.f32.mrb[0].mxu0
        %v4685 = vpop.f32.mrb[0].mxu0
        %v4686 = vpop.f32.mrb[0].mxu0
        %4687 = vdwg.mxu0
        %v4689 = vsel %vm4406, %v4499, 0
        %v4692 = vsel %vm4506, %v4078, 0
        %4694 = vmatprep.subr.bf16.mxu0 0
        %4695 = vmatpush1.bf16.msra.mxu0 %v4692
        %4696 = vmatprep.subr.bf16.mxu0 0
        %4697 = vmatpush1.bf16.msra.mxu0 0
        %4698 = vmatprep.subr.bf16.mxu0 0
        %4699 = vmatpush1.bf16.msra.mxu0 0
        %4700 = vmatprep.subr.bf16.mxu0 0
        %4701 = vmatpush1.bf16.msra.mxu0 0
        %4702 = vmatprep.subr.bf16.mxu0 0
        %4703 = vmatpush1.bf16.msra.mxu0 0
        %4704 = vmatprep.subr.bf16.mxu0 0
        %4705 = vmatpush1.bf16.msra.mxu0 0
        %4706 = vmatprep.subr.bf16.mxu0 0
        %4707 = vmatpush1.bf16.msra.mxu0 0
        %4708 = vmatprep.subr.bf16.mxu0 0
        %4709 = vmatpush1.bf16.msra.mxu0 0
        %4710 = vmatprep.subr.bf16.mxu0 0
        %4711 = vmatpush1.bf16.msra.mxu0 0
        %4712 = vmatprep.subr.bf16.mxu0 0
        %4713 = vmatpush1.bf16.msra.mxu0 0
        %4714 = vmatprep.subr.bf16.mxu0 0
        %4715 = vmatpush1.bf16.msra.mxu0 0
        %4716 = vmatprep.subr.bf16.mxu0 0
        %4717 = vmatpush1.bf16.msra.mxu0 0
        %4718 = vmatprep.subr.bf16.mxu0 0
        %4719 = vmatpush1.bf16.msra.mxu0 0
        %4720 = vmatprep.subr.bf16.mxu0 0
        %4721 = vmatpush1.bf16.msra.mxu0 0
        %4722 = vmatprep.subr.bf16.mxu0 0
        %4723 = vmatpush1.bf16.msra.mxu0 0
        %4724 = vmatprep.subr.bf16.mxu0 0
        %4725 = vmatpush1.bf16.msra.mxu0 0
        %4726 = vmatprep.mubr.bf16.mxu0 0
        %4727 = vmatmul.mubr.bf16.gmra.mrb[0].mxu0 %v4689
        %v4728 = vpop.f32.mrb[0].mxu0
        %v4729 = vadd.f32 0.0, %v4728
        %v4730 = vpop.f32.mrb[0].mxu0
        %v4731 = vpop.f32.mrb[0].mxu0
        %v4732 = vpop.f32.mrb[0].mxu0
        %4733 = vdwg.mxu0
        %v4735 = vsel %vm4406, %v4500, 0
        %v4738 = vsel %vm4506, %v4080, 0
        %4740 = vmatprep.subr.bf16.mxu0 0
        %4741 = vmatpush1.bf16.msra.mxu0 %v4738
        %4742 = vmatprep.subr.bf16.mxu0 0
        %4743 = vmatpush1.bf16.msra.mxu0 0
        %4744 = vmatprep.subr.bf16.mxu0 0
        %4745 = vmatpush1.bf16.msra.mxu0 0
        %4746 = vmatprep.subr.bf16.mxu0 0
        %4747 = vmatpush1.bf16.msra.mxu0 0
        %4748 = vmatprep.subr.bf16.mxu0 0
        %4749 = vmatpush1.bf16.msra.mxu0 0
        %4750 = vmatprep.subr.bf16.mxu0 0
        %4751 = vmatpush1.bf16.msra.mxu0 0
        %4752 = vmatprep.subr.bf16.mxu0 0
        %4753 = vmatpush1.bf16.msra.mxu0 0
        %4754 = vmatprep.subr.bf16.mxu0 0
        %4755 = vmatpush1.bf16.msra.mxu0 0
        %4756 = vmatprep.subr.bf16.mxu0 0
        %4757 = vmatpush1.bf16.msra.mxu0 0
        %4758 = vmatprep.subr.bf16.mxu0 0
        %4759 = vmatpush1.bf16.msra.mxu0 0
        %4760 = vmatprep.subr.bf16.mxu0 0
        %4761 = vmatpush1.bf16.msra.mxu0 0
        %4762 = vmatprep.subr.bf16.mxu0 0
        %4763 = vmatpush1.bf16.msra.mxu0 0
        %4764 = vmatprep.subr.bf16.mxu0 0
        %4765 = vmatpush1.bf16.msra.mxu0 0
        %4766 = vmatprep.subr.bf16.mxu0 0
        %4767 = vmatpush1.bf16.msra.mxu0 0
        %4768 = vmatprep.subr.bf16.mxu0 0
        %4769 = vmatpush1.bf16.msra.mxu0 0
        %4770 = vmatprep.subr.bf16.mxu0 0
        %4771 = vmatpush1.bf16.msra.mxu0 0
        %4772 = vmatprep.mubr.bf16.mxu0 0
        %4773 = vmatmul.mubr.bf16.gmra.mrb[0].mxu0 %v4735
        %v4774 = vpop.f32.mrb[0].mxu0
        %v4775 = vadd.f32 0.0, %v4774
        %v4776 = vpop.f32.mrb[0].mxu0
        %v4777 = vpop.f32.mrb[0].mxu0
        %v4778 = vpop.f32.mrb[0].mxu0
        %4779 = vdwg.mxu0
        %v4781 = vsel %vm4406, %v4501, 0
        %v4784 = vsel %vm4506, %v4082, 0
        %4786 = vmatprep.subr.bf16.mxu0 0
        %4787 = vmatpush1.bf16.msra.mxu0 %v4784
        %4788 = vmatprep.subr.bf16.mxu0 0
        %4789 = vmatpush1.bf16.msra.mxu0 0
        %4790 = vmatprep.subr.bf16.mxu0 0
        %4791 = vmatpush1.bf16.msra.mxu0 0
        %4792 = vmatprep.subr.bf16.mxu0 0
        %4793 = vmatpush1.bf16.msra.mxu0 0
        %4794 = vmatprep.subr.bf16.mxu0 0
        %4795 = vmatpush1.bf16.msra.mxu0 0
        %4796 = vmatprep.subr.bf16.mxu0 0
        %4797 = vmatpush1.bf16.msra.mxu0 0
        %4798 = vmatprep.subr.bf16.mxu0 0
        %4799 = vmatpush1.bf16.msra.mxu0 0
        %4800 = vmatprep.subr.bf16.mxu0 0
        %4801 = vmatpush1.bf16.msra.mxu0 0
        %4802 = vmatprep.subr.bf16.mxu0 0
        %4803 = vmatpush1.bf16.msra.mxu0 0
        %4804 = vmatprep.subr.bf16.mxu0 0
        %4805 = vmatpush1.bf16.msra.mxu0 0
        %4806 = vmatprep.subr.bf16.mxu0 0
        %4807 = vmatpush1.bf16.msra.mxu0 0
        %4808 = vmatprep.subr.bf16.mxu0 0
        %4809 = vmatpush1.bf16.msra.mxu0 0
        %4810 = vmatprep.subr.bf16.mxu0 0
        %4811 = vmatpush1.bf16.msra.mxu0 0
        %4812 = vmatprep.subr.bf16.mxu0 0
        %4813 = vmatpush1.bf16.msra.mxu0 0
        %4814 = vmatprep.subr.bf16.mxu0 0
        %4815 = vmatpush1.bf16.msra.mxu0 0
        %4816 = vmatprep.subr.bf16.mxu0 0
        %4817 = vmatpush1.bf16.msra.mxu0 0
        %4818 = vmatprep.mubr.bf16.mxu0 0
        %4819 = vmatmul.mubr.bf16.gmra.mrb[0].mxu0 %v4781
        %v4820 = vpop.f32.mrb[0].mxu0
        %v4821 = vadd.f32 0.0, %v4820
        %v4822 = vpop.f32.mrb[0].mxu0
        %v4823 = vpop.f32.mrb[0].mxu0
        %v4824 = vpop.f32.mrb[0].mxu0
        %4825 = vdwg.mxu0
        %v4827 = vsel %vm4406, %v4502, 0
        %v4830 = vsel %vm4506, %v4084, 0
        %4832 = vmatprep.subr.bf16.mxu0 0
        %4833 = vmatpush1.bf16.msra.mxu0 %v4830
        %4834 = vmatprep.subr.bf16.mxu0 0
        %4835 = vmatpush1.bf16.msra.mxu0 0
        %4836 = vmatprep.subr.bf16.mxu0 0
        %4837 = vmatpush1.bf16.msra.mxu0 0
        %4838 = vmatprep.subr.bf16.mxu0 0
        %4839 = vmatpush1.bf16.msra.mxu0 0
        %4840 = vmatprep.subr.bf16.mxu0 0
        %4841 = vmatpush1.bf16.msra.mxu0 0
        %4842 = vmatprep.subr.bf16.mxu0 0
        %4843 = vmatpush1.bf16.msra.mxu0 0
        %4844 = vmatprep.subr.bf16.mxu0 0
        %4845 = vmatpush1.bf16.msra.mxu0 0
        %4846 = vmatprep.subr.bf16.mxu0 0
        %4847 = vmatpush1.bf16.msra.mxu0 0
        %4848 = vmatprep.subr.bf16.mxu0 0
        %4849 = vmatpush1.bf16.msra.mxu0 0
        %4850 = vmatprep.subr.bf16.mxu0 0
        %4851 = vmatpush1.bf16.msra.mxu0 0
        %4852 = vmatprep.subr.bf16.mxu0 0
        %4853 = vmatpush1.bf16.msra.mxu0 0
        %4854 = vmatprep.subr.bf16.mxu0 0
        %4855 = vmatpush1.bf16.msra.mxu0 0
        %4856 = vmatprep.subr.bf16.mxu0 0
        %4857 = vmatpush1.bf16.msra.mxu0 0
        %4858 = vmatprep.subr.bf16.mxu0 0
        %4859 = vmatpush1.bf16.msra.mxu0 0
        %4860 = vmatprep.subr.bf16.mxu0 0
        %4861 = vmatpush1.bf16.msra.mxu0 0
        %4862 = vmatprep.subr.bf16.mxu0 0
        %4863 = vmatpush1.bf16.msra.mxu0 0
        %4864 = vmatprep.mubr.bf16.mxu0 0
        %4865 = vmatmul.mubr.bf16.gmra.mrb[0].mxu0 %v4827
        %v4866 = vpop.f32.mrb[0].mxu0
        %v4867 = vadd.f32 0.0, %v4866
        %v4868 = vpop.f32.mrb[0].mxu0
        %v4869 = vpop.f32.mrb[0].mxu0
        %v4870 = vpop.f32.mrb[0].mxu0
        %4871 = vdwg.mxu0
        %v4872 = vpack.c.bf16 %v4545, %v4545
        %v4873 = vpack.c.bf16 %v4591, %v4591
        %v4874 = vpack.c.bf16 %v4637, %v4637
        %v4875 = vpack.c.bf16 %v4683, %v4683
        %v4876 = vpack.c.bf16 %v4729, %v4729
        %v4877 = vpack.c.bf16 %v4775, %v4775
        %v4878 = vpack.c.bf16 %v4821, %v4821
        %v4879 = vpack.c.bf16 %v4867, %v4867
        %v4880 = vrot.slane %v1611, 4
        %v4882 = vrot.slane %v3926, 4
        %4884 = vmatprep.subr.bf16.mxu0 0
        %4885 = vmatpush1.bf16.xpose.msra.mxu0 %v4882
        %4886 = vmatprep.subr.bf16.mxu0 0
        %4887 = vmatpush1.bf16.xpose.msra.mxu0 0
        %4888 = vmatprep.subr.bf16.mxu0 0
        %4889 = vmatpush1.bf16.xpose.msra.mxu0 0
        %4890 = vmatprep.subr.bf16.mxu0 0
        %4891 = vmatpush1.bf16.xpose.msra.mxu0 0
        %4892 = vmatprep.subr.bf16.mxu0 0
        %4893 = vmatpush1.bf16.xpose.msra.mxu0 0
        %4894 = vmatprep.subr.bf16.mxu0 0
        %4895 = vmatpush1.bf16.xpose.msra.mxu0 0
        %4896 = vmatprep.subr.bf16.mxu0 0
        %4897 = vmatpush1.bf16.xpose.msra.mxu0 0
        %4898 = vmatprep.subr.bf16.mxu0 0
        %4899 = vmatpush1.bf16.xpose.msra.mxu0 0
        %4900 = vmatprep.subr.bf16.mxu0 0
        %4901 = vmatpush1.bf16.xpose.msra.mxu0 0
        %4902 = vmatprep.subr.bf16.mxu0 0
        %4903 = vmatpush1.bf16.xpose.msra.mxu0 0
        %4904 = vmatprep.subr.bf16.mxu0 0
        %4905 = vmatpush1.bf16.xpose.msra.mxu0 0
        %4906 = vmatprep.subr.bf16.mxu0 0
        %4907 = vmatpush1.bf16.xpose.msra.mxu0 0
        %4908 = vmatprep.subr.bf16.mxu0 0
        %4909 = vmatpush1.bf16.xpose.msra.mxu0 0
        %4910 = vmatprep.subr.bf16.mxu0 0
        %4911 = vmatpush1.bf16.xpose.msra.mxu0 0
        %4912 = vmatprep.subr.bf16.mxu0 0
        %4913 = vmatpush1.bf16.xpose.msra.mxu0 0
        %4914 = vmatprep.subr.bf16.mxu0 0
        %4915 = vmatpush1.bf16.xpose.msra.mxu0 0
        %4916 = vmatprep.mubr.bf16.mxu0 0
        %4917 = vmatmul.mubr.bf16.gmra.mrb[0].mxu0 %v4880
        %v4918 = vpop.f32.mrb[0].mxu0
        %v4919 = vadd.f32 0.0, %v4918
        %v4920 = vpop.f32.mrb[0].mxu0
        %v4921 = vpop.f32.mrb[0].mxu0
        %v4922 = vpop.f32.mrb[0].mxu0
        %4923 = vdwg.mxu0
        %v4924 = vrot.slane %v1613, 4
        %v4926 = vrot.slane %v3928, 4
        %4928 = vmatprep.subr.bf16.mxu0 0
        %4929 = vmatpush1.bf16.xpose.msra.mxu0 %v4926
        %4930 = vmatprep.subr.bf16.mxu0 0
        %4931 = vmatpush1.bf16.xpose.msra.mxu0 0
        %4932 = vmatprep.subr.bf16.mxu0 0
        %4933 = vmatpush1.bf16.xpose.msra.mxu0 0
        %4934 = vmatprep.subr.bf16.mxu0 0
        %4935 = vmatpush1.bf16.xpose.msra.mxu0 0
        %4936 = vmatprep.subr.bf16.mxu0 0
        %4937 = vmatpush1.bf16.xpose.msra.mxu0 0
        %4938 = vmatprep.subr.bf16.mxu0 0
        %4939 = vmatpush1.bf16.xpose.msra.mxu0 0
        %4940 = vmatprep.subr.bf16.mxu0 0
        %4941 = vmatpush1.bf16.xpose.msra.mxu0 0
        %4942 = vmatprep.subr.bf16.mxu0 0
        %4943 = vmatpush1.bf16.xpose.msra.mxu0 0
        %4944 = vmatprep.subr.bf16.mxu0 0
        %4945 = vmatpush1.bf16.xpose.msra.mxu0 0
        %4946 = vmatprep.subr.bf16.mxu0 0
        %4947 = vmatpush1.bf16.xpose.msra.mxu0 0
        %4948 = vmatprep.subr.bf16.mxu0 0
        %4949 = vmatpush1.bf16.xpose.msra.mxu0 0
        %4950 = vmatprep.subr.bf16.mxu0 0
        %4951 = vmatpush1.bf16.xpose.msra.mxu0 0
        %4952 = vmatprep.subr.bf16.mxu0 0
        %4953 = vmatpush1.bf16.xpose.msra.mxu0 0
        %4954 = vmatprep.subr.bf16.mxu0 0
        %4955 = vmatpush1.bf16.xpose.msra.mxu0 0
        %4956 = vmatprep.subr.bf16.mxu0 0
        %4957 = vmatpush1.bf16.xpose.msra.mxu0 0
        %4958 = vmatprep.subr.bf16.mxu0 0
        %4959 = vmatpush1.bf16.xpose.msra.mxu0 0
        %4960 = vmatprep.mubr.bf16.mxu0 0
        %4961 = vmatmul.mubr.bf16.gmra.mrb[0].mxu0 %v4924
        %v4962 = vpop.f32.mrb[0].mxu0
        %v4963 = vadd.f32 0.0, %v4962
        %v4964 = vpop.f32.mrb[0].mxu0
        %v4965 = vpop.f32.mrb[0].mxu0
        %v4966 = vpop.f32.mrb[0].mxu0
        %4967 = vdwg.mxu0
        %v4968 = vrot.slane %v1615, 4
        %v4970 = vrot.slane %v3930, 4
        %4972 = vmatprep.subr.bf16.mxu0 0
        %4973 = vmatpush1.bf16.xpose.msra.mxu0 %v4970
        %4974 = vmatprep.subr.bf16.mxu0 0
        %4975 = vmatpush1.bf16.xpose.msra.mxu0 0
        %4976 = vmatprep.subr.bf16.mxu0 0
        %4977 = vmatpush1.bf16.xpose.msra.mxu0 0
        %4978 = vmatprep.subr.bf16.mxu0 0
        %4979 = vmatpush1.bf16.xpose.msra.mxu0 0
        %4980 = vmatprep.subr.bf16.mxu0 0
        %4981 = vmatpush1.bf16.xpose.msra.mxu0 0
        %4982 = vmatprep.subr.bf16.mxu0 0
        %4983 = vmatpush1.bf16.xpose.msra.mxu0 0
        %4984 = vmatprep.subr.bf16.mxu0 0
        %4985 = vmatpush1.bf16.xpose.msra.mxu0 0
        %4986 = vmatprep.subr.bf16.mxu0 0
        %4987 = vmatpush1.bf16.xpose.msra.mxu0 0
        %4988 = vmatprep.subr.bf16.mxu0 0
        %4989 = vmatpush1.bf16.xpose.msra.mxu0 0
        %4990 = vmatprep.subr.bf16.mxu0 0
        %4991 = vmatpush1.bf16.xpose.msra.mxu0 0
        %4992 = vmatprep.subr.bf16.mxu0 0
        %4993 = vmatpush1.bf16.xpose.msra.mxu0 0
        %4994 = vmatprep.subr.bf16.mxu0 0
        %4995 = vmatpush1.bf16.xpose.msra.mxu0 0
        %4996 = vmatprep.subr.bf16.mxu0 0
        %4997 = vmatpush1.bf16.xpose.msra.mxu0 0
        %4998 = vmatprep.subr.bf16.mxu0 0
        %4999 = vmatpush1.bf16.xpose.msra.mxu0 0
        %5000 = vmatprep.subr.bf16.mxu0 0
        %5001 = vmatpush1.bf16.xpose.msra.mxu0 0
        %5002 = vmatprep.subr.bf16.mxu0 0
        %5003 = vmatpush1.bf16.xpose.msra.mxu0 0
        %5004 = vmatprep.mubr.bf16.mxu0 0
        %5005 = vmatmul.mubr.bf16.gmra.mrb[0].mxu0 %v4968
        %v5006 = vpop.f32.mrb[0].mxu0
        %v5007 = vadd.f32 0.0, %v5006
        %v5008 = vpop.f32.mrb[0].mxu0
        %v5009 = vpop.f32.mrb[0].mxu0
        %v5010 = vpop.f32.mrb[0].mxu0
        %5011 = vdwg.mxu0
        %v5012 = vrot.slane %v1617, 4
        %v5014 = vrot.slane %v3932, 4
        %5016 = vmatprep.subr.bf16.mxu0 0
        %5017 = vmatpush1.bf16.xpose.msra.mxu0 %v5014
        %5018 = vmatprep.subr.bf16.mxu0 0
        %5019 = vmatpush1.bf16.xpose.msra.mxu0 0
        %5020 = vmatprep.subr.bf16.mxu0 0
        %5021 = vmatpush1.bf16.xpose.msra.mxu0 0
        %5022 = vmatprep.subr.bf16.mxu0 0
        %5023 = vmatpush1.bf16.xpose.msra.mxu0 0
        %5024 = vmatprep.subr.bf16.mxu0 0
        %5025 = vmatpush1.bf16.xpose.msra.mxu0 0
        %5026 = vmatprep.subr.bf16.mxu0 0
        %5027 = vmatpush1.bf16.xpose.msra.mxu0 0
        %5028 = vmatprep.subr.bf16.mxu0 0
        %5029 = vmatpush1.bf16.xpose.msra.mxu0 0
        %5030 = vmatprep.subr.bf16.mxu0 0
        %5031 = vmatpush1.bf16.xpose.msra.mxu0 0
        %5032 = vmatprep.subr.bf16.mxu0 0
        %5033 = vmatpush1.bf16.xpose.msra.mxu0 0
        %5034 = vmatprep.subr.bf16.mxu0 0
        %5035 = vmatpush1.bf16.xpose.msra.mxu0 0
        %5036 = vmatprep.subr.bf16.mxu0 0
        %5037 = vmatpush1.bf16.xpose.msra.mxu0 0
        %5038 = vmatprep.subr.bf16.mxu0 0
        %5039 = vmatpush1.bf16.xpose.msra.mxu0 0
        %5040 = vmatprep.subr.bf16.mxu0 0
        %5041 = vmatpush1.bf16.xpose.msra.mxu0 0
        %5042 = vmatprep.subr.bf16.mxu0 0
        %5043 = vmatpush1.bf16.xpose.msra.mxu0 0
        %5044 = vmatprep.subr.bf16.mxu0 0
        %5045 = vmatpush1.bf16.xpose.msra.mxu0 0
        %5046 = vmatprep.subr.bf16.mxu0 0
        %5047 = vmatpush1.bf16.xpose.msra.mxu0 0
        %5048 = vmatprep.mubr.bf16.mxu0 0
        %5049 = vmatmul.mubr.bf16.gmra.mrb[0].mxu0 %v5012
        %v5050 = vpop.f32.mrb[0].mxu0
        %v5051 = vadd.f32 0.0, %v5050
        %v5052 = vpop.f32.mrb[0].mxu0
        %v5053 = vpop.f32.mrb[0].mxu0
        %v5054 = vpop.f32.mrb[0].mxu0
        %5055 = vdwg.mxu0
        %v5056 = vrot.slane %v1619, 4
        %v5058 = vrot.slane %v3934, 4
        %5060 = vmatprep.subr.bf16.mxu0 0
        %5061 = vmatpush1.bf16.xpose.msra.mxu0 %v5058
        %5062 = vmatprep.subr.bf16.mxu0 0
        %5063 = vmatpush1.bf16.xpose.msra.mxu0 0
        %5064 = vmatprep.subr.bf16.mxu0 0
        %5065 = vmatpush1.bf16.xpose.msra.mxu0 0
        %5066 = vmatprep.subr.bf16.mxu0 0
        %5067 = vmatpush1.bf16.xpose.msra.mxu0 0
        %5068 = vmatprep.subr.bf16.mxu0 0
        %5069 = vmatpush1.bf16.xpose.msra.mxu0 0
        %5070 = vmatprep.subr.bf16.mxu0 0
        %5071 = vmatpush1.bf16.xpose.msra.mxu0 0
        %5072 = vmatprep.subr.bf16.mxu0 0
        %5073 = vmatpush1.bf16.xpose.msra.mxu0 0
        %5074 = vmatprep.subr.bf16.mxu0 0
        %5075 = vmatpush1.bf16.xpose.msra.mxu0 0
        %5076 = vmatprep.subr.bf16.mxu0 0
        %5077 = vmatpush1.bf16.xpose.msra.mxu0 0
        %5078 = vmatprep.subr.bf16.mxu0 0
        %5079 = vmatpush1.bf16.xpose.msra.mxu0 0
        %5080 = vmatprep.subr.bf16.mxu0 0
        %5081 = vmatpush1.bf16.xpose.msra.mxu0 0
        %5082 = vmatprep.subr.bf16.mxu0 0
        %5083 = vmatpush1.bf16.xpose.msra.mxu0 0
        %5084 = vmatprep.subr.bf16.mxu0 0
        %5085 = vmatpush1.bf16.xpose.msra.mxu0 0
        %5086 = vmatprep.subr.bf16.mxu0 0
        %5087 = vmatpush1.bf16.xpose.msra.mxu0 0
        %5088 = vmatprep.subr.bf16.mxu0 0
        %5089 = vmatpush1.bf16.xpose.msra.mxu0 0
        %5090 = vmatprep.subr.bf16.mxu0 0
        %5091 = vmatpush1.bf16.xpose.msra.mxu0 0
        %5092 = vmatprep.mubr.bf16.mxu0 0
        %5093 = vmatmul.mubr.bf16.gmra.mrb[0].mxu0 %v5056
        %v5094 = vpop.f32.mrb[0].mxu0
        %v5095 = vadd.f32 0.0, %v5094
        %v5096 = vpop.f32.mrb[0].mxu0
        %v5097 = vpop.f32.mrb[0].mxu0
        %v5098 = vpop.f32.mrb[0].mxu0
        %5099 = vdwg.mxu0
        %v5100 = vrot.slane %v1621, 4
        %v5102 = vrot.slane %v3936, 4
        %5104 = vmatprep.subr.bf16.mxu0 0
        %5105 = vmatpush1.bf16.xpose.msra.mxu0 %v5102
        %5106 = vmatprep.subr.bf16.mxu0 0
        %5107 = vmatpush1.bf16.xpose.msra.mxu0 0
        %5108 = vmatprep.subr.bf16.mxu0 0
        %5109 = vmatpush1.bf16.xpose.msra.mxu0 0
        %5110 = vmatprep.subr.bf16.mxu0 0
        %5111 = vmatpush1.bf16.xpose.msra.mxu0 0
        %5112 = vmatprep.subr.bf16.mxu0 0
        %5113 = vmatpush1.bf16.xpose.msra.mxu0 0
        %5114 = vmatprep.subr.bf16.mxu0 0
        %5115 = vmatpush1.bf16.xpose.msra.mxu0 0
        %5116 = vmatprep.subr.bf16.mxu0 0
        %5117 = vmatpush1.bf16.xpose.msra.mxu0 0
        %5118 = vmatprep.subr.bf16.mxu0 0
        %5119 = vmatpush1.bf16.xpose.msra.mxu0 0
        %5120 = vmatprep.subr.bf16.mxu0 0
        %5121 = vmatpush1.bf16.xpose.msra.mxu0 0
        %5122 = vmatprep.subr.bf16.mxu0 0
        %5123 = vmatpush1.bf16.xpose.msra.mxu0 0
        %5124 = vmatprep.subr.bf16.mxu0 0
        %5125 = vmatpush1.bf16.xpose.msra.mxu0 0
        %5126 = vmatprep.subr.bf16.mxu0 0
        %5127 = vmatpush1.bf16.xpose.msra.mxu0 0
        %5128 = vmatprep.subr.bf16.mxu0 0
        %5129 = vmatpush1.bf16.xpose.msra.mxu0 0
        %5130 = vmatprep.subr.bf16.mxu0 0
        %5131 = vmatpush1.bf16.xpose.msra.mxu0 0
        %5132 = vmatprep.subr.bf16.mxu0 0
        %5133 = vmatpush1.bf16.xpose.msra.mxu0 0
        %5134 = vmatprep.subr.bf16.mxu0 0
        %5135 = vmatpush1.bf16.xpose.msra.mxu0 0
        %5136 = vmatprep.mubr.bf16.mxu0 0
        %5137 = vmatmul.mubr.bf16.gmra.mrb[0].mxu0 %v5100
        %v5138 = vpop.f32.mrb[0].mxu0
        %v5139 = vadd.f32 0.0, %v5138
        %v5140 = vpop.f32.mrb[0].mxu0
        %v5141 = vpop.f32.mrb[0].mxu0
        %v5142 = vpop.f32.mrb[0].mxu0
        %5143 = vdwg.mxu0
        %v5144 = vrot.slane %v1623, 4
        %v5146 = vrot.slane %v3938, 4
        %5148 = vmatprep.subr.bf16.mxu0 0
        %5149 = vmatpush1.bf16.xpose.msra.mxu0 %v5146
        %5150 = vmatprep.subr.bf16.mxu0 0
        %5151 = vmatpush1.bf16.xpose.msra.mxu0 0
        %5152 = vmatprep.subr.bf16.mxu0 0
        %5153 = vmatpush1.bf16.xpose.msra.mxu0 0
        %5154 = vmatprep.subr.bf16.mxu0 0
        %5155 = vmatpush1.bf16.xpose.msra.mxu0 0
        %5156 = vmatprep.subr.bf16.mxu0 0
        %5157 = vmatpush1.bf16.xpose.msra.mxu0 0
        %5158 = vmatprep.subr.bf16.mxu0 0
        %5159 = vmatpush1.bf16.xpose.msra.mxu0 0
        %5160 = vmatprep.subr.bf16.mxu0 0
        %5161 = vmatpush1.bf16.xpose.msra.mxu0 0
        %5162 = vmatprep.subr.bf16.mxu0 0
        %5163 = vmatpush1.bf16.xpose.msra.mxu0 0
        %5164 = vmatprep.subr.bf16.mxu0 0
        %5165 = vmatpush1.bf16.xpose.msra.mxu0 0
        %5166 = vmatprep.subr.bf16.mxu0 0
        %5167 = vmatpush1.bf16.xpose.msra.mxu0 0
        %5168 = vmatprep.subr.bf16.mxu0 0
        %5169 = vmatpush1.bf16.xpose.msra.mxu0 0
        %5170 = vmatprep.subr.bf16.mxu0 0
        %5171 = vmatpush1.bf16.xpose.msra.mxu0 0
        %5172 = vmatprep.subr.bf16.mxu0 0
        %5173 = vmatpush1.bf16.xpose.msra.mxu0 0
        %5174 = vmatprep.subr.bf16.mxu0 0
        %5175 = vmatpush1.bf16.xpose.msra.mxu0 0
        %5176 = vmatprep.subr.bf16.mxu0 0
        %5177 = vmatpush1.bf16.xpose.msra.mxu0 0
        %5178 = vmatprep.subr.bf16.mxu0 0
        %5179 = vmatpush1.bf16.xpose.msra.mxu0 0
        %5180 = vmatprep.mubr.bf16.mxu0 0
        %5181 = vmatmul.mubr.bf16.gmra.mrb[0].mxu0 %v5144
        %v5182 = vpop.f32.mrb[0].mxu0
        %v5183 = vadd.f32 0.0, %v5182
        %v5184 = vpop.f32.mrb[0].mxu0
        %v5185 = vpop.f32.mrb[0].mxu0
        %v5186 = vpop.f32.mrb[0].mxu0
        %5187 = vdwg.mxu0
        %v5188 = vrot.slane %v1625, 4
        %v5190 = vrot.slane %v3940, 4
        %5192 = vmatprep.subr.bf16.mxu0 0
        %5193 = vmatpush1.bf16.xpose.msra.mxu0 %v5190
        %5194 = vmatprep.subr.bf16.mxu0 0
        %5195 = vmatpush1.bf16.xpose.msra.mxu0 0
        %5196 = vmatprep.subr.bf16.mxu0 0
        %5197 = vmatpush1.bf16.xpose.msra.mxu0 0
        %5198 = vmatprep.subr.bf16.mxu0 0
        %5199 = vmatpush1.bf16.xpose.msra.mxu0 0
        %5200 = vmatprep.subr.bf16.mxu0 0
        %5201 = vmatpush1.bf16.xpose.msra.mxu0 0
        %5202 = vmatprep.subr.bf16.mxu0 0
        %5203 = vmatpush1.bf16.xpose.msra.mxu0 0
        %5204 = vmatprep.subr.bf16.mxu0 0
        %5205 = vmatpush1.bf16.xpose.msra.mxu0 0
        %5206 = vmatprep.subr.bf16.mxu0 0
        %5207 = vmatpush1.bf16.xpose.msra.mxu0 0
        %5208 = vmatprep.subr.bf16.mxu0 0
        %5209 = vmatpush1.bf16.xpose.msra.mxu0 0
        %5210 = vmatprep.subr.bf16.mxu0 0
        %5211 = vmatpush1.bf16.xpose.msra.mxu0 0
        %5212 = vmatprep.subr.bf16.mxu0 0
        %5213 = vmatpush1.bf16.xpose.msra.mxu0 0
        %5214 = vmatprep.subr.bf16.mxu0 0
        %5215 = vmatpush1.bf16.xpose.msra.mxu0 0
        %5216 = vmatprep.subr.bf16.mxu0 0
        %5217 = vmatpush1.bf16.xpose.msra.mxu0 0
        %5218 = vmatprep.subr.bf16.mxu0 0
        %5219 = vmatpush1.bf16.xpose.msra.mxu0 0
        %5220 = vmatprep.subr.bf16.mxu0 0
        %5221 = vmatpush1.bf16.xpose.msra.mxu0 0
        %5222 = vmatprep.subr.bf16.mxu0 0
        %5223 = vmatpush1.bf16.xpose.msra.mxu0 0
        %5224 = vmatprep.mubr.bf16.mxu0 0
        %5225 = vmatmul.mubr.bf16.gmra.mrb[0].mxu0 %v5188
        %v5226 = vpop.f32.mrb[0].mxu0
        %v5227 = vadd.f32 0.0, %v5226
        %v5228 = vpop.f32.mrb[0].mxu0
        %v5229 = vpop.f32.mrb[0].mxu0
        %v5230 = vpop.f32.mrb[0].mxu0
        %5231 = vdwg.mxu0
        %v5232 = vsel %vm4406, %v4919, -inf
        %5233 = vmax.xlane.f32.xlu0 %v5232
        %v5234 = vpop.xlane.xlu0 %5233
        %v5235 = vsel %vm4406, %v4963, -inf
        %5236 = vmax.xlane.f32.xlu0 %v5235
        %v5237 = vpop.xlane.xlu0 %5236
        %v5238 = vsel %vm4406, %v5007, -inf
        %5239 = vmax.xlane.f32.xlu0 %v5238
        %v5240 = vpop.xlane.xlu0 %5239
        %v5241 = vsel %vm4406, %v5051, -inf
        %5242 = vmax.xlane.f32.xlu0 %v5241
        %v5243 = vpop.xlane.xlu0 %5242
        %v5244 = vsel %vm4406, %v5095, -inf
        %5245 = vmax.xlane.f32.xlu0 %v5244
        %v5246 = vpop.xlane.xlu0 %5245
        %v5247 = vsel %vm4406, %v5139, -inf
        %5248 = vmax.xlane.f32.xlu0 %v5247
        %v5249 = vpop.xlane.xlu0 %5248
        %v5250 = vsel %vm4406, %v5183, -inf
        %5251 = vmax.xlane.f32.xlu0 %v5250
        %v5252 = vpop.xlane.xlu0 %5251
        %v5253 = vsel %vm4406, %v5227, -inf
        %5254 = vmax.xlane.f32.xlu0 %v5253
        %v5255 = vpop.xlane.xlu0 %5254
        %v5256 = vsub.f32 %v4919, %v5234
        %v5257 = vsub.f32 %v4963, %v5237
        %v5258 = vsub.f32 %v5007, %v5240
        %v5259 = vsub.f32 %v5051, %v5243
        %v5260 = vsub.f32 %v5095, %v5246
        %v5261 = vsub.f32 %v5139, %v5249
        %v5262 = vsub.f32 %v5183, %v5252
        %v5263 = vsub.f32 %v5227, %v5255
        %v5264 = vmul.f32 %v5256, 1.442695
        %v5265 = vpow.pop %v5264
        %v5266 = vmul.f32 %v5257, 1.442695
        %v5267 = vpow.pop %v5266
        %v5268 = vmul.f32 %v5258, 1.442695
        %v5269 = vpow.pop %v5268
        %v5270 = vmul.f32 %v5259, 1.442695
        %v5271 = vpow.pop %v5270
        %v5272 = vmul.f32 %v5260, 1.442695
        %v5273 = vpow.pop %v5272
        %v5274 = vmul.f32 %v5261, 1.442695
        %v5275 = vpow.pop %v5274
        %v5276 = vmul.f32 %v5262, 1.442695
        %v5277 = vpow.pop %v5276
        %v5278 = vmul.f32 %v5263, 1.442695
        %v5279 = vpow.pop %v5278
        %v5280 = vsel %vm4406, %v5265, 0.0
        %5281 = vadd.xlane.f32.xlu0 %v5280
        %v5282 = vpop.xlane.xlu0 %5281
        %v5283 = vsel %vm4406, %v5267, 0.0
        %5284 = vadd.xlane.f32.xlu0 %v5283
        %v5285 = vpop.xlane.xlu0 %5284
        %v5286 = vsel %vm4406, %v5269, 0.0
        %5287 = vadd.xlane.f32.xlu0 %v5286
        %v5288 = vpop.xlane.xlu0 %5287
        %v5289 = vsel %vm4406, %v5271, 0.0
        %5290 = vadd.xlane.f32.xlu0 %v5289
        %v5291 = vpop.xlane.xlu0 %5290
        %v5292 = vsel %vm4406, %v5273, 0.0
        %5293 = vadd.xlane.f32.xlu0 %v5292
        %v5294 = vpop.xlane.xlu0 %5293
        %v5295 = vsel %vm4406, %v5275, 0.0
        %5296 = vadd.xlane.f32.xlu0 %v5295
        %v5297 = vpop.xlane.xlu0 %5296
        %v5298 = vsel %vm4406, %v5277, 0.0
        %5299 = vadd.xlane.f32.xlu0 %v5298
        %v5300 = vpop.xlane.xlu0 %5299
        %v5301 = vsel %vm4406, %v5279, 0.0
        %5302 = vadd.xlane.f32.xlu0 %v5301
        %v5303 = vpop.xlane.xlu0 %5302
        %v5304 = vrcp.pop %v5282
        %v5305 = vrcp.pop %v5285
        %v5306 = vrcp.pop %v5288
        %v5307 = vrcp.pop %v5291
        %v5308 = vrcp.pop %v5294
        %v5309 = vrcp.pop %v5297
        %v5310 = vrcp.pop %v5300
        %v5311 = vrcp.pop %v5303
        %v5312 = vmul.f32 %v5265, %v5304
        %v5313 = vmul.f32 %v5267, %v5305
        %v5314 = vmul.f32 %v5269, %v5306
        %v5315 = vmul.f32 %v5271, %v5307
        %v5316 = vmul.f32 %v5273, %v5308
        %v5317 = vmul.f32 %v5275, %v5309
        %v5318 = vmul.f32 %v5277, %v5310
        %v5319 = vmul.f32 %v5279, %v5311
        %v5320 = vpack.c.bf16 %v5312, %v5312
        %v5321 = vpack.c.bf16 %v5313, %v5313
        %v5322 = vpack.c.bf16 %v5314, %v5314
        %v5323 = vpack.c.bf16 %v5315, %v5315
        %v5324 = vpack.c.bf16 %v5316, %v5316
        %v5325 = vpack.c.bf16 %v5317, %v5317
        %v5326 = vpack.c.bf16 %v5318, %v5318
        %v5327 = vpack.c.bf16 %v5319, %v5319
        %v5328 = vrot.slane %v4070, 4
        %v5330 = vsel %vm4406, %v5320, 0
        %v5333 = vsel %vm4506, %v5328, 0
        %5335 = vmatprep.subr.bf16.mxu0 0
        %5336 = vmatpush1.bf16.msra.mxu0 %v5333
        %5337 = vmatprep.subr.bf16.mxu0 0
        %5338 = vmatpush1.bf16.msra.mxu0 0
        %5339 = vmatprep.subr.bf16.mxu0 0
        %5340 = vmatpush1.bf16.msra.mxu0 0
        %5341 = vmatprep.subr.bf16.mxu0 0
        %5342 = vmatpush1.bf16.msra.mxu0 0
        %5343 = vmatprep.subr.bf16.mxu0 0
        %5344 = vmatpush1.bf16.msra.mxu0 0
        %5345 = vmatprep.subr.bf16.mxu0 0
        %5346 = vmatpush1.bf16.msra.mxu0 0
        %5347 = vmatprep.subr.bf16.mxu0 0
        %5348 = vmatpush1.bf16.msra.mxu0 0
        %5349 = vmatprep.subr.bf16.mxu0 0
        %5350 = vmatpush1.bf16.msra.mxu0 0
        %5351 = vmatprep.subr.bf16.mxu0 0
        %5352 = vmatpush1.bf16.msra.mxu0 0
        %5353 = vmatprep.subr.bf16.mxu0 0
        %5354 = vmatpush1.bf16.msra.mxu0 0
        %5355 = vmatprep.subr.bf16.mxu0 0
        %5356 = vmatpush1.bf16.msra.mxu0 0
        %5357 = vmatprep.subr.bf16.mxu0 0
        %5358 = vmatpush1.bf16.msra.mxu0 0
        %5359 = vmatprep.subr.bf16.mxu0 0
        %5360 = vmatpush1.bf16.msra.mxu0 0
        %5361 = vmatprep.subr.bf16.mxu0 0
        %5362 = vmatpush1.bf16.msra.mxu0 0
        %5363 = vmatprep.subr.bf16.mxu0 0
        %5364 = vmatpush1.bf16.msra.mxu0 0
        %5365 = vmatprep.subr.bf16.mxu0 0
        %5366 = vmatpush1.bf16.msra.mxu0 0
        %5367 = vmatprep.mubr.bf16.mxu0 0
        %5368 = vmatmul.mubr.bf16.gmra.mrb[0].mxu0 %v5330
        %v5369 = vpop.f32.mrb[0].mxu0
        %v5370 = vadd.f32 0.0, %v5369
        %v5371 = vpop.f32.mrb[0].mxu0
        %v5372 = vpop.f32.mrb[0].mxu0
        %v5373 = vpop.f32.mrb[0].mxu0
        %5374 = vdwg.mxu0
        %v5375 = vrot.slane %v4072, 4
        %v5377 = vsel %vm4406, %v5321, 0
        %v5380 = vsel %vm4506, %v5375, 0
        %5382 = vmatprep.subr.bf16.mxu0 0
        %5383 = vmatpush1.bf16.msra.mxu0 %v5380
        %5384 = vmatprep.subr.bf16.mxu0 0
        %5385 = vmatpush1.bf16.msra.mxu0 0
        %5386 = vmatprep.subr.bf16.mxu0 0
        %5387 = vmatpush1.bf16.msra.mxu0 0
        %5388 = vmatprep.subr.bf16.mxu0 0
        %5389 = vmatpush1.bf16.msra.mxu0 0
        %5390 = vmatprep.subr.bf16.mxu0 0
        %5391 = vmatpush1.bf16.msra.mxu0 0
        %5392 = vmatprep.subr.bf16.mxu0 0
        %5393 = vmatpush1.bf16.msra.mxu0 0
        %5394 = vmatprep.subr.bf16.mxu0 0
        %5395 = vmatpush1.bf16.msra.mxu0 0
        %5396 = vmatprep.subr.bf16.mxu0 0
        %5397 = vmatpush1.bf16.msra.mxu0 0
        %5398 = vmatprep.subr.bf16.mxu0 0
        %5399 = vmatpush1.bf16.msra.mxu0 0
        %5400 = vmatprep.subr.bf16.mxu0 0
        %5401 = vmatpush1.bf16.msra.mxu0 0
        %5402 = vmatprep.subr.bf16.mxu0 0
        %5403 = vmatpush1.bf16.msra.mxu0 0
        %5404 = vmatprep.subr.bf16.mxu0 0
        %5405 = vmatpush1.bf16.msra.mxu0 0
        %5406 = vmatprep.subr.bf16.mxu0 0
        %5407 = vmatpush1.bf16.msra.mxu0 0
        %5408 = vmatprep.subr.bf16.mxu0 0
        %5409 = vmatpush1.bf16.msra.mxu0 0
        %5410 = vmatprep.subr.bf16.mxu0 0
        %5411 = vmatpush1.bf16.msra.mxu0 0
        %5412 = vmatprep.subr.bf16.mxu0 0
        %5413 = vmatpush1.bf16.msra.mxu0 0
        %5414 = vmatprep.mubr.bf16.mxu0 0
        %5415 = vmatmul.mubr.bf16.gmra.mrb[0].mxu0 %v5377
        %v5416 = vpop.f32.mrb[0].mxu0
        %v5417 = vadd.f32 0.0, %v5416
        %v5418 = vpop.f32.mrb[0].mxu0
        %v5419 = vpop.f32.mrb[0].mxu0
        %v5420 = vpop.f32.mrb[0].mxu0
        %5421 = vdwg.mxu0
        %v5422 = vrot.slane %v4074, 4
        %v5424 = vsel %vm4406, %v5322, 0
        %v5427 = vsel %vm4506, %v5422, 0
        %5429 = vmatprep.subr.bf16.mxu0 0
        %5430 = vmatpush1.bf16.msra.mxu0 %v5427
        %5431 = vmatprep.subr.bf16.mxu0 0
        %5432 = vmatpush1.bf16.msra.mxu0 0
        %5433 = vmatprep.subr.bf16.mxu0 0
        %5434 = vmatpush1.bf16.msra.mxu0 0
        %5435 = vmatprep.subr.bf16.mxu0 0
        %5436 = vmatpush1.bf16.msra.mxu0 0
        %5437 = vmatprep.subr.bf16.mxu0 0
        %5438 = vmatpush1.bf16.msra.mxu0 0
        %5439 = vmatprep.subr.bf16.mxu0 0
        %5440 = vmatpush1.bf16.msra.mxu0 0
        %5441 = vmatprep.subr.bf16.mxu0 0
        %5442 = vmatpush1.bf16.msra.mxu0 0
        %5443 = vmatprep.subr.bf16.mxu0 0
        %5444 = vmatpush1.bf16.msra.mxu0 0
        %5445 = vmatprep.subr.bf16.mxu0 0
        %5446 = vmatpush1.bf16.msra.mxu0 0
        %5447 = vmatprep.subr.bf16.mxu0 0
        %5448 = vmatpush1.bf16.msra.mxu0 0
        %5449 = vmatprep.subr.bf16.mxu0 0
        %5450 = vmatpush1.bf16.msra.mxu0 0
        %5451 = vmatprep.subr.bf16.mxu0 0
        %5452 = vmatpush1.bf16.msra.mxu0 0
        %5453 = vmatprep.subr.bf16.mxu0 0
        %5454 = vmatpush1.bf16.msra.mxu0 0
        %5455 = vmatprep.subr.bf16.mxu0 0
        %5456 = vmatpush1.bf16.msra.mxu0 0
        %5457 = vmatprep.subr.bf16.mxu0 0
        %5458 = vmatpush1.bf16.msra.mxu0 0
        %5459 = vmatprep.subr.bf16.mxu0 0
        %5460 = vmatpush1.bf16.msra.mxu0 0
        %5461 = vmatprep.mubr.bf16.mxu0 0
        %5462 = vmatmul.mubr.bf16.gmra.mrb[0].mxu0 %v5424
        %v5463 = vpop.f32.mrb[0].mxu0
        %v5464 = vadd.f32 0.0, %v5463
        %v5465 = vpop.f32.mrb[0].mxu0
        %v5466 = vpop.f32.mrb[0].mxu0
        %v5467 = vpop.f32.mrb[0].mxu0
        %5468 = vdwg.mxu0
        %v5469 = vrot.slane %v4076, 4
        %v5471 = vsel %vm4406, %v5323, 0
        %v5474 = vsel %vm4506, %v5469, 0
        %5476 = vmatprep.subr.bf16.mxu0 0
        %5477 = vmatpush1.bf16.msra.mxu0 %v5474
        %5478 = vmatprep.subr.bf16.mxu0 0
        %5479 = vmatpush1.bf16.msra.mxu0 0
        %5480 = vmatprep.subr.bf16.mxu0 0
        %5481 = vmatpush1.bf16.msra.mxu0 0
        %5482 = vmatprep.subr.bf16.mxu0 0
        %5483 = vmatpush1.bf16.msra.mxu0 0
        %5484 = vmatprep.subr.bf16.mxu0 0
        %5485 = vmatpush1.bf16.msra.mxu0 0
        %5486 = vmatprep.subr.bf16.mxu0 0
        %5487 = vmatpush1.bf16.msra.mxu0 0
        %5488 = vmatprep.subr.bf16.mxu0 0
        %5489 = vmatpush1.bf16.msra.mxu0 0
        %5490 = vmatprep.subr.bf16.mxu0 0
        %5491 = vmatpush1.bf16.msra.mxu0 0
        %5492 = vmatprep.subr.bf16.mxu0 0
        %5493 = vmatpush1.bf16.msra.mxu0 0
        %5494 = vmatprep.subr.bf16.mxu0 0
        %5495 = vmatpush1.bf16.msra.mxu0 0
        %5496 = vmatprep.subr.bf16.mxu0 0
        %5497 = vmatpush1.bf16.msra.mxu0 0
        %5498 = vmatprep.subr.bf16.mxu0 0
        %5499 = vmatpush1.bf16.msra.mxu0 0
        %5500 = vmatprep.subr.bf16.mxu0 0
        %5501 = vmatpush1.bf16.msra.mxu0 0
        %5502 = vmatprep.subr.bf16.mxu0 0
        %5503 = vmatpush1.bf16.msra.mxu0 0
        %5504 = vmatprep.subr.bf16.mxu0 0
        %5505 = vmatpush1.bf16.msra.mxu0 0
        %5506 = vmatprep.subr.bf16.mxu0 0
        %5507 = vmatpush1.bf16.msra.mxu0 0
        %5508 = vmatprep.mubr.bf16.mxu0 0
        %5509 = vmatmul.mubr.bf16.gmra.mrb[0].mxu0 %v5471
        %v5510 = vpop.f32.mrb[0].mxu0
        %v5511 = vadd.f32 0.0, %v5510
        %v5512 = vpop.f32.mrb[0].mxu0
        %v5513 = vpop.f32.mrb[0].mxu0
        %v5514 = vpop.f32.mrb[0].mxu0
        %5515 = vdwg.mxu0
        %v5516 = vrot.slane %v4078, 4
        %v5518 = vsel %vm4406, %v5324, 0
        %v5521 = vsel %vm4506, %v5516, 0
        %5523 = vmatprep.subr.bf16.mxu0 0
        %5524 = vmatpush1.bf16.msra.mxu0 %v5521
        %5525 = vmatprep.subr.bf16.mxu0 0
        %5526 = vmatpush1.bf16.msra.mxu0 0
        %5527 = vmatprep.subr.bf16.mxu0 0
        %5528 = vmatpush1.bf16.msra.mxu0 0
        %5529 = vmatprep.subr.bf16.mxu0 0
        %5530 = vmatpush1.bf16.msra.mxu0 0
        %5531 = vmatprep.subr.bf16.mxu0 0
        %5532 = vmatpush1.bf16.msra.mxu0 0
        %5533 = vmatprep.subr.bf16.mxu0 0
        %5534 = vmatpush1.bf16.msra.mxu0 0
        %5535 = vmatprep.subr.bf16.mxu0 0
        %5536 = vmatpush1.bf16.msra.mxu0 0
        %5537 = vmatprep.subr.bf16.mxu0 0
        %5538 = vmatpush1.bf16.msra.mxu0 0
        %5539 = vmatprep.subr.bf16.mxu0 0
        %5540 = vmatpush1.bf16.msra.mxu0 0
        %5541 = vmatprep.subr.bf16.mxu0 0
        %5542 = vmatpush1.bf16.msra.mxu0 0
        %5543 = vmatprep.subr.bf16.mxu0 0
        %5544 = vmatpush1.bf16.msra.mxu0 0
        %5545 = vmatprep.subr.bf16.mxu0 0
        %5546 = vmatpush1.bf16.msra.mxu0 0
        %5547 = vmatprep.subr.bf16.mxu0 0
        %5548 = vmatpush1.bf16.msra.mxu0 0
        %5549 = vmatprep.subr.bf16.mxu0 0
        %5550 = vmatpush1.bf16.msra.mxu0 0
        %5551 = vmatprep.subr.bf16.mxu0 0
        %5552 = vmatpush1.bf16.msra.mxu0 0
        %5553 = vmatprep.subr.bf16.mxu0 0
        %5554 = vmatpush1.bf16.msra.mxu0 0
        %5555 = vmatprep.mubr.bf16.mxu0 0
        %5556 = vmatmul.mubr.bf16.gmra.mrb[0].mxu0 %v5518
        %v5557 = vpop.f32.mrb[0].mxu0
        %v5558 = vadd.f32 0.0, %v5557
        %v5559 = vpop.f32.mrb[0].mxu0
        %v5560 = vpop.f32.mrb[0].mxu0
        %v5561 = vpop.f32.mrb[0].mxu0
        %5562 = vdwg.mxu0
        %v5563 = vrot.slane %v4080, 4
        %v5565 = vsel %vm4406, %v5325, 0
        %v5568 = vsel %vm4506, %v5563, 0
        %5570 = vmatprep.subr.bf16.mxu0 0
        %5571 = vmatpush1.bf16.msra.mxu0 %v5568
        %5572 = vmatprep.subr.bf16.mxu0 0
        %5573 = vmatpush1.bf16.msra.mxu0 0
        %5574 = vmatprep.subr.bf16.mxu0 0
        %5575 = vmatpush1.bf16.msra.mxu0 0
        %5576 = vmatprep.subr.bf16.mxu0 0
        %5577 = vmatpush1.bf16.msra.mxu0 0
        %5578 = vmatprep.subr.bf16.mxu0 0
        %5579 = vmatpush1.bf16.msra.mxu0 0
        %5580 = vmatprep.subr.bf16.mxu0 0
        %5581 = vmatpush1.bf16.msra.mxu0 0
        %5582 = vmatprep.subr.bf16.mxu0 0
        %5583 = vmatpush1.bf16.msra.mxu0 0
        %5584 = vmatprep.subr.bf16.mxu0 0
        %5585 = vmatpush1.bf16.msra.mxu0 0
        %5586 = vmatprep.subr.bf16.mxu0 0
        %5587 = vmatpush1.bf16.msra.mxu0 0
        %5588 = vmatprep.subr.bf16.mxu0 0
        %5589 = vmatpush1.bf16.msra.mxu0 0
        %5590 = vmatprep.subr.bf16.mxu0 0
        %5591 = vmatpush1.bf16.msra.mxu0 0
        %5592 = vmatprep.subr.bf16.mxu0 0
        %5593 = vmatpush1.bf16.msra.mxu0 0
        %5594 = vmatprep.subr.bf16.mxu0 0
        %5595 = vmatpush1.bf16.msra.mxu0 0
        %5596 = vmatprep.subr.bf16.mxu0 0
        %5597 = vmatpush1.bf16.msra.mxu0 0
        %5598 = vmatprep.subr.bf16.mxu0 0
        %5599 = vmatpush1.bf16.msra.mxu0 0
        %5600 = vmatprep.subr.bf16.mxu0 0
        %5601 = vmatpush1.bf16.msra.mxu0 0
        %5602 = vmatprep.mubr.bf16.mxu0 0
        %5603 = vmatmul.mubr.bf16.gmra.mrb[0].mxu0 %v5565
        %v5604 = vpop.f32.mrb[0].mxu0
        %v5605 = vadd.f32 0.0, %v5604
        %v5606 = vpop.f32.mrb[0].mxu0
        %v5607 = vpop.f32.mrb[0].mxu0
        %v5608 = vpop.f32.mrb[0].mxu0
        %5609 = vdwg.mxu0
        %v5610 = vrot.slane %v4082, 4
        %v5612 = vsel %vm4406, %v5326, 0
        %v5615 = vsel %vm4506, %v5610, 0
        %5617 = vmatprep.subr.bf16.mxu0 0
        %5618 = vmatpush1.bf16.msra.mxu0 %v5615
        %5619 = vmatprep.subr.bf16.mxu0 0
        %5620 = vmatpush1.bf16.msra.mxu0 0
        %5621 = vmatprep.subr.bf16.mxu0 0
        %5622 = vmatpush1.bf16.msra.mxu0 0
        %5623 = vmatprep.subr.bf16.mxu0 0
        %5624 = vmatpush1.bf16.msra.mxu0 0
        %5625 = vmatprep.subr.bf16.mxu0 0
        %5626 = vmatpush1.bf16.msra.mxu0 0
        %5627 = vmatprep.subr.bf16.mxu0 0
        %5628 = vmatpush1.bf16.msra.mxu0 0
        %5629 = vmatprep.subr.bf16.mxu0 0
        %5630 = vmatpush1.bf16.msra.mxu0 0
        %5631 = vmatprep.subr.bf16.mxu0 0
        %5632 = vmatpush1.bf16.msra.mxu0 0
        %5633 = vmatprep.subr.bf16.mxu0 0
        %5634 = vmatpush1.bf16.msra.mxu0 0
        %5635 = vmatprep.subr.bf16.mxu0 0
        %5636 = vmatpush1.bf16.msra.mxu0 0
        %5637 = vmatprep.subr.bf16.mxu0 0
        %5638 = vmatpush1.bf16.msra.mxu0 0
        %5639 = vmatprep.subr.bf16.mxu0 0
        %5640 = vmatpush1.bf16.msra.mxu0 0
        %5641 = vmatprep.subr.bf16.mxu0 0
        %5642 = vmatpush1.bf16.msra.mxu0 0
        %5643 = vmatprep.subr.bf16.mxu0 0
        %5644 = vmatpush1.bf16.msra.mxu0 0
        %5645 = vmatprep.subr.bf16.mxu0 0
        %5646 = vmatpush1.bf16.msra.mxu0 0
        %5647 = vmatprep.subr.bf16.mxu0 0
        %5648 = vmatpush1.bf16.msra.mxu0 0
        %5649 = vmatprep.mubr.bf16.mxu0 0
        %5650 = vmatmul.mubr.bf16.gmra.mrb[0].mxu0 %v5612
        %v5651 = vpop.f32.mrb[0].mxu0
        %v5652 = vadd.f32 0.0, %v5651
        %v5653 = vpop.f32.mrb[0].mxu0
        %v5654 = vpop.f32.mrb[0].mxu0
        %v5655 = vpop.f32.mrb[0].mxu0
        %5656 = vdwg.mxu0
        %v5657 = vrot.slane %v4084, 4
        %v5659 = vsel %vm4406, %v5327, 0
        %v5662 = vsel %vm4506, %v5657, 0
        %5664 = vmatprep.subr.bf16.mxu0 0
        %5665 = vmatpush1.bf16.msra.mxu0 %v5662
        %5666 = vmatprep.subr.bf16.mxu0 0
        %5667 = vmatpush1.bf16.msra.mxu0 0
        %5668 = vmatprep.subr.bf16.mxu0 0
        %5669 = vmatpush1.bf16.msra.mxu0 0
        %5670 = vmatprep.subr.bf16.mxu0 0
        %5671 = vmatpush1.bf16.msra.mxu0 0
        %5672 = vmatprep.subr.bf16.mxu0 0
        %5673 = vmatpush1.bf16.msra.mxu0 0
        %5674 = vmatprep.subr.bf16.mxu0 0
        %5675 = vmatpush1.bf16.msra.mxu0 0
        %5676 = vmatprep.subr.bf16.mxu0 0
        %5677 = vmatpush1.bf16.msra.mxu0 0
        %5678 = vmatprep.subr.bf16.mxu0 0
        %5679 = vmatpush1.bf16.msra.mxu0 0
        %5680 = vmatprep.subr.bf16.mxu0 0
        %5681 = vmatpush1.bf16.msra.mxu0 0
        %5682 = vmatprep.subr.bf16.mxu0 0
        %5683 = vmatpush1.bf16.msra.mxu0 0
        %5684 = vmatprep.subr.bf16.mxu0 0
        %5685 = vmatpush1.bf16.msra.mxu0 0
        %5686 = vmatprep.subr.bf16.mxu0 0
        %5687 = vmatpush1.bf16.msra.mxu0 0
        %5688 = vmatprep.subr.bf16.mxu0 0
        %5689 = vmatpush1.bf16.msra.mxu0 0
        %5690 = vmatprep.subr.bf16.mxu0 0
        %5691 = vmatpush1.bf16.msra.mxu0 0
        %5692 = vmatprep.subr.bf16.mxu0 0
        %5693 = vmatpush1.bf16.msra.mxu0 0
        %5694 = vmatprep.subr.bf16.mxu0 0
        %5695 = vmatpush1.bf16.msra.mxu0 0
        %5696 = vmatprep.mubr.bf16.mxu0 0
        %5697 = vmatmul.mubr.bf16.gmra.mrb[0].mxu0 %v5659
        %v5698 = vpop.f32.mrb[0].mxu0
        %v5699 = vadd.f32 0.0, %v5698
        %v5700 = vpop.f32.mrb[0].mxu0
        %v5701 = vpop.f32.mrb[0].mxu0
        %v5702 = vpop.f32.mrb[0].mxu0
        %5703 = vdwg.mxu0
        %v5704 = vpack.c.bf16 %v5370, %v5370
        %v5705 = vpack.c.bf16 %v5417, %v5417
        %v5706 = vpack.c.bf16 %v5464, %v5464
        %v5707 = vpack.c.bf16 %v5511, %v5511
        %v5708 = vpack.c.bf16 %v5558, %v5558
        %v5709 = vpack.c.bf16 %v5605, %v5605
        %v5710 = vpack.c.bf16 %v5652, %v5652
        %v5711 = vpack.c.bf16 %v5699, %v5699
        %5712 = vmatprep.subr.bf16.mxu0 0
        %5713 = vmatpush1.bf16.xpose.msra.mxu0 %v3927
        %5714 = vmatprep.subr.bf16.mxu0 0
        %5715 = vmatpush1.bf16.xpose.msra.mxu0 0
        %5716 = vmatprep.subr.bf16.mxu0 0
        %5717 = vmatpush1.bf16.xpose.msra.mxu0 0
        %5718 = vmatprep.subr.bf16.mxu0 0
        %5719 = vmatpush1.bf16.xpose.msra.mxu0 0
        %5720 = vmatprep.subr.bf16.mxu0 0
        %5721 = vmatpush1.bf16.xpose.msra.mxu0 0
        %5722 = vmatprep.subr.bf16.mxu0 0
        %5723 = vmatpush1.bf16.xpose.msra.mxu0 0
        %5724 = vmatprep.subr.bf16.mxu0 0
        %5725 = vmatpush1.bf16.xpose.msra.mxu0 0
        %5726 = vmatprep.subr.bf16.mxu0 0
        %5727 = vmatpush1.bf16.xpose.msra.mxu0 0
        %5728 = vmatprep.subr.bf16.mxu0 0
        %5729 = vmatpush1.bf16.xpose.msra.mxu0 0
        %5730 = vmatprep.subr.bf16.mxu0 0
        %5731 = vmatpush1.bf16.xpose.msra.mxu0 0
        %5732 = vmatprep.subr.bf16.mxu0 0
        %5733 = vmatpush1.bf16.xpose.msra.mxu0 0
        %5734 = vmatprep.subr.bf16.mxu0 0
        %5735 = vmatpush1.bf16.xpose.msra.mxu0 0
        %5736 = vmatprep.subr.bf16.mxu0 0
        %5737 = vmatpush1.bf16.xpose.msra.mxu0 0
        %5738 = vmatprep.subr.bf16.mxu0 0
        %5739 = vmatpush1.bf16.xpose.msra.mxu0 0
        %5740 = vmatprep.subr.bf16.mxu0 0
        %5741 = vmatpush1.bf16.xpose.msra.mxu0 0
        %5742 = vmatprep.subr.bf16.mxu0 0
        %5743 = vmatpush1.bf16.xpose.msra.mxu0 0
        %5744 = vmatprep.mubr.bf16.mxu0 0
        %5745 = vmatmul.mubr.bf16.gmra.mrb[0].mxu0 %v1612
        %v5746 = vpop.f32.mrb[0].mxu0
        %v5747 = vadd.f32 0.0, %v5746
        %v5748 = vpop.f32.mrb[0].mxu0
        %v5749 = vpop.f32.mrb[0].mxu0
        %v5750 = vpop.f32.mrb[0].mxu0
        %5751 = vdwg.mxu0
        %5752 = vmatprep.subr.bf16.mxu0 0
        %5753 = vmatpush1.bf16.xpose.msra.mxu0 %v3929
        %5754 = vmatprep.subr.bf16.mxu0 0
        %5755 = vmatpush1.bf16.xpose.msra.mxu0 0
        %5756 = vmatprep.subr.bf16.mxu0 0
        %5757 = vmatpush1.bf16.xpose.msra.mxu0 0
        %5758 = vmatprep.subr.bf16.mxu0 0
        %5759 = vmatpush1.bf16.xpose.msra.mxu0 0
        %5760 = vmatprep.subr.bf16.mxu0 0
        %5761 = vmatpush1.bf16.xpose.msra.mxu0 0
        %5762 = vmatprep.subr.bf16.mxu0 0
        %5763 = vmatpush1.bf16.xpose.msra.mxu0 0
        %5764 = vmatprep.subr.bf16.mxu0 0
        %5765 = vmatpush1.bf16.xpose.msra.mxu0 0
        %5766 = vmatprep.subr.bf16.mxu0 0
        %5767 = vmatpush1.bf16.xpose.msra.mxu0 0
        %5768 = vmatprep.subr.bf16.mxu0 0
        %5769 = vmatpush1.bf16.xpose.msra.mxu0 0
        %5770 = vmatprep.subr.bf16.mxu0 0
        %5771 = vmatpush1.bf16.xpose.msra.mxu0 0
        %5772 = vmatprep.subr.bf16.mxu0 0
        %5773 = vmatpush1.bf16.xpose.msra.mxu0 0
        %5774 = vmatprep.subr.bf16.mxu0 0
        %5775 = vmatpush1.bf16.xpose.msra.mxu0 0
        %5776 = vmatprep.subr.bf16.mxu0 0
        %5777 = vmatpush1.bf16.xpose.msra.mxu0 0
        %5778 = vmatprep.subr.bf16.mxu0 0
        %5779 = vmatpush1.bf16.xpose.msra.mxu0 0
        %5780 = vmatprep.subr.bf16.mxu0 0
        %5781 = vmatpush1.bf16.xpose.msra.mxu0 0
        %5782 = vmatprep.subr.bf16.mxu0 0
        %5783 = vmatpush1.bf16.xpose.msra.mxu0 0
        %5784 = vmatprep.mubr.bf16.mxu0 0
        %5785 = vmatmul.mubr.bf16.gmra.mrb[0].mxu0 %v1614
        %v5786 = vpop.f32.mrb[0].mxu0
        %v5787 = vadd.f32 0.0, %v5786
        %v5788 = vpop.f32.mrb[0].mxu0
        %v5789 = vpop.f32.mrb[0].mxu0
        %v5790 = vpop.f32.mrb[0].mxu0
        %5791 = vdwg.mxu0
        %5792 = vmatprep.subr.bf16.mxu0 0
        %5793 = vmatpush1.bf16.xpose.msra.mxu0 %v3931
        %5794 = vmatprep.subr.bf16.mxu0 0
        %5795 = vmatpush1.bf16.xpose.msra.mxu0 0
        %5796 = vmatprep.subr.bf16.mxu0 0
        %5797 = vmatpush1.bf16.xpose.msra.mxu0 0
        %5798 = vmatprep.subr.bf16.mxu0 0
        %5799 = vmatpush1.bf16.xpose.msra.mxu0 0
        %5800 = vmatprep.subr.bf16.mxu0 0
        %5801 = vmatpush1.bf16.xpose.msra.mxu0 0
        %5802 = vmatprep.subr.bf16.mxu0 0
        %5803 = vmatpush1.bf16.xpose.msra.mxu0 0
        %5804 = vmatprep.subr.bf16.mxu0 0
        %5805 = vmatpush1.bf16.xpose.msra.mxu0 0
        %5806 = vmatprep.subr.bf16.mxu0 0
        %5807 = vmatpush1.bf16.xpose.msra.mxu0 0
        %5808 = vmatprep.subr.bf16.mxu0 0
        %5809 = vmatpush1.bf16.xpose.msra.mxu0 0
        %5810 = vmatprep.subr.bf16.mxu0 0
        %5811 = vmatpush1.bf16.xpose.msra.mxu0 0
        %5812 = vmatprep.subr.bf16.mxu0 0
        %5813 = vmatpush1.bf16.xpose.msra.mxu0 0
        %5814 = vmatprep.subr.bf16.mxu0 0
        %5815 = vmatpush1.bf16.xpose.msra.mxu0 0
        %5816 = vmatprep.subr.bf16.mxu0 0
        %5817 = vmatpush1.bf16.xpose.msra.mxu0 0
        %5818 = vmatprep.subr.bf16.mxu0 0
        %5819 = vmatpush1.bf16.xpose.msra.mxu0 0
        %5820 = vmatprep.subr.bf16.mxu0 0
        %5821 = vmatpush1.bf16.xpose.msra.mxu0 0
        %5822 = vmatprep.subr.bf16.mxu0 0
        %5823 = vmatpush1.bf16.xpose.msra.mxu0 0
        %5824 = vmatprep.mubr.bf16.mxu0 0
        %5825 = vmatmul.mubr.bf16.gmra.mrb[0].mxu0 %v1616
        %v5826 = vpop.f32.mrb[0].mxu0
        %v5827 = vadd.f32 0.0, %v5826
        %v5828 = vpop.f32.mrb[0].mxu0
        %v5829 = vpop.f32.mrb[0].mxu0
        %v5830 = vpop.f32.mrb[0].mxu0
        %5831 = vdwg.mxu0
        %5832 = vmatprep.subr.bf16.mxu0 0
        %5833 = vmatpush1.bf16.xpose.msra.mxu0 %v3933
        %5834 = vmatprep.subr.bf16.mxu0 0
        %5835 = vmatpush1.bf16.xpose.msra.mxu0 0
        %5836 = vmatprep.subr.bf16.mxu0 0
        %5837 = vmatpush1.bf16.xpose.msra.mxu0 0
        %5838 = vmatprep.subr.bf16.mxu0 0
        %5839 = vmatpush1.bf16.xpose.msra.mxu0 0
        %5840 = vmatprep.subr.bf16.mxu0 0
        %5841 = vmatpush1.bf16.xpose.msra.mxu0 0
        %5842 = vmatprep.subr.bf16.mxu0 0
        %5843 = vmatpush1.bf16.xpose.msra.mxu0 0
        %5844 = vmatprep.subr.bf16.mxu0 0
        %5845 = vmatpush1.bf16.xpose.msra.mxu0 0
        %5846 = vmatprep.subr.bf16.mxu0 0
        %5847 = vmatpush1.bf16.xpose.msra.mxu0 0
        %5848 = vmatprep.subr.bf16.mxu0 0
        %5849 = vmatpush1.bf16.xpose.msra.mxu0 0
        %5850 = vmatprep.subr.bf16.mxu0 0
        %5851 = vmatpush1.bf16.xpose.msra.mxu0 0
        %5852 = vmatprep.subr.bf16.mxu0 0
        %5853 = vmatpush1.bf16.xpose.msra.mxu0 0
        %5854 = vmatprep.subr.bf16.mxu0 0
        %5855 = vmatpush1.bf16.xpose.msra.mxu0 0
        %5856 = vmatprep.subr.bf16.mxu0 0
        %5857 = vmatpush1.bf16.xpose.msra.mxu0 0
        %5858 = vmatprep.subr.bf16.mxu0 0
        %5859 = vmatpush1.bf16.xpose.msra.mxu0 0
        %5860 = vmatprep.subr.bf16.mxu0 0
        %5861 = vmatpush1.bf16.xpose.msra.mxu0 0
        %5862 = vmatprep.subr.bf16.mxu0 0
        %5863 = vmatpush1.bf16.xpose.msra.mxu0 0
        %5864 = vmatprep.mubr.bf16.mxu0 0
        %5865 = vmatmul.mubr.bf16.gmra.mrb[0].mxu0 %v1618
        %v5866 = vpop.f32.mrb[0].mxu0
        %v5867 = vadd.f32 0.0, %v5866
        %v5868 = vpop.f32.mrb[0].mxu0
        %v5869 = vpop.f32.mrb[0].mxu0
        %v5870 = vpop.f32.mrb[0].mxu0
        %5871 = vdwg.mxu0
        %5872 = vmatprep.subr.bf16.mxu0 0
        %5873 = vmatpush1.bf16.xpose.msra.mxu0 %v3935
        %5874 = vmatprep.subr.bf16.mxu0 0
        %5875 = vmatpush1.bf16.xpose.msra.mxu0 0
        %5876 = vmatprep.subr.bf16.mxu0 0
        %5877 = vmatpush1.bf16.xpose.msra.mxu0 0
        %5878 = vmatprep.subr.bf16.mxu0 0
        %5879 = vmatpush1.bf16.xpose.msra.mxu0 0
        %5880 = vmatprep.subr.bf16.mxu0 0
        %5881 = vmatpush1.bf16.xpose.msra.mxu0 0
        %5882 = vmatprep.subr.bf16.mxu0 0
        %5883 = vmatpush1.bf16.xpose.msra.mxu0 0
        %5884 = vmatprep.subr.bf16.mxu0 0
        %5885 = vmatpush1.bf16.xpose.msra.mxu0 0
        %5886 = vmatprep.subr.bf16.mxu0 0
        %5887 = vmatpush1.bf16.xpose.msra.mxu0 0
        %5888 = vmatprep.subr.bf16.mxu0 0
        %5889 = vmatpush1.bf16.xpose.msra.mxu0 0
        %5890 = vmatprep.subr.bf16.mxu0 0
        %5891 = vmatpush1.bf16.xpose.msra.mxu0 0
        %5892 = vmatprep.subr.bf16.mxu0 0
        %5893 = vmatpush1.bf16.xpose.msra.mxu0 0
        %5894 = vmatprep.subr.bf16.mxu0 0
        %5895 = vmatpush1.bf16.xpose.msra.mxu0 0
        %5896 = vmatprep.subr.bf16.mxu0 0
        %5897 = vmatpush1.bf16.xpose.msra.mxu0 0
        %5898 = vmatprep.subr.bf16.mxu0 0
        %5899 = vmatpush1.bf16.xpose.msra.mxu0 0
        %5900 = vmatprep.subr.bf16.mxu0 0
        %5901 = vmatpush1.bf16.xpose.msra.mxu0 0
        %5902 = vmatprep.subr.bf16.mxu0 0
        %5903 = vmatpush1.bf16.xpose.msra.mxu0 0
        %5904 = vmatprep.mubr.bf16.mxu0 0
        %5905 = vmatmul.mubr.bf16.gmra.mrb[0].mxu0 %v1620
        %v5906 = vpop.f32.mrb[0].mxu0
        %v5907 = vadd.f32 0.0, %v5906
        %v5908 = vpop.f32.mrb[0].mxu0
        %v5909 = vpop.f32.mrb[0].mxu0
        %v5910 = vpop.f32.mrb[0].mxu0
        %5911 = vdwg.mxu0
        %5912 = vmatprep.subr.bf16.mxu0 0
        %5913 = vmatpush1.bf16.xpose.msra.mxu0 %v3937
        %5914 = vmatprep.subr.bf16.mxu0 0
        %5915 = vmatpush1.bf16.xpose.msra.mxu0 0
        %5916 = vmatprep.subr.bf16.mxu0 0
        %5917 = vmatpush1.bf16.xpose.msra.mxu0 0
        %5918 = vmatprep.subr.bf16.mxu0 0
        %5919 = vmatpush1.bf16.xpose.msra.mxu0 0
        %5920 = vmatprep.subr.bf16.mxu0 0
        %5921 = vmatpush1.bf16.xpose.msra.mxu0 0
        %5922 = vmatprep.subr.bf16.mxu0 0
        %5923 = vmatpush1.bf16.xpose.msra.mxu0 0
        %5924 = vmatprep.subr.bf16.mxu0 0
        %5925 = vmatpush1.bf16.xpose.msra.mxu0 0
        %5926 = vmatprep.subr.bf16.mxu0 0
        %5927 = vmatpush1.bf16.xpose.msra.mxu0 0
        %5928 = vmatprep.subr.bf16.mxu0 0
        %5929 = vmatpush1.bf16.xpose.msra.mxu0 0
        %5930 = vmatprep.subr.bf16.mxu0 0
        %5931 = vmatpush1.bf16.xpose.msra.mxu0 0
        %5932 = vmatprep.subr.bf16.mxu0 0
        %5933 = vmatpush1.bf16.xpose.msra.mxu0 0
        %5934 = vmatprep.subr.bf16.mxu0 0
        %5935 = vmatpush1.bf16.xpose.msra.mxu0 0
        %5936 = vmatprep.subr.bf16.mxu0 0
        %5937 = vmatpush1.bf16.xpose.msra.mxu0 0
        %5938 = vmatprep.subr.bf16.mxu0 0
        %5939 = vmatpush1.bf16.xpose.msra.mxu0 0
        %5940 = vmatprep.subr.bf16.mxu0 0
        %5941 = vmatpush1.bf16.xpose.msra.mxu0 0
        %5942 = vmatprep.subr.bf16.mxu0 0
        %5943 = vmatpush1.bf16.xpose.msra.mxu0 0
        %5944 = vmatprep.mubr.bf16.mxu0 0
        %5945 = vmatmul.mubr.bf16.gmra.mrb[0].mxu0 %v1622
        %v5946 = vpop.f32.mrb[0].mxu0
        %v5947 = vadd.f32 0.0, %v5946
        %v5948 = vpop.f32.mrb[0].mxu0
        %v5949 = vpop.f32.mrb[0].mxu0
        %v5950 = vpop.f32.mrb[0].mxu0
        %5951 = vdwg.mxu0
        %5952 = vmatprep.subr.bf16.mxu0 0
        %5953 = vmatpush1.bf16.xpose.msra.mxu0 %v3939
        %5954 = vmatprep.subr.bf16.mxu0 0
        %5955 = vmatpush1.bf16.xpose.msra.mxu0 0
        %5956 = vmatprep.subr.bf16.mxu0 0
        %5957 = vmatpush1.bf16.xpose.msra.mxu0 0
        %5958 = vmatprep.subr.bf16.mxu0 0
        %5959 = vmatpush1.bf16.xpose.msra.mxu0 0
        %5960 = vmatprep.subr.bf16.mxu0 0
        %5961 = vmatpush1.bf16.xpose.msra.mxu0 0
        %5962 = vmatprep.subr.bf16.mxu0 0
        %5963 = vmatpush1.bf16.xpose.msra.mxu0 0
        %5964 = vmatprep.subr.bf16.mxu0 0
        %5965 = vmatpush1.bf16.xpose.msra.mxu0 0
        %5966 = vmatprep.subr.bf16.mxu0 0
        %5967 = vmatpush1.bf16.xpose.msra.mxu0 0
        %5968 = vmatprep.subr.bf16.mxu0 0
        %5969 = vmatpush1.bf16.xpose.msra.mxu0 0
        %5970 = vmatprep.subr.bf16.mxu0 0
        %5971 = vmatpush1.bf16.xpose.msra.mxu0 0
        %5972 = vmatprep.subr.bf16.mxu0 0
        %5973 = vmatpush1.bf16.xpose.msra.mxu0 0
        %5974 = vmatprep.subr.bf16.mxu0 0
        %5975 = vmatpush1.bf16.xpose.msra.mxu0 0
        %5976 = vmatprep.subr.bf16.mxu0 0
        %5977 = vmatpush1.bf16.xpose.msra.mxu0 0
        %5978 = vmatprep.subr.bf16.mxu0 0
        %5979 = vmatpush1.bf16.xpose.msra.mxu0 0
        %5980 = vmatprep.subr.bf16.mxu0 0
        %5981 = vmatpush1.bf16.xpose.msra.mxu0 0
        %5982 = vmatprep.subr.bf16.mxu0 0
        %5983 = vmatpush1.bf16.xpose.msra.mxu0 0
        %5984 = vmatprep.mubr.bf16.mxu0 0
        %5985 = vmatmul.mubr.bf16.gmra.mrb[0].mxu0 %v1624
        %v5986 = vpop.f32.mrb[0].mxu0
        %v5987 = vadd.f32 0.0, %v5986
        %v5988 = vpop.f32.mrb[0].mxu0
        %v5989 = vpop.f32.mrb[0].mxu0
        %v5990 = vpop.f32.mrb[0].mxu0
        %5991 = vdwg.mxu0
        %5992 = vmatprep.subr.bf16.mxu0 0
        %5993 = vmatpush1.bf16.xpose.msra.mxu0 %v3941
        %5994 = vmatprep.subr.bf16.mxu0 0
        %5995 = vmatpush1.bf16.xpose.msra.mxu0 0
        %5996 = vmatprep.subr.bf16.mxu0 0
        %5997 = vmatpush1.bf16.xpose.msra.mxu0 0
        %5998 = vmatprep.subr.bf16.mxu0 0
        %5999 = vmatpush1.bf16.xpose.msra.mxu0 0
        %6000 = vmatprep.subr.bf16.mxu0 0
        %6001 = vmatpush1.bf16.xpose.msra.mxu0 0
        %6002 = vmatprep.subr.bf16.mxu0 0
        %6003 = vmatpush1.bf16.xpose.msra.mxu0 0
        %6004 = vmatprep.subr.bf16.mxu0 0
        %6005 = vmatpush1.bf16.xpose.msra.mxu0 0
        %6006 = vmatprep.subr.bf16.mxu0 0
        %6007 = vmatpush1.bf16.xpose.msra.mxu0 0
        %6008 = vmatprep.subr.bf16.mxu0 0
        %6009 = vmatpush1.bf16.xpose.msra.mxu0 0
        %6010 = vmatprep.subr.bf16.mxu0 0
        %6011 = vmatpush1.bf16.xpose.msra.mxu0 0
        %6012 = vmatprep.subr.bf16.mxu0 0
        %6013 = vmatpush1.bf16.xpose.msra.mxu0 0
        %6014 = vmatprep.subr.bf16.mxu0 0
        %6015 = vmatpush1.bf16.xpose.msra.mxu0 0
        %6016 = vmatprep.subr.bf16.mxu0 0
        %6017 = vmatpush1.bf16.xpose.msra.mxu0 0
        %6018 = vmatprep.subr.bf16.mxu0 0
        %6019 = vmatpush1.bf16.xpose.msra.mxu0 0
        %6020 = vmatprep.subr.bf16.mxu0 0
        %6021 = vmatpush1.bf16.xpose.msra.mxu0 0
        %6022 = vmatprep.subr.bf16.mxu0 0
        %6023 = vmatpush1.bf16.xpose.msra.mxu0 0
        %6024 = vmatprep.mubr.bf16.mxu0 0
        %6025 = vmatmul.mubr.bf16.gmra.mrb[0].mxu0 %v1626
        %v6026 = vpop.f32.mrb[0].mxu0
        %v6027 = vadd.f32 0.0, %v6026
        %v6028 = vpop.f32.mrb[0].mxu0
        %v6029 = vpop.f32.mrb[0].mxu0
        %v6030 = vpop.f32.mrb[0].mxu0
        %6031 = vdwg.mxu0
        %v6032 = vsel %vm4406, %v5747, -inf
        %6033 = vmax.xlane.f32.xlu0 %v6032
        %v6034 = vpop.xlane.xlu0 %6033
        %v6035 = vsel %vm4406, %v5787, -inf
        %6036 = vmax.xlane.f32.xlu0 %v6035
        %v6037 = vpop.xlane.xlu0 %6036
        %v6038 = vsel %vm4406, %v5827, -inf
        %6039 = vmax.xlane.f32.xlu0 %v6038
        %v6040 = vpop.xlane.xlu0 %6039
        %v6041 = vsel %vm4406, %v5867, -inf
        %6042 = vmax.xlane.f32.xlu0 %v6041
        %v6043 = vpop.xlane.xlu0 %6042
        %v6044 = vsel %vm4406, %v5907, -inf
        %6045 = vmax.xlane.f32.xlu0 %v6044
        %v6046 = vpop.xlane.xlu0 %6045
        %v6047 = vsel %vm4406, %v5947, -inf
        %6048 = vmax.xlane.f32.xlu0 %v6047
        %v6049 = vpop.xlane.xlu0 %6048
        %v6050 = vsel %vm4406, %v5987, -inf
        %6051 = vmax.xlane.f32.xlu0 %v6050
        %v6052 = vpop.xlane.xlu0 %6051
        %v6053 = vsel %vm4406, %v6027, -inf
        %6054 = vmax.xlane.f32.xlu0 %v6053
        %v6055 = vpop.xlane.xlu0 %6054
        %v6056 = vsub.f32 %v5747, %v6034
        %v6057 = vsub.f32 %v5787, %v6037
        %v6058 = vsub.f32 %v5827, %v6040
        %v6059 = vsub.f32 %v5867, %v6043
        %v6060 = vsub.f32 %v5907, %v6046
        %v6061 = vsub.f32 %v5947, %v6049
        %v6062 = vsub.f32 %v5987, %v6052
        %v6063 = vsub.f32 %v6027, %v6055
        %v6064 = vmul.f32 %v6056, 1.442695
        %v6065 = vpow.pop %v6064
        %v6066 = vmul.f32 %v6057, 1.442695
        %v6067 = vpow.pop %v6066
        %v6068 = vmul.f32 %v6058, 1.442695
        %v6069 = vpow.pop %v6068
        %v6070 = vmul.f32 %v6059, 1.442695
        %v6071 = vpow.pop %v6070
        %v6072 = vmul.f32 %v6060, 1.442695
        %v6073 = vpow.pop %v6072
        %v6074 = vmul.f32 %v6061, 1.442695
        %v6075 = vpow.pop %v6074
        %v6076 = vmul.f32 %v6062, 1.442695
        %v6077 = vpow.pop %v6076
        %v6078 = vmul.f32 %v6063, 1.442695
        %v6079 = vpow.pop %v6078
        %v6080 = vsel %vm4406, %v6065, 0.0
        %6081 = vadd.xlane.f32.xlu0 %v6080
        %v6082 = vpop.xlane.xlu0 %6081
        %v6083 = vsel %vm4406, %v6067, 0.0
        %6084 = vadd.xlane.f32.xlu0 %v6083
        %v6085 = vpop.xlane.xlu0 %6084
        %v6086 = vsel %vm4406, %v6069, 0.0
        %6087 = vadd.xlane.f32.xlu0 %v6086
        %v6088 = vpop.xlane.xlu0 %6087
        %v6089 = vsel %vm4406, %v6071, 0.0
        %6090 = vadd.xlane.f32.xlu0 %v6089
        %v6091 = vpop.xlane.xlu0 %6090
        %v6092 = vsel %vm4406, %v6073, 0.0
        %6093 = vadd.xlane.f32.xlu0 %v6092
        %v6094 = vpop.xlane.xlu0 %6093
        %v6095 = vsel %vm4406, %v6075, 0.0
        %6096 = vadd.xlane.f32.xlu0 %v6095
        %v6097 = vpop.xlane.xlu0 %6096
        %v6098 = vsel %vm4406, %v6077, 0.0
        %6099 = vadd.xlane.f32.xlu0 %v6098
        %v6100 = vpop.xlane.xlu0 %6099
        %v6101 = vsel %vm4406, %v6079, 0.0
        %6102 = vadd.xlane.f32.xlu0 %v6101
        %v6103 = vpop.xlane.xlu0 %6102
        %v6104 = vrcp.pop %v6082
        %v6105 = vrcp.pop %v6085
        %v6106 = vrcp.pop %v6088
        %v6107 = vrcp.pop %v6091
        %v6108 = vrcp.pop %v6094
        %v6109 = vrcp.pop %v6097
        %v6110 = vrcp.pop %v6100
        %v6111 = vrcp.pop %v6103
        %v6112 = vmul.f32 %v6065, %v6104
        %v6113 = vmul.f32 %v6067, %v6105
        %v6114 = vmul.f32 %v6069, %v6106
        %v6115 = vmul.f32 %v6071, %v6107
        %v6116 = vmul.f32 %v6073, %v6108
        %v6117 = vmul.f32 %v6075, %v6109
        %v6118 = vmul.f32 %v6077, %v6110
        %v6119 = vmul.f32 %v6079, %v6111
        %v6120 = vpack.c.bf16 %v6112, %v6112
        %v6121 = vpack.c.bf16 %v6113, %v6113
        %v6122 = vpack.c.bf16 %v6114, %v6114
        %v6123 = vpack.c.bf16 %v6115, %v6115
        %v6124 = vpack.c.bf16 %v6116, %v6116
        %v6125 = vpack.c.bf16 %v6117, %v6117
        %v6126 = vpack.c.bf16 %v6118, %v6118
        %v6127 = vpack.c.bf16 %v6119, %v6119
        %v6129 = vsel %vm4406, %v6120, 0
        %v6132 = vsel %vm4506, %v4071, 0
        %6134 = vmatprep.subr.bf16.mxu0 0
        %6135 = vmatpush1.bf16.msra.mxu0 %v6132
        %6136 = vmatprep.subr.bf16.mxu0 0
        %6137 = vmatpush1.bf16.msra.mxu0 0
        %6138 = vmatprep.subr.bf16.mxu0 0
        %6139 = vmatpush1.bf16.msra.mxu0 0
        %6140 = vmatprep.subr.bf16.mxu0 0
        %6141 = vmatpush1.bf16.msra.mxu0 0
        %6142 = vmatprep.subr.bf16.mxu0 0
        %6143 = vmatpush1.bf16.msra.mxu0 0
        %6144 = vmatprep.subr.bf16.mxu0 0
        %6145 = vmatpush1.bf16.msra.mxu0 0
        %6146 = vmatprep.subr.bf16.mxu0 0
        %6147 = vmatpush1.bf16.msra.mxu0 0
        %6148 = vmatprep.subr.bf16.mxu0 0
        %6149 = vmatpush1.bf16.msra.mxu0 0
        %6150 = vmatprep.subr.bf16.mxu0 0
        %6151 = vmatpush1.bf16.msra.mxu0 0
        %6152 = vmatprep.subr.bf16.mxu0 0
        %6153 = vmatpush1.bf16.msra.mxu0 0
        %6154 = vmatprep.subr.bf16.mxu0 0
        %6155 = vmatpush1.bf16.msra.mxu0 0
        %6156 = vmatprep.subr.bf16.mxu0 0
        %6157 = vmatpush1.bf16.msra.mxu0 0
        %6158 = vmatprep.subr.bf16.mxu0 0
        %6159 = vmatpush1.bf16.msra.mxu0 0
        %6160 = vmatprep.subr.bf16.mxu0 0
        %6161 = vmatpush1.bf16.msra.mxu0 0
        %6162 = vmatprep.subr.bf16.mxu0 0
        %6163 = vmatpush1.bf16.msra.mxu0 0
        %6164 = vmatprep.subr.bf16.mxu0 0
        %6165 = vmatpush1.bf16.msra.mxu0 0
        %6166 = vmatprep.mubr.bf16.mxu0 0
        %6167 = vmatmul.mubr.bf16.gmra.mrb[0].mxu0 %v6129
        %v6168 = vpop.f32.mrb[0].mxu0
        %v6169 = vadd.f32 0.0, %v6168
        %v6170 = vpop.f32.mrb[0].mxu0
        %v6171 = vpop.f32.mrb[0].mxu0
        %v6172 = vpop.f32.mrb[0].mxu0
        %6173 = vdwg.mxu0
        %v6175 = vsel %vm4406, %v6121, 0
        %v6178 = vsel %vm4506, %v4073, 0
        %6180 = vmatprep.subr.bf16.mxu0 0
        %6181 = vmatpush1.bf16.msra.mxu0 %v6178
        %6182 = vmatprep.subr.bf16.mxu0 0
        %6183 = vmatpush1.bf16.msra.mxu0 0
        %6184 = vmatprep.subr.bf16.mxu0 0
        %6185 = vmatpush1.bf16.msra.mxu0 0
        %6186 = vmatprep.subr.bf16.mxu0 0
        %6187 = vmatpush1.bf16.msra.mxu0 0
        %6188 = vmatprep.subr.bf16.mxu0 0
        %6189 = vmatpush1.bf16.msra.mxu0 0
        %6190 = vmatprep.subr.bf16.mxu0 0
        %6191 = vmatpush1.bf16.msra.mxu0 0
        %6192 = vmatprep.subr.bf16.mxu0 0
        %6193 = vmatpush1.bf16.msra.mxu0 0
        %6194 = vmatprep.subr.bf16.mxu0 0
        %6195 = vmatpush1.bf16.msra.mxu0 0
        %6196 = vmatprep.subr.bf16.mxu0 0
        %6197 = vmatpush1.bf16.msra.mxu0 0
        %6198 = vmatprep.subr.bf16.mxu0 0
        %6199 = vmatpush1.bf16.msra.mxu0 0
        %6200 = vmatprep.subr.bf16.mxu0 0
        %6201 = vmatpush1.bf16.msra.mxu0 0
        %6202 = vmatprep.subr.bf16.mxu0 0
        %6203 = vmatpush1.bf16.msra.mxu0 0
        %6204 = vmatprep.subr.bf16.mxu0 0
        %6205 = vmatpush1.bf16.msra.mxu0 0
        %6206 = vmatprep.subr.bf16.mxu0 0
        %6207 = vmatpush1.bf16.msra.mxu0 0
        %6208 = vmatprep.subr.bf16.mxu0 0
        %6209 = vmatpush1.bf16.msra.mxu0 0
        %6210 = vmatprep.subr.bf16.mxu0 0
        %6211 = vmatpush1.bf16.msra.mxu0 0
        %6212 = vmatprep.mubr.bf16.mxu0 0
        %6213 = vmatmul.mubr.bf16.gmra.mrb[0].mxu0 %v6175
        %v6214 = vpop.f32.mrb[0].mxu0
        %v6215 = vadd.f32 0.0, %v6214
        %v6216 = vpop.f32.mrb[0].mxu0
        %v6217 = vpop.f32.mrb[0].mxu0
        %v6218 = vpop.f32.mrb[0].mxu0
        %6219 = vdwg.mxu0
        %v6221 = vsel %vm4406, %v6122, 0
        %v6224 = vsel %vm4506, %v4075, 0
        %6226 = vmatprep.subr.bf16.mxu0 0
        %6227 = vmatpush1.bf16.msra.mxu0 %v6224
        %6228 = vmatprep.subr.bf16.mxu0 0
        %6229 = vmatpush1.bf16.msra.mxu0 0
        %6230 = vmatprep.subr.bf16.mxu0 0
        %6231 = vmatpush1.bf16.msra.mxu0 0
        %6232 = vmatprep.subr.bf16.mxu0 0
        %6233 = vmatpush1.bf16.msra.mxu0 0
        %6234 = vmatprep.subr.bf16.mxu0 0
        %6235 = vmatpush1.bf16.msra.mxu0 0
        %6236 = vmatprep.subr.bf16.mxu0 0
        %6237 = vmatpush1.bf16.msra.mxu0 0
        %6238 = vmatprep.subr.bf16.mxu0 0
        %6239 = vmatpush1.bf16.msra.mxu0 0
        %6240 = vmatprep.subr.bf16.mxu0 0
        %6241 = vmatpush1.bf16.msra.mxu0 0
        %6242 = vmatprep.subr.bf16.mxu0 0
        %6243 = vmatpush1.bf16.msra.mxu0 0
        %6244 = vmatprep.subr.bf16.mxu0 0
        %6245 = vmatpush1.bf16.msra.mxu0 0
        %6246 = vmatprep.subr.bf16.mxu0 0
        %6247 = vmatpush1.bf16.msra.mxu0 0
        %6248 = vmatprep.subr.bf16.mxu0 0
        %6249 = vmatpush1.bf16.msra.mxu0 0
        %6250 = vmatprep.subr.bf16.mxu0 0
        %6251 = vmatpush1.bf16.msra.mxu0 0
        %6252 = vmatprep.subr.bf16.mxu0 0
        %6253 = vmatpush1.bf16.msra.mxu0 0
        %6254 = vmatprep.subr.bf16.mxu0 0
        %6255 = vmatpush1.bf16.msra.mxu0 0
        %6256 = vmatprep.subr.bf16.mxu0 0
        %6257 = vmatpush1.bf16.msra.mxu0 0
        %6258 = vmatprep.mubr.bf16.mxu0 0
        %6259 = vmatmul.mubr.bf16.gmra.mrb[0].mxu0 %v6221
        %v6260 = vpop.f32.mrb[0].mxu0
        %v6261 = vadd.f32 0.0, %v6260
        %v6262 = vpop.f32.mrb[0].mxu0
        %v6263 = vpop.f32.mrb[0].mxu0
        %v6264 = vpop.f32.mrb[0].mxu0
        %6265 = vdwg.mxu0
        %v6267 = vsel %vm4406, %v6123, 0
        %v6270 = vsel %vm4506, %v4077, 0
        %6272 = vmatprep.subr.bf16.mxu0 0
        %6273 = vmatpush1.bf16.msra.mxu0 %v6270
        %6274 = vmatprep.subr.bf16.mxu0 0
        %6275 = vmatpush1.bf16.msra.mxu0 0
        %6276 = vmatprep.subr.bf16.mxu0 0
        %6277 = vmatpush1.bf16.msra.mxu0 0
        %6278 = vmatprep.subr.bf16.mxu0 0
        %6279 = vmatpush1.bf16.msra.mxu0 0
        %6280 = vmatprep.subr.bf16.mxu0 0
        %6281 = vmatpush1.bf16.msra.mxu0 0
        %6282 = vmatprep.subr.bf16.mxu0 0
        %6283 = vmatpush1.bf16.msra.mxu0 0
        %6284 = vmatprep.subr.bf16.mxu0 0
        %6285 = vmatpush1.bf16.msra.mxu0 0
        %6286 = vmatprep.subr.bf16.mxu0 0
        %6287 = vmatpush1.bf16.msra.mxu0 0
        %6288 = vmatprep.subr.bf16.mxu0 0
        %6289 = vmatpush1.bf16.msra.mxu0 0
        %6290 = vmatprep.subr.bf16.mxu0 0
        %6291 = vmatpush1.bf16.msra.mxu0 0
        %6292 = vmatprep.subr.bf16.mxu0 0
        %6293 = vmatpush1.bf16.msra.mxu0 0
        %6294 = vmatprep.subr.bf16.mxu0 0
        %6295 = vmatpush1.bf16.msra.mxu0 0
        %6296 = vmatprep.subr.bf16.mxu0 0
        %6297 = vmatpush1.bf16.msra.mxu0 0
        %6298 = vmatprep.subr.bf16.mxu0 0
        %6299 = vmatpush1.bf16.msra.mxu0 0
        %6300 = vmatprep.subr.bf16.mxu0 0
        %6301 = vmatpush1.bf16.msra.mxu0 0
        %6302 = vmatprep.subr.bf16.mxu0 0
        %6303 = vmatpush1.bf16.msra.mxu0 0
        %6304 = vmatprep.mubr.bf16.mxu0 0
        %6305 = vmatmul.mubr.bf16.gmra.mrb[0].mxu0 %v6267
        %v6306 = vpop.f32.mrb[0].mxu0
        %v6307 = vadd.f32 0.0, %v6306
        %v6308 = vpop.f32.mrb[0].mxu0
        %v6309 = vpop.f32.mrb[0].mxu0
        %v6310 = vpop.f32.mrb[0].mxu0
        %6311 = vdwg.mxu0
        %v6313 = vsel %vm4406, %v6124, 0
        %v6316 = vsel %vm4506, %v4079, 0
        %6318 = vmatprep.subr.bf16.mxu0 0
        %6319 = vmatpush1.bf16.msra.mxu0 %v6316
        %6320 = vmatprep.subr.bf16.mxu0 0
        %6321 = vmatpush1.bf16.msra.mxu0 0
        %6322 = vmatprep.subr.bf16.mxu0 0
        %6323 = vmatpush1.bf16.msra.mxu0 0
        %6324 = vmatprep.subr.bf16.mxu0 0
        %6325 = vmatpush1.bf16.msra.mxu0 0
        %6326 = vmatprep.subr.bf16.mxu0 0
        %6327 = vmatpush1.bf16.msra.mxu0 0
        %6328 = vmatprep.subr.bf16.mxu0 0
        %6329 = vmatpush1.bf16.msra.mxu0 0
        %6330 = vmatprep.subr.bf16.mxu0 0
        %6331 = vmatpush1.bf16.msra.mxu0 0
        %6332 = vmatprep.subr.bf16.mxu0 0
        %6333 = vmatpush1.bf16.msra.mxu0 0
        %6334 = vmatprep.subr.bf16.mxu0 0
        %6335 = vmatpush1.bf16.msra.mxu0 0
        %6336 = vmatprep.subr.bf16.mxu0 0
        %6337 = vmatpush1.bf16.msra.mxu0 0
        %6338 = vmatprep.subr.bf16.mxu0 0
        %6339 = vmatpush1.bf16.msra.mxu0 0
        %6340 = vmatprep.subr.bf16.mxu0 0
        %6341 = vmatpush1.bf16.msra.mxu0 0
        %6342 = vmatprep.subr.bf16.mxu0 0
        %6343 = vmatpush1.bf16.msra.mxu0 0
        %6344 = vmatprep.subr.bf16.mxu0 0
        %6345 = vmatpush1.bf16.msra.mxu0 0
        %6346 = vmatprep.subr.bf16.mxu0 0
        %6347 = vmatpush1.bf16.msra.mxu0 0
        %6348 = vmatprep.subr.bf16.mxu0 0
        %6349 = vmatpush1.bf16.msra.mxu0 0
        %6350 = vmatprep.mubr.bf16.mxu0 0
        %6351 = vmatmul.mubr.bf16.gmra.mrb[0].mxu0 %v6313
        %v6352 = vpop.f32.mrb[0].mxu0
        %v6353 = vadd.f32 0.0, %v6352
        %v6354 = vpop.f32.mrb[0].mxu0
        %v6355 = vpop.f32.mrb[0].mxu0
        %v6356 = vpop.f32.mrb[0].mxu0
        %6357 = vdwg.mxu0
        %v6359 = vsel %vm4406, %v6125, 0
        %v6362 = vsel %vm4506, %v4081, 0
        %6364 = vmatprep.subr.bf16.mxu0 0
        %6365 = vmatpush1.bf16.msra.mxu0 %v6362
        %6366 = vmatprep.subr.bf16.mxu0 0
        %6367 = vmatpush1.bf16.msra.mxu0 0
        %6368 = vmatprep.subr.bf16.mxu0 0
        %6369 = vmatpush1.bf16.msra.mxu0 0
        %6370 = vmatprep.subr.bf16.mxu0 0
        %6371 = vmatpush1.bf16.msra.mxu0 0
        %6372 = vmatprep.subr.bf16.mxu0 0
        %6373 = vmatpush1.bf16.msra.mxu0 0
        %6374 = vmatprep.subr.bf16.mxu0 0
        %6375 = vmatpush1.bf16.msra.mxu0 0
        %6376 = vmatprep.subr.bf16.mxu0 0
        %6377 = vmatpush1.bf16.msra.mxu0 0
        %6378 = vmatprep.subr.bf16.mxu0 0
        %6379 = vmatpush1.bf16.msra.mxu0 0
        %6380 = vmatprep.subr.bf16.mxu0 0
        %6381 = vmatpush1.bf16.msra.mxu0 0
        %6382 = vmatprep.subr.bf16.mxu0 0
        %6383 = vmatpush1.bf16.msra.mxu0 0
        %6384 = vmatprep.subr.bf16.mxu0 0
        %6385 = vmatpush1.bf16.msra.mxu0 0
        %6386 = vmatprep.subr.bf16.mxu0 0
        %6387 = vmatpush1.bf16.msra.mxu0 0
        %6388 = vmatprep.subr.bf16.mxu0 0
        %6389 = vmatpush1.bf16.msra.mxu0 0
        %6390 = vmatprep.subr.bf16.mxu0 0
        %6391 = vmatpush1.bf16.msra.mxu0 0
        %6392 = vmatprep.subr.bf16.mxu0 0
        %6393 = vmatpush1.bf16.msra.mxu0 0
        %6394 = vmatprep.subr.bf16.mxu0 0
        %6395 = vmatpush1.bf16.msra.mxu0 0
        %6396 = vmatprep.mubr.bf16.mxu0 0
        %6397 = vmatmul.mubr.bf16.gmra.mrb[0].mxu0 %v6359
        %v6398 = vpop.f32.mrb[0].mxu0
        %v6399 = vadd.f32 0.0, %v6398
        %v6400 = vpop.f32.mrb[0].mxu0
        %v6401 = vpop.f32.mrb[0].mxu0
        %v6402 = vpop.f32.mrb[0].mxu0
        %6403 = vdwg.mxu0
        %v6405 = vsel %vm4406, %v6126, 0
        %v6408 = vsel %vm4506, %v4083, 0
        %6410 = vmatprep.subr.bf16.mxu0 0
        %6411 = vmatpush1.bf16.msra.mxu0 %v6408
        %6412 = vmatprep.subr.bf16.mxu0 0
        %6413 = vmatpush1.bf16.msra.mxu0 0
        %6414 = vmatprep.subr.bf16.mxu0 0
        %6415 = vmatpush1.bf16.msra.mxu0 0
        %6416 = vmatprep.subr.bf16.mxu0 0
        %6417 = vmatpush1.bf16.msra.mxu0 0
        %6418 = vmatprep.subr.bf16.mxu0 0
        %6419 = vmatpush1.bf16.msra.mxu0 0
        %6420 = vmatprep.subr.bf16.mxu0 0
        %6421 = vmatpush1.bf16.msra.mxu0 0
        %6422 = vmatprep.subr.bf16.mxu0 0
        %6423 = vmatpush1.bf16.msra.mxu0 0
        %6424 = vmatprep.subr.bf16.mxu0 0
        %6425 = vmatpush1.bf16.msra.mxu0 0
        %6426 = vmatprep.subr.bf16.mxu0 0
        %6427 = vmatpush1.bf16.msra.mxu0 0
        %6428 = vmatprep.subr.bf16.mxu0 0
        %6429 = vmatpush1.bf16.msra.mxu0 0
        %6430 = vmatprep.subr.bf16.mxu0 0
        %6431 = vmatpush1.bf16.msra.mxu0 0
        %6432 = vmatprep.subr.bf16.mxu0 0
        %6433 = vmatpush1.bf16.msra.mxu0 0
        %6434 = vmatprep.subr.bf16.mxu0 0
        %6435 = vmatpush1.bf16.msra.mxu0 0
        %6436 = vmatprep.subr.bf16.mxu0 0
        %6437 = vmatpush1.bf16.msra.mxu0 0
        %6438 = vmatprep.subr.bf16.mxu0 0
        %6439 = vmatpush1.bf16.msra.mxu0 0
        %6440 = vmatprep.subr.bf16.mxu0 0
        %6441 = vmatpush1.bf16.msra.mxu0 0
        %6442 = vmatprep.mubr.bf16.mxu0 0
        %6443 = vmatmul.mubr.bf16.gmra.mrb[0].mxu0 %v6405
        %v6444 = vpop.f32.mrb[0].mxu0
        %v6445 = vadd.f32 0.0, %v6444
        %v6446 = vpop.f32.mrb[0].mxu0
        %v6447 = vpop.f32.mrb[0].mxu0
        %v6448 = vpop.f32.mrb[0].mxu0
        %6449 = vdwg.mxu0
        %v6451 = vsel %vm4406, %v6127, 0
        %v6454 = vsel %vm4506, %v4085, 0
        %6456 = vmatprep.subr.bf16.mxu0 0
        %6457 = vmatpush1.bf16.msra.mxu0 %v6454
        %6458 = vmatprep.subr.bf16.mxu0 0
        %6459 = vmatpush1.bf16.msra.mxu0 0
        %6460 = vmatprep.subr.bf16.mxu0 0
        %6461 = vmatpush1.bf16.msra.mxu0 0
        %6462 = vmatprep.subr.bf16.mxu0 0
        %6463 = vmatpush1.bf16.msra.mxu0 0
        %6464 = vmatprep.subr.bf16.mxu0 0
        %6465 = vmatpush1.bf16.msra.mxu0 0
        %6466 = vmatprep.subr.bf16.mxu0 0
        %6467 = vmatpush1.bf16.msra.mxu0 0
        %6468 = vmatprep.subr.bf16.mxu0 0
        %6469 = vmatpush1.bf16.msra.mxu0 0
        %6470 = vmatprep.subr.bf16.mxu0 0
        %6471 = vmatpush1.bf16.msra.mxu0 0
        %6472 = vmatprep.subr.bf16.mxu0 0
        %6473 = vmatpush1.bf16.msra.mxu0 0
        %6474 = vmatprep.subr.bf16.mxu0 0
        %6475 = vmatpush1.bf16.msra.mxu0 0
        %6476 = vmatprep.subr.bf16.mxu0 0
        %6477 = vmatpush1.bf16.msra.mxu0 0
        %6478 = vmatprep.subr.bf16.mxu0 0
        %6479 = vmatpush1.bf16.msra.mxu0 0
        %6480 = vmatprep.subr.bf16.mxu0 0
        %6481 = vmatpush1.bf16.msra.mxu0 0
        %6482 = vmatprep.subr.bf16.mxu0 0
        %6483 = vmatpush1.bf16.msra.mxu0 0
        %6484 = vmatprep.subr.bf16.mxu0 0
        %6485 = vmatpush1.bf16.msra.mxu0 0
        %6486 = vmatprep.subr.bf16.mxu0 0
        %6487 = vmatpush1.bf16.msra.mxu0 0
        %6488 = vmatprep.mubr.bf16.mxu0 0
        %6489 = vmatmul.mubr.bf16.gmra.mrb[0].mxu0 %v6451
        %v6490 = vpop.f32.mrb[0].mxu0
        %v6491 = vadd.f32 0.0, %v6490
        %v6492 = vpop.f32.mrb[0].mxu0
        %v6493 = vpop.f32.mrb[0].mxu0
        %v6494 = vpop.f32.mrb[0].mxu0
        %6495 = vdwg.mxu0
        %v6496 = vpack.c.bf16 %v6169, %v6169
        %v6497 = vpack.c.bf16 %v6215, %v6215
        %v6498 = vpack.c.bf16 %v6261, %v6261
        %v6499 = vpack.c.bf16 %v6307, %v6307
        %v6500 = vpack.c.bf16 %v6353, %v6353
        %v6501 = vpack.c.bf16 %v6399, %v6399
        %v6502 = vpack.c.bf16 %v6445, %v6445
        %v6503 = vpack.c.bf16 %v6491, %v6491
        %v6504 = vrot.slane %v1612, 4
        %v6506 = vrot.slane %v3927, 4
        %6508 = vmatprep.subr.bf16.mxu0 0
        %6509 = vmatpush1.bf16.xpose.msra.mxu0 %v6506
        %6510 = vmatprep.subr.bf16.mxu0 0
        %6511 = vmatpush1.bf16.xpose.msra.mxu0 0
        %6512 = vmatprep.subr.bf16.mxu0 0
        %6513 = vmatpush1.bf16.xpose.msra.mxu0 0
        %6514 = vmatprep.subr.bf16.mxu0 0
        %6515 = vmatpush1.bf16.xpose.msra.mxu0 0
        %6516 = vmatprep.subr.bf16.mxu0 0
        %6517 = vmatpush1.bf16.xpose.msra.mxu0 0
        %6518 = vmatprep.subr.bf16.mxu0 0
        %6519 = vmatpush1.bf16.xpose.msra.mxu0 0
        %6520 = vmatprep.subr.bf16.mxu0 0
        %6521 = vmatpush1.bf16.xpose.msra.mxu0 0
        %6522 = vmatprep.subr.bf16.mxu0 0
        %6523 = vmatpush1.bf16.xpose.msra.mxu0 0
        %6524 = vmatprep.subr.bf16.mxu0 0
        %6525 = vmatpush1.bf16.xpose.msra.mxu0 0
        %6526 = vmatprep.subr.bf16.mxu0 0
        %6527 = vmatpush1.bf16.xpose.msra.mxu0 0
        %6528 = vmatprep.subr.bf16.mxu0 0
        %6529 = vmatpush1.bf16.xpose.msra.mxu0 0
        %6530 = vmatprep.subr.bf16.mxu0 0
        %6531 = vmatpush1.bf16.xpose.msra.mxu0 0
        %6532 = vmatprep.subr.bf16.mxu0 0
        %6533 = vmatpush1.bf16.xpose.msra.mxu0 0
        %6534 = vmatprep.subr.bf16.mxu0 0
        %6535 = vmatpush1.bf16.xpose.msra.mxu0 0
        %6536 = vmatprep.subr.bf16.mxu0 0
        %6537 = vmatpush1.bf16.xpose.msra.mxu0 0
        %6538 = vmatprep.subr.bf16.mxu0 0
        %6539 = vmatpush1.bf16.xpose.msra.mxu0 0
        %6540 = vmatprep.mubr.bf16.mxu0 0
        %6541 = vmatmul.mubr.bf16.gmra.mrb[0].mxu0 %v6504
        %v6542 = vpop.f32.mrb[0].mxu0
        %v6543 = vadd.f32 0.0, %v6542
        %v6544 = vpop.f32.mrb[0].mxu0
        %v6545 = vpop.f32.mrb[0].mxu0
        %v6546 = vpop.f32.mrb[0].mxu0
        %6547 = vdwg.mxu0
        %v6548 = vrot.slane %v1614, 4
        %v6550 = vrot.slane %v3929, 4
        %6552 = vmatprep.subr.bf16.mxu0 0
        %6553 = vmatpush1.bf16.xpose.msra.mxu0 %v6550
        %6554 = vmatprep.subr.bf16.mxu0 0
        %6555 = vmatpush1.bf16.xpose.msra.mxu0 0
        %6556 = vmatprep.subr.bf16.mxu0 0
        %6557 = vmatpush1.bf16.xpose.msra.mxu0 0
        %6558 = vmatprep.subr.bf16.mxu0 0
        %6559 = vmatpush1.bf16.xpose.msra.mxu0 0
        %6560 = vmatprep.subr.bf16.mxu0 0
        %6561 = vmatpush1.bf16.xpose.msra.mxu0 0
        %6562 = vmatprep.subr.bf16.mxu0 0
        %6563 = vmatpush1.bf16.xpose.msra.mxu0 0
        %6564 = vmatprep.subr.bf16.mxu0 0
        %6565 = vmatpush1.bf16.xpose.msra.mxu0 0
        %6566 = vmatprep.subr.bf16.mxu0 0
        %6567 = vmatpush1.bf16.xpose.msra.mxu0 0
        %6568 = vmatprep.subr.bf16.mxu0 0
        %6569 = vmatpush1.bf16.xpose.msra.mxu0 0
        %6570 = vmatprep.subr.bf16.mxu0 0
        %6571 = vmatpush1.bf16.xpose.msra.mxu0 0
        %6572 = vmatprep.subr.bf16.mxu0 0
        %6573 = vmatpush1.bf16.xpose.msra.mxu0 0
        %6574 = vmatprep.subr.bf16.mxu0 0
        %6575 = vmatpush1.bf16.xpose.msra.mxu0 0
        %6576 = vmatprep.subr.bf16.mxu0 0
        %6577 = vmatpush1.bf16.xpose.msra.mxu0 0
        %6578 = vmatprep.subr.bf16.mxu0 0
        %6579 = vmatpush1.bf16.xpose.msra.mxu0 0
        %6580 = vmatprep.subr.bf16.mxu0 0
        %6581 = vmatpush1.bf16.xpose.msra.mxu0 0
        %6582 = vmatprep.subr.bf16.mxu0 0
        %6583 = vmatpush1.bf16.xpose.msra.mxu0 0
        %6584 = vmatprep.mubr.bf16.mxu0 0
        %6585 = vmatmul.mubr.bf16.gmra.mrb[0].mxu0 %v6548
        %v6586 = vpop.f32.mrb[0].mxu0
        %v6587 = vadd.f32 0.0, %v6586
        %v6588 = vpop.f32.mrb[0].mxu0
        %v6589 = vpop.f32.mrb[0].mxu0
        %v6590 = vpop.f32.mrb[0].mxu0
        %6591 = vdwg.mxu0
        %v6592 = vrot.slane %v1616, 4
        %v6594 = vrot.slane %v3931, 4
        %6596 = vmatprep.subr.bf16.mxu0 0
        %6597 = vmatpush1.bf16.xpose.msra.mxu0 %v6594
        %6598 = vmatprep.subr.bf16.mxu0 0
        %6599 = vmatpush1.bf16.xpose.msra.mxu0 0
        %6600 = vmatprep.subr.bf16.mxu0 0
        %6601 = vmatpush1.bf16.xpose.msra.mxu0 0
        %6602 = vmatprep.subr.bf16.mxu0 0
        %6603 = vmatpush1.bf16.xpose.msra.mxu0 0
        %6604 = vmatprep.subr.bf16.mxu0 0
        %6605 = vmatpush1.bf16.xpose.msra.mxu0 0
        %6606 = vmatprep.subr.bf16.mxu0 0
        %6607 = vmatpush1.bf16.xpose.msra.mxu0 0
        %6608 = vmatprep.subr.bf16.mxu0 0
        %6609 = vmatpush1.bf16.xpose.msra.mxu0 0
        %6610 = vmatprep.subr.bf16.mxu0 0
        %6611 = vmatpush1.bf16.xpose.msra.mxu0 0
        %6612 = vmatprep.subr.bf16.mxu0 0
        %6613 = vmatpush1.bf16.xpose.msra.mxu0 0
        %6614 = vmatprep.subr.bf16.mxu0 0
        %6615 = vmatpush1.bf16.xpose.msra.mxu0 0
        %6616 = vmatprep.subr.bf16.mxu0 0
        %6617 = vmatpush1.bf16.xpose.msra.mxu0 0
        %6618 = vmatprep.subr.bf16.mxu0 0
        %6619 = vmatpush1.bf16.xpose.msra.mxu0 0
        %6620 = vmatprep.subr.bf16.mxu0 0
        %6621 = vmatpush1.bf16.xpose.msra.mxu0 0
        %6622 = vmatprep.subr.bf16.mxu0 0
        %6623 = vmatpush1.bf16.xpose.msra.mxu0 0
        %6624 = vmatprep.subr.bf16.mxu0 0
        %6625 = vmatpush1.bf16.xpose.msra.mxu0 0
        %6626 = vmatprep.subr.bf16.mxu0 0
        %6627 = vmatpush1.bf16.xpose.msra.mxu0 0
        %6628 = vmatprep.mubr.bf16.mxu0 0
        %6629 = vmatmul.mubr.bf16.gmra.mrb[0].mxu0 %v6592
        %v6630 = vpop.f32.mrb[0].mxu0
        %v6631 = vadd.f32 0.0, %v6630
        %v6632 = vpop.f32.mrb[0].mxu0
        %v6633 = vpop.f32.mrb[0].mxu0
        %v6634 = vpop.f32.mrb[0].mxu0
        %6635 = vdwg.mxu0
        %v6636 = vrot.slane %v1618, 4
        %v6638 = vrot.slane %v3933, 4
        %6640 = vmatprep.subr.bf16.mxu0 0
        %6641 = vmatpush1.bf16.xpose.msra.mxu0 %v6638
        %6642 = vmatprep.subr.bf16.mxu0 0
        %6643 = vmatpush1.bf16.xpose.msra.mxu0 0
        %6644 = vmatprep.subr.bf16.mxu0 0
        %6645 = vmatpush1.bf16.xpose.msra.mxu0 0
        %6646 = vmatprep.subr.bf16.mxu0 0
        %6647 = vmatpush1.bf16.xpose.msra.mxu0 0
        %6648 = vmatprep.subr.bf16.mxu0 0
        %6649 = vmatpush1.bf16.xpose.msra.mxu0 0
        %6650 = vmatprep.subr.bf16.mxu0 0
        %6651 = vmatpush1.bf16.xpose.msra.mxu0 0
        %6652 = vmatprep.subr.bf16.mxu0 0
        %6653 = vmatpush1.bf16.xpose.msra.mxu0 0
        %6654 = vmatprep.subr.bf16.mxu0 0
        %6655 = vmatpush1.bf16.xpose.msra.mxu0 0
        %6656 = vmatprep.subr.bf16.mxu0 0
        %6657 = vmatpush1.bf16.xpose.msra.mxu0 0
        %6658 = vmatprep.subr.bf16.mxu0 0
        %6659 = vmatpush1.bf16.xpose.msra.mxu0 0
        %6660 = vmatprep.subr.bf16.mxu0 0
        %6661 = vmatpush1.bf16.xpose.msra.mxu0 0
        %6662 = vmatprep.subr.bf16.mxu0 0
        %6663 = vmatpush1.bf16.xpose.msra.mxu0 0
        %6664 = vmatprep.subr.bf16.mxu0 0
        %6665 = vmatpush1.bf16.xpose.msra.mxu0 0
        %6666 = vmatprep.subr.bf16.mxu0 0
        %6667 = vmatpush1.bf16.xpose.msra.mxu0 0
        %6668 = vmatprep.subr.bf16.mxu0 0
        %6669 = vmatpush1.bf16.xpose.msra.mxu0 0
        %6670 = vmatprep.subr.bf16.mxu0 0
        %6671 = vmatpush1.bf16.xpose.msra.mxu0 0
        %6672 = vmatprep.mubr.bf16.mxu0 0
        %6673 = vmatmul.mubr.bf16.gmra.mrb[0].mxu0 %v6636
        %v6674 = vpop.f32.mrb[0].mxu0
        %v6675 = vadd.f32 0.0, %v6674
        %v6676 = vpop.f32.mrb[0].mxu0
        %v6677 = vpop.f32.mrb[0].mxu0
        %v6678 = vpop.f32.mrb[0].mxu0
        %6679 = vdwg.mxu0
        %v6680 = vrot.slane %v1620, 4
        %v6682 = vrot.slane %v3935, 4
        %6684 = vmatprep.subr.bf16.mxu0 0
        %6685 = vmatpush1.bf16.xpose.msra.mxu0 %v6682
        %6686 = vmatprep.subr.bf16.mxu0 0
        %6687 = vmatpush1.bf16.xpose.msra.mxu0 0
        %6688 = vmatprep.subr.bf16.mxu0 0
        %6689 = vmatpush1.bf16.xpose.msra.mxu0 0
        %6690 = vmatprep.subr.bf16.mxu0 0
        %6691 = vmatpush1.bf16.xpose.msra.mxu0 0
        %6692 = vmatprep.subr.bf16.mxu0 0
        %6693 = vmatpush1.bf16.xpose.msra.mxu0 0
        %6694 = vmatprep.subr.bf16.mxu0 0
        %6695 = vmatpush1.bf16.xpose.msra.mxu0 0
        %6696 = vmatprep.subr.bf16.mxu0 0
        %6697 = vmatpush1.bf16.xpose.msra.mxu0 0
        %6698 = vmatprep.subr.bf16.mxu0 0
        %6699 = vmatpush1.bf16.xpose.msra.mxu0 0
        %6700 = vmatprep.subr.bf16.mxu0 0
        %6701 = vmatpush1.bf16.xpose.msra.mxu0 0
        %6702 = vmatprep.subr.bf16.mxu0 0
        %6703 = vmatpush1.bf16.xpose.msra.mxu0 0
        %6704 = vmatprep.subr.bf16.mxu0 0
        %6705 = vmatpush1.bf16.xpose.msra.mxu0 0
        %6706 = vmatprep.subr.bf16.mxu0 0
        %6707 = vmatpush1.bf16.xpose.msra.mxu0 0
        %6708 = vmatprep.subr.bf16.mxu0 0
        %6709 = vmatpush1.bf16.xpose.msra.mxu0 0
        %6710 = vmatprep.subr.bf16.mxu0 0
        %6711 = vmatpush1.bf16.xpose.msra.mxu0 0
        %6712 = vmatprep.subr.bf16.mxu0 0
        %6713 = vmatpush1.bf16.xpose.msra.mxu0 0
        %6714 = vmatprep.subr.bf16.mxu0 0
        %6715 = vmatpush1.bf16.xpose.msra.mxu0 0
        %6716 = vmatprep.mubr.bf16.mxu0 0
        %6717 = vmatmul.mubr.bf16.gmra.mrb[0].mxu0 %v6680
        %v6718 = vpop.f32.mrb[0].mxu0
        %v6719 = vadd.f32 0.0, %v6718
        %v6720 = vpop.f32.mrb[0].mxu0
        %v6721 = vpop.f32.mrb[0].mxu0
        %v6722 = vpop.f32.mrb[0].mxu0
        %6723 = vdwg.mxu0
        %v6724 = vrot.slane %v1622, 4
        %v6726 = vrot.slane %v3937, 4
        %6728 = vmatprep.subr.bf16.mxu0 0
        %6729 = vmatpush1.bf16.xpose.msra.mxu0 %v6726
        %6730 = vmatprep.subr.bf16.mxu0 0
        %6731 = vmatpush1.bf16.xpose.msra.mxu0 0
        %6732 = vmatprep.subr.bf16.mxu0 0
        %6733 = vmatpush1.bf16.xpose.msra.mxu0 0
        %6734 = vmatprep.subr.bf16.mxu0 0
        %6735 = vmatpush1.bf16.xpose.msra.mxu0 0
        %6736 = vmatprep.subr.bf16.mxu0 0
        %6737 = vmatpush1.bf16.xpose.msra.mxu0 0
        %6738 = vmatprep.subr.bf16.mxu0 0
        %6739 = vmatpush1.bf16.xpose.msra.mxu0 0
        %6740 = vmatprep.subr.bf16.mxu0 0
        %6741 = vmatpush1.bf16.xpose.msra.mxu0 0
        %6742 = vmatprep.subr.bf16.mxu0 0
        %6743 = vmatpush1.bf16.xpose.msra.mxu0 0
        %6744 = vmatprep.subr.bf16.mxu0 0
        %6745 = vmatpush1.bf16.xpose.msra.mxu0 0
        %6746 = vmatprep.subr.bf16.mxu0 0
        %6747 = vmatpush1.bf16.xpose.msra.mxu0 0
        %6748 = vmatprep.subr.bf16.mxu0 0
        %6749 = vmatpush1.bf16.xpose.msra.mxu0 0
        %6750 = vmatprep.subr.bf16.mxu0 0
        %6751 = vmatpush1.bf16.xpose.msra.mxu0 0
        %6752 = vmatprep.subr.bf16.mxu0 0
        %6753 = vmatpush1.bf16.xpose.msra.mxu0 0
        %6754 = vmatprep.subr.bf16.mxu0 0
        %6755 = vmatpush1.bf16.xpose.msra.mxu0 0
        %6756 = vmatprep.subr.bf16.mxu0 0
        %6757 = vmatpush1.bf16.xpose.msra.mxu0 0
        %6758 = vmatprep.subr.bf16.mxu0 0
        %6759 = vmatpush1.bf16.xpose.msra.mxu0 0
        %6760 = vmatprep.mubr.bf16.mxu0 0
        %6761 = vmatmul.mubr.bf16.gmra.mrb[0].mxu0 %v6724
        %v6762 = vpop.f32.mrb[0].mxu0
        %v6763 = vadd.f32 0.0, %v6762
        %v6764 = vpop.f32.mrb[0].mxu0
        %v6765 = vpop.f32.mrb[0].mxu0
        %v6766 = vpop.f32.mrb[0].mxu0
        %6767 = vdwg.mxu0
        %v6768 = vrot.slane %v1624, 4
        %v6770 = vrot.slane %v3939, 4
        %6772 = vmatprep.subr.bf16.mxu0 0
        %6773 = vmatpush1.bf16.xpose.msra.mxu0 %v6770
        %6774 = vmatprep.subr.bf16.mxu0 0
        %6775 = vmatpush1.bf16.xpose.msra.mxu0 0
        %6776 = vmatprep.subr.bf16.mxu0 0
        %6777 = vmatpush1.bf16.xpose.msra.mxu0 0
        %6778 = vmatprep.subr.bf16.mxu0 0
        %6779 = vmatpush1.bf16.xpose.msra.mxu0 0
        %6780 = vmatprep.subr.bf16.mxu0 0
        %6781 = vmatpush1.bf16.xpose.msra.mxu0 0
        %6782 = vmatprep.subr.bf16.mxu0 0
        %6783 = vmatpush1.bf16.xpose.msra.mxu0 0
        %6784 = vmatprep.subr.bf16.mxu0 0
        %6785 = vmatpush1.bf16.xpose.msra.mxu0 0
        %6786 = vmatprep.subr.bf16.mxu0 0
        %6787 = vmatpush1.bf16.xpose.msra.mxu0 0
        %6788 = vmatprep.subr.bf16.mxu0 0
        %6789 = vmatpush1.bf16.xpose.msra.mxu0 0
        %6790 = vmatprep.subr.bf16.mxu0 0
        %6791 = vmatpush1.bf16.xpose.msra.mxu0 0
        %6792 = vmatprep.subr.bf16.mxu0 0
        %6793 = vmatpush1.bf16.xpose.msra.mxu0 0
        %6794 = vmatprep.subr.bf16.mxu0 0
        %6795 = vmatpush1.bf16.xpose.msra.mxu0 0
        %6796 = vmatprep.subr.bf16.mxu0 0
        %6797 = vmatpush1.bf16.xpose.msra.mxu0 0
        %6798 = vmatprep.subr.bf16.mxu0 0
        %6799 = vmatpush1.bf16.xpose.msra.mxu0 0
        %6800 = vmatprep.subr.bf16.mxu0 0
        %6801 = vmatpush1.bf16.xpose.msra.mxu0 0
        %6802 = vmatprep.subr.bf16.mxu0 0
        %6803 = vmatpush1.bf16.xpose.msra.mxu0 0
        %6804 = vmatprep.mubr.bf16.mxu0 0
        %6805 = vmatmul.mubr.bf16.gmra.mrb[0].mxu0 %v6768
        %v6806 = vpop.f32.mrb[0].mxu0
        %v6807 = vadd.f32 0.0, %v6806
        %v6808 = vpop.f32.mrb[0].mxu0
        %v6809 = vpop.f32.mrb[0].mxu0
        %v6810 = vpop.f32.mrb[0].mxu0
        %6811 = vdwg.mxu0
        %v6812 = vrot.slane %v1626, 4
        %v6814 = vrot.slane %v3941, 4
        %6816 = vmatprep.subr.bf16.mxu0 0
        %6817 = vmatpush1.bf16.xpose.msra.mxu0 %v6814
        %6818 = vmatprep.subr.bf16.mxu0 0
        %6819 = vmatpush1.bf16.xpose.msra.mxu0 0
        %6820 = vmatprep.subr.bf16.mxu0 0
        %6821 = vmatpush1.bf16.xpose.msra.mxu0 0
        %6822 = vmatprep.subr.bf16.mxu0 0
        %6823 = vmatpush1.bf16.xpose.msra.mxu0 0
        %6824 = vmatprep.subr.bf16.mxu0 0
        %6825 = vmatpush1.bf16.xpose.msra.mxu0 0
        %6826 = vmatprep.subr.bf16.mxu0 0
        %6827 = vmatpush1.bf16.xpose.msra.mxu0 0
        %6828 = vmatprep.subr.bf16.mxu0 0
        %6829 = vmatpush1.bf16.xpose.msra.mxu0 0
        %6830 = vmatprep.subr.bf16.mxu0 0
        %6831 = vmatpush1.bf16.xpose.msra.mxu0 0
        %6832 = vmatprep.subr.bf16.mxu0 0
        %6833 = vmatpush1.bf16.xpose.msra.mxu0 0
        %6834 = vmatprep.subr.bf16.mxu0 0
        %6835 = vmatpush1.bf16.xpose.msra.mxu0 0
        %6836 = vmatprep.subr.bf16.mxu0 0
        %6837 = vmatpush1.bf16.xpose.msra.mxu0 0
        %6838 = vmatprep.subr.bf16.mxu0 0
        %6839 = vmatpush1.bf16.xpose.msra.mxu0 0
        %6840 = vmatprep.subr.bf16.mxu0 0
        %6841 = vmatpush1.bf16.xpose.msra.mxu0 0
        %6842 = vmatprep.subr.bf16.mxu0 0
        %6843 = vmatpush1.bf16.xpose.msra.mxu0 0
        %6844 = vmatprep.subr.bf16.mxu0 0
        %6845 = vmatpush1.bf16.xpose.msra.mxu0 0
        %6846 = vmatprep.subr.bf16.mxu0 0
        %6847 = vmatpush1.bf16.xpose.msra.mxu0 0
        %6848 = vmatprep.mubr.bf16.mxu0 0
        %6849 = vmatmul.mubr.bf16.gmra.mrb[0].mxu0 %v6812
        %v6850 = vpop.f32.mrb[0].mxu0
        %v6851 = vadd.f32 0.0, %v6850
        %v6852 = vpop.f32.mrb[0].mxu0
        %v6853 = vpop.f32.mrb[0].mxu0
        %v6854 = vpop.f32.mrb[0].mxu0
        %6855 = vdwg.mxu0
        %v6856 = vsel %vm4406, %v6543, -inf
        %6857 = vmax.xlane.f32.xlu0 %v6856
        %v6858 = vpop.xlane.xlu0 %6857
        %v6859 = vsel %vm4406, %v6587, -inf
        %6860 = vmax.xlane.f32.xlu0 %v6859
        %v6861 = vpop.xlane.xlu0 %6860
        %v6862 = vsel %vm4406, %v6631, -inf
        %6863 = vmax.xlane.f32.xlu0 %v6862
        %v6864 = vpop.xlane.xlu0 %6863
        %v6865 = vsel %vm4406, %v6675, -inf
        %6866 = vmax.xlane.f32.xlu0 %v6865
        %v6867 = vpop.xlane.xlu0 %6866
        %v6868 = vsel %vm4406, %v6719, -inf
        %6869 = vmax.xlane.f32.xlu0 %v6868
        %v6870 = vpop.xlane.xlu0 %6869
        %v6871 = vsel %vm4406, %v6763, -inf
        %6872 = vmax.xlane.f32.xlu0 %v6871
        %v6873 = vpop.xlane.xlu0 %6872
        %v6874 = vsel %vm4406, %v6807, -inf
        %6875 = vmax.xlane.f32.xlu0 %v6874
        %v6876 = vpop.xlane.xlu0 %6875
        %v6877 = vsel %vm4406, %v6851, -inf
        %6878 = vmax.xlane.f32.xlu0 %v6877
        %v6879 = vpop.xlane.xlu0 %6878
        %v6880 = vsub.f32 %v6543, %v6858
        %v6881 = vsub.f32 %v6587, %v6861
        %v6882 = vsub.f32 %v6631, %v6864
        %v6883 = vsub.f32 %v6675, %v6867
        %v6884 = vsub.f32 %v6719, %v6870
        %v6885 = vsub.f32 %v6763, %v6873
        %v6886 = vsub.f32 %v6807, %v6876
        %v6887 = vsub.f32 %v6851, %v6879
        %v6888 = vmul.f32 %v6880, 1.442695
        %v6889 = vpow.pop %v6888
        %v6890 = vmul.f32 %v6881, 1.442695
        %v6891 = vpow.pop %v6890
        %v6892 = vmul.f32 %v6882, 1.442695
        %v6893 = vpow.pop %v6892
        %v6894 = vmul.f32 %v6883, 1.442695
        %v6895 = vpow.pop %v6894
        %v6896 = vmul.f32 %v6884, 1.442695
        %v6897 = vpow.pop %v6896
        %v6898 = vmul.f32 %v6885, 1.442695
        %v6899 = vpow.pop %v6898
        %v6900 = vmul.f32 %v6886, 1.442695
        %v6901 = vpow.pop %v6900
        %v6902 = vmul.f32 %v6887, 1.442695
        %v6903 = vpow.pop %v6902
        %v6904 = vsel %vm4406, %v6889, 0.0
        %6905 = vadd.xlane.f32.xlu0 %v6904
        %v6906 = vpop.xlane.xlu0 %6905
        %v6907 = vsel %vm4406, %v6891, 0.0
        %6908 = vadd.xlane.f32.xlu0 %v6907
        %v6909 = vpop.xlane.xlu0 %6908
        %v6910 = vsel %vm4406, %v6893, 0.0
        %6911 = vadd.xlane.f32.xlu0 %v6910
        %v6912 = vpop.xlane.xlu0 %6911
        %v6913 = vsel %vm4406, %v6895, 0.0
        %6914 = vadd.xlane.f32.xlu0 %v6913
        %v6915 = vpop.xlane.xlu0 %6914
        %v6916 = vsel %vm4406, %v6897, 0.0
        %6917 = vadd.xlane.f32.xlu0 %v6916
        %v6918 = vpop.xlane.xlu0 %6917
        %v6919 = vsel %vm4406, %v6899, 0.0
        %6920 = vadd.xlane.f32.xlu0 %v6919
        %v6921 = vpop.xlane.xlu0 %6920
        %v6922 = vsel %vm4406, %v6901, 0.0
        %6923 = vadd.xlane.f32.xlu0 %v6922
        %v6924 = vpop.xlane.xlu0 %6923
        %v6925 = vsel %vm4406, %v6903, 0.0
        %6926 = vadd.xlane.f32.xlu0 %v6925
        %v6927 = vpop.xlane.xlu0 %6926
        %v6928 = vrcp.pop %v6906
        %v6929 = vrcp.pop %v6909
        %v6930 = vrcp.pop %v6912
        %v6931 = vrcp.pop %v6915
        %v6932 = vrcp.pop %v6918
        %v6933 = vrcp.pop %v6921
        %v6934 = vrcp.pop %v6924
        %v6935 = vrcp.pop %v6927
        %v6936 = vmul.f32 %v6889, %v6928
        %v6937 = vmul.f32 %v6891, %v6929
        %v6938 = vmul.f32 %v6893, %v6930
        %v6939 = vmul.f32 %v6895, %v6931
        %v6940 = vmul.f32 %v6897, %v6932
        %v6941 = vmul.f32 %v6899, %v6933
        %v6942 = vmul.f32 %v6901, %v6934
        %v6943 = vmul.f32 %v6903, %v6935
        %v6944 = vpack.c.bf16 %v6936, %v6936
        %v6945 = vpack.c.bf16 %v6937, %v6937
        %v6946 = vpack.c.bf16 %v6938, %v6938
        %v6947 = vpack.c.bf16 %v6939, %v6939
        %v6948 = vpack.c.bf16 %v6940, %v6940
        %v6949 = vpack.c.bf16 %v6941, %v6941
        %v6950 = vpack.c.bf16 %v6942, %v6942
        %v6951 = vpack.c.bf16 %v6943, %v6943
        %v6952 = vrot.slane %v4071, 4
        %v6954 = vsel %vm4406, %v6944, 0
        %v6957 = vsel %vm4506, %v6952, 0
        %6959 = vmatprep.subr.bf16.mxu0 0
        %6960 = vmatpush1.bf16.msra.mxu0 %v6957
        %6961 = vmatprep.subr.bf16.mxu0 0
        %6962 = vmatpush1.bf16.msra.mxu0 0
        %6963 = vmatprep.subr.bf16.mxu0 0
        %6964 = vmatpush1.bf16.msra.mxu0 0
        %6965 = vmatprep.subr.bf16.mxu0 0
        %6966 = vmatpush1.bf16.msra.mxu0 0
        %6967 = vmatprep.subr.bf16.mxu0 0
        %6968 = vmatpush1.bf16.msra.mxu0 0
        %6969 = vmatprep.subr.bf16.mxu0 0
        %6970 = vmatpush1.bf16.msra.mxu0 0
        %6971 = vmatprep.subr.bf16.mxu0 0
        %6972 = vmatpush1.bf16.msra.mxu0 0
        %6973 = vmatprep.subr.bf16.mxu0 0
        %6974 = vmatpush1.bf16.msra.mxu0 0
        %6975 = vmatprep.subr.bf16.mxu0 0
        %6976 = vmatpush1.bf16.msra.mxu0 0
        %6977 = vmatprep.subr.bf16.mxu0 0
        %6978 = vmatpush1.bf16.msra.mxu0 0
        %6979 = vmatprep.subr.bf16.mxu0 0
        %6980 = vmatpush1.bf16.msra.mxu0 0
        %6981 = vmatprep.subr.bf16.mxu0 0
        %6982 = vmatpush1.bf16.msra.mxu0 0
        %6983 = vmatprep.subr.bf16.mxu0 0
        %6984 = vmatpush1.bf16.msra.mxu0 0
        %6985 = vmatprep.subr.bf16.mxu0 0
        %6986 = vmatpush1.bf16.msra.mxu0 0
        %6987 = vmatprep.subr.bf16.mxu0 0
        %6988 = vmatpush1.bf16.msra.mxu0 0
        %6989 = vmatprep.subr.bf16.mxu0 0
        %6990 = vmatpush1.bf16.msra.mxu0 0
        %6991 = vmatprep.mubr.bf16.mxu0 0
        %6992 = vmatmul.mubr.bf16.gmra.mrb[0].mxu0 %v6954
        %v6993 = vpop.f32.mrb[0].mxu0
        %v6994 = vadd.f32 0.0, %v6993
        %v6995 = vpop.f32.mrb[0].mxu0
        %v6996 = vpop.f32.mrb[0].mxu0
        %v6997 = vpop.f32.mrb[0].mxu0
        %6998 = vdwg.mxu0
        %v6999 = vrot.slane %v4073, 4
        %v7001 = vsel %vm4406, %v6945, 0
        %v7004 = vsel %vm4506, %v6999, 0
        %7006 = vmatprep.subr.bf16.mxu0 0
        %7007 = vmatpush1.bf16.msra.mxu0 %v7004
        %7008 = vmatprep.subr.bf16.mxu0 0
        %7009 = vmatpush1.bf16.msra.mxu0 0
        %7010 = vmatprep.subr.bf16.mxu0 0
        %7011 = vmatpush1.bf16.msra.mxu0 0
        %7012 = vmatprep.subr.bf16.mxu0 0
        %7013 = vmatpush1.bf16.msra.mxu0 0
        %7014 = vmatprep.subr.bf16.mxu0 0
        %7015 = vmatpush1.bf16.msra.mxu0 0
        %7016 = vmatprep.subr.bf16.mxu0 0
        %7017 = vmatpush1.bf16.msra.mxu0 0
        %7018 = vmatprep.subr.bf16.mxu0 0
        %7019 = vmatpush1.bf16.msra.mxu0 0
        %7020 = vmatprep.subr.bf16.mxu0 0
        %7021 = vmatpush1.bf16.msra.mxu0 0
        %7022 = vmatprep.subr.bf16.mxu0 0
        %7023 = vmatpush1.bf16.msra.mxu0 0
        %7024 = vmatprep.subr.bf16.mxu0 0
        %7025 = vmatpush1.bf16.msra.mxu0 0
        %7026 = vmatprep.subr.bf16.mxu0 0
        %7027 = vmatpush1.bf16.msra.mxu0 0
        %7028 = vmatprep.subr.bf16.mxu0 0
        %7029 = vmatpush1.bf16.msra.mxu0 0
        %7030 = vmatprep.subr.bf16.mxu0 0
        %7031 = vmatpush1.bf16.msra.mxu0 0
        %7032 = vmatprep.subr.bf16.mxu0 0
        %7033 = vmatpush1.bf16.msra.mxu0 0
        %7034 = vmatprep.subr.bf16.mxu0 0
        %7035 = vmatpush1.bf16.msra.mxu0 0
        %7036 = vmatprep.subr.bf16.mxu0 0
        %7037 = vmatpush1.bf16.msra.mxu0 0
        %7038 = vmatprep.mubr.bf16.mxu0 0
        %7039 = vmatmul.mubr.bf16.gmra.mrb[0].mxu0 %v7001
        %v7040 = vpop.f32.mrb[0].mxu0
        %v7041 = vadd.f32 0.0, %v7040
        %v7042 = vpop.f32.mrb[0].mxu0
        %v7043 = vpop.f32.mrb[0].mxu0
        %v7044 = vpop.f32.mrb[0].mxu0
        %7045 = vdwg.mxu0
        %v7046 = vrot.slane %v4075, 4
        %v7048 = vsel %vm4406, %v6946, 0
        %v7051 = vsel %vm4506, %v7046, 0
        %7053 = vmatprep.subr.bf16.mxu0 0
        %7054 = vmatpush1.bf16.msra.mxu0 %v7051
        %7055 = vmatprep.subr.bf16.mxu0 0
        %7056 = vmatpush1.bf16.msra.mxu0 0
        %7057 = vmatprep.subr.bf16.mxu0 0
        %7058 = vmatpush1.bf16.msra.mxu0 0
        %7059 = vmatprep.subr.bf16.mxu0 0
        %7060 = vmatpush1.bf16.msra.mxu0 0
        %7061 = vmatprep.subr.bf16.mxu0 0
        %7062 = vmatpush1.bf16.msra.mxu0 0
        %7063 = vmatprep.subr.bf16.mxu0 0
        %7064 = vmatpush1.bf16.msra.mxu0 0
        %7065 = vmatprep.subr.bf16.mxu0 0
        %7066 = vmatpush1.bf16.msra.mxu0 0
        %7067 = vmatprep.subr.bf16.mxu0 0
        %7068 = vmatpush1.bf16.msra.mxu0 0
        %7069 = vmatprep.subr.bf16.mxu0 0
        %7070 = vmatpush1.bf16.msra.mxu0 0
        %7071 = vmatprep.subr.bf16.mxu0 0
        %7072 = vmatpush1.bf16.msra.mxu0 0
        %7073 = vmatprep.subr.bf16.mxu0 0
        %7074 = vmatpush1.bf16.msra.mxu0 0
        %7075 = vmatprep.subr.bf16.mxu0 0
        %7076 = vmatpush1.bf16.msra.mxu0 0
        %7077 = vmatprep.subr.bf16.mxu0 0
        %7078 = vmatpush1.bf16.msra.mxu0 0
        %7079 = vmatprep.subr.bf16.mxu0 0
        %7080 = vmatpush1.bf16.msra.mxu0 0
        %7081 = vmatprep.subr.bf16.mxu0 0
        %7082 = vmatpush1.bf16.msra.mxu0 0
        %7083 = vmatprep.subr.bf16.mxu0 0
        %7084 = vmatpush1.bf16.msra.mxu0 0
        %7085 = vmatprep.mubr.bf16.mxu0 0
        %7086 = vmatmul.mubr.bf16.gmra.mrb[0].mxu0 %v7048
        %v7087 = vpop.f32.mrb[0].mxu0
        %v7088 = vadd.f32 0.0, %v7087
        %v7089 = vpop.f32.mrb[0].mxu0
        %v7090 = vpop.f32.mrb[0].mxu0
        %v7091 = vpop.f32.mrb[0].mxu0
        %7092 = vdwg.mxu0
        %v7093 = vrot.slane %v4077, 4
        %v7095 = vsel %vm4406, %v6947, 0
        %v7098 = vsel %vm4506, %v7093, 0
        %7100 = vmatprep.subr.bf16.mxu0 0
        %7101 = vmatpush1.bf16.msra.mxu0 %v7098
        %7102 = vmatprep.subr.bf16.mxu0 0
        %7103 = vmatpush1.bf16.msra.mxu0 0
        %7104 = vmatprep.subr.bf16.mxu0 0
        %7105 = vmatpush1.bf16.msra.mxu0 0
        %7106 = vmatprep.subr.bf16.mxu0 0
        %7107 = vmatpush1.bf16.msra.mxu0 0
        %7108 = vmatprep.subr.bf16.mxu0 0
        %7109 = vmatpush1.bf16.msra.mxu0 0
        %7110 = vmatprep.subr.bf16.mxu0 0
        %7111 = vmatpush1.bf16.msra.mxu0 0
        %7112 = vmatprep.subr.bf16.mxu0 0
        %7113 = vmatpush1.bf16.msra.mxu0 0
        %7114 = vmatprep.subr.bf16.mxu0 0
        %7115 = vmatpush1.bf16.msra.mxu0 0
        %7116 = vmatprep.subr.bf16.mxu0 0
        %7117 = vmatpush1.bf16.msra.mxu0 0
        %7118 = vmatprep.subr.bf16.mxu0 0
        %7119 = vmatpush1.bf16.msra.mxu0 0
        %7120 = vmatprep.subr.bf16.mxu0 0
        %7121 = vmatpush1.bf16.msra.mxu0 0
        %7122 = vmatprep.subr.bf16.mxu0 0
        %7123 = vmatpush1.bf16.msra.mxu0 0
        %7124 = vmatprep.subr.bf16.mxu0 0
        %7125 = vmatpush1.bf16.msra.mxu0 0
        %7126 = vmatprep.subr.bf16.mxu0 0
        %7127 = vmatpush1.bf16.msra.mxu0 0
        %7128 = vmatprep.subr.bf16.mxu0 0
        %7129 = vmatpush1.bf16.msra.mxu0 0
        %7130 = vmatprep.subr.bf16.mxu0 0
        %7131 = vmatpush1.bf16.msra.mxu0 0
        %7132 = vmatprep.mubr.bf16.mxu0 0
        %7133 = vmatmul.mubr.bf16.gmra.mrb[0].mxu0 %v7095
        %v7134 = vpop.f32.mrb[0].mxu0
        %v7135 = vadd.f32 0.0, %v7134
        %v7136 = vpop.f32.mrb[0].mxu0
        %v7137 = vpop.f32.mrb[0].mxu0
        %v7138 = vpop.f32.mrb[0].mxu0
        %7139 = vdwg.mxu0
        %v7140 = vrot.slane %v4079, 4
        %v7142 = vsel %vm4406, %v6948, 0
        %v7145 = vsel %vm4506, %v7140, 0
        %7147 = vmatprep.subr.bf16.mxu0 0
        %7148 = vmatpush1.bf16.msra.mxu0 %v7145
        %7149 = vmatprep.subr.bf16.mxu0 0
        %7150 = vmatpush1.bf16.msra.mxu0 0
        %7151 = vmatprep.subr.bf16.mxu0 0
        %7152 = vmatpush1.bf16.msra.mxu0 0
        %7153 = vmatprep.subr.bf16.mxu0 0
        %7154 = vmatpush1.bf16.msra.mxu0 0
        %7155 = vmatprep.subr.bf16.mxu0 0
        %7156 = vmatpush1.bf16.msra.mxu0 0
        %7157 = vmatprep.subr.bf16.mxu0 0
        %7158 = vmatpush1.bf16.msra.mxu0 0
        %7159 = vmatprep.subr.bf16.mxu0 0
        %7160 = vmatpush1.bf16.msra.mxu0 0
        %7161 = vmatprep.subr.bf16.mxu0 0
        %7162 = vmatpush1.bf16.msra.mxu0 0
        %7163 = vmatprep.subr.bf16.mxu0 0
        %7164 = vmatpush1.bf16.msra.mxu0 0
        %7165 = vmatprep.subr.bf16.mxu0 0
        %7166 = vmatpush1.bf16.msra.mxu0 0
        %7167 = vmatprep.subr.bf16.mxu0 0
        %7168 = vmatpush1.bf16.msra.mxu0 0
        %7169 = vmatprep.subr.bf16.mxu0 0
        %7170 = vmatpush1.bf16.msra.mxu0 0
        %7171 = vmatprep.subr.bf16.mxu0 0
        %7172 = vmatpush1.bf16.msra.mxu0 0
        %7173 = vmatprep.subr.bf16.mxu0 0
        %7174 = vmatpush1.bf16.msra.mxu0 0
        %7175 = vmatprep.subr.bf16.mxu0 0
        %7176 = vmatpush1.bf16.msra.mxu0 0
        %7177 = vmatprep.subr.bf16.mxu0 0
        %7178 = vmatpush1.bf16.msra.mxu0 0
        %7179 = vmatprep.mubr.bf16.mxu0 0
        %7180 = vmatmul.mubr.bf16.gmra.mrb[0].mxu0 %v7142
        %v7181 = vpop.f32.mrb[0].mxu0
        %v7182 = vadd.f32 0.0, %v7181
        %v7183 = vpop.f32.mrb[0].mxu0
        %v7184 = vpop.f32.mrb[0].mxu0
        %v7185 = vpop.f32.mrb[0].mxu0
        %7186 = vdwg.mxu0
        %v7187 = vrot.slane %v4081, 4
        %v7189 = vsel %vm4406, %v6949, 0
        %v7192 = vsel %vm4506, %v7187, 0
        %7194 = vmatprep.subr.bf16.mxu0 0
        %7195 = vmatpush1.bf16.msra.mxu0 %v7192
        %7196 = vmatprep.subr.bf16.mxu0 0
        %7197 = vmatpush1.bf16.msra.mxu0 0
        %7198 = vmatprep.subr.bf16.mxu0 0
        %7199 = vmatpush1.bf16.msra.mxu0 0
        %7200 = vmatprep.subr.bf16.mxu0 0
        %7201 = vmatpush1.bf16.msra.mxu0 0
        %7202 = vmatprep.subr.bf16.mxu0 0
        %7203 = vmatpush1.bf16.msra.mxu0 0
        %7204 = vmatprep.subr.bf16.mxu0 0
        %7205 = vmatpush1.bf16.msra.mxu0 0
        %7206 = vmatprep.subr.bf16.mxu0 0
        %7207 = vmatpush1.bf16.msra.mxu0 0
        %7208 = vmatprep.subr.bf16.mxu0 0
        %7209 = vmatpush1.bf16.msra.mxu0 0
        %7210 = vmatprep.subr.bf16.mxu0 0
        %7211 = vmatpush1.bf16.msra.mxu0 0
        %7212 = vmatprep.subr.bf16.mxu0 0
        %7213 = vmatpush1.bf16.msra.mxu0 0
        %7214 = vmatprep.subr.bf16.mxu0 0
        %7215 = vmatpush1.bf16.msra.mxu0 0
        %7216 = vmatprep.subr.bf16.mxu0 0
        %7217 = vmatpush1.bf16.msra.mxu0 0
        %7218 = vmatprep.subr.bf16.mxu0 0
        %7219 = vmatpush1.bf16.msra.mxu0 0
        %7220 = vmatprep.subr.bf16.mxu0 0
        %7221 = vmatpush1.bf16.msra.mxu0 0
        %7222 = vmatprep.subr.bf16.mxu0 0
        %7223 = vmatpush1.bf16.msra.mxu0 0
        %7224 = vmatprep.subr.bf16.mxu0 0
        %7225 = vmatpush1.bf16.msra.mxu0 0
        %7226 = vmatprep.mubr.bf16.mxu0 0
        %7227 = vmatmul.mubr.bf16.gmra.mrb[0].mxu0 %v7189
        %v7228 = vpop.f32.mrb[0].mxu0
        %v7229 = vadd.f32 0.0, %v7228
        %v7230 = vpop.f32.mrb[0].mxu0
        %v7231 = vpop.f32.mrb[0].mxu0
        %v7232 = vpop.f32.mrb[0].mxu0
        %7233 = vdwg.mxu0
        %v7234 = vrot.slane %v4083, 4
        %v7236 = vsel %vm4406, %v6950, 0
        %v7239 = vsel %vm4506, %v7234, 0
        %7241 = vmatprep.subr.bf16.mxu0 0
        %7242 = vmatpush1.bf16.msra.mxu0 %v7239
        %7243 = vmatprep.subr.bf16.mxu0 0
        %7244 = vmatpush1.bf16.msra.mxu0 0
        %7245 = vmatprep.subr.bf16.mxu0 0
        %7246 = vmatpush1.bf16.msra.mxu0 0
        %7247 = vmatprep.subr.bf16.mxu0 0
        %7248 = vmatpush1.bf16.msra.mxu0 0
        %7249 = vmatprep.subr.bf16.mxu0 0
        %7250 = vmatpush1.bf16.msra.mxu0 0
        %7251 = vmatprep.subr.bf16.mxu0 0
        %7252 = vmatpush1.bf16.msra.mxu0 0
        %7253 = vmatprep.subr.bf16.mxu0 0
        %7254 = vmatpush1.bf16.msra.mxu0 0
        %7255 = vmatprep.subr.bf16.mxu0 0
        %7256 = vmatpush1.bf16.msra.mxu0 0
        %7257 = vmatprep.subr.bf16.mxu0 0
        %7258 = vmatpush1.bf16.msra.mxu0 0
        %7259 = vmatprep.subr.bf16.mxu0 0
        %7260 = vmatpush1.bf16.msra.mxu0 0
        %7261 = vmatprep.subr.bf16.mxu0 0
        %7262 = vmatpush1.bf16.msra.mxu0 0
        %7263 = vmatprep.subr.bf16.mxu0 0
        %7264 = vmatpush1.bf16.msra.mxu0 0
        %7265 = vmatprep.subr.bf16.mxu0 0
        %7266 = vmatpush1.bf16.msra.mxu0 0
        %7267 = vmatprep.subr.bf16.mxu0 0
        %7268 = vmatpush1.bf16.msra.mxu0 0
        %7269 = vmatprep.subr.bf16.mxu0 0
        %7270 = vmatpush1.bf16.msra.mxu0 0
        %7271 = vmatprep.subr.bf16.mxu0 0
        %7272 = vmatpush1.bf16.msra.mxu0 0
        %7273 = vmatprep.mubr.bf16.mxu0 0
        %7274 = vmatmul.mubr.bf16.gmra.mrb[0].mxu0 %v7236
        %v7275 = vpop.f32.mrb[0].mxu0
        %v7276 = vadd.f32 0.0, %v7275
        %v7277 = vpop.f32.mrb[0].mxu0
        %v7278 = vpop.f32.mrb[0].mxu0
        %v7279 = vpop.f32.mrb[0].mxu0
        %7280 = vdwg.mxu0
        %v7281 = vrot.slane %v4085, 4
        %v7283 = vsel %vm4406, %v6951, 0
        %v7286 = vsel %vm4506, %v7281, 0
        %7288 = vmatprep.subr.bf16.mxu0 0
        %7289 = vmatpush1.bf16.msra.mxu0 %v7286
        %7290 = vmatprep.subr.bf16.mxu0 0
        %7291 = vmatpush1.bf16.msra.mxu0 0
        %7292 = vmatprep.subr.bf16.mxu0 0
        %7293 = vmatpush1.bf16.msra.mxu0 0
        %7294 = vmatprep.subr.bf16.mxu0 0
        %7295 = vmatpush1.bf16.msra.mxu0 0
        %7296 = vmatprep.subr.bf16.mxu0 0
        %7297 = vmatpush1.bf16.msra.mxu0 0
        %7298 = vmatprep.subr.bf16.mxu0 0
        %7299 = vmatpush1.bf16.msra.mxu0 0
        %7300 = vmatprep.subr.bf16.mxu0 0
        %7301 = vmatpush1.bf16.msra.mxu0 0
        %7302 = vmatprep.subr.bf16.mxu0 0
        %7303 = vmatpush1.bf16.msra.mxu0 0
        %7304 = vmatprep.subr.bf16.mxu0 0
        %7305 = vmatpush1.bf16.msra.mxu0 0
        %7306 = vmatprep.subr.bf16.mxu0 0
        %7307 = vmatpush1.bf16.msra.mxu0 0
        %7308 = vmatprep.subr.bf16.mxu0 0
        %7309 = vmatpush1.bf16.msra.mxu0 0
        %7310 = vmatprep.subr.bf16.mxu0 0
        %7311 = vmatpush1.bf16.msra.mxu0 0
        %7312 = vmatprep.subr.bf16.mxu0 0
        %7313 = vmatpush1.bf16.msra.mxu0 0
        %7314 = vmatprep.subr.bf16.mxu0 0
        %7315 = vmatpush1.bf16.msra.mxu0 0
        %7316 = vmatprep.subr.bf16.mxu0 0
        %7317 = vmatpush1.bf16.msra.mxu0 0
        %7318 = vmatprep.subr.bf16.mxu0 0
        %7319 = vmatpush1.bf16.msra.mxu0 0
        %7320 = vmatprep.mubr.bf16.mxu0 0
        %7321 = vmatmul.mubr.bf16.gmra.mrb[0].mxu0 %v7283
        %v7322 = vpop.f32.mrb[0].mxu0
        %v7323 = vadd.f32 0.0, %v7322
        %v7324 = vpop.f32.mrb[0].mxu0
        %v7325 = vpop.f32.mrb[0].mxu0
        %v7326 = vpop.f32.mrb[0].mxu0
        %7327 = vdwg.mxu0
        %v7328 = vpack.c.bf16 %v6994, %v6994
        %v7329 = vpack.c.bf16 %v7041, %v7041
        %v7330 = vpack.c.bf16 %v7088, %v7088
        %v7331 = vpack.c.bf16 %v7135, %v7135
        %v7332 = vpack.c.bf16 %v7182, %v7182
        %v7333 = vpack.c.bf16 %v7229, %v7229
        %v7334 = vpack.c.bf16 %v7276, %v7276
        %v7335 = vpack.c.bf16 %v7323, %v7323
        %v7368 = vunpack.c.l.b16 %v4872
        %v7369 = vunpack.c.l.b16 %v5704
        %v7370 = vunpack.c.l.b16 %v6496
        %v7371 = vunpack.c.l.b16 %v7328
        %v7372 = vunpack.c.l.b16 %v4873
        %v7373 = vunpack.c.l.b16 %v5705
        %v7374 = vunpack.c.l.b16 %v6497
        %v7375 = vunpack.c.l.b16 %v7329
        %v7376 = vunpack.c.l.b16 %v4874
        %v7377 = vunpack.c.l.b16 %v5706
        %v7378 = vunpack.c.l.b16 %v6498
        %v7379 = vunpack.c.l.b16 %v7330
        %v7380 = vunpack.c.l.b16 %v4875
        %v7381 = vunpack.c.l.b16 %v5707
        %v7382 = vunpack.c.l.b16 %v6499
        %v7383 = vunpack.c.l.b16 %v7331
        %v7384 = vunpack.c.l.b16 %v4876
        %v7385 = vunpack.c.l.b16 %v5708
        %v7386 = vunpack.c.l.b16 %v6500
        %v7387 = vunpack.c.l.b16 %v7332
        %v7388 = vunpack.c.l.b16 %v4877
        %v7389 = vunpack.c.l.b16 %v5709
        %v7390 = vunpack.c.l.b16 %v6501
        %v7391 = vunpack.c.l.b16 %v7333
        %v7392 = vunpack.c.l.b16 %v4878
        %v7393 = vunpack.c.l.b16 %v5710
        %v7394 = vunpack.c.l.b16 %v6502
        %v7395 = vunpack.c.l.b16 %v7334
        %v7396 = vunpack.c.l.b16 %v4879
        %v7397 = vunpack.c.l.b16 %v5711
        %v7398 = vunpack.c.l.b16 %v6503
        %v7399 = vunpack.c.l.b16 %v7335
        %s7400 = smul.addr %s468, 4
        %s7401 = scalar_lea.vmem [#allocation11], %s7400
        %v7402 = vld [vmem:[%s7401] sm:$0xff]
        %v7403 = vld [vmem:[%s7401 + $0x8] sm:$0xff]
        %v7404 = vld [vmem:[%s7401 + $0x10] sm:$0xff]
        %v7405 = vld [vmem:[%s7401 + $0x18] sm:$0xff]
        %v7406 = vld [vmem:[%s7401 + $0x20] sm:$0xff]
        %v7407 = vld [vmem:[%s7401 + $0x28] sm:$0xff]
        %v7408 = vld [vmem:[%s7401 + $0x30] sm:$0xff]
        %v7409 = vld [vmem:[%s7401 + $0x38] sm:$0xff]
        %v7410 = vld [vmem:[%s7401 + $0x40] sm:$0xff]
        %v7411 = vld [vmem:[%s7401 + $0x48] sm:$0xff]
        %v7412 = vld [vmem:[%s7401 + $0x50] sm:$0xff]
        %v7413 = vld [vmem:[%s7401 + $0x58] sm:$0xff]
        %v7414 = vld [vmem:[%s7401 + $0x60] sm:$0xff]
        %v7415 = vld [vmem:[%s7401 + $0x68] sm:$0xff]
        %v7416 = vld [vmem:[%s7401 + $0x70] sm:$0xff]
        %v7417 = vld [vmem:[%s7401 + $0x78] sm:$0xff]
        %v7418 = vld [vmem:[%s7401 + $0x80] sm:$0xff]
        %v7419 = vld [vmem:[%s7401 + $0x88] sm:$0xff]
        %v7420 = vld [vmem:[%s7401 + $0x90] sm:$0xff]
        %v7421 = vld [vmem:[%s7401 + $0x98] sm:$0xff]
        %v7422 = vld [vmem:[%s7401 + $0xa0] sm:$0xff]
        %v7423 = vld [vmem:[%s7401 + $0xa8] sm:$0xff]
        %v7424 = vld [vmem:[%s7401 + $0xb0] sm:$0xff]
        %v7425 = vld [vmem:[%s7401 + $0xb8] sm:$0xff]
        %v7426 = vld [vmem:[%s7401 + $0xc0] sm:$0xff]
        %v7427 = vld [vmem:[%s7401 + $0xc8] sm:$0xff]
        %v7428 = vld [vmem:[%s7401 + $0xd0] sm:$0xff]
        %v7429 = vld [vmem:[%s7401 + $0xd8] sm:$0xff]
        %v7430 = vld [vmem:[%s7401 + $0xe0] sm:$0xff]
        %v7431 = vld [vmem:[%s7401 + $0xe8] sm:$0xff]
        %v7432 = vld [vmem:[%s7401 + $0xf0] sm:$0xff]
        %v7433 = vld [vmem:[%s7401 + $0xf8] sm:$0xff]
        %v7434 = vld [vmem:[%s7401 + $0x100] sm:$0xff]
        %v7435 = vld [vmem:[%s7401 + $0x108] sm:$0xff]
        %v7436 = vld [vmem:[%s7401 + $0x110] sm:$0xff]
        %v7437 = vld [vmem:[%s7401 + $0x118] sm:$0xff]
        %v7438 = vld [vmem:[%s7401 + $0x120] sm:$0xff]
        %v7439 = vld [vmem:[%s7401 + $0x128] sm:$0xff]
        %v7440 = vld [vmem:[%s7401 + $0x130] sm:$0xff]
        %v7441 = vld [vmem:[%s7401 + $0x138] sm:$0xff]
        %v7442 = vld [vmem:[%s7401 + $0x140] sm:$0xff]
        %v7443 = vld [vmem:[%s7401 + $0x148] sm:$0xff]
        %v7444 = vld [vmem:[%s7401 + $0x150] sm:$0xff]
        %v7445 = vld [vmem:[%s7401 + $0x158] sm:$0xff]
        %v7446 = vld [vmem:[%s7401 + $0x160] sm:$0xff]
        %v7447 = vld [vmem:[%s7401 + $0x168] sm:$0xff]
        %v7448 = vld [vmem:[%s7401 + $0x170] sm:$0xff]
        %v7449 = vld [vmem:[%s7401 + $0x178] sm:$0xff]
        %v7450 = vld [vmem:[%s7401 + $0x180] sm:$0xff]
        %v7451 = vld [vmem:[%s7401 + $0x188] sm:$0xff]
        %v7452 = vld [vmem:[%s7401 + $0x190] sm:$0xff]
        %v7453 = vld [vmem:[%s7401 + $0x198] sm:$0xff]
        %v7454 = vld [vmem:[%s7401 + $0x1a0] sm:$0xff]
        %v7455 = vld [vmem:[%s7401 + $0x1a8] sm:$0xff]
        %v7456 = vld [vmem:[%s7401 + $0x1b0] sm:$0xff]
        %v7457 = vld [vmem:[%s7401 + $0x1b8] sm:$0xff]
        %v7458 = vld [vmem:[%s7401 + $0x1c0] sm:$0xff]
        %v7459 = vld [vmem:[%s7401 + $0x1c8] sm:$0xff]
        %v7460 = vld [vmem:[%s7401 + $0x1d0] sm:$0xff]
        %v7461 = vld [vmem:[%s7401 + $0x1d8] sm:$0xff]
        %v7462 = vld [vmem:[%s7401 + $0x1e0] sm:$0xff]
        %v7463 = vld [vmem:[%s7401 + $0x1e8] sm:$0xff]
        %v7464 = vld [vmem:[%s7401 + $0x1f0] sm:$0xff]
        %v7465 = vld [vmem:[%s7401 + $0x1f8] sm:$0xff]
        %v7466 = vld [vmem:[%s7401 + $0x200] sm:$0xff]
        %v7467 = vld [vmem:[%s7401 + $0x208] sm:$0xff]
        %v7468 = vld [vmem:[%s7401 + $0x210] sm:$0xff]
        %v7469 = vld [vmem:[%s7401 + $0x218] sm:$0xff]
        %v7470 = vld [vmem:[%s7401 + $0x220] sm:$0xff]
        %v7471 = vld [vmem:[%s7401 + $0x228] sm:$0xff]
        %v7472 = vld [vmem:[%s7401 + $0x230] sm:$0xff]
        %v7473 = vld [vmem:[%s7401 + $0x238] sm:$0xff]
        %v7474 = vld [vmem:[%s7401 + $0x240] sm:$0xff]
        %v7475 = vld [vmem:[%s7401 + $0x248] sm:$0xff]
        %v7476 = vld [vmem:[%s7401 + $0x250] sm:$0xff]
        %v7477 = vld [vmem:[%s7401 + $0x258] sm:$0xff]
        %v7478 = vld [vmem:[%s7401 + $0x260] sm:$0xff]
        %v7479 = vld [vmem:[%s7401 + $0x268] sm:$0xff]
        %v7480 = vld [vmem:[%s7401 + $0x270] sm:$0xff]
        %v7481 = vld [vmem:[%s7401 + $0x278] sm:$0xff]
        %v7482 = vld [vmem:[%s7401 + $0x280] sm:$0xff]
        %v7483 = vld [vmem:[%s7401 + $0x288] sm:$0xff]
        %v7484 = vld [vmem:[%s7401 + $0x290] sm:$0xff]
        %v7485 = vld [vmem:[%s7401 + $0x298] sm:$0xff]
        %v7486 = vld [vmem:[%s7401 + $0x2a0] sm:$0xff]
        %v7487 = vld [vmem:[%s7401 + $0x2a8] sm:$0xff]
        %v7488 = vld [vmem:[%s7401 + $0x2b0] sm:$0xff]
        %v7489 = vld [vmem:[%s7401 + $0x2b8] sm:$0xff]
        %v7490 = vld [vmem:[%s7401 + $0x2c0] sm:$0xff]
        %v7491 = vld [vmem:[%s7401 + $0x2c8] sm:$0xff]
        %v7492 = vld [vmem:[%s7401 + $0x2d0] sm:$0xff]
        %v7493 = vld [vmem:[%s7401 + $0x2d8] sm:$0xff]
        %v7494 = vld [vmem:[%s7401 + $0x2e0] sm:$0xff]
        %v7495 = vld [vmem:[%s7401 + $0x2e8] sm:$0xff]
        %v7496 = vld [vmem:[%s7401 + $0x2f0] sm:$0xff]
        %v7497 = vld [vmem:[%s7401 + $0x2f8] sm:$0xff]
        %v7498 = vld [vmem:[%s7401 + $0x300] sm:$0xff]
        %v7499 = vld [vmem:[%s7401 + $0x308] sm:$0xff]
        %v7500 = vld [vmem:[%s7401 + $0x310] sm:$0xff]
        %v7501 = vld [vmem:[%s7401 + $0x318] sm:$0xff]
        %v7502 = vld [vmem:[%s7401 + $0x320] sm:$0xff]
        %v7503 = vld [vmem:[%s7401 + $0x328] sm:$0xff]
        %v7504 = vld [vmem:[%s7401 + $0x330] sm:$0xff]
        %v7505 = vld [vmem:[%s7401 + $0x338] sm:$0xff]
        %v7506 = vld [vmem:[%s7401 + $0x340] sm:$0xff]
        %v7507 = vld [vmem:[%s7401 + $0x348] sm:$0xff]
        %v7508 = vld [vmem:[%s7401 + $0x350] sm:$0xff]
        %v7509 = vld [vmem:[%s7401 + $0x358] sm:$0xff]
        %v7510 = vld [vmem:[%s7401 + $0x360] sm:$0xff]
        %v7511 = vld [vmem:[%s7401 + $0x368] sm:$0xff]
        %v7512 = vld [vmem:[%s7401 + $0x370] sm:$0xff]
        %v7513 = vld [vmem:[%s7401 + $0x378] sm:$0xff]
        %v7514 = vld [vmem:[%s7401 + $0x380] sm:$0xff]
        %v7515 = vld [vmem:[%s7401 + $0x388] sm:$0xff]
        %v7516 = vld [vmem:[%s7401 + $0x390] sm:$0xff]
        %v7517 = vld [vmem:[%s7401 + $0x398] sm:$0xff]
        %v7518 = vld [vmem:[%s7401 + $0x3a0] sm:$0xff]
        %v7519 = vld [vmem:[%s7401 + $0x3a8] sm:$0xff]
        %v7520 = vld [vmem:[%s7401 + $0x3b0] sm:$0xff]
        %v7521 = vld [vmem:[%s7401 + $0x3b8] sm:$0xff]
        %v7522 = vld [vmem:[%s7401 + $0x3c0] sm:$0xff]
        %v7523 = vld [vmem:[%s7401 + $0x3c8] sm:$0xff]
        %v7524 = vld [vmem:[%s7401 + $0x3d0] sm:$0xff]
        %v7525 = vld [vmem:[%s7401 + $0x3d8] sm:$0xff]
        %v7526 = vld [vmem:[%s7401 + $0x3e0] sm:$0xff]
        %v7527 = vld [vmem:[%s7401 + $0x3e8] sm:$0xff]
        %v7528 = vld [vmem:[%s7401 + $0x3f0] sm:$0xff]
        %v7529 = vld [vmem:[%s7401 + $0x3f8] sm:$0xff]
        %v7530 = vlaneseq
        %v7531 = vshrl.u32 %v7530, 7
        %v7532 = vsub.s32 3, %v7531
        %v7533 = vrot.slane %v416, %v7532
        %v7534 = vlaneseq
        %v7535 = vshrl.u32 %v7534, 7
        %v7536 = vsub.s32 3, %v7535
        %v7537 = vrot.slane %v417, %v7536
        %v7538 = vlaneseq
        %v7539 = vshrl.u32 %v7538, 7
        %v7540 = vsub.s32 3, %v7539
        %v7541 = vrot.slane %v418, %v7540
        %v7542 = vlaneseq
        %v7543 = vshrl.u32 %v7542, 7
        %v7544 = vsub.s32 3, %v7543
        %v7545 = vrot.slane %v419, %v7544
        %v7546 = vpack.c.b16 %v7372, %v7368
        %v7547 = vpack.c.b16 %v7373, %v7369
        %v7548 = vpack.c.b16 %v7374, %v7370
        %v7549 = vpack.c.b16 %v7375, %v7371
        %v7550 = vpack.c.b16 %v7380, %v7376
        %v7551 = vpack.c.b16 %v7381, %v7377
        %v7552 = vpack.c.b16 %v7382, %v7378
        %v7553 = vpack.c.b16 %v7383, %v7379
        %v7554 = vpack.c.b16 %v7388, %v7384
        %v7555 = vpack.c.b16 %v7389, %v7385
        %v7556 = vpack.c.b16 %v7390, %v7386
        %v7557 = vpack.c.b16 %v7391, %v7387
        %v7558 = vpack.c.b16 %v7396, %v7392
        %v7559 = vpack.c.b16 %v7397, %v7393
        %v7560 = vpack.c.b16 %v7398, %v7394
        %v7561 = vpack.c.b16 %v7399, %v7395
        %v7706 = vunpack.c.l.b16 %v7402
        %v7707 = vunpack.c.h.b16 %v7402
        %v7708 = vunpack.c.l.b16 %v7403
        %v7709 = vunpack.c.h.b16 %v7403
        %v7710 = vunpack.c.l.b16 %v7404
        %v7711 = vunpack.c.h.b16 %v7404
        %v7712 = vunpack.c.l.b16 %v7405
        %v7713 = vunpack.c.h.b16 %v7405
        %v7714 = vunpack.c.l.b16 %v7406
        %v7715 = vunpack.c.h.b16 %v7406
        %v7716 = vunpack.c.l.b16 %v7407
        %v7717 = vunpack.c.h.b16 %v7407
        %v7718 = vunpack.c.l.b16 %v7408
        %v7719 = vunpack.c.h.b16 %v7408
        %v7720 = vunpack.c.l.b16 %v7409
        %v7721 = vunpack.c.h.b16 %v7409
        %v7722 = vunpack.c.l.b16 %v7410
        %v7723 = vunpack.c.h.b16 %v7410
        %v7724 = vunpack.c.l.b16 %v7411
        %v7725 = vunpack.c.h.b16 %v7411
        %v7726 = vunpack.c.l.b16 %v7412
        %v7727 = vunpack.c.h.b16 %v7412
        %v7728 = vunpack.c.l.b16 %v7413
        %v7729 = vunpack.c.h.b16 %v7413
        %v7730 = vunpack.c.l.b16 %v7414
        %v7731 = vunpack.c.h.b16 %v7414
        %v7732 = vunpack.c.l.b16 %v7415
        %v7733 = vunpack.c.h.b16 %v7415
        %v7734 = vunpack.c.l.b16 %v7416
        %v7735 = vunpack.c.h.b16 %v7416
        %v7736 = vunpack.c.l.b16 %v7417
        %v7737 = vunpack.c.h.b16 %v7417
        %v7738 = vunpack.c.l.b16 %v7418
        %v7739 = vunpack.c.h.b16 %v7418
        %v7740 = vunpack.c.l.b16 %v7419
        %v7741 = vunpack.c.h.b16 %v7419
        %v7742 = vunpack.c.l.b16 %v7420
        %v7743 = vunpack.c.h.b16 %v7420
        %v7744 = vunpack.c.l.b16 %v7421
        %v7745 = vunpack.c.h.b16 %v7421
        %v7746 = vunpack.c.l.b16 %v7422
        %v7747 = vunpack.c.h.b16 %v7422
        %v7748 = vunpack.c.l.b16 %v7423
        %v7749 = vunpack.c.h.b16 %v7423
        %v7750 = vunpack.c.l.b16 %v7424
        %v7751 = vunpack.c.h.b16 %v7424
        %v7752 = vunpack.c.l.b16 %v7425
        %v7753 = vunpack.c.h.b16 %v7425
        %v7754 = vunpack.c.l.b16 %v7426
        %v7755 = vunpack.c.h.b16 %v7426
        %v7756 = vunpack.c.l.b16 %v7427
        %v7757 = vunpack.c.h.b16 %v7427
        %v7758 = vunpack.c.l.b16 %v7428
        %v7759 = vunpack.c.h.b16 %v7428
        %v7760 = vunpack.c.l.b16 %v7429
        %v7761 = vunpack.c.h.b16 %v7429
        %v7762 = vunpack.c.l.b16 %v7430
        %v7763 = vunpack.c.h.b16 %v7430
        %v7764 = vunpack.c.l.b16 %v7431
        %v7765 = vunpack.c.h.b16 %v7431
        %v7766 = vunpack.c.l.b16 %v7432
        %v7767 = vunpack.c.h.b16 %v7432
        %v7768 = vunpack.c.l.b16 %v7433
        %v7769 = vunpack.c.h.b16 %v7433
        %v7770 = vunpack.c.l.b16 %v7434
        %v7771 = vunpack.c.h.b16 %v7434
        %v7772 = vunpack.c.l.b16 %v7435
        %v7773 = vunpack.c.h.b16 %v7435
        %v7774 = vunpack.c.l.b16 %v7436
        %v7775 = vunpack.c.h.b16 %v7436
        %v7776 = vunpack.c.l.b16 %v7437
        %v7777 = vunpack.c.h.b16 %v7437
        %v7778 = vunpack.c.l.b16 %v7438
        %v7779 = vunpack.c.h.b16 %v7438
        %v7780 = vunpack.c.l.b16 %v7439
        %v7781 = vunpack.c.h.b16 %v7439
        %v7782 = vunpack.c.l.b16 %v7440
        %v7783 = vunpack.c.h.b16 %v7440
        %v7784 = vunpack.c.l.b16 %v7441
        %v7785 = vunpack.c.h.b16 %v7441
        %v7786 = vunpack.c.l.b16 %v7442
        %v7787 = vunpack.c.h.b16 %v7442
        %v7788 = vunpack.c.l.b16 %v7443
        %v7789 = vunpack.c.h.b16 %v7443
        %v7790 = vunpack.c.l.b16 %v7444
        %v7791 = vunpack.c.h.b16 %v7444
        %v7792 = vunpack.c.l.b16 %v7445
        %v7793 = vunpack.c.h.b16 %v7445
        %v7794 = vunpack.c.l.b16 %v7446
        %v7795 = vunpack.c.h.b16 %v7446
        %v7796 = vunpack.c.l.b16 %v7447
        %v7797 = vunpack.c.h.b16 %v7447
        %v7798 = vunpack.c.l.b16 %v7448
        %v7799 = vunpack.c.h.b16 %v7448
        %v7800 = vunpack.c.l.b16 %v7449
        %v7801 = vunpack.c.h.b16 %v7449
        %v7802 = vunpack.c.l.b16 %v7450
        %v7803 = vunpack.c.h.b16 %v7450
        %v7804 = vunpack.c.l.b16 %v7451
        %v7805 = vunpack.c.h.b16 %v7451
        %v7806 = vunpack.c.l.b16 %v7452
        %v7807 = vunpack.c.h.b16 %v7452
        %v7808 = vunpack.c.l.b16 %v7453
        %v7809 = vunpack.c.h.b16 %v7453
        %v7810 = vunpack.c.l.b16 %v7454
        %v7811 = vunpack.c.h.b16 %v7454
        %v7812 = vunpack.c.l.b16 %v7455
        %v7813 = vunpack.c.h.b16 %v7455
        %v7814 = vunpack.c.l.b16 %v7456
        %v7815 = vunpack.c.h.b16 %v7456
        %v7816 = vunpack.c.l.b16 %v7457
        %v7817 = vunpack.c.h.b16 %v7457
        %v7818 = vunpack.c.l.b16 %v7458
        %v7819 = vunpack.c.h.b16 %v7458
        %v7820 = vunpack.c.l.b16 %v7459
        %v7821 = vunpack.c.h.b16 %v7459
        %v7822 = vunpack.c.l.b16 %v7460
        %v7823 = vunpack.c.h.b16 %v7460
        %v7824 = vunpack.c.l.b16 %v7461
        %v7825 = vunpack.c.h.b16 %v7461
        %v7826 = vunpack.c.l.b16 %v7462
        %v7827 = vunpack.c.h.b16 %v7462
        %v7828 = vunpack.c.l.b16 %v7463
        %v7829 = vunpack.c.h.b16 %v7463
        %v7830 = vunpack.c.l.b16 %v7464
        %v7831 = vunpack.c.h.b16 %v7464
        %v7832 = vunpack.c.l.b16 %v7465
        %v7833 = vunpack.c.h.b16 %v7465
        %v7834 = vunpack.c.l.b16 %v7466
        %v7835 = vunpack.c.h.b16 %v7466
        %v7836 = vunpack.c.l.b16 %v7467
        %v7837 = vunpack.c.h.b16 %v7467
        %v7838 = vunpack.c.l.b16 %v7468
        %v7839 = vunpack.c.h.b16 %v7468
        %v7840 = vunpack.c.l.b16 %v7469
        %v7841 = vunpack.c.h.b16 %v7469
        %v7842 = vunpack.c.l.b16 %v7470
        %v7843 = vunpack.c.h.b16 %v7470
        %v7844 = vunpack.c.l.b16 %v7471
        %v7845 = vunpack.c.h.b16 %v7471
        %v7846 = vunpack.c.l.b16 %v7472
        %v7847 = vunpack.c.h.b16 %v7472
        %v7848 = vunpack.c.l.b16 %v7473
        %v7849 = vunpack.c.h.b16 %v7473
        %v7850 = vunpack.c.l.b16 %v7474
        %v7851 = vunpack.c.h.b16 %v7474
        %v7852 = vunpack.c.l.b16 %v7475
        %v7853 = vunpack.c.h.b16 %v7475
        %v7854 = vunpack.c.l.b16 %v7476
        %v7855 = vunpack.c.h.b16 %v7476
        %v7856 = vunpack.c.l.b16 %v7477
        %v7857 = vunpack.c.h.b16 %v7477
        %v7858 = vunpack.c.l.b16 %v7478
        %v7859 = vunpack.c.h.b16 %v7478
        %v7860 = vunpack.c.l.b16 %v7479
        %v7861 = vunpack.c.h.b16 %v7479
        %v7862 = vunpack.c.l.b16 %v7480
        %v7863 = vunpack.c.h.b16 %v7480
        %v7864 = vunpack.c.l.b16 %v7481
        %v7865 = vunpack.c.h.b16 %v7481
        %v7866 = vunpack.c.l.b16 %v7482
        %v7867 = vunpack.c.h.b16 %v7482
        %v7868 = vunpack.c.l.b16 %v7483
        %v7869 = vunpack.c.h.b16 %v7483
        %v7870 = vunpack.c.l.b16 %v7484
        %v7871 = vunpack.c.h.b16 %v7484
        %v7872 = vunpack.c.l.b16 %v7485
        %v7873 = vunpack.c.h.b16 %v7485
        %v7874 = vunpack.c.l.b16 %v7486
        %v7875 = vunpack.c.h.b16 %v7486
        %v7876 = vunpack.c.l.b16 %v7487
        %v7877 = vunpack.c.h.b16 %v7487
        %v7878 = vunpack.c.l.b16 %v7488
        %v7879 = vunpack.c.h.b16 %v7488
        %v7880 = vunpack.c.l.b16 %v7489
        %v7881 = vunpack.c.h.b16 %v7489
        %v7882 = vunpack.c.l.b16 %v7490
        %v7883 = vunpack.c.h.b16 %v7490
        %v7884 = vunpack.c.l.b16 %v7491
        %v7885 = vunpack.c.h.b16 %v7491
        %v7886 = vunpack.c.l.b16 %v7492
        %v7887 = vunpack.c.h.b16 %v7492
        %v7888 = vunpack.c.l.b16 %v7493
        %v7889 = vunpack.c.h.b16 %v7493
        %v7890 = vunpack.c.l.b16 %v7494
        %v7891 = vunpack.c.h.b16 %v7494
        %v7892 = vunpack.c.l.b16 %v7495
        %v7893 = vunpack.c.h.b16 %v7495
        %v7894 = vunpack.c.l.b16 %v7496
        %v7895 = vunpack.c.h.b16 %v7496
        %v7896 = vunpack.c.l.b16 %v7497
        %v7897 = vunpack.c.h.b16 %v7497
        %v7898 = vunpack.c.l.b16 %v7498
        %v7899 = vunpack.c.h.b16 %v7498
        %v7900 = vunpack.c.l.b16 %v7499
        %v7901 = vunpack.c.h.b16 %v7499
        %v7902 = vunpack.c.l.b16 %v7500
        %v7903 = vunpack.c.h.b16 %v7500
        %v7904 = vunpack.c.l.b16 %v7501
        %v7905 = vunpack.c.h.b16 %v7501
        %v7906 = vunpack.c.l.b16 %v7502
        %v7907 = vunpack.c.h.b16 %v7502
        %v7908 = vunpack.c.l.b16 %v7503
        %v7909 = vunpack.c.h.b16 %v7503
        %v7910 = vunpack.c.l.b16 %v7504
        %v7911 = vunpack.c.h.b16 %v7504
        %v7912 = vunpack.c.l.b16 %v7505
        %v7913 = vunpack.c.h.b16 %v7505
        %v7914 = vunpack.c.l.b16 %v7506
        %v7915 = vunpack.c.h.b16 %v7506
        %v7916 = vunpack.c.l.b16 %v7507
        %v7917 = vunpack.c.h.b16 %v7507
        %v7918 = vunpack.c.l.b16 %v7508
        %v7919 = vunpack.c.h.b16 %v7508
        %v7920 = vunpack.c.l.b16 %v7509
        %v7921 = vunpack.c.h.b16 %v7509
        %v7922 = vunpack.c.l.b16 %v7510
        %v7923 = vunpack.c.h.b16 %v7510
        %v7924 = vunpack.c.l.b16 %v7511
        %v7925 = vunpack.c.h.b16 %v7511
        %v7926 = vunpack.c.l.b16 %v7512
        %v7927 = vunpack.c.h.b16 %v7512
        %v7928 = vunpack.c.l.b16 %v7513
        %v7929 = vunpack.c.h.b16 %v7513
        %v7930 = vunpack.c.l.b16 %v7514
        %v7931 = vunpack.c.h.b16 %v7514
        %v7932 = vunpack.c.l.b16 %v7515
        %v7933 = vunpack.c.h.b16 %v7515
        %v7934 = vunpack.c.l.b16 %v7516
        %v7935 = vunpack.c.h.b16 %v7516
        %v7936 = vunpack.c.l.b16 %v7517
        %v7937 = vunpack.c.h.b16 %v7517
        %v7938 = vunpack.c.l.b16 %v7518
        %v7939 = vunpack.c.h.b16 %v7518
        %v7940 = vunpack.c.l.b16 %v7519
        %v7941 = vunpack.c.h.b16 %v7519
        %v7942 = vunpack.c.l.b16 %v7520
        %v7943 = vunpack.c.h.b16 %v7520
        %v7944 = vunpack.c.l.b16 %v7521
        %v7945 = vunpack.c.h.b16 %v7521
        %v7946 = vunpack.c.l.b16 %v7522
        %v7947 = vunpack.c.h.b16 %v7522
        %v7948 = vunpack.c.l.b16 %v7523
        %v7949 = vunpack.c.h.b16 %v7523
        %v7950 = vunpack.c.l.b16 %v7524
        %v7951 = vunpack.c.h.b16 %v7524
        %v7952 = vunpack.c.l.b16 %v7525
        %v7953 = vunpack.c.h.b16 %v7525
        %v7954 = vunpack.c.l.b16 %v7526
        %v7955 = vunpack.c.h.b16 %v7526
        %v7956 = vunpack.c.l.b16 %v7527
        %v7957 = vunpack.c.h.b16 %v7527
        %v7958 = vunpack.c.l.b16 %v7528
        %v7959 = vunpack.c.h.b16 %v7528
        %v7960 = vunpack.c.l.b16 %v7529
        %v7961 = vunpack.c.h.b16 %v7529
        %v7962 = vpack.c.b16 %v7710, %v7706
        %v7963 = vpack.c.b16 %v7711, %v7707
        %v7964 = vpack.c.b16 %v7712, %v7708
        %v7965 = vpack.c.b16 %v7713, %v7709
        %v7966 = vpack.c.b16 %v7718, %v7714
        %v7967 = vpack.c.b16 %v7719, %v7715
        %v7968 = vpack.c.b16 %v7720, %v7716
        %v7969 = vpack.c.b16 %v7721, %v7717
        %v7970 = vpack.c.b16 %v7726, %v7722
        %v7971 = vpack.c.b16 %v7727, %v7723
        %v7972 = vpack.c.b16 %v7728, %v7724
        %v7973 = vpack.c.b16 %v7729, %v7725
        %v7974 = vpack.c.b16 %v7734, %v7730
        %v7975 = vpack.c.b16 %v7735, %v7731
        %v7976 = vpack.c.b16 %v7736, %v7732
        %v7977 = vpack.c.b16 %v7737, %v7733
        %v7978 = vpack.c.b16 %v7742, %v7738
        %v7979 = vpack.c.b16 %v7743, %v7739
        %v7980 = vpack.c.b16 %v7744, %v7740
        %v7981 = vpack.c.b16 %v7745, %v7741
        %v7982 = vpack.c.b16 %v7750, %v7746
        %v7983 = vpack.c.b16 %v7751, %v7747
        %v7984 = vpack.c.b16 %v7752, %v7748
        %v7985 = vpack.c.b16 %v7753, %v7749
        %v7986 = vpack.c.b16 %v7758, %v7754
        %v7987 = vpack.c.b16 %v7759, %v7755
        %v7988 = vpack.c.b16 %v7760, %v7756
        %v7989 = vpack.c.b16 %v7761, %v7757
        %v7990 = vpack.c.b16 %v7766, %v7762
        %v7991 = vpack.c.b16 %v7767, %v7763
        %v7992 = vpack.c.b16 %v7768, %v7764
        %v7993 = vpack.c.b16 %v7769, %v7765
        %v7994 = vpack.c.b16 %v7774, %v7770
        %v7995 = vpack.c.b16 %v7775, %v7771
        %v7996 = vpack.c.b16 %v7776, %v7772
        %v7997 = vpack.c.b16 %v7777, %v7773
        %v7998 = vpack.c.b16 %v7782, %v7778
        %v7999 = vpack.c.b16 %v7783, %v7779
        %v8000 = vpack.c.b16 %v7784, %v7780
        %v8001 = vpack.c.b16 %v7785, %v7781
        %v8002 = vpack.c.b16 %v7790, %v7786
        %v8003 = vpack.c.b16 %v7791, %v7787
        %v8004 = vpack.c.b16 %v7792, %v7788
        %v8005 = vpack.c.b16 %v7793, %v7789
        %v8006 = vpack.c.b16 %v7798, %v7794
        %v8007 = vpack.c.b16 %v7799, %v7795
        %v8008 = vpack.c.b16 %v7800, %v7796
        %v8009 = vpack.c.b16 %v7801, %v7797
        %v8010 = vpack.c.b16 %v7806, %v7802
        %v8011 = vpack.c.b16 %v7807, %v7803
        %v8012 = vpack.c.b16 %v7808, %v7804
        %v8013 = vpack.c.b16 %v7809, %v7805
        %v8014 = vpack.c.b16 %v7814, %v7810
        %v8015 = vpack.c.b16 %v7815, %v7811
        %v8016 = vpack.c.b16 %v7816, %v7812
        %v8017 = vpack.c.b16 %v7817, %v7813
        %v8018 = vpack.c.b16 %v7822, %v7818
        %v8019 = vpack.c.b16 %v7823, %v7819
        %v8020 = vpack.c.b16 %v7824, %v7820
        %v8021 = vpack.c.b16 %v7825, %v7821
        %v8022 = vpack.c.b16 %v7830, %v7826
        %v8023 = vpack.c.b16 %v7831, %v7827
        %v8024 = vpack.c.b16 %v7832, %v7828
        %v8025 = vpack.c.b16 %v7833, %v7829
        %v8026 = vpack.c.b16 %v7838, %v7834
        %v8027 = vpack.c.b16 %v7839, %v7835
        %v8028 = vpack.c.b16 %v7840, %v7836
        %v8029 = vpack.c.b16 %v7841, %v7837
        %v8030 = vpack.c.b16 %v7846, %v7842
        %v8031 = vpack.c.b16 %v7847, %v7843
        %v8032 = vpack.c.b16 %v7848, %v7844
        %v8033 = vpack.c.b16 %v7849, %v7845
        %v8034 = vpack.c.b16 %v7854, %v7850
        %v8035 = vpack.c.b16 %v7855, %v7851
        %v8036 = vpack.c.b16 %v7856, %v7852
        %v8037 = vpack.c.b16 %v7857, %v7853
        %v8038 = vpack.c.b16 %v7862, %v7858
        %v8039 = vpack.c.b16 %v7863, %v7859
        %v8040 = vpack.c.b16 %v7864, %v7860
        %v8041 = vpack.c.b16 %v7865, %v7861
        %v8042 = vpack.c.b16 %v7870, %v7866
        %v8043 = vpack.c.b16 %v7871, %v7867
        %v8044 = vpack.c.b16 %v7872, %v7868
        %v8045 = vpack.c.b16 %v7873, %v7869
        %v8046 = vpack.c.b16 %v7878, %v7874
        %v8047 = vpack.c.b16 %v7879, %v7875
        %v8048 = vpack.c.b16 %v7880, %v7876
        %v8049 = vpack.c.b16 %v7881, %v7877
        %v8050 = vpack.c.b16 %v7886, %v7882
        %v8051 = vpack.c.b16 %v7887, %v7883
        %v8052 = vpack.c.b16 %v7888, %v7884
        %v8053 = vpack.c.b16 %v7889, %v7885
        %v8054 = vpack.c.b16 %v7894, %v7890
        %v8055 = vpack.c.b16 %v7895, %v7891
        %v8056 = vpack.c.b16 %v7896, %v7892
        %v8057 = vpack.c.b16 %v7897, %v7893
        %v8058 = vpack.c.b16 %v7902, %v7898
        %v8059 = vpack.c.b16 %v7903, %v7899
        %v8060 = vpack.c.b16 %v7904, %v7900
        %v8061 = vpack.c.b16 %v7905, %v7901
        %v8062 = vpack.c.b16 %v7910, %v7906
        %v8063 = vpack.c.b16 %v7911, %v7907
        %v8064 = vpack.c.b16 %v7912, %v7908
        %v8065 = vpack.c.b16 %v7913, %v7909
        %v8066 = vpack.c.b16 %v7918, %v7914
        %v8067 = vpack.c.b16 %v7919, %v7915
        %v8068 = vpack.c.b16 %v7920, %v7916
        %v8069 = vpack.c.b16 %v7921, %v7917
        %v8070 = vpack.c.b16 %v7926, %v7922
        %v8071 = vpack.c.b16 %v7927, %v7923
        %v8072 = vpack.c.b16 %v7928, %v7924
        %v8073 = vpack.c.b16 %v7929, %v7925
        %v8074 = vpack.c.b16 %v7934, %v7930
        %v8075 = vpack.c.b16 %v7935, %v7931
        %v8076 = vpack.c.b16 %v7936, %v7932
        %v8077 = vpack.c.b16 %v7937, %v7933
        %v8078 = vpack.c.b16 %v7942, %v7938
        %v8079 = vpack.c.b16 %v7943, %v7939
        %v8080 = vpack.c.b16 %v7944, %v7940
        %v8081 = vpack.c.b16 %v7945, %v7941
        %v8082 = vpack.c.b16 %v7950, %v7946
        %v8083 = vpack.c.b16 %v7951, %v7947
        %v8084 = vpack.c.b16 %v7952, %v7948
        %v8085 = vpack.c.b16 %v7953, %v7949
        %v8086 = vpack.c.b16 %v7958, %v7954
        %v8087 = vpack.c.b16 %v7959, %v7955
        %v8088 = vpack.c.b16 %v7960, %v7956
        %v8089 = vpack.c.b16 %v7961, %v7957
        %8218 = vmatprep.subr.bf16.mxu0 %v7963
        %8219 = vmatpush1.bf16.msra.mxu0 %v7962
        %8220 = vmatprep.subr.bf16.mxu0 %v7967
        %8221 = vmatpush1.bf16.msra.mxu0 %v7966
        %8222 = vmatprep.subr.bf16.mxu0 %v7971
        %8223 = vmatpush1.bf16.msra.mxu0 %v7970
        %8224 = vmatprep.subr.bf16.mxu0 %v7975
        %8225 = vmatpush1.bf16.msra.mxu0 %v7974
        %8226 = vmatprep.subr.bf16.mxu0 %v7979
        %8227 = vmatpush1.bf16.msra.mxu0 %v7978
        %8228 = vmatprep.subr.bf16.mxu0 %v7983
        %8229 = vmatpush1.bf16.msra.mxu0 %v7982
        %8230 = vmatprep.subr.bf16.mxu0 %v7987
        %8231 = vmatpush1.bf16.msra.mxu0 %v7986
        %8232 = vmatprep.subr.bf16.mxu0 %v7991
        %8233 = vmatpush1.bf16.msra.mxu0 %v7990
        %8234 = vmatprep.subr.bf16.mxu0 %v7995
        %8235 = vmatpush1.bf16.msra.mxu0 %v7994
        %8236 = vmatprep.subr.bf16.mxu0 %v7999
        %8237 = vmatpush1.bf16.msra.mxu0 %v7998
        %8238 = vmatprep.subr.bf16.mxu0 %v8003
        %8239 = vmatpush1.bf16.msra.mxu0 %v8002
        %8240 = vmatprep.subr.bf16.mxu0 %v8007
        %8241 = vmatpush1.bf16.msra.mxu0 %v8006
        %8242 = vmatprep.subr.bf16.mxu0 %v8011
        %8243 = vmatpush1.bf16.msra.mxu0 %v8010
        %8244 = vmatprep.subr.bf16.mxu0 %v8015
        %8245 = vmatpush1.bf16.msra.mxu0 %v8014
        %8246 = vmatprep.subr.bf16.mxu0 %v8019
        %8247 = vmatpush1.bf16.msra.mxu0 %v8018
        %8248 = vmatprep.subr.bf16.mxu0 %v8023
        %8249 = vmatpush1.bf16.msra.mxu0 %v8022
        %8250 = vmatprep.mubr.bf16.mxu0 %v7547
        %8251 = vmatmul.mubr.bf16.gmra.mrb[0].mxu0 %v7546
        %v8252 = vpop.f32.mrb[0].mxu0
        %v8253 = vadd.f32 %v7533, %v8252
        %v8254 = vpop.f32.mrb[0].mxu0
        %v8255 = vadd.f32 %v7537, %v8254
        %v8256 = vpop.f32.mrb[0].mxu0
        %v8257 = vadd.f32 %v7533, %v8256
        %v8258 = vpop.f32.mrb[0].mxu0
        %v8259 = vadd.f32 %v7537, %v8258
        %8260 = vmatprep.mubr.bf16.mxu0 %v7551
        %8261 = vmatmul.mubr.bf16.gmra.mrb[0].mxu0 %v7550
        %v8262 = vpop.f32.mrb[0].mxu0
        %v8263 = vadd.f32 %v7533, %v8262
        %v8264 = vpop.f32.mrb[0].mxu0
        %v8265 = vadd.f32 %v7537, %v8264
        %v8266 = vpop.f32.mrb[0].mxu0
        %v8267 = vadd.f32 %v7533, %v8266
        %v8268 = vpop.f32.mrb[0].mxu0
        %v8269 = vadd.f32 %v7537, %v8268
        %8270 = vmatprep.mubr.bf16.mxu0 %v7555
        %8271 = vmatmul.mubr.bf16.gmra.mrb[0].mxu0 %v7554
        %v8272 = vpop.f32.mrb[0].mxu0
        %v8273 = vadd.f32 %v7533, %v8272
        %v8274 = vpop.f32.mrb[0].mxu0
        %v8275 = vadd.f32 %v7537, %v8274
        %v8276 = vpop.f32.mrb[0].mxu0
        %v8277 = vadd.f32 %v7533, %v8276
        %v8278 = vpop.f32.mrb[0].mxu0
        %v8279 = vadd.f32 %v7537, %v8278
        %8280 = vmatprep.mubr.bf16.mxu0 %v7559
        %8281 = vmatmul.mubr.bf16.gmra.mrb[0].mxu0 %v7558
        %v8282 = vpop.f32.mrb[0].mxu0
        %v8283 = vadd.f32 %v7533, %v8282
        %v8284 = vpop.f32.mrb[0].mxu0
        %v8285 = vadd.f32 %v7537, %v8284
        %v8286 = vpop.f32.mrb[0].mxu0
        %v8287 = vadd.f32 %v7533, %v8286
        %v8288 = vpop.f32.mrb[0].mxu0
        %v8289 = vadd.f32 %v7537, %v8288
        %8290 = vdwg.mxu0
        %8291 = vmatprep.subr.bf16.mxu0 %v8027
        %8292 = vmatpush1.bf16.msra.mxu0 %v8026
        %8293 = vmatprep.subr.bf16.mxu0 %v8031
        %8294 = vmatpush1.bf16.msra.mxu0 %v8030
        %8295 = vmatprep.subr.bf16.mxu0 %v8035
        %8296 = vmatpush1.bf16.msra.mxu0 %v8034
        %8297 = vmatprep.subr.bf16.mxu0 %v8039
        %8298 = vmatpush1.bf16.msra.mxu0 %v8038
        %8299 = vmatprep.subr.bf16.mxu0 %v8043
        %8300 = vmatpush1.bf16.msra.mxu0 %v8042
        %8301 = vmatprep.subr.bf16.mxu0 %v8047
        %8302 = vmatpush1.bf16.msra.mxu0 %v8046
        %8303 = vmatprep.subr.bf16.mxu0 %v8051
        %8304 = vmatpush1.bf16.msra.mxu0 %v8050
        %8305 = vmatprep.subr.bf16.mxu0 %v8055
        %8306 = vmatpush1.bf16.msra.mxu0 %v8054
        %8307 = vmatprep.subr.bf16.mxu0 %v8059
        %8308 = vmatpush1.bf16.msra.mxu0 %v8058
        %8309 = vmatprep.subr.bf16.mxu0 %v8063
        %8310 = vmatpush1.bf16.msra.mxu0 %v8062
        %8311 = vmatprep.subr.bf16.mxu0 %v8067
        %8312 = vmatpush1.bf16.msra.mxu0 %v8066
        %8313 = vmatprep.subr.bf16.mxu0 %v8071
        %8314 = vmatpush1.bf16.msra.mxu0 %v8070
        %8315 = vmatprep.subr.bf16.mxu0 %v8075
        %8316 = vmatpush1.bf16.msra.mxu0 %v8074
        %8317 = vmatprep.subr.bf16.mxu0 %v8079
        %8318 = vmatpush1.bf16.msra.mxu0 %v8078
        %8319 = vmatprep.subr.bf16.mxu0 %v8083
        %8320 = vmatpush1.bf16.msra.mxu0 %v8082
        %8321 = vmatprep.subr.bf16.mxu0 %v8087
        %8322 = vmatpush1.bf16.msra.mxu0 %v8086
        %8323 = vmatprep.mubr.bf16.mxu0 %v7549
        %8324 = vmatmul.mubr.bf16.gmra.mrb[0].mxu0 %v7548
        %v8325 = vpop.f32.mrb[0].mxu0
        %v8326 = vadd.f32 %v8253, %v8325
        %v8327 = vpop.f32.mrb[0].mxu0
        %v8328 = vadd.f32 %v8255, %v8327
        %v8329 = vpop.f32.mrb[0].mxu0
        %v8330 = vadd.f32 %v8257, %v8329
        %v8331 = vpop.f32.mrb[0].mxu0
        %v8332 = vadd.f32 %v8259, %v8331
        %8333 = vmatprep.mubr.bf16.mxu0 %v7553
        %8334 = vmatmul.mubr.bf16.gmra.mrb[0].mxu0 %v7552
        %v8335 = vpop.f32.mrb[0].mxu0
        %v8336 = vadd.f32 %v8263, %v8335
        %v8337 = vpop.f32.mrb[0].mxu0
        %v8338 = vadd.f32 %v8265, %v8337
        %v8339 = vpop.f32.mrb[0].mxu0
        %v8340 = vadd.f32 %v8267, %v8339
        %v8341 = vpop.f32.mrb[0].mxu0
        %v8342 = vadd.f32 %v8269, %v8341
        %8343 = vmatprep.mubr.bf16.mxu0 %v7557
        %8344 = vmatmul.mubr.bf16.gmra.mrb[0].mxu0 %v7556
        %v8345 = vpop.f32.mrb[0].mxu0
        %v8346 = vadd.f32 %v8273, %v8345
        %v8347 = vpop.f32.mrb[0].mxu0
        %v8348 = vadd.f32 %v8275, %v8347
        %v8349 = vpop.f32.mrb[0].mxu0
        %v8350 = vadd.f32 %v8277, %v8349
        %v8351 = vpop.f32.mrb[0].mxu0
        %v8352 = vadd.f32 %v8279, %v8351
        %8353 = vmatprep.mubr.bf16.mxu0 %v7561
        %8354 = vmatmul.mubr.bf16.gmra.mrb[0].mxu0 %v7560
        %v8355 = vpop.f32.mrb[0].mxu0
        %v8356 = vadd.f32 %v8283, %v8355
        %v8357 = vpop.f32.mrb[0].mxu0
        %v8358 = vadd.f32 %v8285, %v8357
        %v8359 = vpop.f32.mrb[0].mxu0
        %v8360 = vadd.f32 %v8287, %v8359
        %v8361 = vpop.f32.mrb[0].mxu0
        %v8362 = vadd.f32 %v8289, %v8361
        %8363 = vdwg.mxu0
        %8364 = vmatprep.subr.bf16.mxu0 %v7965
        %8365 = vmatpush1.bf16.msra.mxu0 %v7964
        %8366 = vmatprep.subr.bf16.mxu0 %v7969
        %8367 = vmatpush1.bf16.msra.mxu0 %v7968
        %8368 = vmatprep.subr.bf16.mxu0 %v7973
        %8369 = vmatpush1.bf16.msra.mxu0 %v7972
        %8370 = vmatprep.subr.bf16.mxu0 %v7977
        %8371 = vmatpush1.bf16.msra.mxu0 %v7976
        %8372 = vmatprep.subr.bf16.mxu0 %v7981
        %8373 = vmatpush1.bf16.msra.mxu0 %v7980
        %8374 = vmatprep.subr.bf16.mxu0 %v7985
        %8375 = vmatpush1.bf16.msra.mxu0 %v7984
        %8376 = vmatprep.subr.bf16.mxu0 %v7989
        %8377 = vmatpush1.bf16.msra.mxu0 %v7988
        %8378 = vmatprep.subr.bf16.mxu0 %v7993
        %8379 = vmatpush1.bf16.msra.mxu0 %v7992
        %8380 = vmatprep.subr.bf16.mxu0 %v7997
        %8381 = vmatpush1.bf16.msra.mxu0 %v7996
        %8382 = vmatprep.subr.bf16.mxu0 %v8001
        %8383 = vmatpush1.bf16.msra.mxu0 %v8000
        %8384 = vmatprep.subr.bf16.mxu0 %v8005
        %8385 = vmatpush1.bf16.msra.mxu0 %v8004
        %8386 = vmatprep.subr.bf16.mxu0 %v8009
        %8387 = vmatpush1.bf16.msra.mxu0 %v8008
        %8388 = vmatprep.subr.bf16.mxu0 %v8013
        %8389 = vmatpush1.bf16.msra.mxu0 %v8012
        %8390 = vmatprep.subr.bf16.mxu0 %v8017
        %8391 = vmatpush1.bf16.msra.mxu0 %v8016
        %8392 = vmatprep.subr.bf16.mxu0 %v8021
        %8393 = vmatpush1.bf16.msra.mxu0 %v8020
        %8394 = vmatprep.subr.bf16.mxu0 %v8025
        %8395 = vmatpush1.bf16.msra.mxu0 %v8024
        %8396 = vmatprep.mubr.bf16.mxu0 %v7547
        %8397 = vmatmul.mubr.bf16.gmra.mrb[0].mxu0 %v7546
        %v8398 = vpop.f32.mrb[0].mxu0
        %v8399 = vadd.f32 %v7541, %v8398
        %v8400 = vpop.f32.mrb[0].mxu0
        %v8401 = vadd.f32 %v7545, %v8400
        %v8402 = vpop.f32.mrb[0].mxu0
        %v8403 = vadd.f32 %v7541, %v8402
        %v8404 = vpop.f32.mrb[0].mxu0
        %v8405 = vadd.f32 %v7545, %v8404
        %8406 = vmatprep.mubr.bf16.mxu0 %v7551
        %8407 = vmatmul.mubr.bf16.gmra.mrb[0].mxu0 %v7550
        %v8408 = vpop.f32.mrb[0].mxu0
        %v8409 = vadd.f32 %v7541, %v8408
        %v8410 = vpop.f32.mrb[0].mxu0
        %v8411 = vadd.f32 %v7545, %v8410
        %v8412 = vpop.f32.mrb[0].mxu0
        %v8413 = vadd.f32 %v7541, %v8412
        %v8414 = vpop.f32.mrb[0].mxu0
        %v8415 = vadd.f32 %v7545, %v8414
        %8416 = vmatprep.mubr.bf16.mxu0 %v7555
        %8417 = vmatmul.mubr.bf16.gmra.mrb[0].mxu0 %v7554
        %v8418 = vpop.f32.mrb[0].mxu0
        %v8419 = vadd.f32 %v7541, %v8418
        %v8420 = vpop.f32.mrb[0].mxu0
        %v8421 = vadd.f32 %v7545, %v8420
        %v8422 = vpop.f32.mrb[0].mxu0
        %v8423 = vadd.f32 %v7541, %v8422
        %v8424 = vpop.f32.mrb[0].mxu0
        %v8425 = vadd.f32 %v7545, %v8424
        %8426 = vmatprep.mubr.bf16.mxu0 %v7559
        %8427 = vmatmul.mubr.bf16.gmra.mrb[0].mxu0 %v7558
        %v8428 = vpop.f32.mrb[0].mxu0
        %v8429 = vadd.f32 %v7541, %v8428
        %v8430 = vpop.f32.mrb[0].mxu0
        %v8431 = vadd.f32 %v7545, %v8430
        %v8432 = vpop.f32.mrb[0].mxu0
        %v8433 = vadd.f32 %v7541, %v8432
        %v8434 = vpop.f32.mrb[0].mxu0
        %v8435 = vadd.f32 %v7545, %v8434
        %8436 = vdwg.mxu0
        %8437 = vmatprep.subr.bf16.mxu0 %v8029
        %8438 = vmatpush1.bf16.msra.mxu0 %v8028
        %8439 = vmatprep.subr.bf16.mxu0 %v8033
        %8440 = vmatpush1.bf16.msra.mxu0 %v8032
        %8441 = vmatprep.subr.bf16.mxu0 %v8037
        %8442 = vmatpush1.bf16.msra.mxu0 %v8036
        %8443 = vmatprep.subr.bf16.mxu0 %v8041
        %8444 = vmatpush1.bf16.msra.mxu0 %v8040
        %8445 = vmatprep.subr.bf16.mxu0 %v8045
        %8446 = vmatpush1.bf16.msra.mxu0 %v8044
        %8447 = vmatprep.subr.bf16.mxu0 %v8049
        %8448 = vmatpush1.bf16.msra.mxu0 %v8048
        %8449 = vmatprep.subr.bf16.mxu0 %v8053
        %8450 = vmatpush1.bf16.msra.mxu0 %v8052
        %8451 = vmatprep.subr.bf16.mxu0 %v8057
        %8452 = vmatpush1.bf16.msra.mxu0 %v8056
        %8453 = vmatprep.subr.bf16.mxu0 %v8061
        %8454 = vmatpush1.bf16.msra.mxu0 %v8060
        %8455 = vmatprep.subr.bf16.mxu0 %v8065
        %8456 = vmatpush1.bf16.msra.mxu0 %v8064
        %8457 = vmatprep.subr.bf16.mxu0 %v8069
        %8458 = vmatpush1.bf16.msra.mxu0 %v8068
        %8459 = vmatprep.subr.bf16.mxu0 %v8073
        %8460 = vmatpush1.bf16.msra.mxu0 %v8072
        %8461 = vmatprep.subr.bf16.mxu0 %v8077
        %8462 = vmatpush1.bf16.msra.mxu0 %v8076
        %8463 = vmatprep.subr.bf16.mxu0 %v8081
        %8464 = vmatpush1.bf16.msra.mxu0 %v8080
        %8465 = vmatprep.subr.bf16.mxu0 %v8085
        %8466 = vmatpush1.bf16.msra.mxu0 %v8084
        %8467 = vmatprep.subr.bf16.mxu0 %v8089
        %8468 = vmatpush1.bf16.msra.mxu0 %v8088
        %8469 = vmatprep.mubr.bf16.mxu0 %v7549
        %8470 = vmatmul.mubr.bf16.gmra.mrb[0].mxu0 %v7548
        %v8471 = vpop.f32.mrb[0].mxu0
        %v8472 = vadd.f32 %v8399, %v8471
        %v8473 = vpop.f32.mrb[0].mxu0
        %v8474 = vadd.f32 %v8401, %v8473
        %v8475 = vpop.f32.mrb[0].mxu0
        %v8476 = vadd.f32 %v8403, %v8475
        %v8477 = vpop.f32.mrb[0].mxu0
        %v8478 = vadd.f32 %v8405, %v8477
        %8479 = vmatprep.mubr.bf16.mxu0 %v7553
        %8480 = vmatmul.mubr.bf16.gmra.mrb[0].mxu0 %v7552
        %v8481 = vpop.f32.mrb[0].mxu0
        %v8482 = vadd.f32 %v8409, %v8481
        %v8483 = vpop.f32.mrb[0].mxu0
        %v8484 = vadd.f32 %v8411, %v8483
        %v8485 = vpop.f32.mrb[0].mxu0
        %v8486 = vadd.f32 %v8413, %v8485
        %v8487 = vpop.f32.mrb[0].mxu0
        %v8488 = vadd.f32 %v8415, %v8487
        %8489 = vmatprep.mubr.bf16.mxu0 %v7557
        %8490 = vmatmul.mubr.bf16.gmra.mrb[0].mxu0 %v7556
        %v8491 = vpop.f32.mrb[0].mxu0
        %v8492 = vadd.f32 %v8419, %v8491
        %v8493 = vpop.f32.mrb[0].mxu0
        %v8494 = vadd.f32 %v8421, %v8493
        %v8495 = vpop.f32.mrb[0].mxu0
        %v8496 = vadd.f32 %v8423, %v8495
        %v8497 = vpop.f32.mrb[0].mxu0
        %v8498 = vadd.f32 %v8425, %v8497
        %8499 = vmatprep.mubr.bf16.mxu0 %v7561
        %8500 = vmatmul.mubr.bf16.gmra.mrb[0].mxu0 %v7560
        %v8501 = vpop.f32.mrb[0].mxu0
        %v8502 = vadd.f32 %v8429, %v8501
        %v8503 = vpop.f32.mrb[0].mxu0
        %v8504 = vadd.f32 %v8431, %v8503
        %v8505 = vpop.f32.mrb[0].mxu0
        %v8506 = vadd.f32 %v8433, %v8505
        %v8507 = vpop.f32.mrb[0].mxu0
        %v8508 = vadd.f32 %v8435, %v8507
        %8509 = vdwg.mxu0
        %v8510 = vadd.f32 %v420, %v8326
        %v8511 = vadd.f32 %v421, %v8328
        %v8512 = vadd.f32 %v422, %v8472
        %v8513 = vadd.f32 %v423, %v8474
        %v8514 = vadd.f32 %v424, %v8330
        %v8515 = vadd.f32 %v425, %v8332
        %v8516 = vadd.f32 %v426, %v8476
        %v8517 = vadd.f32 %v427, %v8478
        %v8518 = vadd.f32 %v428, %v8336
        %v8519 = vadd.f32 %v429, %v8338
        %v8520 = vadd.f32 %v430, %v8482
        %v8521 = vadd.f32 %v431, %v8484
        %v8522 = vadd.f32 %v432, %v8340
        %v8523 = vadd.f32 %v433, %v8342
        %v8524 = vadd.f32 %v434, %v8486
        %v8525 = vadd.f32 %v435, %v8488
        %v8526 = vadd.f32 %v436, %v8346
        %v8527 = vadd.f32 %v437, %v8348
        %v8528 = vadd.f32 %v438, %v8492
        %v8529 = vadd.f32 %v439, %v8494
        %v8530 = vadd.f32 %v440, %v8350
        %v8531 = vadd.f32 %v441, %v8352
        %v8532 = vadd.f32 %v442, %v8496
        %v8533 = vadd.f32 %v443, %v8498
        %v8534 = vadd.f32 %v444, %v8356
        %v8535 = vadd.f32 %v445, %v8358
        %v8536 = vadd.f32 %v446, %v8502
        %v8537 = vadd.f32 %v447, %v8504
        %v8538 = vadd.f32 %v448, %v8360
        %v8539 = vadd.f32 %v449, %v8362
        %v8540 = vadd.f32 %v450, %v8506
        %v8541 = vadd.f32 %v451, %v8508
        %v8542 = vadd.f32 %v8510, %v8511
        %v8543 = vadd.f32 %v8542, %v8512
        %v8544 = vadd.f32 %v8543, %v8513
        %8545 = vadd.xlane.f32.xlu0 %v8544
        %v8546 = vpop.xlane.xlu0 %8545
        %v8547 = vadd.f32 %v8514, %v8515
        %v8548 = vadd.f32 %v8547, %v8516
        %v8549 = vadd.f32 %v8548, %v8517
        %8550 = vadd.xlane.f32.xlu0 %v8549
        %v8551 = vpop.xlane.xlu0 %8550
        %v8552 = vadd.f32 %v8518, %v8519
        %v8553 = vadd.f32 %v8552, %v8520
        %v8554 = vadd.f32 %v8553, %v8521
        %8555 = vadd.xlane.f32.xlu0 %v8554
        %v8556 = vpop.xlane.xlu0 %8555
        %v8557 = vadd.f32 %v8522, %v8523
        %v8558 = vadd.f32 %v8557, %v8524
        %v8559 = vadd.f32 %v8558, %v8525
        %8560 = vadd.xlane.f32.xlu0 %v8559
        %v8561 = vpop.xlane.xlu0 %8560
        %v8562 = vadd.f32 %v8526, %v8527
        %v8563 = vadd.f32 %v8562, %v8528
        %v8564 = vadd.f32 %v8563, %v8529
        %8565 = vadd.xlane.f32.xlu0 %v8564
        %v8566 = vpop.xlane.xlu0 %8565
        %v8567 = vadd.f32 %v8530, %v8531
        %v8568 = vadd.f32 %v8567, %v8532
        %v8569 = vadd.f32 %v8568, %v8533
        %8570 = vadd.xlane.f32.xlu0 %v8569
        %v8571 = vpop.xlane.xlu0 %8570
        %v8572 = vadd.f32 %v8534, %v8535
        %v8573 = vadd.f32 %v8572, %v8536
        %v8574 = vadd.f32 %v8573, %v8537
        %8575 = vadd.xlane.f32.xlu0 %v8574
        %v8576 = vpop.xlane.xlu0 %8575
        %v8577 = vadd.f32 %v8538, %v8539
        %v8578 = vadd.f32 %v8577, %v8540
        %v8579 = vadd.f32 %v8578, %v8541
        %8580 = vadd.xlane.f32.xlu0 %v8579
        %v8581 = vpop.xlane.xlu0 %8580
        %v8582 = vrcp.pop 512.0
        %v8583 = vmul.f32 %v8546, %v8582
        %v8584 = vmul.f32 %v8551, %v8582
        %v8585 = vmul.f32 %v8556, %v8582
        %v8586 = vmul.f32 %v8561, %v8582
        %v8587 = vmul.f32 %v8566, %v8582
        %v8588 = vmul.f32 %v8571, %v8582
        %v8589 = vmul.f32 %v8576, %v8582
        %v8590 = vmul.f32 %v8581, %v8582
        %v8591 = vsub.f32 %v8510, %v8583
        %v8592 = vsub.f32 %v8511, %v8583
        %v8593 = vsub.f32 %v8512, %v8583
        %v8594 = vsub.f32 %v8513, %v8583
        %v8595 = vsub.f32 %v8514, %v8584
        %v8596 = vsub.f32 %v8515, %v8584
        %v8597 = vsub.f32 %v8516, %v8584
        %v8598 = vsub.f32 %v8517, %v8584
        %v8599 = vsub.f32 %v8518, %v8585
        %v8600 = vsub.f32 %v8519, %v8585
        %v8601 = vsub.f32 %v8520, %v8585
        %v8602 = vsub.f32 %v8521, %v8585
        %v8603 = vsub.f32 %v8522, %v8586
        %v8604 = vsub.f32 %v8523, %v8586
        %v8605 = vsub.f32 %v8524, %v8586
        %v8606 = vsub.f32 %v8525, %v8586
        %v8607 = vsub.f32 %v8526, %v8587
        %v8608 = vsub.f32 %v8527, %v8587
        %v8609 = vsub.f32 %v8528, %v8587
        %v8610 = vsub.f32 %v8529, %v8587
        %v8611 = vsub.f32 %v8530, %v8588
        %v8612 = vsub.f32 %v8531, %v8588
        %v8613 = vsub.f32 %v8532, %v8588
        %v8614 = vsub.f32 %v8533, %v8588
        %v8615 = vsub.f32 %v8534, %v8589
        %v8616 = vsub.f32 %v8535, %v8589
        %v8617 = vsub.f32 %v8536, %v8589
        %v8618 = vsub.f32 %v8537, %v8589
        %v8619 = vsub.f32 %v8538, %v8590
        %v8620 = vsub.f32 %v8539, %v8590
        %v8621 = vsub.f32 %v8540, %v8590
        %v8622 = vsub.f32 %v8541, %v8590
        %v8623 = vmul.f32 %v8591, %v8591
        %v8624 = vmul.f32 %v8592, %v8592
        %v8625 = vmul.f32 %v8593, %v8593
        %v8626 = vmul.f32 %v8594, %v8594
        %v8627 = vmul.f32 %v8595, %v8595
        %v8628 = vmul.f32 %v8596, %v8596
        %v8629 = vmul.f32 %v8597, %v8597
        %v8630 = vmul.f32 %v8598, %v8598
        %v8631 = vmul.f32 %v8599, %v8599
        %v8632 = vmul.f32 %v8600, %v8600
        %v8633 = vmul.f32 %v8601, %v8601
        %v8634 = vmul.f32 %v8602, %v8602
        %v8635 = vmul.f32 %v8603, %v8603
        %v8636 = vmul.f32 %v8604, %v8604
        %v8637 = vmul.f32 %v8605, %v8605
        %v8638 = vmul.f32 %v8606, %v8606
        %v8639 = vmul.f32 %v8607, %v8607
        %v8640 = vmul.f32 %v8608, %v8608
        %v8641 = vmul.f32 %v8609, %v8609
        %v8642 = vmul.f32 %v8610, %v8610
        %v8643 = vmul.f32 %v8611, %v8611
        %v8644 = vmul.f32 %v8612, %v8612
        %v8645 = vmul.f32 %v8613, %v8613
        %v8646 = vmul.f32 %v8614, %v8614
        %v8647 = vmul.f32 %v8615, %v8615
        %v8648 = vmul.f32 %v8616, %v8616
        %v8649 = vmul.f32 %v8617, %v8617
        %v8650 = vmul.f32 %v8618, %v8618
        %v8651 = vmul.f32 %v8619, %v8619
        %v8652 = vmul.f32 %v8620, %v8620
        %v8653 = vmul.f32 %v8621, %v8621
        %v8654 = vmul.f32 %v8622, %v8622
        %v8655 = vadd.f32 %v8623, %v8624
        %v8656 = vadd.f32 %v8655, %v8625
        %v8657 = vadd.f32 %v8656, %v8626
        %8658 = vadd.xlane.f32.xlu0 %v8657
        %v8659 = vpop.xlane.xlu0 %8658
        %v8660 = vadd.f32 %v8627, %v8628
        %v8661 = vadd.f32 %v8660, %v8629
        %v8662 = vadd.f32 %v8661, %v8630
        %8663 = vadd.xlane.f32.xlu0 %v8662
        %v8664 = vpop.xlane.xlu0 %8663
        %v8665 = vadd.f32 %v8631, %v8632
        %v8666 = vadd.f32 %v8665, %v8633
        %v8667 = vadd.f32 %v8666, %v8634
        %8668 = vadd.xlane.f32.xlu0 %v8667
        %v8669 = vpop.xlane.xlu0 %8668
        %v8670 = vadd.f32 %v8635, %v8636
        %v8671 = vadd.f32 %v8670, %v8637
        %v8672 = vadd.f32 %v8671, %v8638
        %8673 = vadd.xlane.f32.xlu0 %v8672
        %v8674 = vpop.xlane.xlu0 %8673
        %v8675 = vadd.f32 %v8639, %v8640
        %v8676 = vadd.f32 %v8675, %v8641
        %v8677 = vadd.f32 %v8676, %v8642
        %8678 = vadd.xlane.f32.xlu0 %v8677
        %v8679 = vpop.xlane.xlu0 %8678
        %v8680 = vadd.f32 %v8643, %v8644
        %v8681 = vadd.f32 %v8680, %v8645
        %v8682 = vadd.f32 %v8681, %v8646
        %8683 = vadd.xlane.f32.xlu0 %v8682
        %v8684 = vpop.xlane.xlu0 %8683
        %v8685 = vadd.f32 %v8647, %v8648
        %v8686 = vadd.f32 %v8685, %v8649
        %v8687 = vadd.f32 %v8686, %v8650
        %8688 = vadd.xlane.f32.xlu0 %v8687
        %v8689 = vpop.xlane.xlu0 %8688
        %v8690 = vadd.f32 %v8651, %v8652
        %v8691 = vadd.f32 %v8690, %v8653
        %v8692 = vadd.f32 %v8691, %v8654
        %8693 = vadd.xlane.f32.xlu0 %v8692
        %v8694 = vpop.xlane.xlu0 %8693
        %v8695 = vmul.f32 %v8659, %v8582
        %v8696 = vmul.f32 %v8664, %v8582
        %v8697 = vmul.f32 %v8669, %v8582
        %v8698 = vmul.f32 %v8674, %v8582
        %v8699 = vmul.f32 %v8679, %v8582
        %v8700 = vmul.f32 %v8684, %v8582
        %v8701 = vmul.f32 %v8689, %v8582
        %v8702 = vmul.f32 %v8694, %v8582
        %v8703 = vadd.f32 %v8695, 1e-05
        %v8704 = vadd.f32 %v8696, 1e-05
        %v8705 = vadd.f32 %v8697, 1e-05
        %v8706 = vadd.f32 %v8698, 1e-05
        %v8707 = vadd.f32 %v8699, 1e-05
        %v8708 = vadd.f32 %v8700, 1e-05
        %v8709 = vadd.f32 %v8701, 1e-05
        %v8710 = vadd.f32 %v8702, 1e-05
        %v8711 = vrsqrt.pop %v8703
        %v8712 = vrsqrt.pop %v8704
        %v8713 = vrsqrt.pop %v8705
        %v8714 = vrsqrt.pop %v8706
        %v8715 = vrsqrt.pop %v8707
        %v8716 = vrsqrt.pop %v8708
        %v8717 = vrsqrt.pop %v8709
        %v8718 = vrsqrt.pop %v8710
        %v8719 = vmul.f32 %v8591, %v8711
        %v8720 = vmul.f32 %v8592, %v8711
        %v8721 = vmul.f32 %v8593, %v8711
        %v8722 = vmul.f32 %v8594, %v8711
        %v8723 = vmul.f32 %v8595, %v8712
        %v8724 = vmul.f32 %v8596, %v8712
        %v8725 = vmul.f32 %v8597, %v8712
        %v8726 = vmul.f32 %v8598, %v8712
        %v8727 = vmul.f32 %v8599, %v8713
        %v8728 = vmul.f32 %v8600, %v8713
        %v8729 = vmul.f32 %v8601, %v8713
        %v8730 = vmul.f32 %v8602, %v8713
        %v8731 = vmul.f32 %v8603, %v8714
        %v8732 = vmul.f32 %v8604, %v8714
        %v8733 = vmul.f32 %v8605, %v8714
        %v8734 = vmul.f32 %v8606, %v8714
        %v8735 = vmul.f32 %v8607, %v8715
        %v8736 = vmul.f32 %v8608, %v8715
        %v8737 = vmul.f32 %v8609, %v8715
        %v8738 = vmul.f32 %v8610, %v8715
        %v8739 = vmul.f32 %v8611, %v8716
        %v8740 = vmul.f32 %v8612, %v8716
        %v8741 = vmul.f32 %v8613, %v8716
        %v8742 = vmul.f32 %v8614, %v8716
        %v8743 = vmul.f32 %v8615, %v8717
        %v8744 = vmul.f32 %v8616, %v8717
        %v8745 = vmul.f32 %v8617, %v8717
        %v8746 = vmul.f32 %v8618, %v8717
        %v8747 = vmul.f32 %v8619, %v8718
        %v8748 = vmul.f32 %v8620, %v8718
        %v8749 = vmul.f32 %v8621, %v8718
        %v8750 = vmul.f32 %v8622, %v8718
        %v8751 = vlaneseq
        %v8752 = vshrl.u32 %v8751, 7
        %v8753 = vsub.s32 4, %v8752
        %v8754 = vrot.slane %v416, %v8753
        %v8755 = vlaneseq
        %v8756 = vshrl.u32 %v8755, 7
        %v8757 = vsub.s32 4, %v8756
        %v8758 = vrot.slane %v417, %v8757
        %v8759 = vlaneseq
        %v8760 = vshrl.u32 %v8759, 7
        %v8761 = vsub.s32 4, %v8760
        %v8762 = vrot.slane %v418, %v8761
        %v8763 = vlaneseq
        %v8764 = vshrl.u32 %v8763, 7
        %v8765 = vsub.s32 4, %v8764
        %v8766 = vrot.slane %v419, %v8765
        %v8767 = vmul.f32 %v8719, %v8754
        %v8768 = vmul.f32 %v8720, %v8758
        %v8769 = vmul.f32 %v8721, %v8762
        %v8770 = vmul.f32 %v8722, %v8766
        %v8771 = vmul.f32 %v8723, %v8754
        %v8772 = vmul.f32 %v8724, %v8758
        %v8773 = vmul.f32 %v8725, %v8762
        %v8774 = vmul.f32 %v8726, %v8766
        %v8775 = vmul.f32 %v8727, %v8754
        %v8776 = vmul.f32 %v8728, %v8758
        %v8777 = vmul.f32 %v8729, %v8762
        %v8778 = vmul.f32 %v8730, %v8766
        %v8779 = vmul.f32 %v8731, %v8754
        %v8780 = vmul.f32 %v8732, %v8758
        %v8781 = vmul.f32 %v8733, %v8762
        %v8782 = vmul.f32 %v8734, %v8766
        %v8783 = vmul.f32 %v8735, %v8754
        %v8784 = vmul.f32 %v8736, %v8758
        %v8785 = vmul.f32 %v8737, %v8762
        %v8786 = vmul.f32 %v8738, %v8766
        %v8787 = vmul.f32 %v8739, %v8754
        %v8788 = vmul.f32 %v8740, %v8758
        %v8789 = vmul.f32 %v8741, %v8762
        %v8790 = vmul.f32 %v8742, %v8766
        %v8791 = vmul.f32 %v8743, %v8754
        %v8792 = vmul.f32 %v8744, %v8758
        %v8793 = vmul.f32 %v8745, %v8762
        %v8794 = vmul.f32 %v8746, %v8766
        %v8795 = vmul.f32 %v8747, %v8754
        %v8796 = vmul.f32 %v8748, %v8758
        %v8797 = vmul.f32 %v8749, %v8762
        %v8798 = vmul.f32 %v8750, %v8766
        %v8799 = vlaneseq
        %v8800 = vshrl.u32 %v8799, 7
        %v8801 = vsub.s32 5, %v8800
        %v8802 = vrot.slane %v416, %v8801
        %v8803 = vlaneseq
        %v8804 = vshrl.u32 %v8803, 7
        %v8805 = vsub.s32 5, %v8804
        %v8806 = vrot.slane %v417, %v8805
        %v8807 = vlaneseq
        %v8808 = vshrl.u32 %v8807, 7
        %v8809 = vsub.s32 5, %v8808
        %v8810 = vrot.slane %v418, %v8809
        %v8811 = vlaneseq
        %v8812 = vshrl.u32 %v8811, 7
        %v8813 = vsub.s32 5, %v8812
        %v8814 = vrot.slane %v419, %v8813
        %v8815 = vadd.f32 %v8767, %v8802
        %v8816 = vadd.f32 %v8768, %v8806
        %v8817 = vadd.f32 %v8769, %v8810
        %v8818 = vadd.f32 %v8770, %v8814
        %v8819 = vadd.f32 %v8771, %v8802
        %v8820 = vadd.f32 %v8772, %v8806
        %v8821 = vadd.f32 %v8773, %v8810
        %v8822 = vadd.f32 %v8774, %v8814
        %v8823 = vadd.f32 %v8775, %v8802
        %v8824 = vadd.f32 %v8776, %v8806
        %v8825 = vadd.f32 %v8777, %v8810
        %v8826 = vadd.f32 %v8778, %v8814
        %v8827 = vadd.f32 %v8779, %v8802
        %v8828 = vadd.f32 %v8780, %v8806
        %v8829 = vadd.f32 %v8781, %v8810
        %v8830 = vadd.f32 %v8782, %v8814
        %v8831 = vadd.f32 %v8783, %v8802
        %v8832 = vadd.f32 %v8784, %v8806
        %v8833 = vadd.f32 %v8785, %v8810
        %v8834 = vadd.f32 %v8786, %v8814
        %v8835 = vadd.f32 %v8787, %v8802
        %v8836 = vadd.f32 %v8788, %v8806
        %v8837 = vadd.f32 %v8789, %v8810
        %v8838 = vadd.f32 %v8790, %v8814
        %v8839 = vadd.f32 %v8791, %v8802
        %v8840 = vadd.f32 %v8792, %v8806
        %v8841 = vadd.f32 %v8793, %v8810
        %v8842 = vadd.f32 %v8794, %v8814
        %v8843 = vadd.f32 %v8795, %v8802
        %v8844 = vadd.f32 %v8796, %v8806
        %v8845 = vadd.f32 %v8797, %v8810
        %v8846 = vadd.f32 %v8798, %v8814
        %p8847 = scmp.lt.s32.totalorder %s27, 1
        // Predicated region
        $region73: #{tpu_custom_call.1} parent=43 // pred_check
          %p8848 = pneg %p8847
        $region74: #{tpu_custom_call.1} parent=43 // pred_check_branch
          %8850 = sbr.rel (%p8848) target = $region76
        $region75: #{tpu_custom_call.1} parent=43 // pred_region
          %8851 = vst [vmem:[#allocation2] sm:$0xff] %v8815
          %8852 = vst [vmem:[#allocation2 + $0x8] sm:$0xff] %v8816
          %8853 = vst [vmem:[#allocation2 + $0x10] sm:$0xff] %v8817
          %8854 = vst [vmem:[#allocation2 + $0x18] sm:$0xff] %v8818
          %8855 = vst [vmem:[#allocation2 + $0x20] sm:$0xff] %v8819
          %8856 = vst [vmem:[#allocation2 + $0x28] sm:$0xff] %v8820
          %8857 = vst [vmem:[#allocation2 + $0x30] sm:$0xff] %v8821
          %8858 = vst [vmem:[#allocation2 + $0x38] sm:$0xff] %v8822
          %8859 = vst [vmem:[#allocation2 + $0x40] sm:$0xff] %v8823
          %8860 = vst [vmem:[#allocation2 + $0x48] sm:$0xff] %v8824
          %8861 = vst [vmem:[#allocation2 + $0x50] sm:$0xff] %v8825
          %8862 = vst [vmem:[#allocation2 + $0x58] sm:$0xff] %v8826
          %8863 = vst [vmem:[#allocation2 + $0x60] sm:$0xff] %v8827
          %8864 = vst [vmem:[#allocation2 + $0x68] sm:$0xff] %v8828
          %8865 = vst [vmem:[#allocation2 + $0x70] sm:$0xff] %v8829
          %8866 = vst [vmem:[#allocation2 + $0x78] sm:$0xff] %v8830
          %8867 = vst [vmem:[#allocation2 + $0x80] sm:$0xff] %v8831
          %8868 = vst [vmem:[#allocation2 + $0x88] sm:$0xff] %v8832
          %8869 = vst [vmem:[#allocation2 + $0x90] sm:$0xff] %v8833
          %8870 = vst [vmem:[#allocation2 + $0x98] sm:$0xff] %v8834
          %8871 = vst [vmem:[#allocation2 + $0xa0] sm:$0xff] %v8835
          %8872 = vst [vmem:[#allocation2 + $0xa8] sm:$0xff] %v8836
          %8873 = vst [vmem:[#allocation2 + $0xb0] sm:$0xff] %v8837
          %8874 = vst [vmem:[#allocation2 + $0xb8] sm:$0xff] %v8838
          %8875 = vst [vmem:[#allocation2 + $0xc0] sm:$0xff] %v8839
          %8876 = vst [vmem:[#allocation2 + $0xc8] sm:$0xff] %v8840
          %8877 = vst [vmem:[#allocation2 + $0xd0] sm:$0xff] %v8841
          %8878 = vst [vmem:[#allocation2 + $0xd8] sm:$0xff] %v8842
          %8879 = vst [vmem:[#allocation2 + $0xe0] sm:$0xff] %v8843
          %8880 = vst [vmem:[#allocation2 + $0xe8] sm:$0xff] %v8844
          %8881 = vst [vmem:[#allocation2 + $0xf0] sm:$0xff] %v8845
          %8882 = vst [vmem:[#allocation2 + $0xf8] sm:$0xff] %v8846
        $region76: #{tpu_custom_call.1} parent=43 // pred_fallthru
          _
        %p8883 = scmp.eq.s32.totalorder %s27, 1
        // Predicated region
        $region77: #{tpu_custom_call.1} parent=43 // pred_check
          %p8884 = pneg %p8883
        $region78: #{tpu_custom_call.1} parent=43 // pred_check_branch
          %8886 = sbr.rel (%p8884) target = $region80
        $region79: #{tpu_custom_call.1} parent=43 // pred_region
          %8887 = vst [vmem:[#allocation14] sm:$0xff] %v8815
          %8888 = vst [vmem:[#allocation14 + $0x8] sm:$0xff] %v8816
          %8889 = vst [vmem:[#allocation14 + $0x10] sm:$0xff] %v8817
          %8890 = vst [vmem:[#allocation14 + $0x18] sm:$0xff] %v8818
          %8891 = vst [vmem:[#allocation14 + $0x20] sm:$0xff] %v8819
          %8892 = vst [vmem:[#allocation14 + $0x28] sm:$0xff] %v8820
          %8893 = vst [vmem:[#allocation14 + $0x30] sm:$0xff] %v8821
          %8894 = vst [vmem:[#allocation14 + $0x38] sm:$0xff] %v8822
          %8895 = vst [vmem:[#allocation14 + $0x40] sm:$0xff] %v8823
          %8896 = vst [vmem:[#allocation14 + $0x48] sm:$0xff] %v8824
          %8897 = vst [vmem:[#allocation14 + $0x50] sm:$0xff] %v8825
          %8898 = vst [vmem:[#allocation14 + $0x58] sm:$0xff] %v8826
          %8899 = vst [vmem:[#allocation14 + $0x60] sm:$0xff] %v8827
          %8900 = vst [vmem:[#allocation14 + $0x68] sm:$0xff] %v8828
          %8901 = vst [vmem:[#allocation14 + $0x70] sm:$0xff] %v8829
          %8902 = vst [vmem:[#allocation14 + $0x78] sm:$0xff] %v8830
          %8903 = vst [vmem:[#allocation14 + $0x80] sm:$0xff] %v8831
          %8904 = vst [vmem:[#allocation14 + $0x88] sm:$0xff] %v8832
          %8905 = vst [vmem:[#allocation14 + $0x90] sm:$0xff] %v8833
          %8906 = vst [vmem:[#allocation14 + $0x98] sm:$0xff] %v8834
          %8907 = vst [vmem:[#allocation14 + $0xa0] sm:$0xff] %v8835
          %8908 = vst [vmem:[#allocation14 + $0xa8] sm:$0xff] %v8836
          %8909 = vst [vmem:[#allocation14 + $0xb0] sm:$0xff] %v8837
          %8910 = vst [vmem:[#allocation14 + $0xb8] sm:$0xff] %v8838
          %8911 = vst [vmem:[#allocation14 + $0xc0] sm:$0xff] %v8839
          %8912 = vst [vmem:[#allocation14 + $0xc8] sm:$0xff] %v8840
          %8913 = vst [vmem:[#allocation14 + $0xd0] sm:$0xff] %v8841
          %8914 = vst [vmem:[#allocation14 + $0xd8] sm:$0xff] %v8842
          %8915 = vst [vmem:[#allocation14 + $0xe0] sm:$0xff] %v8843
          %8916 = vst [vmem:[#allocation14 + $0xe8] sm:$0xff] %v8844
          %8917 = vst [vmem:[#allocation14 + $0xf0] sm:$0xff] %v8845
          %8918 = vst [vmem:[#allocation14 + $0xf8] sm:$0xff] %v8846
        $region80: #{tpu_custom_call.1} parent=43 // pred_fallthru
          _
        // Predicated region
        $region81: #{tpu_custom_call.1} parent=43 // pred_check
          %p8919 = pneg %p188
        $region82: #{tpu_custom_call.1} parent=43 // pred_check_branch
          %8921 = sbr.rel (%p8919) target = $region84
        $region83: #{tpu_custom_call.1} parent=43 // pred_region
          %s8922 = smul.u32 8, %s26
          %s8924 = ssub.s32 4096, 4096
          %8925 = vsyncadd [#allocation5], %s8924
          %s8926 = smul.addr %s8922, 4
          %s8927 = smul.addr %s8926, 128
          %s8928 = scalar_lea.hbm %s6, %s8927
          %s8929 = sshll.u32 [#allocation14], 4
          %s8930 = int_to_ptr.vmem [resolvable:$true] %s8929
          %8935 = dma.vmem_to_hbm [thread:$0]  %s8930, 4096, %s8928, [#allocation5], 512, 512, 32
        $region84: #{tpu_custom_call.1} parent=43 // pred_fallthru
          _
        // Predicated region
        $region85: #{tpu_custom_call.1} parent=43 // pred_check
          %p8936 = pneg %p188
        $region86: #{tpu_custom_call.1} parent=43 // pred_check_branch
          %8938 = sbr.rel (%p8936) target = $region88
        $region87: #{tpu_custom_call.1} parent=43 // pred_region
          %8939 = dma.done [#allocation5], 4096
        $region88: #{tpu_custom_call.1} parent=43 // pred_fallthru
          _
      $region44: #{tpu_custom_call.1} parent=5 // pred_fallthru
        _
      %p8940 = scmp.le.s32.totalorder 2, %s17
      // Predicated region
      $region89: #{tpu_custom_call.1} parent=5 // pred_check
        %p8941 = pneg %p8940
      $region90: #{tpu_custom_call.1} parent=5 // pred_check_branch
        %8943 = sbr.rel (%p8941) target = $region92
      $region91: #{tpu_custom_call.1} parent=5 // pred_region
        %s8944 = ssub.s32 %s17, 2
      $region92: #{tpu_custom_call.1} parent=5 // pred_fallthru
        _
    $region6: #{tpu_custom_call.1} parent=1 // loop_footer
      %s21 = sadd.s32 1, %s17
    $region7: #{tpu_custom_call.1} parent=1 // loop_footer_branch
      %16 = sbr.rel target = $region3
    $region8: #{tpu_custom_call.1} parent=1 // loop_exit
      _
    %8945 = vsyncpa [#allocation4], 1
    %s8946 = scalar_lea.sflag [#allocation4], 1
    %8947 = vsyncpa %s8946, 1
    %8948 = vsyncpa [#allocation7], 1
    %8949 = vsyncpa [#allocation10], 1
    %8950 = vsyncpa [#allocation13], 1
    %8951 = vsyncpa [#allocation5], 1
    %s8952 = scalar_lea.sflag [#allocation5], 1
    %8953 = vsyncpa %s8952, 1

</llo_original>
